<compile_context>
chip_gen: v7x
topology: tpu7x:2x2x1
jax: 0.10.0
libtpu: 0.0.40
codegen_flags: <defaults>
</compile_context>

<pallas_src>
import functools

import numpy as np
import jax
import jax.numpy as jnp
from jax.experimental import pallas as pl
from jax.experimental.pallas import tpu as pltpu

NUM_CLASS = 10
FC_IN_PAD = 512   # 16*5*5 = 400 -> padded contraction dim
FC_H_PAD = 128    # 120 / 84 / 10 -> padded feature dims (lane-dense)
TB_CONV = 8       # images per conv grid step


def _round_up(x, m):
    return (x + m - 1) // m * m


# ----------------------------------------------------------------------------
# Pallas kernels
# ----------------------------------------------------------------------------
def _conv_relu_pool_kernel(x_ref, wt_ref, b_ref, o_ref, *, K, OH, OW, OC):
    """Fused conv (width-Toeplitz GEMM) + bias + ReLU + 2x2 pool pair-max.

    x_ref : (TB, Hp, Wp*IC)       bf16   raw padded activations (no im2col!)
    wt_ref: (K, Wp*IC, OW*OC)     bf16   Toeplitz-expanded weights
    b_ref : (1, OW*OC)            f32    bias tiled over OW
    o_ref : (TB, OH-1, (OW-1)*OC) f32    pair-maxed pre-subsample pool output
    """
    OWOC = OW * OC
    bias = b_ref[...]                                  # hoisted (1, OW*OC)
    for tb in range(x_ref.shape[0]):                   # small static unroll
        x_i = x_ref[tb]                                # (Hp, Wp*IC)
        acc = jnp.zeros((OH, OWOC), jnp.float32)
        for kh in range(K):                            # 5 MXU matmuls, f32 acc
            acc = acc + jnp.dot(x_i[kh:kh + OH, :], wt_ref[kh],
                                preferred_element_type=jnp.float32)
        y = jnp.maximum(acc + bias, 0.0)               # bias + ReLU (f32, VPU)
        # 2x2 max-pool: pair-max along H (rows) and W (lane groups of OC).
        hp = jnp.maximum(y[:OH - 1, :], y[1:, :])          # (OH-1, OW*OC)
        wp = jnp.maximum(hp[:, :OWOC - OC], hp[:, OC:])    # (OH-1, (OW-1)*OC)
        o_ref[tb] = wp


def _mlp_kernel(x_ref, w1_ref, b1_ref, w2_ref, b2_ref, w3_ref, b3_ref, o_ref):
    """fc1+ReLU -> fc2+ReLU -> fc3 fused; intermediates never touch HBM."""
    h = jnp.dot(x_ref[...], w1_ref[...], preferred_element_type=jnp.float32)
    h = jnp.maximum(h + b1_ref[...], 0.0).astype(jnp.bfloat16)
    h = jnp.dot(h, w2_ref[...], preferred_element_type=jnp.float32)
    h = jnp.maximum(h + b2_ref[...], 0.0).astype(jnp.bfloat16)
    h = jnp.dot(h, w3_ref[...], preferred_element_type=jnp.float32)
    o_ref[...] = h + b3_ref[...]


# ----------------------------------------------------------------------------
# Pallas wrappers
# ----------------------------------------------------------------------------
def conv_relu_pool(x_flat, wt, b_tiled, *, K, OH, OW, OC, tb=TB_CONV):
    """x_flat: (Bp, Hp, Wp*IC) bf16 -> pooled NHWC (Bp, OH//2, OW//2, OC) f32."""
    Bp, Hp, WIC = x_flat.shape
    OWOC = OW * OC
    out = pl.pallas_call(
        functools.partial(_conv_relu_pool_kernel, K=K, OH=OH, OW=OW, OC=OC),
        out_shape=jax.ShapeDtypeStruct((Bp, OH - 1, (OW - 1) * OC), jnp.float32),
        grid=(Bp // tb,),
        in_specs=[
            pl.BlockSpec((tb, Hp, WIC), lambda i: (i, 0, 0)),
            pl.BlockSpec((K, WIC, OWOC), lambda i: (0, 0, 0)),
            pl.BlockSpec((1, OWOC), lambda i: (0, 0)),
        ],
        out_specs=pl.BlockSpec((tb, OH - 1, (OW - 1) * OC), lambda i: (i, 0, 0)),
        compiler_params=pltpu.CompilerParams(
            dimension_semantics=("parallel",)),
    )(x_flat, wt, b_tiled)
    # Cheap XLA glue: keep the even anchors of the in-kernel pair-maxes.
    out = out.reshape(Bp, OH - 1, OW - 1, OC)
    return out[:, 0::2, 0::2, :]                       # (Bp, OH//2, OW//2, OC)


def mlp(x, w1, b1, w2, b2, w3, b3, *, tm):
    """x: (Bp, FC_IN_PAD) bf16 -> (Bp, FC_H_PAD) f32, fully fused 3-layer MLP."""
    Bp, D = x.shape
    N1, N2, N3 = w1.shape[1], w2.shape[1], w3.shape[1]
    return pl.pallas_call(
        _mlp_kernel,
        out_shape=jax.ShapeDtypeStruct((Bp, N3), jnp.float32),
        grid=(Bp // tm,),
        in_specs=[
            pl.BlockSpec((tm, D), lambda i: (i, 0)),
            pl.BlockSpec((D, N1), lambda i: (0, 0)),
            pl.BlockSpec((1, N1), lambda i: (0, 0)),
            pl.BlockSpec((N1, N2), lambda i: (0, 0)),
            pl.BlockSpec((1, N2), lambda i: (0, 0)),
            pl.BlockSpec((N2, N3), lambda i: (0, 0)),
            pl.BlockSpec((1, N3), lambda i: (0, 0)),
        ],
        out_specs=pl.BlockSpec((tm, N3), lambda i: (i, 0)),
        compiler_params=pltpu.CompilerParams(
            dimension_semantics=("parallel",)),
    )(x, w1, b1, w2, b2, w3, b3)


# ----------------------------------------------------------------------------
# One-time parameter preparation (done once, outside the traced forward)
# ----------------------------------------------------------------------------
def _build_width_toeplitz(w_torch, Wp):
    """w_torch: (OC, IC, K, K) -> (K, Wp*IC, OW*OC) with
    Wt[kh, wi*IC+ic, ow*OC+oc] = w[oc, ic, kh, wi-ow] for 0 <= wi-ow < K."""
    w = np.asarray(jax.device_get(w_torch), dtype=np.float32)
    OC, IC, K, _ = w.shape
    OW = Wp - K + 1
    wt = np.zeros((K, Wp, IC, OW, OC), np.float32)
    for kh in range(K):
        for kw in range(K):
            w_ic_oc = w[:, :, kh, kw].T                # (IC, OC)
            for ow in range(OW):
                wt[kh, ow + kw, :, ow, :] = w_ic_oc
    return jnp.asarray(wt.reshape(K, Wp * IC, OW * OC))


def prepare_params(params):
    """Toeplitz-expand conv weights, tile biases, pre-transpose & pad FC."""
    def pad2(a, r, c):
        a = jnp.asarray(a, jnp.float32)
        return jnp.zeros((r, c), jnp.float32).at[:a.shape[0], :a.shape[1]].set(a)

    def pad_bias(b, n):
        b = jnp.asarray(b, jnp.float32)
        return jnp.zeros((1, n), jnp.float32).at[0, :b.shape[0]].set(b)

    return {
        # conv1: 28x28 input, pad=2 -> Hp=Wp=32, OH=OW=28, OC=6
        "wt1": _build_width_toeplitz(params["w1"], 32).astype(jnp.bfloat16),
        "bt1": jnp.tile(params["b1"], 28).reshape(1, 28 * 6).astype(jnp.float32),
        # conv2: 14x14 input, no pad -> OH=OW=10, OC=16
        "wt2": _build_width_toeplitz(params["w2"], 14).astype(jnp.bfloat16),
        "bt2": jnp.tile(params["b2"], 10).reshape(1, 10 * 16).astype(jnp.float32),
        # FC: pre-transposed (in, out), zero-padded to lane-friendly sizes
        "wf1": pad2(params["wf1"].T, FC_IN_PAD, FC_H_PAD).astype(jnp.bfloat16),
        "bf1": pad_bias(params["bf1"], FC_H_PAD),
        "wf2": pad2(params["wf2"].T, FC_H_PAD, FC_H_PAD).astype(jnp.bfloat16),
        "bf2": pad_bias(params["bf2"], FC_H_PAD),
        "wf3": pad2(params["wf3"].T, FC_H_PAD, FC_H_PAD).astype(jnp.bfloat16),
        "bf3": pad_bias(params["bf3"], FC_H_PAD),
    }


# ----------------------------------------------------------------------------
# LeNet forward (input: PyTorch-style NCHW float32 (B, 1, 28, 28))
# ----------------------------------------------------------------------------
def lenet_forward(x_nchw, p):
    B = x_nchw.shape[0]
    Bp = _round_up(B, TB_CONV)

    # conv1 prep: NCHW -> NHWC, spatial pad 2, batch pad, flatten W*C, bf16
    x = jnp.transpose(x_nchw, (0, 2, 3, 1))                       # (B,28,28,1)
    x = jnp.pad(x, ((0, Bp - B), (2, 2), (2, 2), (0, 0)))
    x = x.reshape(Bp, 32, 32 * 1).astype(jnp.bfloat16)
    # conv1 + ReLU + pool (fused)                                  (Bp,14,14,6)
    x = conv_relu_pool(x, p["wt1"], p["bt1"], K=5, OH=28, OW=28, OC=6)

    # conv2 prep: flatten W*C, bf16
    x = x.reshape(Bp, 14, 14 * 6).astype(jnp.bfloat16)
    # conv2 + ReLU + pool (fused)                                  (Bp,5,5,16)
    x = conv_relu_pool(x, p["wt2"], p["bt2"], K=5, OH=10, OW=10, OC=16)

    # flatten exactly like torch's x.view(B, -1) on an NCHW tensor, pad to 512
    x = jnp.transpose(x, (0, 3, 1, 2)).reshape(Bp, 16 * 5 * 5)
    x = jnp.pad(x, ((0, 0), (0, FC_IN_PAD - 16 * 5 * 5))).astype(jnp.bfloat16)

    # fused fc1+ReLU -> fc2+ReLU -> fc3
    tm = 512 if Bp % 512 == 0 else (128 if Bp % 128 == 0 else 8)
    out = mlp(x, p["wf1"], p["bf1"], p["wf2"], p["bf2"], p["wf3"], p["bf3"],
              tm=tm)
    return out[:B, :NUM_CLASS]


def init_params(key, num_class=NUM_CLASS):
    ks = jax.random.split(key, 10)
    s = 0.05
    return {
        "w1": jax.random.normal(ks[0], (6, 1, 5, 5), jnp.float32) * s,
        "b1": jax.random.normal(ks[1], (6,), jnp.float32) * s,
        "w2": jax.random.normal(ks[2], (16, 6, 5, 5), jnp.float32) * s,
        "b2": jax.random.normal(ks[3], (16,), jnp.float32) * s,
        "wf1": jax.random.normal(ks[4], (120, 16 * 5 * 5), jnp.float32) * s,
        "bf1": jax.random.normal(ks[5], (120,), jnp.float32) * s,
        "wf2": jax.random.normal(ks[6], (84, 120), jnp.float32) * s,
        "bf2": jax.random.normal(ks[7], (84,), jnp.float32) * s,
        "wf3": jax.random.normal(ks[8], (num_class, 84), jnp.float32) * s,
        "bf3": jax.random.normal(ks[9], (num_class,), jnp.float32) * s,
    }


if __name__ == "__main__":
    key = jax.random.PRNGKey(0)
    k_x, k_p = jax.random.split(key)
    # MNIST-style input: 28x28 is required by the 16*5*5 flatten in the module.
    x = jax.random.normal(k_x, (2, 1, 28, 28), jnp.float32)
    params = init_params(k_p)
    prepared = prepare_params(params)           # one-time weight re-layout

    fwd = jax.jit(lenet_forward)
    out = jax.block_until_ready(fwd(x, prepared))
    assert out.shape == (2, 10) and out.dtype == jnp.float32
    print("KERNEL_OK")
</pallas_src>

<mosaic_0001>
module attributes {stable_mosaic.version = 11 : i64} {
  func.func @_conv_relu_pool_kernel(%arg0: i32, %arg1: memref<8x32x32xbf16, #tpu.memory_space<vmem>>, %arg2: memref<5x32x168xbf16, #tpu.memory_space<vmem>>, %arg3: memref<1x168xf32, #tpu.memory_space<vmem>>, %arg4: memref<8x27x162xf32, #tpu.memory_space<vmem>>) attributes {dimension_semantics = [#tpu.dimension_semantics<parallel>], iteration_bounds = array<i64: 1>, scalar_prefetch = 0 : i64, scratch_operands = 0 : i64, tpu.core_type = #tpu.core_type<tc>, window_params = [{transform_indices = @transform_0, window_bounds = array<i64: 8, 32, 32>}, {pipeline_mode = #tpu.pipeline_mode<synchronous>, transform_indices = @transform_1, window_bounds = array<i64: 5, 32, 168>}, {pipeline_mode = #tpu.pipeline_mode<synchronous>, transform_indices = @transform_2, window_bounds = array<i64: 1, 168>}, {transform_indices = @transform_3, window_bounds = array<i64: 8, 27, 162>}]} {
    %c0 = arith.constant 0 : index
    %c0_0 = arith.constant 0 : index
    %0 = vector.load %arg3[%c0, %c0_0] : memref<1x168xf32, #tpu.memory_space<vmem>>, vector<1x168xf32>
    %c0_1 = arith.constant 0 : index
    %c0_2 = arith.constant 0 : index
    %c0_3 = arith.constant 0 : index
    %1 = vector.load %arg1[%c0_1, %c0_2, %c0_3] : memref<8x32x32xbf16, #tpu.memory_space<vmem>>, vector<1x32x32xbf16>
    %2 = vector.shape_cast %1 : vector<1x32x32xbf16> to vector<32x32xbf16>
    %cst = arith.constant 0.000000e+00 : f32
    %3 = vector.broadcast %cst : f32 to vector<28x168xf32>
    %4 = vector.extract_strided_slice %2 {offsets = [0, 0], sizes = [28, 32], strides = [1, 1]} : vector<32x32xbf16> to vector<28x32xbf16>
    %c0_4 = arith.constant 0 : index
    %c0_5 = arith.constant 0 : index
    %c0_6 = arith.constant 0 : index
    %5 = vector.load %arg2[%c0_4, %c0_5, %c0_6] : memref<5x32x168xbf16, #tpu.memory_space<vmem>>, vector<1x32x168xbf16>
    %6 = vector.shape_cast %5 : vector<1x32x168xbf16> to vector<32x168xbf16>
    %cst_7 = arith.constant dense<0.000000e+00> : vector<28x168xf32>
    %7 = tpu.matmul %4, %6, %cst_7 {dimension_numbers = #tpu.dot_dimension_numbers<[1], [0], [0], [1], [0, 0, 1, 1], [], []>} : vector<28x32xbf16>, vector<32x168xbf16>, vector<28x168xf32> -> vector<28x168xf32>
    %8 = arith.addf %3, %7 : vector<28x168xf32>
    %9 = vector.extract_strided_slice %2 {offsets = [1, 0], sizes = [28, 32], strides = [1, 1]} : vector<32x32xbf16> to vector<28x32xbf16>
    %c1 = arith.constant 1 : index
    %c0_8 = arith.constant 0 : index
    %c0_9 = arith.constant 0 : index
    %10 = vector.load %arg2[%c1, %c0_8, %c0_9] : memref<5x32x168xbf16, #tpu.memory_space<vmem>>, vector<1x32x168xbf16>
    %11 = vector.shape_cast %10 : vector<1x32x168xbf16> to vector<32x168xbf16>
    %cst_10 = arith.constant dense<0.000000e+00> : vector<28x168xf32>
    %12 = tpu.matmul %9, %11, %cst_10 {dimension_numbers = #tpu.dot_dimension_numbers<[1], [0], [0], [1], [0, 0, 1, 1], [], []>} : vector<28x32xbf16>, vector<32x168xbf16>, vector<28x168xf32> -> vector<28x168xf32>
    %13 = arith.addf %8, %12 : vector<28x168xf32>
    %14 = vector.extract_strided_slice %2 {offsets = [2, 0], sizes = [28, 32], strides = [1, 1]} : vector<32x32xbf16> to vector<28x32xbf16>
    %c2 = arith.constant 2 : index
    %c0_11 = arith.constant 0 : index
    %c0_12 = arith.constant 0 : index
    %15 = vector.load %arg2[%c2, %c0_11, %c0_12] : memref<5x32x168xbf16, #tpu.memory_space<vmem>>, vector<1x32x168xbf16>
    %16 = vector.shape_cast %15 : vector<1x32x168xbf16> to vector<32x168xbf16>
    %cst_13 = arith.constant dense<0.000000e+00> : vector<28x168xf32>
    %17 = tpu.matmul %14, %16, %cst_13 {dimension_numbers = #tpu.dot_dimension_numbers<[1], [0], [0], [1], [0, 0, 1, 1], [], []>} : vector<28x32xbf16>, vector<32x168xbf16>, vector<28x168xf32> -> vector<28x168xf32>
    %18 = arith.addf %13, %17 : vector<28x168xf32>
    %19 = vector.extract_strided_slice %2 {offsets = [3, 0], sizes = [28, 32], strides = [1, 1]} : vector<32x32xbf16> to vector<28x32xbf16>
    %c3 = arith.constant 3 : index
    %c0_14 = arith.constant 0 : index
    %c0_15 = arith.constant 0 : index
    %20 = vector.load %arg2[%c3, %c0_14, %c0_15] : memref<5x32x168xbf16, #tpu.memory_space<vmem>>, vector<1x32x168xbf16>
    %21 = vector.shape_cast %20 : vector<1x32x168xbf16> to vector<32x168xbf16>
    %cst_16 = arith.constant dense<0.000000e+00> : vector<28x168xf32>
    %22 = tpu.matmul %19, %21, %cst_16 {dimension_numbers = #tpu.dot_dimension_numbers<[1], [0], [0], [1], [0, 0, 1, 1], [], []>} : vector<28x32xbf16>, vector<32x168xbf16>, vector<28x168xf32> -> vector<28x168xf32>
    %23 = arith.addf %18, %22 : vector<28x168xf32>
    %24 = vector.extract_strided_slice %2 {offsets = [4, 0], sizes = [28, 32], strides = [1, 1]} : vector<32x32xbf16> to vector<28x32xbf16>
    %c4 = arith.constant 4 : index
    %c0_17 = arith.constant 0 : index
    %c0_18 = arith.constant 0 : index
    %25 = vector.load %arg2[%c4, %c0_17, %c0_18] : memref<5x32x168xbf16, #tpu.memory_space<vmem>>, vector<1x32x168xbf16>
    %26 = vector.shape_cast %25 : vector<1x32x168xbf16> to vector<32x168xbf16>
    %cst_19 = arith.constant dense<0.000000e+00> : vector<28x168xf32>
    %27 = tpu.matmul %24, %26, %cst_19 {dimension_numbers = #tpu.dot_dimension_numbers<[1], [0], [0], [1], [0, 0, 1, 1], [], []>} : vector<28x32xbf16>, vector<32x168xbf16>, vector<28x168xf32> -> vector<28x168xf32>
    %28 = arith.addf %23, %27 : vector<28x168xf32>
    %29 = vector.broadcast %0 : vector<1x168xf32> to vector<28x168xf32>
    %30 = arith.addf %28, %29 : vector<28x168xf32>
    %cst_20 = arith.constant 0.000000e+00 : f32
    %31 = vector.broadcast %cst_20 : f32 to vector<28x168xf32>
    %32 = arith.maximumf %30, %31 : vector<28x168xf32>
    %33 = vector.extract_strided_slice %32 {offsets = [0, 0], sizes = [27, 168], strides = [1, 1]} : vector<28x168xf32> to vector<27x168xf32>
    %34 = vector.extract_strided_slice %32 {offsets = [1, 0], sizes = [27, 168], strides = [1, 1]} : vector<28x168xf32> to vector<27x168xf32>
    %35 = arith.maximumf %33, %34 : vector<27x168xf32>
    %36 = vector.extract_strided_slice %35 {offsets = [0, 0], sizes = [27, 162], strides = [1, 1]} : vector<27x168xf32> to vector<27x162xf32>
    %37 = vector.extract_strided_slice %35 {offsets = [0, 6], sizes = [27, 162], strides = [1, 1]} : vector<27x168xf32> to vector<27x162xf32>
    %38 = arith.maximumf %36, %37 : vector<27x162xf32>
    %c0_21 = arith.constant 0 : index
    %c0_22 = arith.constant 0 : index
    %c0_23 = arith.constant 0 : index
    %39 = vector.load %arg4[%c0_21, %c0_22, %c0_23] : memref<8x27x162xf32, #tpu.memory_space<vmem>>, vector<1x27x162xf32>
    %40 = vector.shape_cast %39 : vector<1x27x162xf32> to vector<27x162xf32>
    %41 = vector.shape_cast %38 : vector<27x162xf32> to vector<1x27x162xf32>
    tpu.vector_store %arg4[%c0_21, %c0_22, %c0_23], %41 {strides = array<i32>} : memref<8x27x162xf32, #tpu.memory_space<vmem>>, vector<1x27x162xf32>,
    %c1_24 = arith.constant 1 : index
    %c0_25 = arith.constant 0 : index
    %c0_26 = arith.constant 0 : index
    %42 = vector.load %arg1[%c1_24, %c0_25, %c0_26] : memref<8x32x32xbf16, #tpu.memory_space<vmem>>, vector<1x32x32xbf16>
    %43 = vector.shape_cast %42 : vector<1x32x32xbf16> to vector<32x32xbf16>
    %cst_27 = arith.constant 0.000000e+00 : f32
    %44 = vector.broadcast %cst_27 : f32 to vector<28x168xf32>
    %45 = vector.extract_strided_slice %43 {offsets = [0, 0], sizes = [28, 32], strides = [1, 1]} : vector<32x32xbf16> to vector<28x32xbf16>
    %c0_28 = arith.constant 0 : index
    %c0_29 = arith.constant 0 : index
    %c0_30 = arith.constant 0 : index
    %46 = vector.load %arg2[%c0_28, %c0_29, %c0_30] : memref<5x32x168xbf16, #tpu.memory_space<vmem>>, vector<1x32x168xbf16>
    %47 = vector.shape_cast %46 : vector<1x32x168xbf16> to vector<32x168xbf16>
    %cst_31 = arith.constant dense<0.000000e+00> : vector<28x168xf32>
    %48 = tpu.matmul %45, %47, %cst_31 {dimension_numbers = #tpu.dot_dimension_numbers<[1], [0], [0], [1], [0, 0, 1, 1], [], []>} : vector<28x32xbf16>, vector<32x168xbf16>, vector<28x168xf32> -> vector<28x168xf32>
    %49 = arith.addf %44, %48 : vector<28x168xf32>
    %50 = vector.extract_strided_slice %43 {offsets = [1, 0], sizes = [28, 32], strides = [1, 1]} : vector<32x32xbf16> to vector<28x32xbf16>
    %c1_32 = arith.constant 1 : index
    %c0_33 = arith.constant 0 : index
    %c0_34 = arith.constant 0 : index
    %51 = vector.load %arg2[%c1_32, %c0_33, %c0_34] : memref<5x32x168xbf16, #tpu.memory_space<vmem>>, vector<1x32x168xbf16>
    %52 = vector.shape_cast %51 : vector<1x32x168xbf16> to vector<32x168xbf16>
    %cst_35 = arith.constant dense<0.000000e+00> : vector<28x168xf32>
    %53 = tpu.matmul %50, %52, %cst_35 {dimension_numbers = #tpu.dot_dimension_numbers<[1], [0], [0], [1], [0, 0, 1, 1], [], []>} : vector<28x32xbf16>, vector<32x168xbf16>, vector<28x168xf32> -> vector<28x168xf32>
    %54 = arith.addf %49, %53 : vector<28x168xf32>
    %55 = vector.extract_strided_slice %43 {offsets = [2, 0], sizes = [28, 32], strides = [1, 1]} : vector<32x32xbf16> to vector<28x32xbf16>
    %c2_36 = arith.constant 2 : index
    %c0_37 = arith.constant 0 : index
    %c0_38 = arith.constant 0 : index
    %56 = vector.load %arg2[%c2_36, %c0_37, %c0_38] : memref<5x32x168xbf16, #tpu.memory_space<vmem>>, vector<1x32x168xbf16>
    %57 = vector.shape_cast %56 : vector<1x32x168xbf16> to vector<32x168xbf16>
    %cst_39 = arith.constant dense<0.000000e+00> : vector<28x168xf32>
    %58 = tpu.matmul %55, %57, %cst_39 {dimension_numbers = #tpu.dot_dimension_numbers<[1], [0], [0], [1], [0, 0, 1, 1], [], []>} : vector<28x32xbf16>, vector<32x168xbf16>, vector<28x168xf32> -> vector<28x168xf32>
    %59 = arith.addf %54, %58 : vector<28x168xf32>
    %60 = vector.extract_strided_slice %43 {offsets = [3, 0], sizes = [28, 32], strides = [1, 1]} : vector<32x32xbf16> to vector<28x32xbf16>
    %c3_40 = arith.constant 3 : index
    %c0_41 = arith.constant 0 : index
    %c0_42 = arith.constant 0 : index
    %61 = vector.load %arg2[%c3_40, %c0_41, %c0_42] : memref<5x32x168xbf16, #tpu.memory_space<vmem>>, vector<1x32x168xbf16>
    %62 = vector.shape_cast %61 : vector<1x32x168xbf16> to vector<32x168xbf16>
    %cst_43 = arith.constant dense<0.000000e+00> : vector<28x168xf32>
    %63 = tpu.matmul %60, %62, %cst_43 {dimension_numbers = #tpu.dot_dimension_numbers<[1], [0], [0], [1], [0, 0, 1, 1], [], []>} : vector<28x32xbf16>, vector<32x168xbf16>, vector<28x168xf32> -> vector<28x168xf32>
    %64 = arith.addf %59, %63 : vector<28x168xf32>
    %65 = vector.extract_strided_slice %43 {offsets = [4, 0], sizes = [28, 32], strides = [1, 1]} : vector<32x32xbf16> to vector<28x32xbf16>
    %c4_44 = arith.constant 4 : index
    %c0_45 = arith.constant 0 : index
    %c0_46 = arith.constant 0 : index
    %66 = vector.load %arg2[%c4_44, %c0_45, %c0_46] : memref<5x32x168xbf16, #tpu.memory_space<vmem>>, vector<1x32x168xbf16>
    %67 = vector.shape_cast %66 : vector<1x32x168xbf16> to vector<32x168xbf16>
    %cst_47 = arith.constant dense<0.000000e+00> : vector<28x168xf32>
    %68 = tpu.matmul %65, %67, %cst_47 {dimension_numbers = #tpu.dot_dimension_numbers<[1], [0], [0], [1], [0, 0, 1, 1], [], []>} : vector<28x32xbf16>, vector<32x168xbf16>, vector<28x168xf32> -> vector<28x168xf32>
    %69 = arith.addf %64, %68 : vector<28x168xf32>
    %70 = vector.broadcast %0 : vector<1x168xf32> to vector<28x168xf32>
    %71 = arith.addf %69, %70 : vector<28x168xf32>
    %cst_48 = arith.constant 0.000000e+00 : f32
    %72 = vector.broadcast %cst_48 : f32 to vector<28x168xf32>
    %73 = arith.maximumf %71, %72 : vector<28x168xf32>
    %74 = vector.extract_strided_slice %73 {offsets = [0, 0], sizes = [27, 168], strides = [1, 1]} : vector<28x168xf32> to vector<27x168xf32>
    %75 = vector.extract_strided_slice %73 {offsets = [1, 0], sizes = [27, 168], strides = [1, 1]} : vector<28x168xf32> to vector<27x168xf32>
    %76 = arith.maximumf %74, %75 : vector<27x168xf32>
    %77 = vector.extract_strided_slice %76 {offsets = [0, 0], sizes = [27, 162], strides = [1, 1]} : vector<27x168xf32> to vector<27x162xf32>
    %78 = vector.extract_strided_slice %76 {offsets = [0, 6], sizes = [27, 162], strides = [1, 1]} : vector<27x168xf32> to vector<27x162xf32>
    %79 = arith.maximumf %77, %78 : vector<27x162xf32>
    %c1_49 = arith.constant 1 : index
    %c0_50 = arith.constant 0 : index
    %c0_51 = arith.constant 0 : index
    %80 = vector.load %arg4[%c1_49, %c0_50, %c0_51] : memref<8x27x162xf32, #tpu.memory_space<vmem>>, vector<1x27x162xf32>
    %81 = vector.shape_cast %80 : vector<1x27x162xf32> to vector<27x162xf32>
    %82 = vector.shape_cast %79 : vector<27x162xf32> to vector<1x27x162xf32>
    tpu.vector_store %arg4[%c1_49, %c0_50, %c0_51], %82 {strides = array<i32>} : memref<8x27x162xf32, #tpu.memory_space<vmem>>, vector<1x27x162xf32>,
    %c2_52 = arith.constant 2 : index
    %c0_53 = arith.constant 0 : index
    %c0_54 = arith.constant 0 : index
    %83 = vector.load %arg1[%c2_52, %c0_53, %c0_54] : memref<8x32x32xbf16, #tpu.memory_space<vmem>>, vector<1x32x32xbf16>
    %84 = vector.shape_cast %83 : vector<1x32x32xbf16> to vector<32x32xbf16>
    %cst_55 = arith.constant 0.000000e+00 : f32
    %85 = vector.broadcast %cst_55 : f32 to vector<28x168xf32>
    %86 = vector.extract_strided_slice %84 {offsets = [0, 0], sizes = [28, 32], strides = [1, 1]} : vector<32x32xbf16> to vector<28x32xbf16>
    %c0_56 = arith.constant 0 : index
    %c0_57 = arith.constant 0 : index
    %c0_58 = arith.constant 0 : index
    %87 = vector.load %arg2[%c0_56, %c0_57, %c0_58] : memref<5x32x168xbf16, #tpu.memory_space<vmem>>, vector<1x32x168xbf16>
    %88 = vector.shape_cast %87 : vector<1x32x168xbf16> to vector<32x168xbf16>
    %cst_59 = arith.constant dense<0.000000e+00> : vector<28x168xf32>
    %89 = tpu.matmul %86, %88, %cst_59 {dimension_numbers = #tpu.dot_dimension_numbers<[1], [0], [0], [1], [0, 0, 1, 1], [], []>} : vector<28x32xbf16>, vector<32x168xbf16>, vector<28x168xf32> -> vector<28x168xf32>
    %90 = arith.addf %85, %89 : vector<28x168xf32>
    %91 = vector.extract_strided_slice %84 {offsets = [1, 0], sizes = [28, 32], strides = [1, 1]} : vector<32x32xbf16> to vector<28x32xbf16>
    %c1_60 = arith.constant 1 : index
    %c0_61 = arith.constant 0 : index
    %c0_62 = arith.constant 0 : index
    %92 = vector.load %arg2[%c1_60, %c0_61, %c0_62] : memref<5x32x168xbf16, #tpu.memory_space<vmem>>, vector<1x32x168xbf16>
    %93 = vector.shape_cast %92 : vector<1x32x168xbf16> to vector<32x168xbf16>
    %cst_63 = arith.constant dense<0.000000e+00> : vector<28x168xf32>
    %94 = tpu.matmul %91, %93, %cst_63 {dimension_numbers = #tpu.dot_dimension_numbers<[1], [0], [0], [1], [0, 0, 1, 1], [], []>} : vector<28x32xbf16>, vector<32x168xbf16>, vector<28x168xf32> -> vector<28x168xf32>
    %95 = arith.addf %90, %94 : vector<28x168xf32>
    %96 = vector.extract_strided_slice %84 {offsets = [2, 0], sizes = [28, 32], strides = [1, 1]} : vector<32x32xbf16> to vector<28x32xbf16>
    %c2_64 = arith.constant 2 : index
    %c0_65 = arith.constant 0 : index
    %c0_66 = arith.constant 0 : index
    %97 = vector.load %arg2[%c2_64, %c0_65, %c0_66] : memref<5x32x168xbf16, #tpu.memory_space<vmem>>, vector<1x32x168xbf16>
    %98 = vector.shape_cast %97 : vector<1x32x168xbf16> to vector<32x168xbf16>
    %cst_67 = arith.constant dense<0.000000e+00> : vector<28x168xf32>
    %99 = tpu.matmul %96, %98, %cst_67 {dimension_numbers = #tpu.dot_dimension_numbers<[1], [0], [0], [1], [0, 0, 1, 1], [], []>} : vector<28x32xbf16>, vector<32x168xbf16>, vector<28x168xf32> -> vector<28x168xf32>
    %100 = arith.addf %95, %99 : vector<28x168xf32>
    %101 = vector.extract_strided_slice %84 {offsets = [3, 0], sizes = [28, 32], strides = [1, 1]} : vector<32x32xbf16> to vector<28x32xbf16>
    %c3_68 = arith.constant 3 : index
    %c0_69 = arith.constant 0 : index
    %c0_70 = arith.constant 0 : index
    %102 = vector.load %arg2[%c3_68, %c0_69, %c0_70] : memref<5x32x168xbf16, #tpu.memory_space<vmem>>, vector<1x32x168xbf16>
    %103 = vector.shape_cast %102 : vector<1x32x168xbf16> to vector<32x168xbf16>
    %cst_71 = arith.constant dense<0.000000e+00> : vector<28x168xf32>
    %104 = tpu.matmul %101, %103, %cst_71 {dimension_numbers = #tpu.dot_dimension_numbers<[1], [0], [0], [1], [0, 0, 1, 1], [], []>} : vector<28x32xbf16>, vector<32x168xbf16>, vector<28x168xf32> -> vector<28x168xf32>
    %105 = arith.addf %100, %104 : vector<28x168xf32>
    %106 = vector.extract_strided_slice %84 {offsets = [4, 0], sizes = [28, 32], strides = [1, 1]} : vector<32x32xbf16> to vector<28x32xbf16>
    %c4_72 = arith.constant 4 : index
    %c0_73 = arith.constant 0 : index
    %c0_74 = arith.constant 0 : index
    %107 = vector.load %arg2[%c4_72, %c0_73, %c0_74] : memref<5x32x168xbf16, #tpu.memory_space<vmem>>, vector<1x32x168xbf16>
    %108 = vector.shape_cast %107 : vector<1x32x168xbf16> to vector<32x168xbf16>
    %cst_75 = arith.constant dense<0.000000e+00> : vector<28x168xf32>
    %109 = tpu.matmul %106, %108, %cst_75 {dimension_numbers = #tpu.dot_dimension_numbers<[1], [0], [0], [1], [0, 0, 1, 1], [], []>} : vector<28x32xbf16>, vector<32x168xbf16>, vector<28x168xf32> -> vector<28x168xf32>
    %110 = arith.addf %105, %109 : vector<28x168xf32>
    %111 = vector.broadcast %0 : vector<1x168xf32> to vector<28x168xf32>
    %112 = arith.addf %110, %111 : vector<28x168xf32>
    %cst_76 = arith.constant 0.000000e+00 : f32
    %113 = vector.broadcast %cst_76 : f32 to vector<28x168xf32>
    %114 = arith.maximumf %112, %113 : vector<28x168xf32>
    %115 = vector.extract_strided_slice %114 {offsets = [0, 0], sizes = [27, 168], strides = [1, 1]} : vector<28x168xf32> to vector<27x168xf32>
    %116 = vector.extract_strided_slice %114 {offsets = [1, 0], sizes = [27, 168], strides = [1, 1]} : vector<28x168xf32> to vector<27x168xf32>
    %117 = arith.maximumf %115, %116 : vector<27x168xf32>
    %118 = vector.extract_strided_slice %117 {offsets = [0, 0], sizes = [27, 162], strides = [1, 1]} : vector<27x168xf32> to vector<27x162xf32>
    %119 = vector.extract_strided_slice %117 {offsets = [0, 6], sizes = [27, 162], strides = [1, 1]} : vector<27x168xf32> to vector<27x162xf32>
    %120 = arith.maximumf %118, %119 : vector<27x162xf32>
    %c2_77 = arith.constant 2 : index
    %c0_78 = arith.constant 0 : index
    %c0_79 = arith.constant 0 : index
    %121 = vector.load %arg4[%c2_77, %c0_78, %c0_79] : memref<8x27x162xf32, #tpu.memory_space<vmem>>, vector<1x27x162xf32>
    %122 = vector.shape_cast %121 : vector<1x27x162xf32> to vector<27x162xf32>
    %123 = vector.shape_cast %120 : vector<27x162xf32> to vector<1x27x162xf32>
    tpu.vector_store %arg4[%c2_77, %c0_78, %c0_79], %123 {strides = array<i32>} : memref<8x27x162xf32, #tpu.memory_space<vmem>>, vector<1x27x162xf32>,
    %c3_80 = arith.constant 3 : index
    %c0_81 = arith.constant 0 : index
    %c0_82 = arith.constant 0 : index
    %124 = vector.load %arg1[%c3_80, %c0_81, %c0_82] : memref<8x32x32xbf16, #tpu.memory_space<vmem>>, vector<1x32x32xbf16>
    %125 = vector.shape_cast %124 : vector<1x32x32xbf16> to vector<32x32xbf16>
    %cst_83 = arith.constant 0.000000e+00 : f32
    %126 = vector.broadcast %cst_83 : f32 to vector<28x168xf32>
    %127 = vector.extract_strided_slice %125 {offsets = [0, 0], sizes = [28, 32], strides = [1, 1]} : vector<32x32xbf16> to vector<28x32xbf16>
    %c0_84 = arith.constant 0 : index
    %c0_85 = arith.constant 0 : index
    %c0_86 = arith.constant 0 : index
    %128 = vector.load %arg2[%c0_84, %c0_85, %c0_86] : memref<5x32x168xbf16, #tpu.memory_space<vmem>>, vector<1x32x168xbf16>
    %129 = vector.shape_cast %128 : vector<1x32x168xbf16> to vector<32x168xbf16>
    %cst_87 = arith.constant dense<0.000000e+00> : vector<28x168xf32>
    %130 = tpu.matmul %127, %129, %cst_87 {dimension_numbers = #tpu.dot_dimension_numbers<[1], [0], [0], [1], [0, 0, 1, 1], [], []>} : vector<28x32xbf16>, vector<32x168xbf16>, vector<28x168xf32> -> vector<28x168xf32>
    %131 = arith.addf %126, %130 : vector<28x168xf32>
    %132 = vector.extract_strided_slice %125 {offsets = [1, 0], sizes = [28, 32], strides = [1, 1]} : vector<32x32xbf16> to vector<28x32xbf16>
    %c1_88 = arith.constant 1 : index
    %c0_89 = arith.constant 0 : index
    %c0_90 = arith.constant 0 : index
    %133 = vector.load %arg2[%c1_88, %c0_89, %c0_90] : memref<5x32x168xbf16, #tpu.memory_space<vmem>>, vector<1x32x168xbf16>
    %134 = vector.shape_cast %133 : vector<1x32x168xbf16> to vector<32x168xbf16>
    %cst_91 = arith.constant dense<0.000000e+00> : vector<28x168xf32>
    %135 = tpu.matmul %132, %134, %cst_91 {dimension_numbers = #tpu.dot_dimension_numbers<[1], [0], [0], [1], [0, 0, 1, 1], [], []>} : vector<28x32xbf16>, vector<32x168xbf16>, vector<28x168xf32> -> vector<28x168xf32>
    %136 = arith.addf %131, %135 : vector<28x168xf32>
    %137 = vector.extract_strided_slice %125 {offsets = [2, 0], sizes = [28, 32], strides = [1, 1]} : vector<32x32xbf16> to vector<28x32xbf16>
    %c2_92 = arith.constant 2 : index
    %c0_93 = arith.constant 0 : index
    %c0_94 = arith.constant 0 : index
    %138 = vector.load %arg2[%c2_92, %c0_93, %c0_94] : memref<5x32x168xbf16, #tpu.memory_space<vmem>>, vector<1x32x168xbf16>
    %139 = vector.shape_cast %138 : vector<1x32x168xbf16> to vector<32x168xbf16>
    %cst_95 = arith.constant dense<0.000000e+00> : vector<28x168xf32>
    %140 = tpu.matmul %137, %139, %cst_95 {dimension_numbers = #tpu.dot_dimension_numbers<[1], [0], [0], [1], [0, 0, 1, 1], [], []>} : vector<28x32xbf16>, vector<32x168xbf16>, vector<28x168xf32> -> vector<28x168xf32>
    %141 = arith.addf %136, %140 : vector<28x168xf32>
    %142 = vector.extract_strided_slice %125 {offsets = [3, 0], sizes = [28, 32], strides = [1, 1]} : vector<32x32xbf16> to vector<28x32xbf16>
    %c3_96 = arith.constant 3 : index
    %c0_97 = arith.constant 0 : index
    %c0_98 = arith.constant 0 : index
    %143 = vector.load %arg2[%c3_96, %c0_97, %c0_98] : memref<5x32x168xbf16, #tpu.memory_space<vmem>>, vector<1x32x168xbf16>
    %144 = vector.shape_cast %143 : vector<1x32x168xbf16> to vector<32x168xbf16>
    %cst_99 = arith.constant dense<0.000000e+00> : vector<28x168xf32>
    %145 = tpu.matmul %142, %144, %cst_99 {dimension_numbers = #tpu.dot_dimension_numbers<[1], [0], [0], [1], [0, 0, 1, 1], [], []>} : vector<28x32xbf16>, vector<32x168xbf16>, vector<28x168xf32> -> vector<28x168xf32>
    %146 = arith.addf %141, %145 : vector<28x168xf32>
    %147 = vector.extract_strided_slice %125 {offsets = [4, 0], sizes = [28, 32], strides = [1, 1]} : vector<32x32xbf16> to vector<28x32xbf16>
    %c4_100 = arith.constant 4 : index
    %c0_101 = arith.constant 0 : index
    %c0_102 = arith.constant 0 : index
    %148 = vector.load %arg2[%c4_100, %c0_101, %c0_102] : memref<5x32x168xbf16, #tpu.memory_space<vmem>>, vector<1x32x168xbf16>
    %149 = vector.shape_cast %148 : vector<1x32x168xbf16> to vector<32x168xbf16>
    %cst_103 = arith.constant dense<0.000000e+00> : vector<28x168xf32>
    %150 = tpu.matmul %147, %149, %cst_103 {dimension_numbers = #tpu.dot_dimension_numbers<[1], [0], [0], [1], [0, 0, 1, 1], [], []>} : vector<28x32xbf16>, vector<32x168xbf16>, vector<28x168xf32> -> vector<28x168xf32>
    %151 = arith.addf %146, %150 : vector<28x168xf32>
    %152 = vector.broadcast %0 : vector<1x168xf32> to vector<28x168xf32>
    %153 = arith.addf %151, %152 : vector<28x168xf32>
    %cst_104 = arith.constant 0.000000e+00 : f32
    %154 = vector.broadcast %cst_104 : f32 to vector<28x168xf32>
    %155 = arith.maximumf %153, %154 : vector<28x168xf32>
    %156 = vector.extract_strided_slice %155 {offsets = [0, 0], sizes = [27, 168], strides = [1, 1]} : vector<28x168xf32> to vector<27x168xf32>
    %157 = vector.extract_strided_slice %155 {offsets = [1, 0], sizes = [27, 168], strides = [1, 1]} : vector<28x168xf32> to vector<27x168xf32>
    %158 = arith.maximumf %156, %157 : vector<27x168xf32>
    %159 = vector.extract_strided_slice %158 {offsets = [0, 0], sizes = [27, 162], strides = [1, 1]} : vector<27x168xf32> to vector<27x162xf32>
    %160 = vector.extract_strided_slice %158 {offsets = [0, 6], sizes = [27, 162], strides = [1, 1]} : vector<27x168xf32> to vector<27x162xf32>
    %161 = arith.maximumf %159, %160 : vector<27x162xf32>
    %c3_105 = arith.constant 3 : index
    %c0_106 = arith.constant 0 : index
    %c0_107 = arith.constant 0 : index
    %162 = vector.load %arg4[%c3_105, %c0_106, %c0_107] : memref<8x27x162xf32, #tpu.memory_space<vmem>>, vector<1x27x162xf32>
    %163 = vector.shape_cast %162 : vector<1x27x162xf32> to vector<27x162xf32>
    %164 = vector.shape_cast %161 : vector<27x162xf32> to vector<1x27x162xf32>
    tpu.vector_store %arg4[%c3_105, %c0_106, %c0_107], %164 {strides = array<i32>} : memref<8x27x162xf32, #tpu.memory_space<vmem>>, vector<1x27x162xf32>,
    %c4_108 = arith.constant 4 : index
    %c0_109 = arith.constant 0 : index
    %c0_110 = arith.constant 0 : index
    %165 = vector.load %arg1[%c4_108, %c0_109, %c0_110] : memref<8x32x32xbf16, #tpu.memory_space<vmem>>, vector<1x32x32xbf16>
    %166 = vector.shape_cast %165 : vector<1x32x32xbf16> to vector<32x32xbf16>
    %cst_111 = arith.constant 0.000000e+00 : f32
    %167 = vector.broadcast %cst_111 : f32 to vector<28x168xf32>
    %168 = vector.extract_strided_slice %166 {offsets = [0, 0], sizes = [28, 32], strides = [1, 1]} : vector<32x32xbf16> to vector<28x32xbf16>
    %c0_112 = arith.constant 0 : index
    %c0_113 = arith.constant 0 : index
    %c0_114 = arith.constant 0 : index
    %169 = vector.load %arg2[%c0_112, %c0_113, %c0_114] : memref<5x32x168xbf16, #tpu.memory_space<vmem>>, vector<1x32x168xbf16>
    %170 = vector.shape_cast %169 : vector<1x32x168xbf16> to vector<32x168xbf16>
    %cst_115 = arith.constant dense<0.000000e+00> : vector<28x168xf32>
    %171 = tpu.matmul %168, %170, %cst_115 {dimension_numbers = #tpu.dot_dimension_numbers<[1], [0], [0], [1], [0, 0, 1, 1], [], []>} : vector<28x32xbf16>, vector<32x168xbf16>, vector<28x168xf32> -> vector<28x168xf32>
    %172 = arith.addf %167, %171 : vector<28x168xf32>
    %173 = vector.extract_strided_slice %166 {offsets = [1, 0], sizes = [28, 32], strides = [1, 1]} : vector<32x32xbf16> to vector<28x32xbf16>
    %c1_116 = arith.constant 1 : index
    %c0_117 = arith.constant 0 : index
    %c0_118 = arith.constant 0 : index
    %174 = vector.load %arg2[%c1_116, %c0_117, %c0_118] : memref<5x32x168xbf16, #tpu.memory_space<vmem>>, vector<1x32x168xbf16>
    %175 = vector.shape_cast %174 : vector<1x32x168xbf16> to vector<32x168xbf16>
    %cst_119 = arith.constant dense<0.000000e+00> : vector<28x168xf32>
    %176 = tpu.matmul %173, %175, %cst_119 {dimension_numbers = #tpu.dot_dimension_numbers<[1], [0], [0], [1], [0, 0, 1, 1], [], []>} : vector<28x32xbf16>, vector<32x168xbf16>, vector<28x168xf32> -> vector<28x168xf32>
    %177 = arith.addf %172, %176 : vector<28x168xf32>
    %178 = vector.extract_strided_slice %166 {offsets = [2, 0], sizes = [28, 32], strides = [1, 1]} : vector<32x32xbf16> to vector<28x32xbf16>
    %c2_120 = arith.constant 2 : index
    %c0_121 = arith.constant 0 : index
    %c0_122 = arith.constant 0 : index
    %179 = vector.load %arg2[%c2_120, %c0_121, %c0_122] : memref<5x32x168xbf16, #tpu.memory_space<vmem>>, vector<1x32x168xbf16>
    %180 = vector.shape_cast %179 : vector<1x32x168xbf16> to vector<32x168xbf16>
    %cst_123 = arith.constant dense<0.000000e+00> : vector<28x168xf32>
    %181 = tpu.matmul %178, %180, %cst_123 {dimension_numbers = #tpu.dot_dimension_numbers<[1], [0], [0], [1], [0, 0, 1, 1], [], []>} : vector<28x32xbf16>, vector<32x168xbf16>, vector<28x168xf32> -> vector<28x168xf32>
    %182 = arith.addf %177, %181 : vector<28x168xf32>
    %183 = vector.extract_strided_slice %166 {offsets = [3, 0], sizes = [28, 32], strides = [1, 1]} : vector<32x32xbf16> to vector<28x32xbf16>
    %c3_124 = arith.constant 3 : index
    %c0_125 = arith.constant 0 : index
    %c0_126 = arith.constant 0 : index
    %184 = vector.load %arg2[%c3_124, %c0_125, %c0_126] : memref<5x32x168xbf16, #tpu.memory_space<vmem>>, vector<1x32x168xbf16>
    %185 = vector.shape_cast %184 : vector<1x32x168xbf16> to vector<32x168xbf16>
    %cst_127 = arith.constant dense<0.000000e+00> : vector<28x168xf32>
    %186 = tpu.matmul %183, %185, %cst_127 {dimension_numbers = #tpu.dot_dimension_numbers<[1], [0], [0], [1], [0, 0, 1, 1], [], []>} : vector<28x32xbf16>, vector<32x168xbf16>, vector<28x168xf32> -> vector<28x168xf32>
    %187 = arith.addf %182, %186 : vector<28x168xf32>
    %188 = vector.extract_strided_slice %166 {offsets = [4, 0], sizes = [28, 32], strides = [1, 1]} : vector<32x32xbf16> to vector<28x32xbf16>
    %c4_128 = arith.constant 4 : index
    %c0_129 = arith.constant 0 : index
    %c0_130 = arith.constant 0 : index
    %189 = vector.load %arg2[%c4_128, %c0_129, %c0_130] : memref<5x32x168xbf16, #tpu.memory_space<vmem>>, vector<1x32x168xbf16>
    %190 = vector.shape_cast %189 : vector<1x32x168xbf16> to vector<32x168xbf16>
    %cst_131 = arith.constant dense<0.000000e+00> : vector<28x168xf32>
    %191 = tpu.matmul %188, %190, %cst_131 {dimension_numbers = #tpu.dot_dimension_numbers<[1], [0], [0], [1], [0, 0, 1, 1], [], []>} : vector<28x32xbf16>, vector<32x168xbf16>, vector<28x168xf32> -> vector<28x168xf32>
    %192 = arith.addf %187, %191 : vector<28x168xf32>
    %193 = vector.broadcast %0 : vector<1x168xf32> to vector<28x168xf32>
    %194 = arith.addf %192, %193 : vector<28x168xf32>
    %cst_132 = arith.constant 0.000000e+00 : f32
    %195 = vector.broadcast %cst_132 : f32 to vector<28x168xf32>
    %196 = arith.maximumf %194, %195 : vector<28x168xf32>
    %197 = vector.extract_strided_slice %196 {offsets = [0, 0], sizes = [27, 168], strides = [1, 1]} : vector<28x168xf32> to vector<27x168xf32>
    %198 = vector.extract_strided_slice %196 {offsets = [1, 0], sizes = [27, 168], strides = [1, 1]} : vector<28x168xf32> to vector<27x168xf32>
    %199 = arith.maximumf %197, %198 : vector<27x168xf32>
    %200 = vector.extract_strided_slice %199 {offsets = [0, 0], sizes = [27, 162], strides = [1, 1]} : vector<27x168xf32> to vector<27x162xf32>
    %201 = vector.extract_strided_slice %199 {offsets = [0, 6], sizes = [27, 162], strides = [1, 1]} : vector<27x168xf32> to vector<27x162xf32>
    %202 = arith.maximumf %200, %201 : vector<27x162xf32>
    %c4_133 = arith.constant 4 : index
    %c0_134 = arith.constant 0 : index
    %c0_135 = arith.constant 0 : index
    %203 = vector.load %arg4[%c4_133, %c0_134, %c0_135] : memref<8x27x162xf32, #tpu.memory_space<vmem>>, vector<1x27x162xf32>
    %204 = vector.shape_cast %203 : vector<1x27x162xf32> to vector<27x162xf32>
    %205 = vector.shape_cast %202 : vector<27x162xf32> to vector<1x27x162xf32>
    tpu.vector_store %arg4[%c4_133, %c0_134, %c0_135], %205 {strides = array<i32>} : memref<8x27x162xf32, #tpu.memory_space<vmem>>, vector<1x27x162xf32>,
    %c5 = arith.constant 5 : index
    %c0_136 = arith.constant 0 : index
    %c0_137 = arith.constant 0 : index
    %206 = vector.load %arg1[%c5, %c0_136, %c0_137] : memref<8x32x32xbf16, #tpu.memory_space<vmem>>, vector<1x32x32xbf16>
    %207 = vector.shape_cast %206 : vector<1x32x32xbf16> to vector<32x32xbf16>
    %cst_138 = arith.constant 0.000000e+00 : f32
    %208 = vector.broadcast %cst_138 : f32 to vector<28x168xf32>
    %209 = vector.extract_strided_slice %207 {offsets = [0, 0], sizes = [28, 32], strides = [1, 1]} : vector<32x32xbf16> to vector<28x32xbf16>
    %c0_139 = arith.constant 0 : index
    %c0_140 = arith.constant 0 : index
    %c0_141 = arith.constant 0 : index
    %210 = vector.load %arg2[%c0_139, %c0_140, %c0_141] : memref<5x32x168xbf16, #tpu.memory_space<vmem>>, vector<1x32x168xbf16>
    %211 = vector.shape_cast %210 : vector<1x32x168xbf16> to vector<32x168xbf16>
    %cst_142 = arith.constant dense<0.000000e+00> : vector<28x168xf32>
    %212 = tpu.matmul %209, %211, %cst_142 {dimension_numbers = #tpu.dot_dimension_numbers<[1], [0], [0], [1], [0, 0, 1, 1], [], []>} : vector<28x32xbf16>, vector<32x168xbf16>, vector<28x168xf32> -> vector<28x168xf32>
    %213 = arith.addf %208, %212 : vector<28x168xf32>
    %214 = vector.extract_strided_slice %207 {offsets = [1, 0], sizes = [28, 32], strides = [1, 1]} : vector<32x32xbf16> to vector<28x32xbf16>
    %c1_143 = arith.constant 1 : index
    %c0_144 = arith.constant 0 : index
    %c0_145 = arith.constant 0 : index
    %215 = vector.load %arg2[%c1_143, %c0_144, %c0_145] : memref<5x32x168xbf16, #tpu.memory_space<vmem>>, vector<1x32x168xbf16>
    %216 = vector.shape_cast %215 : vector<1x32x168xbf16> to vector<32x168xbf16>
    %cst_146 = arith.constant dense<0.000000e+00> : vector<28x168xf32>
    %217 = tpu.matmul %214, %216, %cst_146 {dimension_numbers = #tpu.dot_dimension_numbers<[1], [0], [0], [1], [0, 0, 1, 1], [], []>} : vector<28x32xbf16>, vector<32x168xbf16>, vector<28x168xf32> -> vector<28x168xf32>
    %218 = arith.addf %213, %217 : vector<28x168xf32>
    %219 = vector.extract_strided_slice %207 {offsets = [2, 0], sizes = [28, 32], strides = [1, 1]} : vector<32x32xbf16> to vector<28x32xbf16>
    %c2_147 = arith.constant 2 : index
    %c0_148 = arith.constant 0 : index
    %c0_149 = arith.constant 0 : index
    %220 = vector.load %arg2[%c2_147, %c0_148, %c0_149] : memref<5x32x168xbf16, #tpu.memory_space<vmem>>, vector<1x32x168xbf16>
    %221 = vector.shape_cast %220 : vector<1x32x168xbf16> to vector<32x168xbf16>
    %cst_150 = arith.constant dense<0.000000e+00> : vector<28x168xf32>
    %222 = tpu.matmul %219, %221, %cst_150 {dimension_numbers = #tpu.dot_dimension_numbers<[1], [0], [0], [1], [0, 0, 1, 1], [], []>} : vector<28x32xbf16>, vector<32x168xbf16>, vector<28x168xf32> -> vector<28x168xf32>
    %223 = arith.addf %218, %222 : vector<28x168xf32>
    %224 = vector.extract_strided_slice %207 {offsets = [3, 0], sizes = [28, 32], strides = [1, 1]} : vector<32x32xbf16> to vector<28x32xbf16>
    %c3_151 = arith.constant 3 : index
    %c0_152 = arith.constant 0 : index
    %c0_153 = arith.constant 0 : index
    %225 = vector.load %arg2[%c3_151, %c0_152, %c0_153] : memref<5x32x168xbf16, #tpu.memory_space<vmem>>, vector<1x32x168xbf16>
    %226 = vector.shape_cast %225 : vector<1x32x168xbf16> to vector<32x168xbf16>
    %cst_154 = arith.constant dense<0.000000e+00> : vector<28x168xf32>
    %227 = tpu.matmul %224, %226, %cst_154 {dimension_numbers = #tpu.dot_dimension_numbers<[1], [0], [0], [1], [0, 0, 1, 1], [], []>} : vector<28x32xbf16>, vector<32x168xbf16>, vector<28x168xf32> -> vector<28x168xf32>
    %228 = arith.addf %223, %227 : vector<28x168xf32>
    %229 = vector.extract_strided_slice %207 {offsets = [4, 0], sizes = [28, 32], strides = [1, 1]} : vector<32x32xbf16> to vector<28x32xbf16>
    %c4_155 = arith.constant 4 : index
    %c0_156 = arith.constant 0 : index
    %c0_157 = arith.constant 0 : index
    %230 = vector.load %arg2[%c4_155, %c0_156, %c0_157] : memref<5x32x168xbf16, #tpu.memory_space<vmem>>, vector<1x32x168xbf16>
    %231 = vector.shape_cast %230 : vector<1x32x168xbf16> to vector<32x168xbf16>
    %cst_158 = arith.constant dense<0.000000e+00> : vector<28x168xf32>
    %232 = tpu.matmul %229, %231, %cst_158 {dimension_numbers = #tpu.dot_dimension_numbers<[1], [0], [0], [1], [0, 0, 1, 1], [], []>} : vector<28x32xbf16>, vector<32x168xbf16>, vector<28x168xf32> -> vector<28x168xf32>
    %233 = arith.addf %228, %232 : vector<28x168xf32>
    %234 = vector.broadcast %0 : vector<1x168xf32> to vector<28x168xf32>
    %235 = arith.addf %233, %234 : vector<28x168xf32>
    %cst_159 = arith.constant 0.000000e+00 : f32
    %236 = vector.broadcast %cst_159 : f32 to vector<28x168xf32>
    %237 = arith.maximumf %235, %236 : vector<28x168xf32>
    %238 = vector.extract_strided_slice %237 {offsets = [0, 0], sizes = [27, 168], strides = [1, 1]} : vector<28x168xf32> to vector<27x168xf32>
    %239 = vector.extract_strided_slice %237 {offsets = [1, 0], sizes = [27, 168], strides = [1, 1]} : vector<28x168xf32> to vector<27x168xf32>
    %240 = arith.maximumf %238, %239 : vector<27x168xf32>
    %241 = vector.extract_strided_slice %240 {offsets = [0, 0], sizes = [27, 162], strides = [1, 1]} : vector<27x168xf32> to vector<27x162xf32>
    %242 = vector.extract_strided_slice %240 {offsets = [0, 6], sizes = [27, 162], strides = [1, 1]} : vector<27x168xf32> to vector<27x162xf32>
    %243 = arith.maximumf %241, %242 : vector<27x162xf32>
    %c5_160 = arith.constant 5 : index
    %c0_161 = arith.constant 0 : index
    %c0_162 = arith.constant 0 : index
    %244 = vector.load %arg4[%c5_160, %c0_161, %c0_162] : memref<8x27x162xf32, #tpu.memory_space<vmem>>, vector<1x27x162xf32>
    %245 = vector.shape_cast %244 : vector<1x27x162xf32> to vector<27x162xf32>
    %246 = vector.shape_cast %243 : vector<27x162xf32> to vector<1x27x162xf32>
    tpu.vector_store %arg4[%c5_160, %c0_161, %c0_162], %246 {strides = array<i32>} : memref<8x27x162xf32, #tpu.memory_space<vmem>>, vector<1x27x162xf32>,
    %c6 = arith.constant 6 : index
    %c0_163 = arith.constant 0 : index
    %c0_164 = arith.constant 0 : index
    %247 = vector.load %arg1[%c6, %c0_163, %c0_164] : memref<8x32x32xbf16, #tpu.memory_space<vmem>>, vector<1x32x32xbf16>
    %248 = vector.shape_cast %247 : vector<1x32x32xbf16> to vector<32x32xbf16>
    %cst_165 = arith.constant 0.000000e+00 : f32
    %249 = vector.broadcast %cst_165 : f32 to vector<28x168xf32>
    %250 = vector.extract_strided_slice %248 {offsets = [0, 0], sizes = [28, 32], strides = [1, 1]} : vector<32x32xbf16> to vector<28x32xbf16>
    %c0_166 = arith.constant 0 : index
    %c0_167 = arith.constant 0 : index
    %c0_168 = arith.constant 0 : index
    %251 = vector.load %arg2[%c0_166, %c0_167, %c0_168] : memref<5x32x168xbf16, #tpu.memory_space<vmem>>, vector<1x32x168xbf16>
    %252 = vector.shape_cast %251 : vector<1x32x168xbf16> to vector<32x168xbf16>
    %cst_169 = arith.constant dense<0.000000e+00> : vector<28x168xf32>
    %253 = tpu.matmul %250, %252, %cst_169 {dimension_numbers = #tpu.dot_dimension_numbers<[1], [0], [0], [1], [0, 0, 1, 1], [], []>} : vector<28x32xbf16>, vector<32x168xbf16>, vector<28x168xf32> -> vector<28x168xf32>
    %254 = arith.addf %249, %253 : vector<28x168xf32>
    %255 = vector.extract_strided_slice %248 {offsets = [1, 0], sizes = [28, 32], strides = [1, 1]} : vector<32x32xbf16> to vector<28x32xbf16>
    %c1_170 = arith.constant 1 : index
    %c0_171 = arith.constant 0 : index
    %c0_172 = arith.constant 0 : index
    %256 = vector.load %arg2[%c1_170, %c0_171, %c0_172] : memref<5x32x168xbf16, #tpu.memory_space<vmem>>, vector<1x32x168xbf16>
    %257 = vector.shape_cast %256 : vector<1x32x168xbf16> to vector<32x168xbf16>
    %cst_173 = arith.constant dense<0.000000e+00> : vector<28x168xf32>
    %258 = tpu.matmul %255, %257, %cst_173 {dimension_numbers = #tpu.dot_dimension_numbers<[1], [0], [0], [1], [0, 0, 1, 1], [], []>} : vector<28x32xbf16>, vector<32x168xbf16>, vector<28x168xf32> -> vector<28x168xf32>
    %259 = arith.addf %254, %258 : vector<28x168xf32>
    %260 = vector.extract_strided_slice %248 {offsets = [2, 0], sizes = [28, 32], strides = [1, 1]} : vector<32x32xbf16> to vector<28x32xbf16>
    %c2_174 = arith.constant 2 : index
    %c0_175 = arith.constant 0 : index
    %c0_176 = arith.constant 0 : index
    %261 = vector.load %arg2[%c2_174, %c0_175, %c0_176] : memref<5x32x168xbf16, #tpu.memory_space<vmem>>, vector<1x32x168xbf16>
    %262 = vector.shape_cast %261 : vector<1x32x168xbf16> to vector<32x168xbf16>
    %cst_177 = arith.constant dense<0.000000e+00> : vector<28x168xf32>
    %263 = tpu.matmul %260, %262, %cst_177 {dimension_numbers = #tpu.dot_dimension_numbers<[1], [0], [0], [1], [0, 0, 1, 1], [], []>} : vector<28x32xbf16>, vector<32x168xbf16>, vector<28x168xf32> -> vector<28x168xf32>
    %264 = arith.addf %259, %263 : vector<28x168xf32>
    %265 = vector.extract_strided_slice %248 {offsets = [3, 0], sizes = [28, 32], strides = [1, 1]} : vector<32x32xbf16> to vector<28x32xbf16>
    %c3_178 = arith.constant 3 : index
    %c0_179 = arith.constant 0 : index
    %c0_180 = arith.constant 0 : index
    %266 = vector.load %arg2[%c3_178, %c0_179, %c0_180] : memref<5x32x168xbf16, #tpu.memory_space<vmem>>, vector<1x32x168xbf16>
    %267 = vector.shape_cast %266 : vector<1x32x168xbf16> to vector<32x168xbf16>
    %cst_181 = arith.constant dense<0.000000e+00> : vector<28x168xf32>
    %268 = tpu.matmul %265, %267, %cst_181 {dimension_numbers = #tpu.dot_dimension_numbers<[1], [0], [0], [1], [0, 0, 1, 1], [], []>} : vector<28x32xbf16>, vector<32x168xbf16>, vector<28x168xf32> -> vector<28x168xf32>
    %269 = arith.addf %264, %268 : vector<28x168xf32>
    %270 = vector.extract_strided_slice %248 {offsets = [4, 0], sizes = [28, 32], strides = [1, 1]} : vector<32x32xbf16> to vector<28x32xbf16>
    %c4_182 = arith.constant 4 : index
    %c0_183 = arith.constant 0 : index
    %c0_184 = arith.constant 0 : index
    %271 = vector.load %arg2[%c4_182, %c0_183, %c0_184] : memref<5x32x168xbf16, #tpu.memory_space<vmem>>, vector<1x32x168xbf16>
    %272 = vector.shape_cast %271 : vector<1x32x168xbf16> to vector<32x168xbf16>
    %cst_185 = arith.constant dense<0.000000e+00> : vector<28x168xf32>
    %273 = tpu.matmul %270, %272, %cst_185 {dimension_numbers = #tpu.dot_dimension_numbers<[1], [0], [0], [1], [0, 0, 1, 1], [], []>} : vector<28x32xbf16>, vector<32x168xbf16>, vector<28x168xf32> -> vector<28x168xf32>
    %274 = arith.addf %269, %273 : vector<28x168xf32>
    %275 = vector.broadcast %0 : vector<1x168xf32> to vector<28x168xf32>
    %276 = arith.addf %274, %275 : vector<28x168xf32>
    %cst_186 = arith.constant 0.000000e+00 : f32
    %277 = vector.broadcast %cst_186 : f32 to vector<28x168xf32>
    %278 = arith.maximumf %276, %277 : vector<28x168xf32>
    %279 = vector.extract_strided_slice %278 {offsets = [0, 0], sizes = [27, 168], strides = [1, 1]} : vector<28x168xf32> to vector<27x168xf32>
    %280 = vector.extract_strided_slice %278 {offsets = [1, 0], sizes = [27, 168], strides = [1, 1]} : vector<28x168xf32> to vector<27x168xf32>
    %281 = arith.maximumf %279, %280 : vector<27x168xf32>
    %282 = vector.extract_strided_slice %281 {offsets = [0, 0], sizes = [27, 162], strides = [1, 1]} : vector<27x168xf32> to vector<27x162xf32>
    %283 = vector.extract_strided_slice %281 {offsets = [0, 6], sizes = [27, 162], strides = [1, 1]} : vector<27x168xf32> to vector<27x162xf32>
    %284 = arith.maximumf %282, %283 : vector<27x162xf32>
    %c6_187 = arith.constant 6 : index
    %c0_188 = arith.constant 0 : index
    %c0_189 = arith.constant 0 : index
    %285 = vector.load %arg4[%c6_187, %c0_188, %c0_189] : memref<8x27x162xf32, #tpu.memory_space<vmem>>, vector<1x27x162xf32>
    %286 = vector.shape_cast %285 : vector<1x27x162xf32> to vector<27x162xf32>
    %287 = vector.shape_cast %284 : vector<27x162xf32> to vector<1x27x162xf32>
    tpu.vector_store %arg4[%c6_187, %c0_188, %c0_189], %287 {strides = array<i32>} : memref<8x27x162xf32, #tpu.memory_space<vmem>>, vector<1x27x162xf32>,
    %c7 = arith.constant 7 : index
    %c0_190 = arith.constant 0 : index
    %c0_191 = arith.constant 0 : index
    %288 = vector.load %arg1[%c7, %c0_190, %c0_191] : memref<8x32x32xbf16, #tpu.memory_space<vmem>>, vector<1x32x32xbf16>
    %289 = vector.shape_cast %288 : vector<1x32x32xbf16> to vector<32x32xbf16>
    %cst_192 = arith.constant 0.000000e+00 : f32
    %290 = vector.broadcast %cst_192 : f32 to vector<28x168xf32>
    %291 = vector.extract_strided_slice %289 {offsets = [0, 0], sizes = [28, 32], strides = [1, 1]} : vector<32x32xbf16> to vector<28x32xbf16>
    %c0_193 = arith.constant 0 : index
    %c0_194 = arith.constant 0 : index
    %c0_195 = arith.constant 0 : index
    %292 = vector.load %arg2[%c0_193, %c0_194, %c0_195] : memref<5x32x168xbf16, #tpu.memory_space<vmem>>, vector<1x32x168xbf16>
    %293 = vector.shape_cast %292 : vector<1x32x168xbf16> to vector<32x168xbf16>
    %cst_196 = arith.constant dense<0.000000e+00> : vector<28x168xf32>
    %294 = tpu.matmul %291, %293, %cst_196 {dimension_numbers = #tpu.dot_dimension_numbers<[1], [0], [0], [1], [0, 0, 1, 1], [], []>} : vector<28x32xbf16>, vector<32x168xbf16>, vector<28x168xf32> -> vector<28x168xf32>
    %295 = arith.addf %290, %294 : vector<28x168xf32>
    %296 = vector.extract_strided_slice %289 {offsets = [1, 0], sizes = [28, 32], strides = [1, 1]} : vector<32x32xbf16> to vector<28x32xbf16>
    %c1_197 = arith.constant 1 : index
    %c0_198 = arith.constant 0 : index
    %c0_199 = arith.constant 0 : index
    %297 = vector.load %arg2[%c1_197, %c0_198, %c0_199] : memref<5x32x168xbf16, #tpu.memory_space<vmem>>, vector<1x32x168xbf16>
    %298 = vector.shape_cast %297 : vector<1x32x168xbf16> to vector<32x168xbf16>
    %cst_200 = arith.constant dense<0.000000e+00> : vector<28x168xf32>
    %299 = tpu.matmul %296, %298, %cst_200 {dimension_numbers = #tpu.dot_dimension_numbers<[1], [0], [0], [1], [0, 0, 1, 1], [], []>} : vector<28x32xbf16>, vector<32x168xbf16>, vector<28x168xf32> -> vector<28x168xf32>
    %300 = arith.addf %295, %299 : vector<28x168xf32>
    %301 = vector.extract_strided_slice %289 {offsets = [2, 0], sizes = [28, 32], strides = [1, 1]} : vector<32x32xbf16> to vector<28x32xbf16>
    %c2_201 = arith.constant 2 : index
    %c0_202 = arith.constant 0 : index
    %c0_203 = arith.constant 0 : index
    %302 = vector.load %arg2[%c2_201, %c0_202, %c0_203] : memref<5x32x168xbf16, #tpu.memory_space<vmem>>, vector<1x32x168xbf16>
    %303 = vector.shape_cast %302 : vector<1x32x168xbf16> to vector<32x168xbf16>
    %cst_204 = arith.constant dense<0.000000e+00> : vector<28x168xf32>
    %304 = tpu.matmul %301, %303, %cst_204 {dimension_numbers = #tpu.dot_dimension_numbers<[1], [0], [0], [1], [0, 0, 1, 1], [], []>} : vector<28x32xbf16>, vector<32x168xbf16>, vector<28x168xf32> -> vector<28x168xf32>
    %305 = arith.addf %300, %304 : vector<28x168xf32>
    %306 = vector.extract_strided_slice %289 {offsets = [3, 0], sizes = [28, 32], strides = [1, 1]} : vector<32x32xbf16> to vector<28x32xbf16>
    %c3_205 = arith.constant 3 : index
    %c0_206 = arith.constant 0 : index
    %c0_207 = arith.constant 0 : index
    %307 = vector.load %arg2[%c3_205, %c0_206, %c0_207] : memref<5x32x168xbf16, #tpu.memory_space<vmem>>, vector<1x32x168xbf16>
    %308 = vector.shape_cast %307 : vector<1x32x168xbf16> to vector<32x168xbf16>
    %cst_208 = arith.constant dense<0.000000e+00> : vector<28x168xf32>
    %309 = tpu.matmul %306, %308, %cst_208 {dimension_numbers = #tpu.dot_dimension_numbers<[1], [0], [0], [1], [0, 0, 1, 1], [], []>} : vector<28x32xbf16>, vector<32x168xbf16>, vector<28x168xf32> -> vector<28x168xf32>
    %310 = arith.addf %305, %309 : vector<28x168xf32>
    %311 = vector.extract_strided_slice %289 {offsets = [4, 0], sizes = [28, 32], strides = [1, 1]} : vector<32x32xbf16> to vector<28x32xbf16>
    %c4_209 = arith.constant 4 : index
    %c0_210 = arith.constant 0 : index
    %c0_211 = arith.constant 0 : index
    %312 = vector.load %arg2[%c4_209, %c0_210, %c0_211] : memref<5x32x168xbf16, #tpu.memory_space<vmem>>, vector<1x32x168xbf16>
    %313 = vector.shape_cast %312 : vector<1x32x168xbf16> to vector<32x168xbf16>
    %cst_212 = arith.constant dense<0.000000e+00> : vector<28x168xf32>
    %314 = tpu.matmul %311, %313, %cst_212 {dimension_numbers = #tpu.dot_dimension_numbers<[1], [0], [0], [1], [0, 0, 1, 1], [], []>} : vector<28x32xbf16>, vector<32x168xbf16>, vector<28x168xf32> -> vector<28x168xf32>
    %315 = arith.addf %310, %314 : vector<28x168xf32>
    %316 = vector.broadcast %0 : vector<1x168xf32> to vector<28x168xf32>
    %317 = arith.addf %315, %316 : vector<28x168xf32>
    %cst_213 = arith.constant 0.000000e+00 : f32
    %318 = vector.broadcast %cst_213 : f32 to vector<28x168xf32>
    %319 = arith.maximumf %317, %318 : vector<28x168xf32>
    %320 = vector.extract_strided_slice %319 {offsets = [0, 0], sizes = [27, 168], strides = [1, 1]} : vector<28x168xf32> to vector<27x168xf32>
    %321 = vector.extract_strided_slice %319 {offsets = [1, 0], sizes = [27, 168], strides = [1, 1]} : vector<28x168xf32> to vector<27x168xf32>
    %322 = arith.maximumf %320, %321 : vector<27x168xf32>
    %323 = vector.extract_strided_slice %322 {offsets = [0, 0], sizes = [27, 162], strides = [1, 1]} : vector<27x168xf32> to vector<27x162xf32>
    %324 = vector.extract_strided_slice %322 {offsets = [0, 6], sizes = [27, 162], strides = [1, 1]} : vector<27x168xf32> to vector<27x162xf32>
    %325 = arith.maximumf %323, %324 : vector<27x162xf32>
    %c7_214 = arith.constant 7 : index
    %c0_215 = arith.constant 0 : index
    %c0_216 = arith.constant 0 : index
    %326 = vector.load %arg4[%c7_214, %c0_215, %c0_216] : memref<8x27x162xf32, #tpu.memory_space<vmem>>, vector<1x27x162xf32>
    %327 = vector.shape_cast %326 : vector<1x27x162xf32> to vector<27x162xf32>
    %328 = vector.shape_cast %325 : vector<27x162xf32> to vector<1x27x162xf32>
    tpu.vector_store %arg4[%c7_214, %c0_215, %c0_216], %328 {strides = array<i32>} : memref<8x27x162xf32, #tpu.memory_space<vmem>>, vector<1x27x162xf32>,
    return
  }
  func.func @transform_0(%arg0: i32) -> (i32, i32, i32) {
    %c0_i32 = arith.constant 0 : i32
    %c0_i32_0 = arith.constant 0 : i32
    %c0_i32_1 = arith.constant 0 : i32
    return %arg0, %c0_i32, %c0_i32_0 : i32, i32, i32
  }
  func.func @transform_1(%arg0: i32) -> (i32, i32, i32) {
    %c0_i32 = arith.constant 0 : i32
    %c0_i32_0 = arith.constant 0 : i32
    %c0_i32_1 = arith.constant 0 : i32
    %c0_i32_2 = arith.constant 0 : i32
    return %c0_i32, %c0_i32_0, %c0_i32_1 : i32, i32, i32
  }
  func.func @transform_2(%arg0: i32) -> (i32, i32) {
    %c0_i32 = arith.constant 0 : i32
    %c0_i32_0 = arith.constant 0 : i32
    %c0_i32_1 = arith.constant 0 : i32
    return %c0_i32, %c0_i32_0 : i32, i32
  }
  func.func @transform_3(%arg0: i32) -> (i32, i32, i32) {
    %c0_i32 = arith.constant 0 : i32
    %c0_i32_0 = arith.constant 0 : i32
    %c0_i32_1 = arith.constant 0 : i32
    return %arg0, %c0_i32, %c0_i32_0 : i32, i32, i32
  }
}

module attributes {stable_mosaic.version = 11 : i64} {
  func.func @_conv_relu_pool_kernel(%arg0: i32, %arg1: memref<8x14x84xbf16, #tpu.memory_space<vmem>>, %arg2: memref<5x84x160xbf16, #tpu.memory_space<vmem>>, %arg3: memref<1x160xf32, #tpu.memory_space<vmem>>, %arg4: memref<8x9x144xf32, #tpu.memory_space<vmem>>) attributes {dimension_semantics = [#tpu.dimension_semantics<parallel>], iteration_bounds = array<i64: 1>, scalar_prefetch = 0 : i64, scratch_operands = 0 : i64, tpu.core_type = #tpu.core_type<tc>, window_params = [{transform_indices = @transform_0, window_bounds = array<i64: 8, 14, 84>}, {pipeline_mode = #tpu.pipeline_mode<synchronous>, transform_indices = @transform_1, window_bounds = array<i64: 5, 84, 160>}, {pipeline_mode = #tpu.pipeline_mode<synchronous>, transform_indices = @transform_2, window_bounds = array<i64: 1, 160>}, {transform_indices = @transform_3, window_bounds = array<i64: 8, 9, 144>}]} {
    %c0 = arith.constant 0 : index
    %c0_0 = arith.constant 0 : index
    %0 = vector.load %arg3[%c0, %c0_0] : memref<1x160xf32, #tpu.memory_space<vmem>>, vector<1x160xf32>
    %c0_1 = arith.constant 0 : index
    %c0_2 = arith.constant 0 : index
    %c0_3 = arith.constant 0 : index
    %1 = vector.load %arg1[%c0_1, %c0_2, %c0_3] : memref<8x14x84xbf16, #tpu.memory_space<vmem>>, vector<1x14x84xbf16>
    %2 = vector.shape_cast %1 : vector<1x14x84xbf16> to vector<14x84xbf16>
    %cst = arith.constant 0.000000e+00 : f32
    %3 = vector.broadcast %cst : f32 to vector<10x160xf32>
    %4 = vector.extract_strided_slice %2 {offsets = [0, 0], sizes = [10, 84], strides = [1, 1]} : vector<14x84xbf16> to vector<10x84xbf16>
    %c0_4 = arith.constant 0 : index
    %c0_5 = arith.constant 0 : index
    %c0_6 = arith.constant 0 : index
    %5 = vector.load %arg2[%c0_4, %c0_5, %c0_6] : memref<5x84x160xbf16, #tpu.memory_space<vmem>>, vector<1x84x160xbf16>
    %6 = vector.shape_cast %5 : vector<1x84x160xbf16> to vector<84x160xbf16>
    %cst_7 = arith.constant dense<0.000000e+00> : vector<10x160xf32>
    %7 = tpu.matmul %4, %6, %cst_7 {dimension_numbers = #tpu.dot_dimension_numbers<[1], [0], [0], [1], [0, 0, 1, 1], [], []>} : vector<10x84xbf16>, vector<84x160xbf16>, vector<10x160xf32> -> vector<10x160xf32>
    %8 = arith.addf %3, %7 : vector<10x160xf32>
    %9 = vector.extract_strided_slice %2 {offsets = [1, 0], sizes = [10, 84], strides = [1, 1]} : vector<14x84xbf16> to vector<10x84xbf16>
    %c1 = arith.constant 1 : index
    %c0_8 = arith.constant 0 : index
    %c0_9 = arith.constant 0 : index
    %10 = vector.load %arg2[%c1, %c0_8, %c0_9] : memref<5x84x160xbf16, #tpu.memory_space<vmem>>, vector<1x84x160xbf16>
    %11 = vector.shape_cast %10 : vector<1x84x160xbf16> to vector<84x160xbf16>
    %cst_10 = arith.constant dense<0.000000e+00> : vector<10x160xf32>
    %12 = tpu.matmul %9, %11, %cst_10 {dimension_numbers = #tpu.dot_dimension_numbers<[1], [0], [0], [1], [0, 0, 1, 1], [], []>} : vector<10x84xbf16>, vector<84x160xbf16>, vector<10x160xf32> -> vector<10x160xf32>
    %13 = arith.addf %8, %12 : vector<10x160xf32>
    %14 = vector.extract_strided_slice %2 {offsets = [2, 0], sizes = [10, 84], strides = [1, 1]} : vector<14x84xbf16> to vector<10x84xbf16>
    %c2 = arith.constant 2 : index
    %c0_11 = arith.constant 0 : index
    %c0_12 = arith.constant 0 : index
    %15 = vector.load %arg2[%c2, %c0_11, %c0_12] : memref<5x84x160xbf16, #tpu.memory_space<vmem>>, vector<1x84x160xbf16>
    %16 = vector.shape_cast %15 : vector<1x84x160xbf16> to vector<84x160xbf16>
    %cst_13 = arith.constant dense<0.000000e+00> : vector<10x160xf32>
    %17 = tpu.matmul %14, %16, %cst_13 {dimension_numbers = #tpu.dot_dimension_numbers<[1], [0], [0], [1], [0, 0, 1, 1], [], []>} : vector<10x84xbf16>, vector<84x160xbf16>, vector<10x160xf32> -> vector<10x160xf32>
    %18 = arith.addf %13, %17 : vector<10x160xf32>
    %19 = vector.extract_strided_slice %2 {offsets = [3, 0], sizes = [10, 84], strides = [1, 1]} : vector<14x84xbf16> to vector<10x84xbf16>
    %c3 = arith.constant 3 : index
    %c0_14 = arith.constant 0 : index
    %c0_15 = arith.constant 0 : index
    %20 = vector.load %arg2[%c3, %c0_14, %c0_15] : memref<5x84x160xbf16, #tpu.memory_space<vmem>>, vector<1x84x160xbf16>
    %21 = vector.shape_cast %20 : vector<1x84x160xbf16> to vector<84x160xbf16>
    %cst_16 = arith.constant dense<0.000000e+00> : vector<10x160xf32>
    %22 = tpu.matmul %19, %21, %cst_16 {dimension_numbers = #tpu.dot_dimension_numbers<[1], [0], [0], [1], [0, 0, 1, 1], [], []>} : vector<10x84xbf16>, vector<84x160xbf16>, vector<10x160xf32> -> vector<10x160xf32>
    %23 = arith.addf %18, %22 : vector<10x160xf32>
    %24 = vector.extract_strided_slice %2 {offsets = [4, 0], sizes = [10, 84], strides = [1, 1]} : vector<14x84xbf16> to vector<10x84xbf16>
    %c4 = arith.constant 4 : index
    %c0_17 = arith.constant 0 : index
    %c0_18 = arith.constant 0 : index
    %25 = vector.load %arg2[%c4, %c0_17, %c0_18] : memref<5x84x160xbf16, #tpu.memory_space<vmem>>, vector<1x84x160xbf16>
    %26 = vector.shape_cast %25 : vector<1x84x160xbf16> to vector<84x160xbf16>
    %cst_19 = arith.constant dense<0.000000e+00> : vector<10x160xf32>
    %27 = tpu.matmul %24, %26, %cst_19 {dimension_numbers = #tpu.dot_dimension_numbers<[1], [0], [0], [1], [0, 0, 1, 1], [], []>} : vector<10x84xbf16>, vector<84x160xbf16>, vector<10x160xf32> -> vector<10x160xf32>
    %28 = arith.addf %23, %27 : vector<10x160xf32>
    %29 = vector.broadcast %0 : vector<1x160xf32> to vector<10x160xf32>
    %30 = arith.addf %28, %29 : vector<10x160xf32>
    %cst_20 = arith.constant 0.000000e+00 : f32
    %31 = vector.broadcast %cst_20 : f32 to vector<10x160xf32>
    %32 = arith.maximumf %30, %31 : vector<10x160xf32>
    %33 = vector.extract_strided_slice %32 {offsets = [0, 0], sizes = [9, 160], strides = [1, 1]} : vector<10x160xf32> to vector<9x160xf32>
    %34 = vector.extract_strided_slice %32 {offsets = [1, 0], sizes = [9, 160], strides = [1, 1]} : vector<10x160xf32> to vector<9x160xf32>
    %35 = arith.maximumf %33, %34 : vector<9x160xf32>
    %36 = vector.extract_strided_slice %35 {offsets = [0, 0], sizes = [9, 144], strides = [1, 1]} : vector<9x160xf32> to vector<9x144xf32>
    %37 = vector.extract_strided_slice %35 {offsets = [0, 16], sizes = [9, 144], strides = [1, 1]} : vector<9x160xf32> to vector<9x144xf32>
    %38 = arith.maximumf %36, %37 : vector<9x144xf32>
    %c0_21 = arith.constant 0 : index
    %c0_22 = arith.constant 0 : index
    %c0_23 = arith.constant 0 : index
    %39 = vector.load %arg4[%c0_21, %c0_22, %c0_23] : memref<8x9x144xf32, #tpu.memory_space<vmem>>, vector<1x9x144xf32>
    %40 = vector.shape_cast %39 : vector<1x9x144xf32> to vector<9x144xf32>
    %41 = vector.shape_cast %38 : vector<9x144xf32> to vector<1x9x144xf32>
    tpu.vector_store %arg4[%c0_21, %c0_22, %c0_23], %41 {strides = array<i32>} : memref<8x9x144xf32, #tpu.memory_space<vmem>>, vector<1x9x144xf32>,
    %c1_24 = arith.constant 1 : index
    %c0_25 = arith.constant 0 : index
    %c0_26 = arith.constant 0 : index
    %42 = vector.load %arg1[%c1_24, %c0_25, %c0_26] : memref<8x14x84xbf16, #tpu.memory_space<vmem>>, vector<1x14x84xbf16>
    %43 = vector.shape_cast %42 : vector<1x14x84xbf16> to vector<14x84xbf16>
    %cst_27 = arith.constant 0.000000e+00 : f32
    %44 = vector.broadcast %cst_27 : f32 to vector<10x160xf32>
    %45 = vector.extract_strided_slice %43 {offsets = [0, 0], sizes = [10, 84], strides = [1, 1]} : vector<14x84xbf16> to vector<10x84xbf16>
    %c0_28 = arith.constant 0 : index
    %c0_29 = arith.constant 0 : index
    %c0_30 = arith.constant 0 : index
    %46 = vector.load %arg2[%c0_28, %c0_29, %c0_30] : memref<5x84x160xbf16, #tpu.memory_space<vmem>>, vector<1x84x160xbf16>
    %47 = vector.shape_cast %46 : vector<1x84x160xbf16> to vector<84x160xbf16>
    %cst_31 = arith.constant dense<0.000000e+00> : vector<10x160xf32>
    %48 = tpu.matmul %45, %47, %cst_31 {dimension_numbers = #tpu.dot_dimension_numbers<[1], [0], [0], [1], [0, 0, 1, 1], [], []>} : vector<10x84xbf16>, vector<84x160xbf16>, vector<10x160xf32> -> vector<10x160xf32>
    %49 = arith.addf %44, %48 : vector<10x160xf32>
    %50 = vector.extract_strided_slice %43 {offsets = [1, 0], sizes = [10, 84], strides = [1, 1]} : vector<14x84xbf16> to vector<10x84xbf16>
    %c1_32 = arith.constant 1 : index
    %c0_33 = arith.constant 0 : index
    %c0_34 = arith.constant 0 : index
    %51 = vector.load %arg2[%c1_32, %c0_33, %c0_34] : memref<5x84x160xbf16, #tpu.memory_space<vmem>>, vector<1x84x160xbf16>
    %52 = vector.shape_cast %51 : vector<1x84x160xbf16> to vector<84x160xbf16>
    %cst_35 = arith.constant dense<0.000000e+00> : vector<10x160xf32>
    %53 = tpu.matmul %50, %52, %cst_35 {dimension_numbers = #tpu.dot_dimension_numbers<[1], [0], [0], [1], [0, 0, 1, 1], [], []>} : vector<10x84xbf16>, vector<84x160xbf16>, vector<10x160xf32> -> vector<10x160xf32>
    %54 = arith.addf %49, %53 : vector<10x160xf32>
    %55 = vector.extract_strided_slice %43 {offsets = [2, 0], sizes = [10, 84], strides = [1, 1]} : vector<14x84xbf16> to vector<10x84xbf16>
    %c2_36 = arith.constant 2 : index
    %c0_37 = arith.constant 0 : index
    %c0_38 = arith.constant 0 : index
    %56 = vector.load %arg2[%c2_36, %c0_37, %c0_38] : memref<5x84x160xbf16, #tpu.memory_space<vmem>>, vector<1x84x160xbf16>
    %57 = vector.shape_cast %56 : vector<1x84x160xbf16> to vector<84x160xbf16>
    %cst_39 = arith.constant dense<0.000000e+00> : vector<10x160xf32>
    %58 = tpu.matmul %55, %57, %cst_39 {dimension_numbers = #tpu.dot_dimension_numbers<[1], [0], [0], [1], [0, 0, 1, 1], [], []>} : vector<10x84xbf16>, vector<84x160xbf16>, vector<10x160xf32> -> vector<10x160xf32>
    %59 = arith.addf %54, %58 : vector<10x160xf32>
    %60 = vector.extract_strided_slice %43 {offsets = [3, 0], sizes = [10, 84], strides = [1, 1]} : vector<14x84xbf16> to vector<10x84xbf16>
    %c3_40 = arith.constant 3 : index
    %c0_41 = arith.constant 0 : index
    %c0_42 = arith.constant 0 : index
    %61 = vector.load %arg2[%c3_40, %c0_41, %c0_42] : memref<5x84x160xbf16, #tpu.memory_space<vmem>>, vector<1x84x160xbf16>
    %62 = vector.shape_cast %61 : vector<1x84x160xbf16> to vector<84x160xbf16>
    %cst_43 = arith.constant dense<0.000000e+00> : vector<10x160xf32>
    %63 = tpu.matmul %60, %62, %cst_43 {dimension_numbers = #tpu.dot_dimension_numbers<[1], [0], [0], [1], [0, 0, 1, 1], [], []>} : vector<10x84xbf16>, vector<84x160xbf16>, vector<10x160xf32> -> vector<10x160xf32>
    %64 = arith.addf %59, %63 : vector<10x160xf32>
    %65 = vector.extract_strided_slice %43 {offsets = [4, 0], sizes = [10, 84], strides = [1, 1]} : vector<14x84xbf16> to vector<10x84xbf16>
    %c4_44 = arith.constant 4 : index
    %c0_45 = arith.constant 0 : index
    %c0_46 = arith.constant 0 : index
    %66 = vector.load %arg2[%c4_44, %c0_45, %c0_46] : memref<5x84x160xbf16, #tpu.memory_space<vmem>>, vector<1x84x160xbf16>
    %67 = vector.shape_cast %66 : vector<1x84x160xbf16> to vector<84x160xbf16>
    %cst_47 = arith.constant dense<0.000000e+00> : vector<10x160xf32>
    %68 = tpu.matmul %65, %67, %cst_47 {dimension_numbers = #tpu.dot_dimension_numbers<[1], [0], [0], [1], [0, 0, 1, 1], [], []>} : vector<10x84xbf16>, vector<84x160xbf16>, vector<10x160xf32> -> vector<10x160xf32>
    %69 = arith.addf %64, %68 : vector<10x160xf32>
    %70 = vector.broadcast %0 : vector<1x160xf32> to vector<10x160xf32>
    %71 = arith.addf %69, %70 : vector<10x160xf32>
    %cst_48 = arith.constant 0.000000e+00 : f32
    %72 = vector.broadcast %cst_48 : f32 to vector<10x160xf32>
    %73 = arith.maximumf %71, %72 : vector<10x160xf32>
    %74 = vector.extract_strided_slice %73 {offsets = [0, 0], sizes = [9, 160], strides = [1, 1]} : vector<10x160xf32> to vector<9x160xf32>
    %75 = vector.extract_strided_slice %73 {offsets = [1, 0], sizes = [9, 160], strides = [1, 1]} : vector<10x160xf32> to vector<9x160xf32>
    %76 = arith.maximumf %74, %75 : vector<9x160xf32>
    %77 = vector.extract_strided_slice %76 {offsets = [0, 0], sizes = [9, 144], strides = [1, 1]} : vector<9x160xf32> to vector<9x144xf32>
    %78 = vector.extract_strided_slice %76 {offsets = [0, 16], sizes = [9, 144], strides = [1, 1]} : vector<9x160xf32> to vector<9x144xf32>
    %79 = arith.maximumf %77, %78 : vector<9x144xf32>
    %c1_49 = arith.constant 1 : index
    %c0_50 = arith.constant 0 : index
    %c0_51 = arith.constant 0 : index
    %80 = vector.load %arg4[%c1_49, %c0_50, %c0_51] : memref<8x9x144xf32, #tpu.memory_space<vmem>>, vector<1x9x144xf32>
    %81 = vector.shape_cast %80 : vector<1x9x144xf32> to vector<9x144xf32>
    %82 = vector.shape_cast %79 : vector<9x144xf32> to vector<1x9x144xf32>
    tpu.vector_store %arg4[%c1_49, %c0_50, %c0_51], %82 {strides = array<i32>} : memref<8x9x144xf32, #tpu.memory_space<vmem>>, vector<1x9x144xf32>,
    %c2_52 = arith.constant 2 : index
    %c0_53 = arith.constant 0 : index
    %c0_54 = arith.constant 0 : index
    %83 = vector.load %arg1[%c2_52, %c0_53, %c0_54] : memref<8x14x84xbf16, #tpu.memory_space<vmem>>, vector<1x14x84xbf16>
    %84 = vector.shape_cast %83 : vector<1x14x84xbf16> to vector<14x84xbf16>
    %cst_55 = arith.constant 0.000000e+00 : f32
    %85 = vector.broadcast %cst_55 : f32 to vector<10x160xf32>
    %86 = vector.extract_strided_slice %84 {offsets = [0, 0], sizes = [10, 84], strides = [1, 1]} : vector<14x84xbf16> to vector<10x84xbf16>
    %c0_56 = arith.constant 0 : index
    %c0_57 = arith.constant 0 : index
    %c0_58 = arith.constant 0 : index
    %87 = vector.load %arg2[%c0_56, %c0_57, %c0_58] : memref<5x84x160xbf16, #tpu.memory_space<vmem>>, vector<1x84x160xbf16>
    %88 = vector.shape_cast %87 : vector<1x84x160xbf16> to vector<84x160xbf16>
    %cst_59 = arith.constant dense<0.000000e+00> : vector<10x160xf32>
    %89 = tpu.matmul %86, %88, %cst_59 {dimension_numbers = #tpu.dot_dimension_numbers<[1], [0], [0], [1], [0, 0, 1, 1], [], []>} : vector<10x84xbf16>, vector<84x160xbf16>, vector<10x160xf32> -> vector<10x160xf32>
    %90 = arith.addf %85, %89 : vector<10x160xf32>
    %91 = vector.extract_strided_slice %84 {offsets = [1, 0], sizes = [10, 84], strides = [1, 1]} : vector<14x84xbf16> to vector<10x84xbf16>
    %c1_60 = arith.constant 1 : index
    %c0_61 = arith.constant 0 : index
    %c0_62 = arith.constant 0 : index
    %92 = vector.load %arg2[%c1_60, %c0_61, %c0_62] : memref<5x84x160xbf16, #tpu.memory_space<vmem>>, vector<1x84x160xbf16>
    %93 = vector.shape_cast %92 : vector<1x84x160xbf16> to vector<84x160xbf16>
    %cst_63 = arith.constant dense<0.000000e+00> : vector<10x160xf32>
    %94 = tpu.matmul %91, %93, %cst_63 {dimension_numbers = #tpu.dot_dimension_numbers<[1], [0], [0], [1], [0, 0, 1, 1], [], []>} : vector<10x84xbf16>, vector<84x160xbf16>, vector<10x160xf32> -> vector<10x160xf32>
    %95 = arith.addf %90, %94 : vector<10x160xf32>
    %96 = vector.extract_strided_slice %84 {offsets = [2, 0], sizes = [10, 84], strides = [1, 1]} : vector<14x84xbf16> to vector<10x84xbf16>
    %c2_64 = arith.constant 2 : index
    %c0_65 = arith.constant 0 : index
    %c0_66 = arith.constant 0 : index
    %97 = vector.load %arg2[%c2_64, %c0_65, %c0_66] : memref<5x84x160xbf16, #tpu.memory_space<vmem>>, vector<1x84x160xbf16>
    %98 = vector.shape_cast %97 : vector<1x84x160xbf16> to vector<84x160xbf16>
    %cst_67 = arith.constant dense<0.000000e+00> : vector<10x160xf32>
    %99 = tpu.matmul %96, %98, %cst_67 {dimension_numbers = #tpu.dot_dimension_numbers<[1], [0], [0], [1], [0, 0, 1, 1], [], []>} : vector<10x84xbf16>, vector<84x160xbf16>, vector<10x160xf32> -> vector<10x160xf32>
    %100 = arith.addf %95, %99 : vector<10x160xf32>
    %101 = vector.extract_strided_slice %84 {offsets = [3, 0], sizes = [10, 84], strides = [1, 1]} : vector<14x84xbf16> to vector<10x84xbf16>
    %c3_68 = arith.constant 3 : index
    %c0_69 = arith.constant 0 : index
    %c0_70 = arith.constant 0 : index
    %102 = vector.load %arg2[%c3_68, %c0_69, %c0_70] : memref<5x84x160xbf16, #tpu.memory_space<vmem>>, vector<1x84x160xbf16>
    %103 = vector.shape_cast %102 : vector<1x84x160xbf16> to vector<84x160xbf16>
    %cst_71 = arith.constant dense<0.000000e+00> : vector<10x160xf32>
    %104 = tpu.matmul %101, %103, %cst_71 {dimension_numbers = #tpu.dot_dimension_numbers<[1], [0], [0], [1], [0, 0, 1, 1], [], []>} : vector<10x84xbf16>, vector<84x160xbf16>, vector<10x160xf32> -> vector<10x160xf32>
    %105 = arith.addf %100, %104 : vector<10x160xf32>
    %106 = vector.extract_strided_slice %84 {offsets = [4, 0], sizes = [10, 84], strides = [1, 1]} : vector<14x84xbf16> to vector<10x84xbf16>
    %c4_72 = arith.constant 4 : index
    %c0_73 = arith.constant 0 : index
    %c0_74 = arith.constant 0 : index
    %107 = vector.load %arg2[%c4_72, %c0_73, %c0_74] : memref<5x84x160xbf16, #tpu.memory_space<vmem>>, vector<1x84x160xbf16>
    %108 = vector.shape_cast %107 : vector<1x84x160xbf16> to vector<84x160xbf16>
    %cst_75 = arith.constant dense<0.000000e+00> : vector<10x160xf32>
    %109 = tpu.matmul %106, %108, %cst_75 {dimension_numbers = #tpu.dot_dimension_numbers<[1], [0], [0], [1], [0, 0, 1, 1], [], []>} : vector<10x84xbf16>, vector<84x160xbf16>, vector<10x160xf32> -> vector<10x160xf32>
    %110 = arith.addf %105, %109 : vector<10x160xf32>
    %111 = vector.broadcast %0 : vector<1x160xf32> to vector<10x160xf32>
    %112 = arith.addf %110, %111 : vector<10x160xf32>
    %cst_76 = arith.constant 0.000000e+00 : f32
    %113 = vector.broadcast %cst_76 : f32 to vector<10x160xf32>
    %114 = arith.maximumf %112, %113 : vector<10x160xf32>
    %115 = vector.extract_strided_slice %114 {offsets = [0, 0], sizes = [9, 160], strides = [1, 1]} : vector<10x160xf32> to vector<9x160xf32>
    %116 = vector.extract_strided_slice %114 {offsets = [1, 0], sizes = [9, 160], strides = [1, 1]} : vector<10x160xf32> to vector<9x160xf32>
    %117 = arith.maximumf %115, %116 : vector<9x160xf32>
    %118 = vector.extract_strided_slice %117 {offsets = [0, 0], sizes = [9, 144], strides = [1, 1]} : vector<9x160xf32> to vector<9x144xf32>
    %119 = vector.extract_strided_slice %117 {offsets = [0, 16], sizes = [9, 144], strides = [1, 1]} : vector<9x160xf32> to vector<9x144xf32>
    %120 = arith.maximumf %118, %119 : vector<9x144xf32>
    %c2_77 = arith.constant 2 : index
    %c0_78 = arith.constant 0 : index
    %c0_79 = arith.constant 0 : index
    %121 = vector.load %arg4[%c2_77, %c0_78, %c0_79] : memref<8x9x144xf32, #tpu.memory_space<vmem>>, vector<1x9x144xf32>
    %122 = vector.shape_cast %121 : vector<1x9x144xf32> to vector<9x144xf32>
    %123 = vector.shape_cast %120 : vector<9x144xf32> to vector<1x9x144xf32>
    tpu.vector_store %arg4[%c2_77, %c0_78, %c0_79], %123 {strides = array<i32>} : memref<8x9x144xf32, #tpu.memory_space<vmem>>, vector<1x9x144xf32>,
    %c3_80 = arith.constant 3 : index
    %c0_81 = arith.constant 0 : index
    %c0_82 = arith.constant 0 : index
    %124 = vector.load %arg1[%c3_80, %c0_81, %c0_82] : memref<8x14x84xbf16, #tpu.memory_space<vmem>>, vector<1x14x84xbf16>
    %125 = vector.shape_cast %124 : vector<1x14x84xbf16> to vector<14x84xbf16>
    %cst_83 = arith.constant 0.000000e+00 : f32
    %126 = vector.broadcast %cst_83 : f32 to vector<10x160xf32>
    %127 = vector.extract_strided_slice %125 {offsets = [0, 0], sizes = [10, 84], strides = [1, 1]} : vector<14x84xbf16> to vector<10x84xbf16>
    %c0_84 = arith.constant 0 : index
    %c0_85 = arith.constant 0 : index
    %c0_86 = arith.constant 0 : index
    %128 = vector.load %arg2[%c0_84, %c0_85, %c0_86] : memref<5x84x160xbf16, #tpu.memory_space<vmem>>, vector<1x84x160xbf16>
    %129 = vector.shape_cast %128 : vector<1x84x160xbf16> to vector<84x160xbf16>
    %cst_87 = arith.constant dense<0.000000e+00> : vector<10x160xf32>
    %130 = tpu.matmul %127, %129, %cst_87 {dimension_numbers = #tpu.dot_dimension_numbers<[1], [0], [0], [1], [0, 0, 1, 1], [], []>} : vector<10x84xbf16>, vector<84x160xbf16>, vector<10x160xf32> -> vector<10x160xf32>
    %131 = arith.addf %126, %130 : vector<10x160xf32>
    %132 = vector.extract_strided_slice %125 {offsets = [1, 0], sizes = [10, 84], strides = [1, 1]} : vector<14x84xbf16> to vector<10x84xbf16>
    %c1_88 = arith.constant 1 : index
    %c0_89 = arith.constant 0 : index
    %c0_90 = arith.constant 0 : index
    %133 = vector.load %arg2[%c1_88, %c0_89, %c0_90] : memref<5x84x160xbf16, #tpu.memory_space<vmem>>, vector<1x84x160xbf16>
    %134 = vector.shape_cast %133 : vector<1x84x160xbf16> to vector<84x160xbf16>
    %cst_91 = arith.constant dense<0.000000e+00> : vector<10x160xf32>
    %135 = tpu.matmul %132, %134, %cst_91 {dimension_numbers = #tpu.dot_dimension_numbers<[1], [0], [0], [1], [0, 0, 1, 1], [], []>} : vector<10x84xbf16>, vector<84x160xbf16>, vector<10x160xf32> -> vector<10x160xf32>
    %136 = arith.addf %131, %135 : vector<10x160xf32>
    %137 = vector.extract_strided_slice %125 {offsets = [2, 0], sizes = [10, 84], strides = [1, 1]} : vector<14x84xbf16> to vector<10x84xbf16>
    %c2_92 = arith.constant 2 : index
    %c0_93 = arith.constant 0 : index
    %c0_94 = arith.constant 0 : index
    %138 = vector.load %arg2[%c2_92, %c0_93, %c0_94] : memref<5x84x160xbf16, #tpu.memory_space<vmem>>, vector<1x84x160xbf16>
    %139 = vector.shape_cast %138 : vector<1x84x160xbf16> to vector<84x160xbf16>
    %cst_95 = arith.constant dense<0.000000e+00> : vector<10x160xf32>
    %140 = tpu.matmul %137, %139, %cst_95 {dimension_numbers = #tpu.dot_dimension_numbers<[1], [0], [0], [1], [0, 0, 1, 1], [], []>} : vector<10x84xbf16>, vector<84x160xbf16>, vector<10x160xf32> -> vector<10x160xf32>
    %141 = arith.addf %136, %140 : vector<10x160xf32>
    %142 = vector.extract_strided_slice %125 {offsets = [3, 0], sizes = [10, 84], strides = [1, 1]} : vector<14x84xbf16> to vector<10x84xbf16>
    %c3_96 = arith.constant 3 : index
    %c0_97 = arith.constant 0 : index
    %c0_98 = arith.constant 0 : index
    %143 = vector.load %arg2[%c3_96, %c0_97, %c0_98] : memref<5x84x160xbf16, #tpu.memory_space<vmem>>, vector<1x84x160xbf16>
    %144 = vector.shape_cast %143 : vector<1x84x160xbf16> to vector<84x160xbf16>
    %cst_99 = arith.constant dense<0.000000e+00> : vector<10x160xf32>
    %145 = tpu.matmul %142, %144, %cst_99 {dimension_numbers = #tpu.dot_dimension_numbers<[1], [0], [0], [1], [0, 0, 1, 1], [], []>} : vector<10x84xbf16>, vector<84x160xbf16>, vector<10x160xf32> -> vector<10x160xf32>
    %146 = arith.addf %141, %145 : vector<10x160xf32>
    %147 = vector.extract_strided_slice %125 {offsets = [4, 0], sizes = [10, 84], strides = [1, 1]} : vector<14x84xbf16> to vector<10x84xbf16>
    %c4_100 = arith.constant 4 : index
    %c0_101 = arith.constant 0 : index
    %c0_102 = arith.constant 0 : index
    %148 = vector.load %arg2[%c4_100, %c0_101, %c0_102] : memref<5x84x160xbf16, #tpu.memory_space<vmem>>, vector<1x84x160xbf16>
    %149 = vector.shape_cast %148 : vector<1x84x160xbf16> to vector<84x160xbf16>
    %cst_103 = arith.constant dense<0.000000e+00> : vector<10x160xf32>
    %150 = tpu.matmul %147, %149, %cst_103 {dimension_numbers = #tpu.dot_dimension_numbers<[1], [0], [0], [1], [0, 0, 1, 1], [], []>} : vector<10x84xbf16>, vector<84x160xbf16>, vector<10x160xf32> -> vector<10x160xf32>
    %151 = arith.addf %146, %150 : vector<10x160xf32>
    %152 = vector.broadcast %0 : vector<1x160xf32> to vector<10x160xf32>
    %153 = arith.addf %151, %152 : vector<10x160xf32>
    %cst_104 = arith.constant 0.000000e+00 : f32
    %154 = vector.broadcast %cst_104 : f32 to vector<10x160xf32>
    %155 = arith.maximumf %153, %154 : vector<10x160xf32>
    %156 = vector.extract_strided_slice %155 {offsets = [0, 0], sizes = [9, 160], strides = [1, 1]} : vector<10x160xf32> to vector<9x160xf32>
    %157 = vector.extract_strided_slice %155 {offsets = [1, 0], sizes = [9, 160], strides = [1, 1]} : vector<10x160xf32> to vector<9x160xf32>
    %158 = arith.maximumf %156, %157 : vector<9x160xf32>
    %159 = vector.extract_strided_slice %158 {offsets = [0, 0], sizes = [9, 144], strides = [1, 1]} : vector<9x160xf32> to vector<9x144xf32>
    %160 = vector.extract_strided_slice %158 {offsets = [0, 16], sizes = [9, 144], strides = [1, 1]} : vector<9x160xf32> to vector<9x144xf32>
    %161 = arith.maximumf %159, %160 : vector<9x144xf32>
    %c3_105 = arith.constant 3 : index
    %c0_106 = arith.constant 0 : index
    %c0_107 = arith.constant 0 : index
    %162 = vector.load %arg4[%c3_105, %c0_106, %c0_107] : memref<8x9x144xf32, #tpu.memory_space<vmem>>, vector<1x9x144xf32>
    %163 = vector.shape_cast %162 : vector<1x9x144xf32> to vector<9x144xf32>
    %164 = vector.shape_cast %161 : vector<9x144xf32> to vector<1x9x144xf32>
    tpu.vector_store %arg4[%c3_105, %c0_106, %c0_107], %164 {strides = array<i32>} : memref<8x9x144xf32, #tpu.memory_space<vmem>>, vector<1x9x144xf32>,
    %c4_108 = arith.constant 4 : index
    %c0_109 = arith.constant 0 : index
    %c0_110 = arith.constant 0 : index
    %165 = vector.load %arg1[%c4_108, %c0_109, %c0_110] : memref<8x14x84xbf16, #tpu.memory_space<vmem>>, vector<1x14x84xbf16>
    %166 = vector.shape_cast %165 : vector<1x14x84xbf16> to vector<14x84xbf16>
    %cst_111 = arith.constant 0.000000e+00 : f32
    %167 = vector.broadcast %cst_111 : f32 to vector<10x160xf32>
    %168 = vector.extract_strided_slice %166 {offsets = [0, 0], sizes = [10, 84], strides = [1, 1]} : vector<14x84xbf16> to vector<10x84xbf16>
    %c0_112 = arith.constant 0 : index
    %c0_113 = arith.constant 0 : index
    %c0_114 = arith.constant 0 : index
    %169 = vector.load %arg2[%c0_112, %c0_113, %c0_114] : memref<5x84x160xbf16, #tpu.memory_space<vmem>>, vector<1x84x160xbf16>
    %170 = vector.shape_cast %169 : vector<1x84x160xbf16> to vector<84x160xbf16>
    %cst_115 = arith.constant dense<0.000000e+00> : vector<10x160xf32>
    %171 = tpu.matmul %168, %170, %cst_115 {dimension_numbers = #tpu.dot_dimension_numbers<[1], [0], [0], [1], [0, 0, 1, 1], [], []>} : vector<10x84xbf16>, vector<84x160xbf16>, vector<10x160xf32> -> vector<10x160xf32>
    %172 = arith.addf %167, %171 : vector<10x160xf32>
    %173 = vector.extract_strided_slice %166 {offsets = [1, 0], sizes = [10, 84], strides = [1, 1]} : vector<14x84xbf16> to vector<10x84xbf16>
    %c1_116 = arith.constant 1 : index
    %c0_117 = arith.constant 0 : index
    %c0_118 = arith.constant 0 : index
    %174 = vector.load %arg2[%c1_116, %c0_117, %c0_118] : memref<5x84x160xbf16, #tpu.memory_space<vmem>>, vector<1x84x160xbf16>
    %175 = vector.shape_cast %174 : vector<1x84x160xbf16> to vector<84x160xbf16>
    %cst_119 = arith.constant dense<0.000000e+00> : vector<10x160xf32>
    %176 = tpu.matmul %173, %175, %cst_119 {dimension_numbers = #tpu.dot_dimension_numbers<[1], [0], [0], [1], [0, 0, 1, 1], [], []>} : vector<10x84xbf16>, vector<84x160xbf16>, vector<10x160xf32> -> vector<10x160xf32>
    %177 = arith.addf %172, %176 : vector<10x160xf32>
    %178 = vector.extract_strided_slice %166 {offsets = [2, 0], sizes = [10, 84], strides = [1, 1]} : vector<14x84xbf16> to vector<10x84xbf16>
    %c2_120 = arith.constant 2 : index
    %c0_121 = arith.constant 0 : index
    %c0_122 = arith.constant 0 : index
    %179 = vector.load %arg2[%c2_120, %c0_121, %c0_122] : memref<5x84x160xbf16, #tpu.memory_space<vmem>>, vector<1x84x160xbf16>
    %180 = vector.shape_cast %179 : vector<1x84x160xbf16> to vector<84x160xbf16>
    %cst_123 = arith.constant dense<0.000000e+00> : vector<10x160xf32>
    %181 = tpu.matmul %178, %180, %cst_123 {dimension_numbers = #tpu.dot_dimension_numbers<[1], [0], [0], [1], [0, 0, 1, 1], [], []>} : vector<10x84xbf16>, vector<84x160xbf16>, vector<10x160xf32> -> vector<10x160xf32>
    %182 = arith.addf %177, %181 : vector<10x160xf32>
    %183 = vector.extract_strided_slice %166 {offsets = [3, 0], sizes = [10, 84], strides = [1, 1]} : vector<14x84xbf16> to vector<10x84xbf16>
    %c3_124 = arith.constant 3 : index
    %c0_125 = arith.constant 0 : index
    %c0_126 = arith.constant 0 : index
    %184 = vector.load %arg2[%c3_124, %c0_125, %c0_126] : memref<5x84x160xbf16, #tpu.memory_space<vmem>>, vector<1x84x160xbf16>
    %185 = vector.shape_cast %184 : vector<1x84x160xbf16> to vector<84x160xbf16>
    %cst_127 = arith.constant dense<0.000000e+00> : vector<10x160xf32>
    %186 = tpu.matmul %183, %185, %cst_127 {dimension_numbers = #tpu.dot_dimension_numbers<[1], [0], [0], [1], [0, 0, 1, 1], [], []>} : vector<10x84xbf16>, vector<84x160xbf16>, vector<10x160xf32> -> vector<10x160xf32>
    %187 = arith.addf %182, %186 : vector<10x160xf32>
    %188 = vector.extract_strided_slice %166 {offsets = [4, 0], sizes = [10, 84], strides = [1, 1]} : vector<14x84xbf16> to vector<10x84xbf16>
    %c4_128 = arith.constant 4 : index
    %c0_129 = arith.constant 0 : index
    %c0_130 = arith.constant 0 : index
    %189 = vector.load %arg2[%c4_128, %c0_129, %c0_130] : memref<5x84x160xbf16, #tpu.memory_space<vmem>>, vector<1x84x160xbf16>
    %190 = vector.shape_cast %189 : vector<1x84x160xbf16> to vector<84x160xbf16>
    %cst_131 = arith.constant dense<0.000000e+00> : vector<10x160xf32>
    %191 = tpu.matmul %188, %190, %cst_131 {dimension_numbers = #tpu.dot_dimension_numbers<[1], [0], [0], [1], [0, 0, 1, 1], [], []>} : vector<10x84xbf16>, vector<84x160xbf16>, vector<10x160xf32> -> vector<10x160xf32>
    %192 = arith.addf %187, %191 : vector<10x160xf32>
    %193 = vector.broadcast %0 : vector<1x160xf32> to vector<10x160xf32>
    %194 = arith.addf %192, %193 : vector<10x160xf32>
    %cst_132 = arith.constant 0.000000e+00 : f32
    %195 = vector.broadcast %cst_132 : f32 to vector<10x160xf32>
    %196 = arith.maximumf %194, %195 : vector<10x160xf32>
    %197 = vector.extract_strided_slice %196 {offsets = [0, 0], sizes = [9, 160], strides = [1, 1]} : vector<10x160xf32> to vector<9x160xf32>
    %198 = vector.extract_strided_slice %196 {offsets = [1, 0], sizes = [9, 160], strides = [1, 1]} : vector<10x160xf32> to vector<9x160xf32>
    %199 = arith.maximumf %197, %198 : vector<9x160xf32>
    %200 = vector.extract_strided_slice %199 {offsets = [0, 0], sizes = [9, 144], strides = [1, 1]} : vector<9x160xf32> to vector<9x144xf32>
    %201 = vector.extract_strided_slice %199 {offsets = [0, 16], sizes = [9, 144], strides = [1, 1]} : vector<9x160xf32> to vector<9x144xf32>
    %202 = arith.maximumf %200, %201 : vector<9x144xf32>
    %c4_133 = arith.constant 4 : index
    %c0_134 = arith.constant 0 : index
    %c0_135 = arith.constant 0 : index
    %203 = vector.load %arg4[%c4_133, %c0_134, %c0_135] : memref<8x9x144xf32, #tpu.memory_space<vmem>>, vector<1x9x144xf32>
    %204 = vector.shape_cast %203 : vector<1x9x144xf32> to vector<9x144xf32>
    %205 = vector.shape_cast %202 : vector<9x144xf32> to vector<1x9x144xf32>
    tpu.vector_store %arg4[%c4_133, %c0_134, %c0_135], %205 {strides = array<i32>} : memref<8x9x144xf32, #tpu.memory_space<vmem>>, vector<1x9x144xf32>,
    %c5 = arith.constant 5 : index
    %c0_136 = arith.constant 0 : index
    %c0_137 = arith.constant 0 : index
    %206 = vector.load %arg1[%c5, %c0_136, %c0_137] : memref<8x14x84xbf16, #tpu.memory_space<vmem>>, vector<1x14x84xbf16>
    %207 = vector.shape_cast %206 : vector<1x14x84xbf16> to vector<14x84xbf16>
    %cst_138 = arith.constant 0.000000e+00 : f32
    %208 = vector.broadcast %cst_138 : f32 to vector<10x160xf32>
    %209 = vector.extract_strided_slice %207 {offsets = [0, 0], sizes = [10, 84], strides = [1, 1]} : vector<14x84xbf16> to vector<10x84xbf16>
    %c0_139 = arith.constant 0 : index
    %c0_140 = arith.constant 0 : index
    %c0_141 = arith.constant 0 : index
    %210 = vector.load %arg2[%c0_139, %c0_140, %c0_141] : memref<5x84x160xbf16, #tpu.memory_space<vmem>>, vector<1x84x160xbf16>
    %211 = vector.shape_cast %210 : vector<1x84x160xbf16> to vector<84x160xbf16>
    %cst_142 = arith.constant dense<0.000000e+00> : vector<10x160xf32>
    %212 = tpu.matmul %209, %211, %cst_142 {dimension_numbers = #tpu.dot_dimension_numbers<[1], [0], [0], [1], [0, 0, 1, 1], [], []>} : vector<10x84xbf16>, vector<84x160xbf16>, vector<10x160xf32> -> vector<10x160xf32>
    %213 = arith.addf %208, %212 : vector<10x160xf32>
    %214 = vector.extract_strided_slice %207 {offsets = [1, 0], sizes = [10, 84], strides = [1, 1]} : vector<14x84xbf16> to vector<10x84xbf16>
    %c1_143 = arith.constant 1 : index
    %c0_144 = arith.constant 0 : index
    %c0_145 = arith.constant 0 : index
    %215 = vector.load %arg2[%c1_143, %c0_144, %c0_145] : memref<5x84x160xbf16, #tpu.memory_space<vmem>>, vector<1x84x160xbf16>
    %216 = vector.shape_cast %215 : vector<1x84x160xbf16> to vector<84x160xbf16>
    %cst_146 = arith.constant dense<0.000000e+00> : vector<10x160xf32>
    %217 = tpu.matmul %214, %216, %cst_146 {dimension_numbers = #tpu.dot_dimension_numbers<[1], [0], [0], [1], [0, 0, 1, 1], [], []>} : vector<10x84xbf16>, vector<84x160xbf16>, vector<10x160xf32> -> vector<10x160xf32>
    %218 = arith.addf %213, %217 : vector<10x160xf32>
    %219 = vector.extract_strided_slice %207 {offsets = [2, 0], sizes = [10, 84], strides = [1, 1]} : vector<14x84xbf16> to vector<10x84xbf16>
    %c2_147 = arith.constant 2 : index
    %c0_148 = arith.constant 0 : index
    %c0_149 = arith.constant 0 : index
    %220 = vector.load %arg2[%c2_147, %c0_148, %c0_149] : memref<5x84x160xbf16, #tpu.memory_space<vmem>>, vector<1x84x160xbf16>
    %221 = vector.shape_cast %220 : vector<1x84x160xbf16> to vector<84x160xbf16>
    %cst_150 = arith.constant dense<0.000000e+00> : vector<10x160xf32>
    %222 = tpu.matmul %219, %221, %cst_150 {dimension_numbers = #tpu.dot_dimension_numbers<[1], [0], [0], [1], [0, 0, 1, 1], [], []>} : vector<10x84xbf16>, vector<84x160xbf16>, vector<10x160xf32> -> vector<10x160xf32>
    %223 = arith.addf %218, %222 : vector<10x160xf32>
    %224 = vector.extract_strided_slice %207 {offsets = [3, 0], sizes = [10, 84], strides = [1, 1]} : vector<14x84xbf16> to vector<10x84xbf16>
    %c3_151 = arith.constant 3 : index
    %c0_152 = arith.constant 0 : index
    %c0_153 = arith.constant 0 : index
    %225 = vector.load %arg2[%c3_151, %c0_152, %c0_153] : memref<5x84x160xbf16, #tpu.memory_space<vmem>>, vector<1x84x160xbf16>
    %226 = vector.shape_cast %225 : vector<1x84x160xbf16> to vector<84x160xbf16>
    %cst_154 = arith.constant dense<0.000000e+00> : vector<10x160xf32>
    %227 = tpu.matmul %224, %226, %cst_154 {dimension_numbers = #tpu.dot_dimension_numbers<[1], [0], [0], [1], [0, 0, 1, 1], [], []>} : vector<10x84xbf16>, vector<84x160xbf16>, vector<10x160xf32> -> vector<10x160xf32>
    %228 = arith.addf %223, %227 : vector<10x160xf32>
    %229 = vector.extract_strided_slice %207 {offsets = [4, 0], sizes = [10, 84], strides = [1, 1]} : vector<14x84xbf16> to vector<10x84xbf16>
    %c4_155 = arith.constant 4 : index
    %c0_156 = arith.constant 0 : index
    %c0_157 = arith.constant 0 : index
    %230 = vector.load %arg2[%c4_155, %c0_156, %c0_157] : memref<5x84x160xbf16, #tpu.memory_space<vmem>>, vector<1x84x160xbf16>
    %231 = vector.shape_cast %230 : vector<1x84x160xbf16> to vector<84x160xbf16>
    %cst_158 = arith.constant dense<0.000000e+00> : vector<10x160xf32>
    %232 = tpu.matmul %229, %231, %cst_158 {dimension_numbers = #tpu.dot_dimension_numbers<[1], [0], [0], [1], [0, 0, 1, 1], [], []>} : vector<10x84xbf16>, vector<84x160xbf16>, vector<10x160xf32> -> vector<10x160xf32>
    %233 = arith.addf %228, %232 : vector<10x160xf32>
    %234 = vector.broadcast %0 : vector<1x160xf32> to vector<10x160xf32>
    %235 = arith.addf %233, %234 : vector<10x160xf32>
    %cst_159 = arith.constant 0.000000e+00 : f32
    %236 = vector.broadcast %cst_159 : f32 to vector<10x160xf32>
    %237 = arith.maximumf %235, %236 : vector<10x160xf32>
    %238 = vector.extract_strided_slice %237 {offsets = [0, 0], sizes = [9, 160], strides = [1, 1]} : vector<10x160xf32> to vector<9x160xf32>
    %239 = vector.extract_strided_slice %237 {offsets = [1, 0], sizes = [9, 160], strides = [1, 1]} : vector<10x160xf32> to vector<9x160xf32>
    %240 = arith.maximumf %238, %239 : vector<9x160xf32>
    %241 = vector.extract_strided_slice %240 {offsets = [0, 0], sizes = [9, 144], strides = [1, 1]} : vector<9x160xf32> to vector<9x144xf32>
    %242 = vector.extract_strided_slice %240 {offsets = [0, 16], sizes = [9, 144], strides = [1, 1]} : vector<9x160xf32> to vector<9x144xf32>
    %243 = arith.maximumf %241, %242 : vector<9x144xf32>
    %c5_160 = arith.constant 5 : index
    %c0_161 = arith.constant 0 : index
    %c0_162 = arith.constant 0 : index
    %244 = vector.load %arg4[%c5_160, %c0_161, %c0_162] : memref<8x9x144xf32, #tpu.memory_space<vmem>>, vector<1x9x144xf32>
    %245 = vector.shape_cast %244 : vector<1x9x144xf32> to vector<9x144xf32>
    %246 = vector.shape_cast %243 : vector<9x144xf32> to vector<1x9x144xf32>
    tpu.vector_store %arg4[%c5_160, %c0_161, %c0_162], %246 {strides = array<i32>} : memref<8x9x144xf32, #tpu.memory_space<vmem>>, vector<1x9x144xf32>,
    %c6 = arith.constant 6 : index
    %c0_163 = arith.constant 0 : index
    %c0_164 = arith.constant 0 : index
    %247 = vector.load %arg1[%c6, %c0_163, %c0_164] : memref<8x14x84xbf16, #tpu.memory_space<vmem>>, vector<1x14x84xbf16>
    %248 = vector.shape_cast %247 : vector<1x14x84xbf16> to vector<14x84xbf16>
    %cst_165 = arith.constant 0.000000e+00 : f32
    %249 = vector.broadcast %cst_165 : f32 to vector<10x160xf32>
    %250 = vector.extract_strided_slice %248 {offsets = [0, 0], sizes = [10, 84], strides = [1, 1]} : vector<14x84xbf16> to vector<10x84xbf16>
    %c0_166 = arith.constant 0 : index
    %c0_167 = arith.constant 0 : index
    %c0_168 = arith.constant 0 : index
    %251 = vector.load %arg2[%c0_166, %c0_167, %c0_168] : memref<5x84x160xbf16, #tpu.memory_space<vmem>>, vector<1x84x160xbf16>
    %252 = vector.shape_cast %251 : vector<1x84x160xbf16> to vector<84x160xbf16>
    %cst_169 = arith.constant dense<0.000000e+00> : vector<10x160xf32>
    %253 = tpu.matmul %250, %252, %cst_169 {dimension_numbers = #tpu.dot_dimension_numbers<[1], [0], [0], [1], [0, 0, 1, 1], [], []>} : vector<10x84xbf16>, vector<84x160xbf16>, vector<10x160xf32> -> vector<10x160xf32>
    %254 = arith.addf %249, %253 : vector<10x160xf32>
    %255 = vector.extract_strided_slice %248 {offsets = [1, 0], sizes = [10, 84], strides = [1, 1]} : vector<14x84xbf16> to vector<10x84xbf16>
    %c1_170 = arith.constant 1 : index
    %c0_171 = arith.constant 0 : index
    %c0_172 = arith.constant 0 : index
    %256 = vector.load %arg2[%c1_170, %c0_171, %c0_172] : memref<5x84x160xbf16, #tpu.memory_space<vmem>>, vector<1x84x160xbf16>
    %257 = vector.shape_cast %256 : vector<1x84x160xbf16> to vector<84x160xbf16>
    %cst_173 = arith.constant dense<0.000000e+00> : vector<10x160xf32>
    %258 = tpu.matmul %255, %257, %cst_173 {dimension_numbers = #tpu.dot_dimension_numbers<[1], [0], [0], [1], [0, 0, 1, 1], [], []>} : vector<10x84xbf16>, vector<84x160xbf16>, vector<10x160xf32> -> vector<10x160xf32>
    %259 = arith.addf %254, %258 : vector<10x160xf32>
    %260 = vector.extract_strided_slice %248 {offsets = [2, 0], sizes = [10, 84], strides = [1, 1]} : vector<14x84xbf16> to vector<10x84xbf16>
    %c2_174 = arith.constant 2 : index
    %c0_175 = arith.constant 0 : index
    %c0_176 = arith.constant 0 : index
    %261 = vector.load %arg2[%c2_174, %c0_175, %c0_176] : memref<5x84x160xbf16, #tpu.memory_space<vmem>>, vector<1x84x160xbf16>
    %262 = vector.shape_cast %261 : vector<1x84x160xbf16> to vector<84x160xbf16>
    %cst_177 = arith.constant dense<0.000000e+00> : vector<10x160xf32>
    %263 = tpu.matmul %260, %262, %cst_177 {dimension_numbers = #tpu.dot_dimension_numbers<[1], [0], [0], [1], [0, 0, 1, 1], [], []>} : vector<10x84xbf16>, vector<84x160xbf16>, vector<10x160xf32> -> vector<10x160xf32>
    %264 = arith.addf %259, %263 : vector<10x160xf32>
    %265 = vector.extract_strided_slice %248 {offsets = [3, 0], sizes = [10, 84], strides = [1, 1]} : vector<14x84xbf16> to vector<10x84xbf16>
    %c3_178 = arith.constant 3 : index
    %c0_179 = arith.constant 0 : index
    %c0_180 = arith.constant 0 : index
    %266 = vector.load %arg2[%c3_178, %c0_179, %c0_180] : memref<5x84x160xbf16, #tpu.memory_space<vmem>>, vector<1x84x160xbf16>
    %267 = vector.shape_cast %266 : vector<1x84x160xbf16> to vector<84x160xbf16>
    %cst_181 = arith.constant dense<0.000000e+00> : vector<10x160xf32>
    %268 = tpu.matmul %265, %267, %cst_181 {dimension_numbers = #tpu.dot_dimension_numbers<[1], [0], [0], [1], [0, 0, 1, 1], [], []>} : vector<10x84xbf16>, vector<84x160xbf16>, vector<10x160xf32> -> vector<10x160xf32>
    %269 = arith.addf %264, %268 : vector<10x160xf32>
    %270 = vector.extract_strided_slice %248 {offsets = [4, 0], sizes = [10, 84], strides = [1, 1]} : vector<14x84xbf16> to vector<10x84xbf16>
    %c4_182 = arith.constant 4 : index
    %c0_183 = arith.constant 0 : index
    %c0_184 = arith.constant 0 : index
    %271 = vector.load %arg2[%c4_182, %c0_183, %c0_184] : memref<5x84x160xbf16, #tpu.memory_space<vmem>>, vector<1x84x160xbf16>
    %272 = vector.shape_cast %271 : vector<1x84x160xbf16> to vector<84x160xbf16>
    %cst_185 = arith.constant dense<0.000000e+00> : vector<10x160xf32>
    %273 = tpu.matmul %270, %272, %cst_185 {dimension_numbers = #tpu.dot_dimension_numbers<[1], [0], [0], [1], [0, 0, 1, 1], [], []>} : vector<10x84xbf16>, vector<84x160xbf16>, vector<10x160xf32> -> vector<10x160xf32>
    %274 = arith.addf %269, %273 : vector<10x160xf32>
    %275 = vector.broadcast %0 : vector<1x160xf32> to vector<10x160xf32>
    %276 = arith.addf %274, %275 : vector<10x160xf32>
    %cst_186 = arith.constant 0.000000e+00 : f32
    %277 = vector.broadcast %cst_186 : f32 to vector<10x160xf32>
    %278 = arith.maximumf %276, %277 : vector<10x160xf32>
    %279 = vector.extract_strided_slice %278 {offsets = [0, 0], sizes = [9, 160], strides = [1, 1]} : vector<10x160xf32> to vector<9x160xf32>
    %280 = vector.extract_strided_slice %278 {offsets = [1, 0], sizes = [9, 160], strides = [1, 1]} : vector<10x160xf32> to vector<9x160xf32>
    %281 = arith.maximumf %279, %280 : vector<9x160xf32>
    %282 = vector.extract_strided_slice %281 {offsets = [0, 0], sizes = [9, 144], strides = [1, 1]} : vector<9x160xf32> to vector<9x144xf32>
    %283 = vector.extract_strided_slice %281 {offsets = [0, 16], sizes = [9, 144], strides = [1, 1]} : vector<9x160xf32> to vector<9x144xf32>
    %284 = arith.maximumf %282, %283 : vector<9x144xf32>
    %c6_187 = arith.constant 6 : index
    %c0_188 = arith.constant 0 : index
    %c0_189 = arith.constant 0 : index
    %285 = vector.load %arg4[%c6_187, %c0_188, %c0_189] : memref<8x9x144xf32, #tpu.memory_space<vmem>>, vector<1x9x144xf32>
    %286 = vector.shape_cast %285 : vector<1x9x144xf32> to vector<9x144xf32>
    %287 = vector.shape_cast %284 : vector<9x144xf32> to vector<1x9x144xf32>
    tpu.vector_store %arg4[%c6_187, %c0_188, %c0_189], %287 {strides = array<i32>} : memref<8x9x144xf32, #tpu.memory_space<vmem>>, vector<1x9x144xf32>,
    %c7 = arith.constant 7 : index
    %c0_190 = arith.constant 0 : index
    %c0_191 = arith.constant 0 : index
    %288 = vector.load %arg1[%c7, %c0_190, %c0_191] : memref<8x14x84xbf16, #tpu.memory_space<vmem>>, vector<1x14x84xbf16>
    %289 = vector.shape_cast %288 : vector<1x14x84xbf16> to vector<14x84xbf16>
    %cst_192 = arith.constant 0.000000e+00 : f32
    %290 = vector.broadcast %cst_192 : f32 to vector<10x160xf32>
    %291 = vector.extract_strided_slice %289 {offsets = [0, 0], sizes = [10, 84], strides = [1, 1]} : vector<14x84xbf16> to vector<10x84xbf16>
    %c0_193 = arith.constant 0 : index
    %c0_194 = arith.constant 0 : index
    %c0_195 = arith.constant 0 : index
    %292 = vector.load %arg2[%c0_193, %c0_194, %c0_195] : memref<5x84x160xbf16, #tpu.memory_space<vmem>>, vector<1x84x160xbf16>
    %293 = vector.shape_cast %292 : vector<1x84x160xbf16> to vector<84x160xbf16>
    %cst_196 = arith.constant dense<0.000000e+00> : vector<10x160xf32>
    %294 = tpu.matmul %291, %293, %cst_196 {dimension_numbers = #tpu.dot_dimension_numbers<[1], [0], [0], [1], [0, 0, 1, 1], [], []>} : vector<10x84xbf16>, vector<84x160xbf16>, vector<10x160xf32> -> vector<10x160xf32>
    %295 = arith.addf %290, %294 : vector<10x160xf32>
    %296 = vector.extract_strided_slice %289 {offsets = [1, 0], sizes = [10, 84], strides = [1, 1]} : vector<14x84xbf16> to vector<10x84xbf16>
    %c1_197 = arith.constant 1 : index
    %c0_198 = arith.constant 0 : index
    %c0_199 = arith.constant 0 : index
    %297 = vector.load %arg2[%c1_197, %c0_198, %c0_199] : memref<5x84x160xbf16, #tpu.memory_space<vmem>>, vector<1x84x160xbf16>
    %298 = vector.shape_cast %297 : vector<1x84x160xbf16> to vector<84x160xbf16>
    %cst_200 = arith.constant dense<0.000000e+00> : vector<10x160xf32>
    %299 = tpu.matmul %296, %298, %cst_200 {dimension_numbers = #tpu.dot_dimension_numbers<[1], [0], [0], [1], [0, 0, 1, 1], [], []>} : vector<10x84xbf16>, vector<84x160xbf16>, vector<10x160xf32> -> vector<10x160xf32>
    %300 = arith.addf %295, %299 : vector<10x160xf32>
    %301 = vector.extract_strided_slice %289 {offsets = [2, 0], sizes = [10, 84], strides = [1, 1]} : vector<14x84xbf16> to vector<10x84xbf16>
    %c2_201 = arith.constant 2 : index
    %c0_202 = arith.constant 0 : index
    %c0_203 = arith.constant 0 : index
    %302 = vector.load %arg2[%c2_201, %c0_202, %c0_203] : memref<5x84x160xbf16, #tpu.memory_space<vmem>>, vector<1x84x160xbf16>
    %303 = vector.shape_cast %302 : vector<1x84x160xbf16> to vector<84x160xbf16>
    %cst_204 = arith.constant dense<0.000000e+00> : vector<10x160xf32>
    %304 = tpu.matmul %301, %303, %cst_204 {dimension_numbers = #tpu.dot_dimension_numbers<[1], [0], [0], [1], [0, 0, 1, 1], [], []>} : vector<10x84xbf16>, vector<84x160xbf16>, vector<10x160xf32> -> vector<10x160xf32>
    %305 = arith.addf %300, %304 : vector<10x160xf32>
    %306 = vector.extract_strided_slice %289 {offsets = [3, 0], sizes = [10, 84], strides = [1, 1]} : vector<14x84xbf16> to vector<10x84xbf16>
    %c3_205 = arith.constant 3 : index
    %c0_206 = arith.constant 0 : index
    %c0_207 = arith.constant 0 : index
    %307 = vector.load %arg2[%c3_205, %c0_206, %c0_207] : memref<5x84x160xbf16, #tpu.memory_space<vmem>>, vector<1x84x160xbf16>
    %308 = vector.shape_cast %307 : vector<1x84x160xbf16> to vector<84x160xbf16>
    %cst_208 = arith.constant dense<0.000000e+00> : vector<10x160xf32>
    %309 = tpu.matmul %306, %308, %cst_208 {dimension_numbers = #tpu.dot_dimension_numbers<[1], [0], [0], [1], [0, 0, 1, 1], [], []>} : vector<10x84xbf16>, vector<84x160xbf16>, vector<10x160xf32> -> vector<10x160xf32>
    %310 = arith.addf %305, %309 : vector<10x160xf32>
    %311 = vector.extract_strided_slice %289 {offsets = [4, 0], sizes = [10, 84], strides = [1, 1]} : vector<14x84xbf16> to vector<10x84xbf16>
    %c4_209 = arith.constant 4 : index
    %c0_210 = arith.constant 0 : index
    %c0_211 = arith.constant 0 : index
    %312 = vector.load %arg2[%c4_209, %c0_210, %c0_211] : memref<5x84x160xbf16, #tpu.memory_space<vmem>>, vector<1x84x160xbf16>
    %313 = vector.shape_cast %312 : vector<1x84x160xbf16> to vector<84x160xbf16>
    %cst_212 = arith.constant dense<0.000000e+00> : vector<10x160xf32>
    %314 = tpu.matmul %311, %313, %cst_212 {dimension_numbers = #tpu.dot_dimension_numbers<[1], [0], [0], [1], [0, 0, 1, 1], [], []>} : vector<10x84xbf16>, vector<84x160xbf16>, vector<10x160xf32> -> vector<10x160xf32>
    %315 = arith.addf %310, %314 : vector<10x160xf32>
    %316 = vector.broadcast %0 : vector<1x160xf32> to vector<10x160xf32>
    %317 = arith.addf %315, %316 : vector<10x160xf32>
    %cst_213 = arith.constant 0.000000e+00 : f32
    %318 = vector.broadcast %cst_213 : f32 to vector<10x160xf32>
    %319 = arith.maximumf %317, %318 : vector<10x160xf32>
    %320 = vector.extract_strided_slice %319 {offsets = [0, 0], sizes = [9, 160], strides = [1, 1]} : vector<10x160xf32> to vector<9x160xf32>
    %321 = vector.extract_strided_slice %319 {offsets = [1, 0], sizes = [9, 160], strides = [1, 1]} : vector<10x160xf32> to vector<9x160xf32>
    %322 = arith.maximumf %320, %321 : vector<9x160xf32>
    %323 = vector.extract_strided_slice %322 {offsets = [0, 0], sizes = [9, 144], strides = [1, 1]} : vector<9x160xf32> to vector<9x144xf32>
    %324 = vector.extract_strided_slice %322 {offsets = [0, 16], sizes = [9, 144], strides = [1, 1]} : vector<9x160xf32> to vector<9x144xf32>
    %325 = arith.maximumf %323, %324 : vector<9x144xf32>
    %c7_214 = arith.constant 7 : index
    %c0_215 = arith.constant 0 : index
    %c0_216 = arith.constant 0 : index
    %326 = vector.load %arg4[%c7_214, %c0_215, %c0_216] : memref<8x9x144xf32, #tpu.memory_space<vmem>>, vector<1x9x144xf32>
    %327 = vector.shape_cast %326 : vector<1x9x144xf32> to vector<9x144xf32>
    %328 = vector.shape_cast %325 : vector<9x144xf32> to vector<1x9x144xf32>
    tpu.vector_store %arg4[%c7_214, %c0_215, %c0_216], %328 {strides = array<i32>} : memref<8x9x144xf32, #tpu.memory_space<vmem>>, vector<1x9x144xf32>,
    return
  }
  func.func @transform_0(%arg0: i32) -> (i32, i32, i32) {
    %c0_i32 = arith.constant 0 : i32
    %c0_i32_0 = arith.constant 0 : i32
    %c0_i32_1 = arith.constant 0 : i32
    return %arg0, %c0_i32, %c0_i32_0 : i32, i32, i32
  }
  func.func @transform_1(%arg0: i32) -> (i32, i32, i32) {
    %c0_i32 = arith.constant 0 : i32
    %c0_i32_0 = arith.constant 0 : i32
    %c0_i32_1 = arith.constant 0 : i32
    %c0_i32_2 = arith.constant 0 : i32
    return %c0_i32, %c0_i32_0, %c0_i32_1 : i32, i32, i32
  }
  func.func @transform_2(%arg0: i32) -> (i32, i32) {
    %c0_i32 = arith.constant 0 : i32
    %c0_i32_0 = arith.constant 0 : i32
    %c0_i32_1 = arith.constant 0 : i32
    return %c0_i32, %c0_i32_0 : i32, i32
  }
  func.func @transform_3(%arg0: i32) -> (i32, i32, i32) {
    %c0_i32 = arith.constant 0 : i32
    %c0_i32_0 = arith.constant 0 : i32
    %c0_i32_1 = arith.constant 0 : i32
    return %arg0, %c0_i32, %c0_i32_0 : i32, i32, i32
  }
}

module attributes {stable_mosaic.version = 11 : i64} {
  func.func @_mlp_kernel(%arg0: i32, %arg1: memref<8x512xbf16, #tpu.memory_space<vmem>>, %arg2: memref<512x128xbf16, #tpu.memory_space<vmem>>, %arg3: memref<1x128xf32, #tpu.memory_space<vmem>>, %arg4: memref<128x128xbf16, #tpu.memory_space<vmem>>, %arg5: memref<1x128xf32, #tpu.memory_space<vmem>>, %arg6: memref<128x128xbf16, #tpu.memory_space<vmem>>, %arg7: memref<1x128xf32, #tpu.memory_space<vmem>>, %arg8: memref<8x128xf32, #tpu.memory_space<vmem>>) attributes {dimension_semantics = [#tpu.dimension_semantics<parallel>], iteration_bounds = array<i64: 1>, scalar_prefetch = 0 : i64, scratch_operands = 0 : i64, tpu.core_type = #tpu.core_type<tc>, window_params = [{transform_indices = @transform_0, window_bounds = array<i64: 8, 512>}, {pipeline_mode = #tpu.pipeline_mode<synchronous>, transform_indices = @transform_1, window_bounds = array<i64: 512, 128>}, {pipeline_mode = #tpu.pipeline_mode<synchronous>, transform_indices = @transform_2, window_bounds = array<i64: 1, 128>}, {pipeline_mode = #tpu.pipeline_mode<synchronous>, transform_indices = @transform_3, window_bounds = array<i64: 128, 128>}, {pipeline_mode = #tpu.pipeline_mode<synchronous>, transform_indices = @transform_4, window_bounds = array<i64: 1, 128>}, {pipeline_mode = #tpu.pipeline_mode<synchronous>, transform_indices = @transform_5, window_bounds = array<i64: 128, 128>}, {pipeline_mode = #tpu.pipeline_mode<synchronous>, transform_indices = @transform_6, window_bounds = array<i64: 1, 128>}, {transform_indices = @transform_7, window_bounds = array<i64: 8, 128>}]} {
    %c0 = arith.constant 0 : index
    %c0_0 = arith.constant 0 : index
    %0 = vector.load %arg1[%c0, %c0_0] : memref<8x512xbf16, #tpu.memory_space<vmem>>, vector<8x512xbf16>
    %c0_1 = arith.constant 0 : index
    %c0_2 = arith.constant 0 : index
    %1 = vector.load %arg2[%c0_1, %c0_2] : memref<512x128xbf16, #tpu.memory_space<vmem>>, vector<512x128xbf16>
    %cst = arith.constant dense<0.000000e+00> : vector<8x128xf32>
    %2 = tpu.matmul %0, %1, %cst {dimension_numbers = #tpu.dot_dimension_numbers<[1], [0], [0], [1], [0, 0, 1, 1], [], []>} : vector<8x512xbf16>, vector<512x128xbf16>, vector<8x128xf32> -> vector<8x128xf32>
    %c0_3 = arith.constant 0 : index
    %c0_4 = arith.constant 0 : index
    %3 = vector.load %arg3[%c0_3, %c0_4] : memref<1x128xf32, #tpu.memory_space<vmem>>, vector<1x128xf32>
    %4 = vector.broadcast %3 : vector<1x128xf32> to vector<8x128xf32>
    %5 = arith.addf %2, %4 : vector<8x128xf32>
    %cst_5 = arith.constant 0.000000e+00 : f32
    %6 = vector.broadcast %cst_5 : f32 to vector<8x128xf32>
    %7 = arith.maximumf %5, %6 : vector<8x128xf32>
    %8 = arith.truncf %7 : vector<8x128xf32> to vector<8x128xbf16>
    %c0_6 = arith.constant 0 : index
    %c0_7 = arith.constant 0 : index
    %9 = vector.load %arg4[%c0_6, %c0_7] : memref<128x128xbf16, #tpu.memory_space<vmem>>, vector<128x128xbf16>
    %cst_8 = arith.constant dense<0.000000e+00> : vector<8x128xf32>
    %10 = tpu.matmul %8, %9, %cst_8 {dimension_numbers = #tpu.dot_dimension_numbers<[1], [0], [0], [1], [0, 0, 1, 1], [], []>} : vector<8x128xbf16>, vector<128x128xbf16>, vector<8x128xf32> -> vector<8x128xf32>
    %c0_9 = arith.constant 0 : index
    %c0_10 = arith.constant 0 : index
    %11 = vector.load %arg5[%c0_9, %c0_10] : memref<1x128xf32, #tpu.memory_space<vmem>>, vector<1x128xf32>
    %12 = vector.broadcast %11 : vector<1x128xf32> to vector<8x128xf32>
    %13 = arith.addf %10, %12 : vector<8x128xf32>
    %cst_11 = arith.constant 0.000000e+00 : f32
    %14 = vector.broadcast %cst_11 : f32 to vector<8x128xf32>
    %15 = arith.maximumf %13, %14 : vector<8x128xf32>
    %16 = arith.truncf %15 : vector<8x128xf32> to vector<8x128xbf16>
    %c0_12 = arith.constant 0 : index
    %c0_13 = arith.constant 0 : index
    %17 = vector.load %arg6[%c0_12, %c0_13] : memref<128x128xbf16, #tpu.memory_space<vmem>>, vector<128x128xbf16>
    %cst_14 = arith.constant dense<0.000000e+00> : vector<8x128xf32>
    %18 = tpu.matmul %16, %17, %cst_14 {dimension_numbers = #tpu.dot_dimension_numbers<[1], [0], [0], [1], [0, 0, 1, 1], [], []>} : vector<8x128xbf16>, vector<128x128xbf16>, vector<8x128xf32> -> vector<8x128xf32>
    %c0_15 = arith.constant 0 : index
    %c0_16 = arith.constant 0 : index
    %19 = vector.load %arg7[%c0_15, %c0_16] : memref<1x128xf32, #tpu.memory_space<vmem>>, vector<1x128xf32>
    %20 = vector.broadcast %19 : vector<1x128xf32> to vector<8x128xf32>
    %21 = arith.addf %18, %20 : vector<8x128xf32>
    %c0_17 = arith.constant 0 : index
    %c0_18 = arith.constant 0 : index
    %22 = vector.load %arg8[%c0_17, %c0_18] : memref<8x128xf32, #tpu.memory_space<vmem>>, vector<8x128xf32>
    tpu.vector_store %arg8[%c0_17, %c0_18], %21 {strides = array<i32>} : memref<8x128xf32, #tpu.memory_space<vmem>>, vector<8x128xf32>,
    return
  }
  func.func @transform_0(%arg0: i32) -> (i32, i32) {
    %c0_i32 = arith.constant 0 : i32
    %c0_i32_0 = arith.constant 0 : i32
    return %arg0, %c0_i32 : i32, i32
  }
  func.func @transform_1(%arg0: i32) -> (i32, i32) {
    %c0_i32 = arith.constant 0 : i32
    %c0_i32_0 = arith.constant 0 : i32
    %c0_i32_1 = arith.constant 0 : i32
    return %c0_i32, %c0_i32_0 : i32, i32
  }
  func.func @transform_2(%arg0: i32) -> (i32, i32) {
    %c0_i32 = arith.constant 0 : i32
    %c0_i32_0 = arith.constant 0 : i32
    %c0_i32_1 = arith.constant 0 : i32
    return %c0_i32, %c0_i32_0 : i32, i32
  }
  func.func @transform_3(%arg0: i32) -> (i32, i32) {
    %c0_i32 = arith.constant 0 : i32
    %c0_i32_0 = arith.constant 0 : i32
    %c0_i32_1 = arith.constant 0 : i32
    return %c0_i32, %c0_i32_0 : i32, i32
  }
  func.func @transform_4(%arg0: i32) -> (i32, i32) {
    %c0_i32 = arith.constant 0 : i32
    %c0_i32_0 = arith.constant 0 : i32
    %c0_i32_1 = arith.constant 0 : i32
    return %c0_i32, %c0_i32_0 : i32, i32
  }
  func.func @transform_5(%arg0: i32) -> (i32, i32) {
    %c0_i32 = arith.constant 0 : i32
    %c0_i32_0 = arith.constant 0 : i32
    %c0_i32_1 = arith.constant 0 : i32
    return %c0_i32, %c0_i32_0 : i32, i32
  }
  func.func @transform_6(%arg0: i32) -> (i32, i32) {
    %c0_i32 = arith.constant 0 : i32
    %c0_i32_0 = arith.constant 0 : i32
    %c0_i32_1 = arith.constant 0 : i32
    return %c0_i32, %c0_i32_0 : i32, i32
  }
  func.func @transform_7(%arg0: i32) -> (i32, i32) {
    %c0_i32 = arith.constant 0 : i32
    %c0_i32_0 = arith.constant 0 : i32
    return %arg0, %c0_i32 : i32, i32
  }
}

</mosaic_0001>

<llo_original>
// kernel: lenet_forward.3
$region0: #{lenet_forward.3}
  #allocation0 [shape = 'u32[]', space=smem, size = 0x4, offset = 0x4, fixed_abs, tag = 'smem constant byte address 0x4 - core index']
  #allocation1 [shape = 'u32[144,128]{1,0:T(1,128)}', space=vmem, size = 0x12000, scoped, tag = 'internal scratch']
  %s0 = inlined_call_operand.vmem [shape: bf16[8,32,32], index: 0, kind: input, shape index: {}]
  %s1 = inlined_call_operand.vmem [shape: bf16[5,32,168], index: 1, kind: input, shape index: {}]
  %s2 = inlined_call_operand.vmem [shape: f32[1,168], index: 2, kind: input, shape index: {}]
  %s3 = inlined_call_operand.vmem [shape: f32[8,27,162], index: 3, kind: output, shape index: {}]
  %s4 = sld [smem:[#allocation0]]
  $region22: #{lenet_forward.3} parent=0
    _
  %s6 = ssub.s32 1, %s4
  %s7 = scalar_select 0, %s6, %s4
  // Predicated region
  $region2: #{lenet_forward.3} parent=0 // pred_check
    _
  $region3: #{lenet_forward.3} parent=0 // pred_check_branch
    %9 = sbr.rel (0) target = $region5
  $region4: #{lenet_forward.3} parent=0 // pred_region
    _
  $region5: #{lenet_forward.3} parent=0 // pred_fallthru
    _
  // Predicated region
  $region6: #{lenet_forward.3} parent=0 // pred_check
    _
  $region7: #{lenet_forward.3} parent=0 // pred_check_branch
    %11 = sbr.rel (0) target = $region9
  $region8: #{lenet_forward.3} parent=0 // pred_region
    _
  $region9: #{lenet_forward.3} parent=0 // pred_fallthru
    _
  // Predicated region
  $region10: #{lenet_forward.3} parent=0 // pred_check
    _
  $region11: #{lenet_forward.3} parent=0 // pred_check_branch
    %13 = sbr.rel (0) target = $region13
  $region12: #{lenet_forward.3} parent=0 // pred_region
    _
  $region13: #{lenet_forward.3} parent=0 // pred_fallthru
    _
  %v15 = vld [vmem:[%s2] sm:$0x3]
  %v16 = vld [vmem:[%s0] sm:$0xf]
  %v17 = vld [vmem:[%s0 + $0x4] sm:$0xf]
  %v18 = vld [vmem:[%s0 + $0x8] sm:$0xf]
  %v19 = vld [vmem:[%s0 + $0xc] sm:$0xf]
  %v20 = vld [vmem:[%s1] sm:$0xff]
  %v21 = vld [vmem:[%s1 + $0x8] sm:$0xff]
  %v22 = vld [vmem:[%s1 + $0x10] sm:$0xff]
  %v23 = vld [vmem:[%s1 + $0x18] sm:$0xff]
  %s24 = scalar_lea.vmem %s1, 32
  %v25 = vld [vmem:[%s24] sm:$0xff]
  %v26 = vld [vmem:[%s24 + $0x8] sm:$0xff]
  %v27 = vld [vmem:[%s24 + $0x10] sm:$0xff]
  %v28 = vld [vmem:[%s24 + $0x18] sm:$0xff]
  %v33 = vunpack.c.l.b16 %v16
  %v34 = vunpack.c.l.b16 %v17
  %v35 = vunpack.c.l.b16 %v18
  %v36 = vunpack.c.l.b16 %v19
  %v37 = vpack.c.b16 %v34, %v33
  %v38 = vpack.c.b16 %v36, %v35
  %vm39 = vsmask.f32 7424
  %v41 = vshrl.u32 %v37, 16
  %v43 = vshll.u32 %v37, 16
  %v45 = vrot.slane %v43, 1
  %v46 = vor.u32 %v41, %v45
  %v48 = vshll.u32 %v38, 16
  %v50 = vrot.slane %v48, 1
  %v51 = vsel %vm39, %v46, %v50
  %v52 = vshrl.u32 %v38, 16
  %v54 = vor.u32 %v52, %v50
  %v59 = vunpack.c.l.b16 %v25
  %v60 = vunpack.c.h.b16 %v25
  %v61 = vunpack.c.l.b16 %v26
  %v62 = vunpack.c.h.b16 %v26
  %v63 = vunpack.c.l.b16 %v27
  %v64 = vunpack.c.h.b16 %v27
  %v65 = vunpack.c.l.b16 %v28
  %v66 = vunpack.c.h.b16 %v28
  %v67 = vpack.c.b16 %v61, %v59
  %v68 = vpack.c.b16 %v62, %v60
  %v69 = vpack.c.b16 %v65, %v63
  %v70 = vpack.c.b16 %v66, %v64
  %vm75 = vcmask 261120
  %v77 = vsel %vm75, %v51, 0
  %v80 = vsel %vm75, %v54, 0
  %82 = vmatprep.subr.bf16.mxu0 %v68
  %83 = vmatpush1.bf16.msra.mxu0 %v67
  %84 = vmatprep.subr.bf16.mxu0 %v70
  %85 = vmatpush1.bf16.msra.mxu0 %v69
  %86 = vmatprep.subr.bf16.mxu0 0
  %87 = vmatpush1.bf16.msra.mxu0 0
  %88 = vmatprep.subr.bf16.mxu0 0
  %89 = vmatpush1.bf16.msra.mxu0 0
  %90 = vmatprep.subr.bf16.mxu0 0
  %91 = vmatpush1.bf16.msra.mxu0 0
  %92 = vmatprep.subr.bf16.mxu0 0
  %93 = vmatpush1.bf16.msra.mxu0 0
  %94 = vmatprep.subr.bf16.mxu0 0
  %95 = vmatpush1.bf16.msra.mxu0 0
  %96 = vmatprep.subr.bf16.mxu0 0
  %97 = vmatpush1.bf16.msra.mxu0 0
  %98 = vmatprep.subr.bf16.mxu0 0
  %99 = vmatpush1.bf16.msra.mxu0 0
  %100 = vmatprep.subr.bf16.mxu0 0
  %101 = vmatpush1.bf16.msra.mxu0 0
  %102 = vmatprep.subr.bf16.mxu0 0
  %103 = vmatpush1.bf16.msra.mxu0 0
  %104 = vmatprep.subr.bf16.mxu0 0
  %105 = vmatpush1.bf16.msra.mxu0 0
  %106 = vmatprep.subr.bf16.mxu0 0
  %107 = vmatpush1.bf16.msra.mxu0 0
  %108 = vmatprep.subr.bf16.mxu0 0
  %109 = vmatpush1.bf16.msra.mxu0 0
  %110 = vmatprep.subr.bf16.mxu0 0
  %111 = vmatpush1.bf16.msra.mxu0 0
  %112 = vmatprep.subr.bf16.mxu0 0
  %113 = vmatpush1.bf16.msra.mxu0 0
  %114 = vmatprep.mubr.bf16.mxu0 0
  %115 = vmatmul.mubr.bf16.gmra.mrb[0].mxu0 %v77
  %v116 = vpop.f32.mrb[0].mxu0
  %v117 = vadd.f32 0.0, %v116
  %v118 = vpop.f32.mrb[0].mxu0
  %v119 = vadd.f32 0.0, %v118
  %v120 = vpop.f32.mrb[0].mxu0
  %v121 = vadd.f32 0.0, %v120
  %v122 = vpop.f32.mrb[0].mxu0
  %v123 = vadd.f32 0.0, %v122
  %124 = vmatprep.mubr.bf16.mxu0 0
  %125 = vmatmul.mubr.bf16.gmra.mrb[0].mxu0 %v80
  %v126 = vpop.f32.mrb[0].mxu0
  %v127 = vadd.f32 0.0, %v126
  %v128 = vpop.f32.mrb[0].mxu0
  %v129 = vadd.f32 0.0, %v128
  %v130 = vpop.f32.mrb[0].mxu0
  %v131 = vadd.f32 0.0, %v130
  %v132 = vpop.f32.mrb[0].mxu0
  %v133 = vadd.f32 0.0, %v132
  %134 = vdwg.mxu0
  %v139 = vunpack.c.l.b16 %v20
  %v140 = vunpack.c.h.b16 %v20
  %v141 = vunpack.c.l.b16 %v21
  %v142 = vunpack.c.h.b16 %v21
  %v143 = vunpack.c.l.b16 %v22
  %v144 = vunpack.c.h.b16 %v22
  %v145 = vunpack.c.l.b16 %v23
  %v146 = vunpack.c.h.b16 %v23
  %v147 = vpack.c.b16 %v141, %v139
  %v148 = vpack.c.b16 %v142, %v140
  %v149 = vpack.c.b16 %v145, %v143
  %v150 = vpack.c.b16 %v146, %v144
  %v155 = vsel %vm75, %v37, 0
  %v157 = vsel %vm75, %v38, 0
  %159 = vmatprep.subr.bf16.mxu0 %v148
  %160 = vmatpush1.bf16.msra.mxu0 %v147
  %161 = vmatprep.subr.bf16.mxu0 %v150
  %162 = vmatpush1.bf16.msra.mxu0 %v149
  %163 = vmatprep.subr.bf16.mxu0 0
  %164 = vmatpush1.bf16.msra.mxu0 0
  %165 = vmatprep.subr.bf16.mxu0 0
  %166 = vmatpush1.bf16.msra.mxu0 0
  %167 = vmatprep.subr.bf16.mxu0 0
  %168 = vmatpush1.bf16.msra.mxu0 0
  %169 = vmatprep.subr.bf16.mxu0 0
  %170 = vmatpush1.bf16.msra.mxu0 0
  %171 = vmatprep.subr.bf16.mxu0 0
  %172 = vmatpush1.bf16.msra.mxu0 0
  %173 = vmatprep.subr.bf16.mxu0 0
  %174 = vmatpush1.bf16.msra.mxu0 0
  %175 = vmatprep.subr.bf16.mxu0 0
  %176 = vmatpush1.bf16.msra.mxu0 0
  %177 = vmatprep.subr.bf16.mxu0 0
  %178 = vmatpush1.bf16.msra.mxu0 0
  %179 = vmatprep.subr.bf16.mxu0 0
  %180 = vmatpush1.bf16.msra.mxu0 0
  %181 = vmatprep.subr.bf16.mxu0 0
  %182 = vmatpush1.bf16.msra.mxu0 0
  %183 = vmatprep.subr.bf16.mxu0 0
  %184 = vmatpush1.bf16.msra.mxu0 0
  %185 = vmatprep.subr.bf16.mxu0 0
  %186 = vmatpush1.bf16.msra.mxu0 0
  %187 = vmatprep.subr.bf16.mxu0 0
  %188 = vmatpush1.bf16.msra.mxu0 0
  %189 = vmatprep.subr.bf16.mxu0 0
  %190 = vmatpush1.bf16.msra.mxu0 0
  %191 = vmatprep.mubr.bf16.mxu0 0
  %192 = vmatmul.mubr.bf16.gmra.mrb[0].mxu0 %v155
  %v193 = vpop.f32.mrb[0].mxu0
  %v194 = vadd.f32 %v117, %v193
  %v195 = vpop.f32.mrb[0].mxu0
  %v196 = vadd.f32 %v119, %v195
  %v197 = vpop.f32.mrb[0].mxu0
  %v198 = vadd.f32 %v121, %v197
  %v199 = vpop.f32.mrb[0].mxu0
  %v200 = vadd.f32 %v123, %v199
  %201 = vmatprep.mubr.bf16.mxu0 0
  %202 = vmatmul.mubr.bf16.gmra.mrb[0].mxu0 %v157
  %v203 = vpop.f32.mrb[0].mxu0
  %v204 = vadd.f32 %v127, %v203
  %v205 = vpop.f32.mrb[0].mxu0
  %v206 = vadd.f32 %v129, %v205
  %v207 = vpop.f32.mrb[0].mxu0
  %v208 = vadd.f32 %v131, %v207
  %v209 = vpop.f32.mrb[0].mxu0
  %v210 = vadd.f32 %v133, %v209
  %211 = vdwg.mxu0
  %s212 = scalar_lea.vmem %s1, 64
  %v213 = vld [vmem:[%s212] sm:$0xff]
  %v214 = vld [vmem:[%s212 + $0x8] sm:$0xff]
  %v215 = vld [vmem:[%s212 + $0x10] sm:$0xff]
  %v216 = vld [vmem:[%s212 + $0x18] sm:$0xff]
  %vm217 = vcmask 1046528
  %v218 = vrot.slane %v37, 1
  %v219 = vrot.slane %v38, 1
  %v220 = vsel %vm217, %v218, %v219
  %v225 = vunpack.c.l.b16 %v213
  %v226 = vunpack.c.h.b16 %v213
  %v227 = vunpack.c.l.b16 %v214
  %v228 = vunpack.c.h.b16 %v214
  %v229 = vunpack.c.l.b16 %v215
  %v230 = vunpack.c.h.b16 %v215
  %v231 = vunpack.c.l.b16 %v216
  %v232 = vunpack.c.h.b16 %v216
  %v233 = vpack.c.b16 %v227, %v225
  %v234 = vpack.c.b16 %v228, %v226
  %v235 = vpack.c.b16 %v231, %v229
  %v236 = vpack.c.b16 %v232, %v230
  %v242 = vsel %vm75, %v220, 0
  %v245 = vsel %vm75, %v219, 0
  %247 = vmatprep.subr.bf16.mxu0 %v234
  %248 = vmatpush1.bf16.msra.mxu0 %v233
  %249 = vmatprep.subr.bf16.mxu0 %v236
  %250 = vmatpush1.bf16.msra.mxu0 %v235
  %251 = vmatprep.subr.bf16.mxu0 0
  %252 = vmatpush1.bf16.msra.mxu0 0
  %253 = vmatprep.subr.bf16.mxu0 0
  %254 = vmatpush1.bf16.msra.mxu0 0
  %255 = vmatprep.subr.bf16.mxu0 0
  %256 = vmatpush1.bf16.msra.mxu0 0
  %257 = vmatprep.subr.bf16.mxu0 0
  %258 = vmatpush1.bf16.msra.mxu0 0
  %259 = vmatprep.subr.bf16.mxu0 0
  %260 = vmatpush1.bf16.msra.mxu0 0
  %261 = vmatprep.subr.bf16.mxu0 0
  %262 = vmatpush1.bf16.msra.mxu0 0
  %263 = vmatprep.subr.bf16.mxu0 0
  %264 = vmatpush1.bf16.msra.mxu0 0
  %265 = vmatprep.subr.bf16.mxu0 0
  %266 = vmatpush1.bf16.msra.mxu0 0
  %267 = vmatprep.subr.bf16.mxu0 0
  %268 = vmatpush1.bf16.msra.mxu0 0
  %269 = vmatprep.subr.bf16.mxu0 0
  %270 = vmatpush1.bf16.msra.mxu0 0
  %271 = vmatprep.subr.bf16.mxu0 0
  %272 = vmatpush1.bf16.msra.mxu0 0
  %273 = vmatprep.subr.bf16.mxu0 0
  %274 = vmatpush1.bf16.msra.mxu0 0
  %275 = vmatprep.subr.bf16.mxu0 0
  %276 = vmatpush1.bf16.msra.mxu0 0
  %277 = vmatprep.subr.bf16.mxu0 0
  %278 = vmatpush1.bf16.msra.mxu0 0
  %279 = vmatprep.mubr.bf16.mxu0 0
  %280 = vmatmul.mubr.bf16.gmra.mrb[0].mxu0 %v242
  %v281 = vpop.f32.mrb[0].mxu0
  %v282 = vadd.f32 0.0, %v281
  %v283 = vpop.f32.mrb[0].mxu0
  %v284 = vadd.f32 0.0, %v283
  %v285 = vpop.f32.mrb[0].mxu0
  %v286 = vadd.f32 0.0, %v285
  %v287 = vpop.f32.mrb[0].mxu0
  %v288 = vadd.f32 0.0, %v287
  %289 = vmatprep.mubr.bf16.mxu0 0
  %290 = vmatmul.mubr.bf16.gmra.mrb[0].mxu0 %v245
  %v291 = vpop.f32.mrb[0].mxu0
  %v292 = vadd.f32 0.0, %v291
  %v293 = vpop.f32.mrb[0].mxu0
  %v294 = vadd.f32 0.0, %v293
  %v295 = vpop.f32.mrb[0].mxu0
  %v296 = vadd.f32 0.0, %v295
  %v297 = vpop.f32.mrb[0].mxu0
  %v298 = vadd.f32 0.0, %v297
  %299 = vdwg.mxu0
  %v300 = vadd.f32 %v194, %v282
  %v301 = vadd.f32 %v196, %v284
  %v302 = vadd.f32 %v198, %v286
  %v303 = vadd.f32 %v200, %v288
  %v304 = vadd.f32 %v204, %v292
  %v305 = vadd.f32 %v206, %v294
  %v306 = vadd.f32 %v208, %v296
  %v307 = vadd.f32 %v210, %v298
  %s308 = scalar_lea.vmem %s1, 96
  %v309 = vld [vmem:[%s308] sm:$0xff]
  %v310 = vld [vmem:[%s308 + $0x8] sm:$0xff]
  %v311 = vld [vmem:[%s308 + $0x10] sm:$0xff]
  %v312 = vld [vmem:[%s308 + $0x18] sm:$0xff]
  %vm313 = vsmask.f32 6400
  %v314 = vrot.slane %v41, 1
  %v315 = vrot.slane %v43, 2
  %v316 = vor.u32 %v314, %v315
  %v317 = vrot.slane %v52, 1
  %v318 = vrot.slane %v48, 2
  %v319 = vor.u32 %v317, %v318
  %v320 = vsel %vm313, %v316, %v319
  %v325 = vunpack.c.l.b16 %v309
  %v326 = vunpack.c.h.b16 %v309
  %v327 = vunpack.c.l.b16 %v310
  %v328 = vunpack.c.h.b16 %v310
  %v329 = vunpack.c.l.b16 %v311
  %v330 = vunpack.c.h.b16 %v311
  %v331 = vunpack.c.l.b16 %v312
  %v332 = vunpack.c.h.b16 %v312
  %v333 = vpack.c.b16 %v327, %v325
  %v334 = vpack.c.b16 %v328, %v326
  %v335 = vpack.c.b16 %v331, %v329
  %v336 = vpack.c.b16 %v332, %v330
  %v342 = vsel %vm75, %v320, 0
  %v345 = vsel %vm75, %v319, 0
  %347 = vmatprep.subr.bf16.mxu0 %v334
  %348 = vmatpush1.bf16.msra.mxu0 %v333
  %349 = vmatprep.subr.bf16.mxu0 %v336
  %350 = vmatpush1.bf16.msra.mxu0 %v335
  %351 = vmatprep.subr.bf16.mxu0 0
  %352 = vmatpush1.bf16.msra.mxu0 0
  %353 = vmatprep.subr.bf16.mxu0 0
  %354 = vmatpush1.bf16.msra.mxu0 0
  %355 = vmatprep.subr.bf16.mxu0 0
  %356 = vmatpush1.bf16.msra.mxu0 0
  %357 = vmatprep.subr.bf16.mxu0 0
  %358 = vmatpush1.bf16.msra.mxu0 0
  %359 = vmatprep.subr.bf16.mxu0 0
  %360 = vmatpush1.bf16.msra.mxu0 0
  %361 = vmatprep.subr.bf16.mxu0 0
  %362 = vmatpush1.bf16.msra.mxu0 0
  %363 = vmatprep.subr.bf16.mxu0 0
  %364 = vmatpush1.bf16.msra.mxu0 0
  %365 = vmatprep.subr.bf16.mxu0 0
  %366 = vmatpush1.bf16.msra.mxu0 0
  %367 = vmatprep.subr.bf16.mxu0 0
  %368 = vmatpush1.bf16.msra.mxu0 0
  %369 = vmatprep.subr.bf16.mxu0 0
  %370 = vmatpush1.bf16.msra.mxu0 0
  %371 = vmatprep.subr.bf16.mxu0 0
  %372 = vmatpush1.bf16.msra.mxu0 0
  %373 = vmatprep.subr.bf16.mxu0 0
  %374 = vmatpush1.bf16.msra.mxu0 0
  %375 = vmatprep.subr.bf16.mxu0 0
  %376 = vmatpush1.bf16.msra.mxu0 0
  %377 = vmatprep.subr.bf16.mxu0 0
  %378 = vmatpush1.bf16.msra.mxu0 0
  %379 = vmatprep.mubr.bf16.mxu0 0
  %380 = vmatmul.mubr.bf16.gmra.mrb[0].mxu0 %v342
  %v381 = vpop.f32.mrb[0].mxu0
  %v382 = vadd.f32 0.0, %v381
  %v383 = vpop.f32.mrb[0].mxu0
  %v384 = vadd.f32 0.0, %v383
  %v385 = vpop.f32.mrb[0].mxu0
  %v386 = vadd.f32 0.0, %v385
  %v387 = vpop.f32.mrb[0].mxu0
  %v388 = vadd.f32 0.0, %v387
  %389 = vmatprep.mubr.bf16.mxu0 0
  %390 = vmatmul.mubr.bf16.gmra.mrb[0].mxu0 %v345
  %v391 = vpop.f32.mrb[0].mxu0
  %v392 = vadd.f32 0.0, %v391
  %v393 = vpop.f32.mrb[0].mxu0
  %v394 = vadd.f32 0.0, %v393
  %v395 = vpop.f32.mrb[0].mxu0
  %v396 = vadd.f32 0.0, %v395
  %v397 = vpop.f32.mrb[0].mxu0
  %v398 = vadd.f32 0.0, %v397
  %399 = vdwg.mxu0
  %v400 = vadd.f32 %v300, %v382
  %v401 = vadd.f32 %v301, %v384
  %v402 = vadd.f32 %v302, %v386
  %v403 = vadd.f32 %v303, %v388
  %v404 = vadd.f32 %v304, %v392
  %v405 = vadd.f32 %v305, %v394
  %v406 = vadd.f32 %v306, %v396
  %v407 = vadd.f32 %v307, %v398
  %s408 = scalar_lea.vmem %s1, 128
  %v409 = vld [vmem:[%s408] sm:$0xff]
  %v410 = vld [vmem:[%s408 + $0x8] sm:$0xff]
  %v411 = vld [vmem:[%s408 + $0x10] sm:$0xff]
  %v412 = vld [vmem:[%s408 + $0x18] sm:$0xff]
  %vm413 = vcmask 1045504
  %v414 = vrot.slane %v37, 2
  %v415 = vrot.slane %v38, 2
  %v416 = vsel %vm413, %v414, %v415
  %v421 = vunpack.c.l.b16 %v409
  %v422 = vunpack.c.h.b16 %v409
  %v423 = vunpack.c.l.b16 %v410
  %v424 = vunpack.c.h.b16 %v410
  %v425 = vunpack.c.l.b16 %v411
  %v426 = vunpack.c.h.b16 %v411
  %v427 = vunpack.c.l.b16 %v412
  %v428 = vunpack.c.h.b16 %v412
  %v429 = vpack.c.b16 %v423, %v421
  %v430 = vpack.c.b16 %v424, %v422
  %v431 = vpack.c.b16 %v427, %v425
  %v432 = vpack.c.b16 %v428, %v426
  %v438 = vsel %vm75, %v416, 0
  %v441 = vsel %vm75, %v415, 0
  %443 = vmatprep.subr.bf16.mxu0 %v430
  %444 = vmatpush1.bf16.msra.mxu0 %v429
  %445 = vmatprep.subr.bf16.mxu0 %v432
  %446 = vmatpush1.bf16.msra.mxu0 %v431
  %447 = vmatprep.subr.bf16.mxu0 0
  %448 = vmatpush1.bf16.msra.mxu0 0
  %449 = vmatprep.subr.bf16.mxu0 0
  %450 = vmatpush1.bf16.msra.mxu0 0
  %451 = vmatprep.subr.bf16.mxu0 0
  %452 = vmatpush1.bf16.msra.mxu0 0
  %453 = vmatprep.subr.bf16.mxu0 0
  %454 = vmatpush1.bf16.msra.mxu0 0
  %455 = vmatprep.subr.bf16.mxu0 0
  %456 = vmatpush1.bf16.msra.mxu0 0
  %457 = vmatprep.subr.bf16.mxu0 0
  %458 = vmatpush1.bf16.msra.mxu0 0
  %459 = vmatprep.subr.bf16.mxu0 0
  %460 = vmatpush1.bf16.msra.mxu0 0
  %461 = vmatprep.subr.bf16.mxu0 0
  %462 = vmatpush1.bf16.msra.mxu0 0
  %463 = vmatprep.subr.bf16.mxu0 0
  %464 = vmatpush1.bf16.msra.mxu0 0
  %465 = vmatprep.subr.bf16.mxu0 0
  %466 = vmatpush1.bf16.msra.mxu0 0
  %467 = vmatprep.subr.bf16.mxu0 0
  %468 = vmatpush1.bf16.msra.mxu0 0
  %469 = vmatprep.subr.bf16.mxu0 0
  %470 = vmatpush1.bf16.msra.mxu0 0
  %471 = vmatprep.subr.bf16.mxu0 0
  %472 = vmatpush1.bf16.msra.mxu0 0
  %473 = vmatprep.subr.bf16.mxu0 0
  %474 = vmatpush1.bf16.msra.mxu0 0
  %475 = vmatprep.mubr.bf16.mxu0 0
  %476 = vmatmul.mubr.bf16.gmra.mrb[0].mxu0 %v438
  %v477 = vpop.f32.mrb[0].mxu0
  %v478 = vadd.f32 0.0, %v477
  %v479 = vpop.f32.mrb[0].mxu0
  %v480 = vadd.f32 0.0, %v479
  %v481 = vpop.f32.mrb[0].mxu0
  %v482 = vadd.f32 0.0, %v481
  %v483 = vpop.f32.mrb[0].mxu0
  %v484 = vadd.f32 0.0, %v483
  %485 = vmatprep.mubr.bf16.mxu0 0
  %486 = vmatmul.mubr.bf16.gmra.mrb[0].mxu0 %v441
  %v487 = vpop.f32.mrb[0].mxu0
  %v488 = vadd.f32 0.0, %v487
  %v489 = vpop.f32.mrb[0].mxu0
  %v490 = vadd.f32 0.0, %v489
  %v491 = vpop.f32.mrb[0].mxu0
  %v492 = vadd.f32 0.0, %v491
  %v493 = vpop.f32.mrb[0].mxu0
  %v494 = vadd.f32 0.0, %v493
  %495 = vdwg.mxu0
  %v496 = vadd.f32 %v400, %v478
  %v497 = vadd.f32 %v401, %v480
  %v498 = vadd.f32 %v402, %v482
  %v499 = vadd.f32 %v403, %v484
  %v500 = vadd.f32 %v404, %v488
  %v501 = vadd.f32 %v405, %v490
  %v502 = vadd.f32 %v406, %v492
  %v503 = vadd.f32 %v407, %v494
  %v505 = vlaneseq
  %v506 = vshrl.u32 %v505, 7
  %v507 = vsub.s32 0, %v506
  %v508 = vrot.slane %v15, %v507
  %v509 = vlaneseq
  %v510 = vshrl.u32 %v509, 7
  %v511 = vsub.s32 1, %v510
  %v512 = vrot.slane %v15, %v511
  %v515 = vadd.f32 %v496, %v508
  %v516 = vadd.f32 %v497, %v512
  %v517 = vadd.f32 %v498, %v508
  %v518 = vadd.f32 %v499, %v512
  %v519 = vadd.f32 %v500, %v508
  %v520 = vadd.f32 %v501, %v512
  %v521 = vadd.f32 %v502, %v508
  %v522 = vadd.f32 %v503, %v512
  %v523 = vmax.f32 %v515, 0.0
  %v524 = vmax.f32 %v516, 0.0
  %v525 = vmax.f32 %v517, 0.0
  %v526 = vmax.f32 %v518, 0.0
  %v527 = vmax.f32 %v519, 0.0
  %v528 = vmax.f32 %v520, 0.0
  %v529 = vmax.f32 %v521, 0.0
  %v530 = vmax.f32 %v522, 0.0
  %vm539 = vcmask 1046528
  %v540 = vrot.slane %v523, 1
  %v541 = vrot.slane %v525, 1
  %v542 = vsel %vm539, %v540, %v541
  %v543 = vrot.slane %v524, 1
  %v544 = vrot.slane %v526, 1
  %v545 = vsel %vm539, %v543, %v544
  %v546 = vrot.slane %v527, 1
  %v547 = vsel %vm539, %v541, %v546
  %v548 = vrot.slane %v528, 1
  %v549 = vsel %vm539, %v544, %v548
  %v550 = vrot.slane %v529, 1
  %v551 = vsel %vm539, %v546, %v550
  %v552 = vrot.slane %v530, 1
  %v553 = vsel %vm539, %v548, %v552
  %v562 = vmax.f32 %v523, %v542
  %v563 = vmax.f32 %v524, %v545
  %v564 = vmax.f32 %v525, %v547
  %v565 = vmax.f32 %v526, %v549
  %v566 = vmax.f32 %v527, %v551
  %v567 = vmax.f32 %v528, %v553
  %v568 = vmax.f32 %v529, %v550
  %v569 = vmax.f32 %v530, %v552
  %578 = vrot.lane.b32.xlu0 %v562, 122
  %v579 = vpop.permute.xlu0 %578
  %580 = vrot.lane.b32.xlu0 %v563, 122
  %v581 = vpop.permute.xlu0 %580
  %582 = vrot.lane.b32.xlu0 %v564, 122
  %v583 = vpop.permute.xlu0 %582
  %584 = vrot.lane.b32.xlu0 %v565, 122
  %v585 = vpop.permute.xlu0 %584
  %586 = vrot.lane.b32.xlu0 %v566, 122
  %v587 = vpop.permute.xlu0 %586
  %588 = vrot.lane.b32.xlu0 %v567, 122
  %v589 = vpop.permute.xlu0 %588
  %590 = vrot.lane.b32.xlu0 %v568, 122
  %v591 = vpop.permute.xlu0 %590
  %592 = vrot.lane.b32.xlu0 %v569, 122
  %v593 = vpop.permute.xlu0 %592
  %vm594 = vcmask 998400
  %v595 = vsel %vm594, %v579, %v581
  %v596 = vsel %vm594, %v583, %v585
  %v597 = vsel %vm594, %v587, %v589
  %v598 = vsel %vm594, %v591, %v593
  %v607 = vmax.f32 %v562, %v595
  %v608 = vmax.f32 %v563, %v581
  %v609 = vmax.f32 %v564, %v596
  %v610 = vmax.f32 %v565, %v585
  %v611 = vmax.f32 %v566, %v597
  %v612 = vmax.f32 %v567, %v589
  %v613 = vmax.f32 %v568, %v598
  %v614 = vmax.f32 %v569, %v593
  %615 = vst [vmem:[%s3] sm:$0xff] %v607
  %vm616 = vcmask 277504
  %617 = vst.msk [vmem:[%s3 + $0x8] sm:$0xff] %vm616, %v608
  %618 = vst [vmem:[%s3 + $0x10] sm:$0xff] %v609
  %619 = vst.msk [vmem:[%s3 + $0x18] sm:$0xff] %vm616, %v610
  %620 = vst [vmem:[%s3 + $0x20] sm:$0xff] %v611
  %621 = vst.msk [vmem:[%s3 + $0x28] sm:$0xff] %vm616, %v612
  %622 = vst [vmem:[%s3 + $0x30] sm:$0x7] %v613
  %vm623 = vcmask 272384
  %624 = vst.msk [vmem:[%s3 + $0x38] sm:$0x7] %vm623, %v614
  %s625 = scalar_lea.vmem %s0, 16
  %v626 = vld [vmem:[%s625] sm:$0xf]
  %v627 = vld [vmem:[%s625 + $0x4] sm:$0xf]
  %v628 = vld [vmem:[%s625 + $0x8] sm:$0xf]
  %v629 = vld [vmem:[%s625 + $0xc] sm:$0xf]
  %v630 = vld [vmem:[%s1] sm:$0xff]
  %v631 = vld [vmem:[%s1 + $0x8] sm:$0xff]
  %v632 = vld [vmem:[%s1 + $0x10] sm:$0xff]
  %v633 = vld [vmem:[%s1 + $0x18] sm:$0xff]
  %v634 = vld [vmem:[%s24] sm:$0xff]
  %v635 = vld [vmem:[%s24 + $0x8] sm:$0xff]
  %v636 = vld [vmem:[%s24 + $0x10] sm:$0xff]
  %v637 = vld [vmem:[%s24 + $0x18] sm:$0xff]
  %v642 = vunpack.c.l.b16 %v626
  %v643 = vunpack.c.l.b16 %v627
  %v644 = vunpack.c.l.b16 %v628
  %v645 = vunpack.c.l.b16 %v629
  %v646 = vpack.c.b16 %v643, %v642
  %v647 = vpack.c.b16 %v645, %v644
  %v649 = vshrl.u32 %v646, 16
  %v651 = vshll.u32 %v646, 16
  %v653 = vrot.slane %v651, 1
  %v654 = vor.u32 %v649, %v653
  %v656 = vshll.u32 %v647, 16
  %v658 = vrot.slane %v656, 1
  %v659 = vsel %vm39, %v654, %v658
  %v660 = vshrl.u32 %v647, 16
  %v662 = vor.u32 %v660, %v658
  %v667 = vunpack.c.l.b16 %v634
  %v668 = vunpack.c.h.b16 %v634
  %v669 = vunpack.c.l.b16 %v635
  %v670 = vunpack.c.h.b16 %v635
  %v671 = vunpack.c.l.b16 %v636
  %v672 = vunpack.c.h.b16 %v636
  %v673 = vunpack.c.l.b16 %v637
  %v674 = vunpack.c.h.b16 %v637
  %v675 = vpack.c.b16 %v669, %v667
  %v676 = vpack.c.b16 %v670, %v668
  %v677 = vpack.c.b16 %v673, %v671
  %v678 = vpack.c.b16 %v674, %v672
  %v684 = vsel %vm75, %v659, 0
  %v687 = vsel %vm75, %v662, 0
  %689 = vmatprep.subr.bf16.mxu0 %v676
  %690 = vmatpush1.bf16.msra.mxu0 %v675
  %691 = vmatprep.subr.bf16.mxu0 %v678
  %692 = vmatpush1.bf16.msra.mxu0 %v677
  %693 = vmatprep.subr.bf16.mxu0 0
  %694 = vmatpush1.bf16.msra.mxu0 0
  %695 = vmatprep.subr.bf16.mxu0 0
  %696 = vmatpush1.bf16.msra.mxu0 0
  %697 = vmatprep.subr.bf16.mxu0 0
  %698 = vmatpush1.bf16.msra.mxu0 0
  %699 = vmatprep.subr.bf16.mxu0 0
  %700 = vmatpush1.bf16.msra.mxu0 0
  %701 = vmatprep.subr.bf16.mxu0 0
  %702 = vmatpush1.bf16.msra.mxu0 0
  %703 = vmatprep.subr.bf16.mxu0 0
  %704 = vmatpush1.bf16.msra.mxu0 0
  %705 = vmatprep.subr.bf16.mxu0 0
  %706 = vmatpush1.bf16.msra.mxu0 0
  %707 = vmatprep.subr.bf16.mxu0 0
  %708 = vmatpush1.bf16.msra.mxu0 0
  %709 = vmatprep.subr.bf16.mxu0 0
  %710 = vmatpush1.bf16.msra.mxu0 0
  %711 = vmatprep.subr.bf16.mxu0 0
  %712 = vmatpush1.bf16.msra.mxu0 0
  %713 = vmatprep.subr.bf16.mxu0 0
  %714 = vmatpush1.bf16.msra.mxu0 0
  %715 = vmatprep.subr.bf16.mxu0 0
  %716 = vmatpush1.bf16.msra.mxu0 0
  %717 = vmatprep.subr.bf16.mxu0 0
  %718 = vmatpush1.bf16.msra.mxu0 0
  %719 = vmatprep.subr.bf16.mxu0 0
  %720 = vmatpush1.bf16.msra.mxu0 0
  %721 = vmatprep.mubr.bf16.mxu0 0
  %722 = vmatmul.mubr.bf16.gmra.mrb[0].mxu0 %v684
  %v723 = vpop.f32.mrb[0].mxu0
  %v724 = vadd.f32 0.0, %v723
  %v725 = vpop.f32.mrb[0].mxu0
  %v726 = vadd.f32 0.0, %v725
  %v727 = vpop.f32.mrb[0].mxu0
  %v728 = vadd.f32 0.0, %v727
  %v729 = vpop.f32.mrb[0].mxu0
  %v730 = vadd.f32 0.0, %v729
  %731 = vmatprep.mubr.bf16.mxu0 0
  %732 = vmatmul.mubr.bf16.gmra.mrb[0].mxu0 %v687
  %v733 = vpop.f32.mrb[0].mxu0
  %v734 = vadd.f32 0.0, %v733
  %v735 = vpop.f32.mrb[0].mxu0
  %v736 = vadd.f32 0.0, %v735
  %v737 = vpop.f32.mrb[0].mxu0
  %v738 = vadd.f32 0.0, %v737
  %v739 = vpop.f32.mrb[0].mxu0
  %v740 = vadd.f32 0.0, %v739
  %741 = vdwg.mxu0
  %v746 = vunpack.c.l.b16 %v630
  %v747 = vunpack.c.h.b16 %v630
  %v748 = vunpack.c.l.b16 %v631
  %v749 = vunpack.c.h.b16 %v631
  %v750 = vunpack.c.l.b16 %v632
  %v751 = vunpack.c.h.b16 %v632
  %v752 = vunpack.c.l.b16 %v633
  %v753 = vunpack.c.h.b16 %v633
  %v754 = vpack.c.b16 %v748, %v746
  %v755 = vpack.c.b16 %v749, %v747
  %v756 = vpack.c.b16 %v752, %v750
  %v757 = vpack.c.b16 %v753, %v751
  %v762 = vsel %vm75, %v646, 0
  %v764 = vsel %vm75, %v647, 0
  %766 = vmatprep.subr.bf16.mxu0 %v755
  %767 = vmatpush1.bf16.msra.mxu0 %v754
  %768 = vmatprep.subr.bf16.mxu0 %v757
  %769 = vmatpush1.bf16.msra.mxu0 %v756
  %770 = vmatprep.subr.bf16.mxu0 0
  %771 = vmatpush1.bf16.msra.mxu0 0
  %772 = vmatprep.subr.bf16.mxu0 0
  %773 = vmatpush1.bf16.msra.mxu0 0
  %774 = vmatprep.subr.bf16.mxu0 0
  %775 = vmatpush1.bf16.msra.mxu0 0
  %776 = vmatprep.subr.bf16.mxu0 0
  %777 = vmatpush1.bf16.msra.mxu0 0
  %778 = vmatprep.subr.bf16.mxu0 0
  %779 = vmatpush1.bf16.msra.mxu0 0
  %780 = vmatprep.subr.bf16.mxu0 0
  %781 = vmatpush1.bf16.msra.mxu0 0
  %782 = vmatprep.subr.bf16.mxu0 0
  %783 = vmatpush1.bf16.msra.mxu0 0
  %784 = vmatprep.subr.bf16.mxu0 0
  %785 = vmatpush1.bf16.msra.mxu0 0
  %786 = vmatprep.subr.bf16.mxu0 0
  %787 = vmatpush1.bf16.msra.mxu0 0
  %788 = vmatprep.subr.bf16.mxu0 0
  %789 = vmatpush1.bf16.msra.mxu0 0
  %790 = vmatprep.subr.bf16.mxu0 0
  %791 = vmatpush1.bf16.msra.mxu0 0
  %792 = vmatprep.subr.bf16.mxu0 0
  %793 = vmatpush1.bf16.msra.mxu0 0
  %794 = vmatprep.subr.bf16.mxu0 0
  %795 = vmatpush1.bf16.msra.mxu0 0
  %796 = vmatprep.subr.bf16.mxu0 0
  %797 = vmatpush1.bf16.msra.mxu0 0
  %798 = vmatprep.mubr.bf16.mxu0 0
  %799 = vmatmul.mubr.bf16.gmra.mrb[0].mxu0 %v762
  %v800 = vpop.f32.mrb[0].mxu0
  %v801 = vadd.f32 %v724, %v800
  %v802 = vpop.f32.mrb[0].mxu0
  %v803 = vadd.f32 %v726, %v802
  %v804 = vpop.f32.mrb[0].mxu0
  %v805 = vadd.f32 %v728, %v804
  %v806 = vpop.f32.mrb[0].mxu0
  %v807 = vadd.f32 %v730, %v806
  %808 = vmatprep.mubr.bf16.mxu0 0
  %809 = vmatmul.mubr.bf16.gmra.mrb[0].mxu0 %v764
  %v810 = vpop.f32.mrb[0].mxu0
  %v811 = vadd.f32 %v734, %v810
  %v812 = vpop.f32.mrb[0].mxu0
  %v813 = vadd.f32 %v736, %v812
  %v814 = vpop.f32.mrb[0].mxu0
  %v815 = vadd.f32 %v738, %v814
  %v816 = vpop.f32.mrb[0].mxu0
  %v817 = vadd.f32 %v740, %v816
  %818 = vdwg.mxu0
  %v819 = vld [vmem:[%s212] sm:$0xff]
  %v820 = vld [vmem:[%s212 + $0x8] sm:$0xff]
  %v821 = vld [vmem:[%s212 + $0x10] sm:$0xff]
  %v822 = vld [vmem:[%s212 + $0x18] sm:$0xff]
  %v823 = vrot.slane %v646, 1
  %v824 = vrot.slane %v647, 1
  %v825 = vsel %vm217, %v823, %v824
  %v830 = vunpack.c.l.b16 %v819
  %v831 = vunpack.c.h.b16 %v819
  %v832 = vunpack.c.l.b16 %v820
  %v833 = vunpack.c.h.b16 %v820
  %v834 = vunpack.c.l.b16 %v821
  %v835 = vunpack.c.h.b16 %v821
  %v836 = vunpack.c.l.b16 %v822
  %v837 = vunpack.c.h.b16 %v822
  %v838 = vpack.c.b16 %v832, %v830
  %v839 = vpack.c.b16 %v833, %v831
  %v840 = vpack.c.b16 %v836, %v834
  %v841 = vpack.c.b16 %v837, %v835
  %v847 = vsel %vm75, %v825, 0
  %v850 = vsel %vm75, %v824, 0
  %852 = vmatprep.subr.bf16.mxu0 %v839
  %853 = vmatpush1.bf16.msra.mxu0 %v838
  %854 = vmatprep.subr.bf16.mxu0 %v841
  %855 = vmatpush1.bf16.msra.mxu0 %v840
  %856 = vmatprep.subr.bf16.mxu0 0
  %857 = vmatpush1.bf16.msra.mxu0 0
  %858 = vmatprep.subr.bf16.mxu0 0
  %859 = vmatpush1.bf16.msra.mxu0 0
  %860 = vmatprep.subr.bf16.mxu0 0
  %861 = vmatpush1.bf16.msra.mxu0 0
  %862 = vmatprep.subr.bf16.mxu0 0
  %863 = vmatpush1.bf16.msra.mxu0 0
  %864 = vmatprep.subr.bf16.mxu0 0
  %865 = vmatpush1.bf16.msra.mxu0 0
  %866 = vmatprep.subr.bf16.mxu0 0
  %867 = vmatpush1.bf16.msra.mxu0 0
  %868 = vmatprep.subr.bf16.mxu0 0
  %869 = vmatpush1.bf16.msra.mxu0 0
  %870 = vmatprep.subr.bf16.mxu0 0
  %871 = vmatpush1.bf16.msra.mxu0 0
  %872 = vmatprep.subr.bf16.mxu0 0
  %873 = vmatpush1.bf16.msra.mxu0 0
  %874 = vmatprep.subr.bf16.mxu0 0
  %875 = vmatpush1.bf16.msra.mxu0 0
  %876 = vmatprep.subr.bf16.mxu0 0
  %877 = vmatpush1.bf16.msra.mxu0 0
  %878 = vmatprep.subr.bf16.mxu0 0
  %879 = vmatpush1.bf16.msra.mxu0 0
  %880 = vmatprep.subr.bf16.mxu0 0
  %881 = vmatpush1.bf16.msra.mxu0 0
  %882 = vmatprep.subr.bf16.mxu0 0
  %883 = vmatpush1.bf16.msra.mxu0 0
  %884 = vmatprep.mubr.bf16.mxu0 0
  %885 = vmatmul.mubr.bf16.gmra.mrb[0].mxu0 %v847
  %v886 = vpop.f32.mrb[0].mxu0
  %v887 = vadd.f32 0.0, %v886
  %v888 = vpop.f32.mrb[0].mxu0
  %v889 = vadd.f32 0.0, %v888
  %v890 = vpop.f32.mrb[0].mxu0
  %v891 = vadd.f32 0.0, %v890
  %v892 = vpop.f32.mrb[0].mxu0
  %v893 = vadd.f32 0.0, %v892
  %894 = vmatprep.mubr.bf16.mxu0 0
  %895 = vmatmul.mubr.bf16.gmra.mrb[0].mxu0 %v850
  %v896 = vpop.f32.mrb[0].mxu0
  %v897 = vadd.f32 0.0, %v896
  %v898 = vpop.f32.mrb[0].mxu0
  %v899 = vadd.f32 0.0, %v898
  %v900 = vpop.f32.mrb[0].mxu0
  %v901 = vadd.f32 0.0, %v900
  %v902 = vpop.f32.mrb[0].mxu0
  %v903 = vadd.f32 0.0, %v902
  %904 = vdwg.mxu0
  %v905 = vadd.f32 %v801, %v887
  %v906 = vadd.f32 %v803, %v889
  %v907 = vadd.f32 %v805, %v891
  %v908 = vadd.f32 %v807, %v893
  %v909 = vadd.f32 %v811, %v897
  %v910 = vadd.f32 %v813, %v899
  %v911 = vadd.f32 %v815, %v901
  %v912 = vadd.f32 %v817, %v903
  %v913 = vld [vmem:[%s308] sm:$0xff]
  %v914 = vld [vmem:[%s308 + $0x8] sm:$0xff]
  %v915 = vld [vmem:[%s308 + $0x10] sm:$0xff]
  %v916 = vld [vmem:[%s308 + $0x18] sm:$0xff]
  %v917 = vrot.slane %v649, 1
  %v918 = vrot.slane %v651, 2
  %v919 = vor.u32 %v917, %v918
  %v920 = vrot.slane %v660, 1
  %v921 = vrot.slane %v656, 2
  %v922 = vor.u32 %v920, %v921
  %v923 = vsel %vm313, %v919, %v922
  %v928 = vunpack.c.l.b16 %v913
  %v929 = vunpack.c.h.b16 %v913
  %v930 = vunpack.c.l.b16 %v914
  %v931 = vunpack.c.h.b16 %v914
  %v932 = vunpack.c.l.b16 %v915
  %v933 = vunpack.c.h.b16 %v915
  %v934 = vunpack.c.l.b16 %v916
  %v935 = vunpack.c.h.b16 %v916
  %v936 = vpack.c.b16 %v930, %v928
  %v937 = vpack.c.b16 %v931, %v929
  %v938 = vpack.c.b16 %v934, %v932
  %v939 = vpack.c.b16 %v935, %v933
  %v945 = vsel %vm75, %v923, 0
  %v948 = vsel %vm75, %v922, 0
  %950 = vmatprep.subr.bf16.mxu0 %v937
  %951 = vmatpush1.bf16.msra.mxu0 %v936
  %952 = vmatprep.subr.bf16.mxu0 %v939
  %953 = vmatpush1.bf16.msra.mxu0 %v938
  %954 = vmatprep.subr.bf16.mxu0 0
  %955 = vmatpush1.bf16.msra.mxu0 0
  %956 = vmatprep.subr.bf16.mxu0 0
  %957 = vmatpush1.bf16.msra.mxu0 0
  %958 = vmatprep.subr.bf16.mxu0 0
  %959 = vmatpush1.bf16.msra.mxu0 0
  %960 = vmatprep.subr.bf16.mxu0 0
  %961 = vmatpush1.bf16.msra.mxu0 0
  %962 = vmatprep.subr.bf16.mxu0 0
  %963 = vmatpush1.bf16.msra.mxu0 0
  %964 = vmatprep.subr.bf16.mxu0 0
  %965 = vmatpush1.bf16.msra.mxu0 0
  %966 = vmatprep.subr.bf16.mxu0 0
  %967 = vmatpush1.bf16.msra.mxu0 0
  %968 = vmatprep.subr.bf16.mxu0 0
  %969 = vmatpush1.bf16.msra.mxu0 0
  %970 = vmatprep.subr.bf16.mxu0 0
  %971 = vmatpush1.bf16.msra.mxu0 0
  %972 = vmatprep.subr.bf16.mxu0 0
  %973 = vmatpush1.bf16.msra.mxu0 0
  %974 = vmatprep.subr.bf16.mxu0 0
  %975 = vmatpush1.bf16.msra.mxu0 0
  %976 = vmatprep.subr.bf16.mxu0 0
  %977 = vmatpush1.bf16.msra.mxu0 0
  %978 = vmatprep.subr.bf16.mxu0 0
  %979 = vmatpush1.bf16.msra.mxu0 0
  %980 = vmatprep.subr.bf16.mxu0 0
  %981 = vmatpush1.bf16.msra.mxu0 0
  %982 = vmatprep.mubr.bf16.mxu0 0
  %983 = vmatmul.mubr.bf16.gmra.mrb[0].mxu0 %v945
  %v984 = vpop.f32.mrb[0].mxu0
  %v985 = vadd.f32 0.0, %v984
  %v986 = vpop.f32.mrb[0].mxu0
  %v987 = vadd.f32 0.0, %v986
  %v988 = vpop.f32.mrb[0].mxu0
  %v989 = vadd.f32 0.0, %v988
  %v990 = vpop.f32.mrb[0].mxu0
  %v991 = vadd.f32 0.0, %v990
  %992 = vmatprep.mubr.bf16.mxu0 0
  %993 = vmatmul.mubr.bf16.gmra.mrb[0].mxu0 %v948
  %v994 = vpop.f32.mrb[0].mxu0
  %v995 = vadd.f32 0.0, %v994
  %v996 = vpop.f32.mrb[0].mxu0
  %v997 = vadd.f32 0.0, %v996
  %v998 = vpop.f32.mrb[0].mxu0
  %v999 = vadd.f32 0.0, %v998
  %v1000 = vpop.f32.mrb[0].mxu0
  %v1001 = vadd.f32 0.0, %v1000
  %1002 = vdwg.mxu0
  %v1003 = vadd.f32 %v905, %v985
  %v1004 = vadd.f32 %v906, %v987
  %v1005 = vadd.f32 %v907, %v989
  %v1006 = vadd.f32 %v908, %v991
  %v1007 = vadd.f32 %v909, %v995
  %v1008 = vadd.f32 %v910, %v997
  %v1009 = vadd.f32 %v911, %v999
  %v1010 = vadd.f32 %v912, %v1001
  %v1011 = vld [vmem:[%s408] sm:$0xff]
  %v1012 = vld [vmem:[%s408 + $0x8] sm:$0xff]
  %v1013 = vld [vmem:[%s408 + $0x10] sm:$0xff]
  %v1014 = vld [vmem:[%s408 + $0x18] sm:$0xff]
  %v1015 = vrot.slane %v646, 2
  %v1016 = vrot.slane %v647, 2
  %v1017 = vsel %vm413, %v1015, %v1016
  %v1022 = vunpack.c.l.b16 %v1011
  %v1023 = vunpack.c.h.b16 %v1011
  %v1024 = vunpack.c.l.b16 %v1012
  %v1025 = vunpack.c.h.b16 %v1012
  %v1026 = vunpack.c.l.b16 %v1013
  %v1027 = vunpack.c.h.b16 %v1013
  %v1028 = vunpack.c.l.b16 %v1014
  %v1029 = vunpack.c.h.b16 %v1014
  %v1030 = vpack.c.b16 %v1024, %v1022
  %v1031 = vpack.c.b16 %v1025, %v1023
  %v1032 = vpack.c.b16 %v1028, %v1026
  %v1033 = vpack.c.b16 %v1029, %v1027
  %v1039 = vsel %vm75, %v1017, 0
  %v1042 = vsel %vm75, %v1016, 0
  %1044 = vmatprep.subr.bf16.mxu0 %v1031
  %1045 = vmatpush1.bf16.msra.mxu0 %v1030
  %1046 = vmatprep.subr.bf16.mxu0 %v1033
  %1047 = vmatpush1.bf16.msra.mxu0 %v1032
  %1048 = vmatprep.subr.bf16.mxu0 0
  %1049 = vmatpush1.bf16.msra.mxu0 0
  %1050 = vmatprep.subr.bf16.mxu0 0
  %1051 = vmatpush1.bf16.msra.mxu0 0
  %1052 = vmatprep.subr.bf16.mxu0 0
  %1053 = vmatpush1.bf16.msra.mxu0 0
  %1054 = vmatprep.subr.bf16.mxu0 0
  %1055 = vmatpush1.bf16.msra.mxu0 0
  %1056 = vmatprep.subr.bf16.mxu0 0
  %1057 = vmatpush1.bf16.msra.mxu0 0
  %1058 = vmatprep.subr.bf16.mxu0 0
  %1059 = vmatpush1.bf16.msra.mxu0 0
  %1060 = vmatprep.subr.bf16.mxu0 0
  %1061 = vmatpush1.bf16.msra.mxu0 0
  %1062 = vmatprep.subr.bf16.mxu0 0
  %1063 = vmatpush1.bf16.msra.mxu0 0
  %1064 = vmatprep.subr.bf16.mxu0 0
  %1065 = vmatpush1.bf16.msra.mxu0 0
  %1066 = vmatprep.subr.bf16.mxu0 0
  %1067 = vmatpush1.bf16.msra.mxu0 0
  %1068 = vmatprep.subr.bf16.mxu0 0
  %1069 = vmatpush1.bf16.msra.mxu0 0
  %1070 = vmatprep.subr.bf16.mxu0 0
  %1071 = vmatpush1.bf16.msra.mxu0 0
  %1072 = vmatprep.subr.bf16.mxu0 0
  %1073 = vmatpush1.bf16.msra.mxu0 0
  %1074 = vmatprep.subr.bf16.mxu0 0
  %1075 = vmatpush1.bf16.msra.mxu0 0
  %1076 = vmatprep.mubr.bf16.mxu0 0
  %1077 = vmatmul.mubr.bf16.gmra.mrb[0].mxu0 %v1039
  %v1078 = vpop.f32.mrb[0].mxu0
  %v1079 = vadd.f32 0.0, %v1078
  %v1080 = vpop.f32.mrb[0].mxu0
  %v1081 = vadd.f32 0.0, %v1080
  %v1082 = vpop.f32.mrb[0].mxu0
  %v1083 = vadd.f32 0.0, %v1082
  %v1084 = vpop.f32.mrb[0].mxu0
  %v1085 = vadd.f32 0.0, %v1084
  %1086 = vmatprep.mubr.bf16.mxu0 0
  %1087 = vmatmul.mubr.bf16.gmra.mrb[0].mxu0 %v1042
  %v1088 = vpop.f32.mrb[0].mxu0
  %v1089 = vadd.f32 0.0, %v1088
  %v1090 = vpop.f32.mrb[0].mxu0
  %v1091 = vadd.f32 0.0, %v1090
  %v1092 = vpop.f32.mrb[0].mxu0
  %v1093 = vadd.f32 0.0, %v1092
  %v1094 = vpop.f32.mrb[0].mxu0
  %v1095 = vadd.f32 0.0, %v1094
  %1096 = vdwg.mxu0
  %v1097 = vadd.f32 %v1003, %v1079
  %v1098 = vadd.f32 %v1004, %v1081
  %v1099 = vadd.f32 %v1005, %v1083
  %v1100 = vadd.f32 %v1006, %v1085
  %v1101 = vadd.f32 %v1007, %v1089
  %v1102 = vadd.f32 %v1008, %v1091
  %v1103 = vadd.f32 %v1009, %v1093
  %v1104 = vadd.f32 %v1010, %v1095
  %v1105 = vadd.f32 %v1097, %v508
  %v1106 = vadd.f32 %v1098, %v512
  %v1107 = vadd.f32 %v1099, %v508
  %v1108 = vadd.f32 %v1100, %v512
  %v1109 = vadd.f32 %v1101, %v508
  %v1110 = vadd.f32 %v1102, %v512
  %v1111 = vadd.f32 %v1103, %v508
  %v1112 = vadd.f32 %v1104, %v512
  %v1113 = vmax.f32 %v1105, 0.0
  %v1114 = vmax.f32 %v1106, 0.0
  %v1115 = vmax.f32 %v1107, 0.0
  %v1116 = vmax.f32 %v1108, 0.0
  %v1117 = vmax.f32 %v1109, 0.0
  %v1118 = vmax.f32 %v1110, 0.0
  %v1119 = vmax.f32 %v1111, 0.0
  %v1120 = vmax.f32 %v1112, 0.0
  %v1129 = vrot.slane %v1113, 1
  %v1130 = vrot.slane %v1115, 1
  %v1131 = vsel %vm539, %v1129, %v1130
  %v1132 = vrot.slane %v1114, 1
  %v1133 = vrot.slane %v1116, 1
  %v1134 = vsel %vm539, %v1132, %v1133
  %v1135 = vrot.slane %v1117, 1
  %v1136 = vsel %vm539, %v1130, %v1135
  %v1137 = vrot.slane %v1118, 1
  %v1138 = vsel %vm539, %v1133, %v1137
  %v1139 = vrot.slane %v1119, 1
  %v1140 = vsel %vm539, %v1135, %v1139
  %v1141 = vrot.slane %v1120, 1
  %v1142 = vsel %vm539, %v1137, %v1141
  %v1151 = vmax.f32 %v1113, %v1131
  %v1152 = vmax.f32 %v1114, %v1134
  %v1153 = vmax.f32 %v1115, %v1136
  %v1154 = vmax.f32 %v1116, %v1138
  %v1155 = vmax.f32 %v1117, %v1140
  %v1156 = vmax.f32 %v1118, %v1142
  %v1157 = vmax.f32 %v1119, %v1139
  %v1158 = vmax.f32 %v1120, %v1141
  %1167 = vrot.lane.b32.xlu0 %v1151, 122
  %v1168 = vpop.permute.xlu0 %1167
  %1169 = vrot.lane.b32.xlu0 %v1152, 122
  %v1170 = vpop.permute.xlu0 %1169
  %1171 = vrot.lane.b32.xlu0 %v1153, 122
  %v1172 = vpop.permute.xlu0 %1171
  %1173 = vrot.lane.b32.xlu0 %v1154, 122
  %v1174 = vpop.permute.xlu0 %1173
  %1175 = vrot.lane.b32.xlu0 %v1155, 122
  %v1176 = vpop.permute.xlu0 %1175
  %1177 = vrot.lane.b32.xlu0 %v1156, 122
  %v1178 = vpop.permute.xlu0 %1177
  %1179 = vrot.lane.b32.xlu0 %v1157, 122
  %v1180 = vpop.permute.xlu0 %1179
  %1181 = vrot.lane.b32.xlu0 %v1158, 122
  %v1182 = vpop.permute.xlu0 %1181
  %v1183 = vsel %vm594, %v1168, %v1170
  %v1184 = vsel %vm594, %v1172, %v1174
  %v1185 = vsel %vm594, %v1176, %v1178
  %v1186 = vsel %vm594, %v1180, %v1182
  %v1195 = vmax.f32 %v1151, %v1183
  %v1196 = vmax.f32 %v1152, %v1170
  %v1197 = vmax.f32 %v1153, %v1184
  %v1198 = vmax.f32 %v1154, %v1174
  %v1199 = vmax.f32 %v1155, %v1185
  %v1200 = vmax.f32 %v1156, %v1178
  %v1201 = vmax.f32 %v1157, %v1186
  %v1202 = vmax.f32 %v1158, %v1182
  %s1203 = scalar_lea.vmem %s3, 64
  %1204 = vst [vmem:[%s1203] sm:$0xff] %v1195
  %1205 = vst.msk [vmem:[%s1203 + $0x8] sm:$0xff] %vm616, %v1196
  %1206 = vst [vmem:[%s1203 + $0x10] sm:$0xff] %v1197
  %1207 = vst.msk [vmem:[%s1203 + $0x18] sm:$0xff] %vm616, %v1198
  %1208 = vst [vmem:[%s1203 + $0x20] sm:$0xff] %v1199
  %1209 = vst.msk [vmem:[%s1203 + $0x28] sm:$0xff] %vm616, %v1200
  %1210 = vst [vmem:[%s1203 + $0x30] sm:$0x7] %v1201
  %1211 = vst.msk [vmem:[%s1203 + $0x38] sm:$0x7] %vm623, %v1202
  %s1212 = scalar_lea.vmem %s0, 32
  %v1213 = vld [vmem:[%s1212] sm:$0xf]
  %v1214 = vld [vmem:[%s1212 + $0x4] sm:$0xf]
  %v1215 = vld [vmem:[%s1212 + $0x8] sm:$0xf]
  %v1216 = vld [vmem:[%s1212 + $0xc] sm:$0xf]
  %v1217 = vld [vmem:[%s1] sm:$0xff]
  %v1218 = vld [vmem:[%s1 + $0x8] sm:$0xff]
  %v1219 = vld [vmem:[%s1 + $0x10] sm:$0xff]
  %v1220 = vld [vmem:[%s1 + $0x18] sm:$0xff]
  %v1221 = vld [vmem:[%s24] sm:$0xff]
  %v1222 = vld [vmem:[%s24 + $0x8] sm:$0xff]
  %v1223 = vld [vmem:[%s24 + $0x10] sm:$0xff]
  %v1224 = vld [vmem:[%s24 + $0x18] sm:$0xff]
  %v1229 = vunpack.c.l.b16 %v1213
  %v1230 = vunpack.c.l.b16 %v1214
  %v1231 = vunpack.c.l.b16 %v1215
  %v1232 = vunpack.c.l.b16 %v1216
  %v1233 = vpack.c.b16 %v1230, %v1229
  %v1234 = vpack.c.b16 %v1232, %v1231
  %v1236 = vshrl.u32 %v1233, 16
  %v1238 = vshll.u32 %v1233, 16
  %v1240 = vrot.slane %v1238, 1
  %v1241 = vor.u32 %v1236, %v1240
  %v1243 = vshll.u32 %v1234, 16
  %v1245 = vrot.slane %v1243, 1
  %v1246 = vsel %vm39, %v1241, %v1245
  %v1247 = vshrl.u32 %v1234, 16
  %v1249 = vor.u32 %v1247, %v1245
  %v1254 = vunpack.c.l.b16 %v1221
  %v1255 = vunpack.c.h.b16 %v1221
  %v1256 = vunpack.c.l.b16 %v1222
  %v1257 = vunpack.c.h.b16 %v1222
  %v1258 = vunpack.c.l.b16 %v1223
  %v1259 = vunpack.c.h.b16 %v1223
  %v1260 = vunpack.c.l.b16 %v1224
  %v1261 = vunpack.c.h.b16 %v1224
  %v1262 = vpack.c.b16 %v1256, %v1254
  %v1263 = vpack.c.b16 %v1257, %v1255
  %v1264 = vpack.c.b16 %v1260, %v1258
  %v1265 = vpack.c.b16 %v1261, %v1259
  %v1271 = vsel %vm75, %v1246, 0
  %v1274 = vsel %vm75, %v1249, 0
  %1276 = vmatprep.subr.bf16.mxu0 %v1263
  %1277 = vmatpush1.bf16.msra.mxu0 %v1262
  %1278 = vmatprep.subr.bf16.mxu0 %v1265
  %1279 = vmatpush1.bf16.msra.mxu0 %v1264
  %1280 = vmatprep.subr.bf16.mxu0 0
  %1281 = vmatpush1.bf16.msra.mxu0 0
  %1282 = vmatprep.subr.bf16.mxu0 0
  %1283 = vmatpush1.bf16.msra.mxu0 0
  %1284 = vmatprep.subr.bf16.mxu0 0
  %1285 = vmatpush1.bf16.msra.mxu0 0
  %1286 = vmatprep.subr.bf16.mxu0 0
  %1287 = vmatpush1.bf16.msra.mxu0 0
  %1288 = vmatprep.subr.bf16.mxu0 0
  %1289 = vmatpush1.bf16.msra.mxu0 0
  %1290 = vmatprep.subr.bf16.mxu0 0
  %1291 = vmatpush1.bf16.msra.mxu0 0
  %1292 = vmatprep.subr.bf16.mxu0 0
  %1293 = vmatpush1.bf16.msra.mxu0 0
  %1294 = vmatprep.subr.bf16.mxu0 0
  %1295 = vmatpush1.bf16.msra.mxu0 0
  %1296 = vmatprep.subr.bf16.mxu0 0
  %1297 = vmatpush1.bf16.msra.mxu0 0
  %1298 = vmatprep.subr.bf16.mxu0 0
  %1299 = vmatpush1.bf16.msra.mxu0 0
  %1300 = vmatprep.subr.bf16.mxu0 0
  %1301 = vmatpush1.bf16.msra.mxu0 0
  %1302 = vmatprep.subr.bf16.mxu0 0
  %1303 = vmatpush1.bf16.msra.mxu0 0
  %1304 = vmatprep.subr.bf16.mxu0 0
  %1305 = vmatpush1.bf16.msra.mxu0 0
  %1306 = vmatprep.subr.bf16.mxu0 0
  %1307 = vmatpush1.bf16.msra.mxu0 0
  %1308 = vmatprep.mubr.bf16.mxu0 0
  %1309 = vmatmul.mubr.bf16.gmra.mrb[0].mxu0 %v1271
  %v1310 = vpop.f32.mrb[0].mxu0
  %v1311 = vadd.f32 0.0, %v1310
  %v1312 = vpop.f32.mrb[0].mxu0
  %v1313 = vadd.f32 0.0, %v1312
  %v1314 = vpop.f32.mrb[0].mxu0
  %v1315 = vadd.f32 0.0, %v1314
  %v1316 = vpop.f32.mrb[0].mxu0
  %v1317 = vadd.f32 0.0, %v1316
  %1318 = vmatprep.mubr.bf16.mxu0 0
  %1319 = vmatmul.mubr.bf16.gmra.mrb[0].mxu0 %v1274
  %v1320 = vpop.f32.mrb[0].mxu0
  %v1321 = vadd.f32 0.0, %v1320
  %v1322 = vpop.f32.mrb[0].mxu0
  %v1323 = vadd.f32 0.0, %v1322
  %v1324 = vpop.f32.mrb[0].mxu0
  %v1325 = vadd.f32 0.0, %v1324
  %v1326 = vpop.f32.mrb[0].mxu0
  %v1327 = vadd.f32 0.0, %v1326
  %1328 = vdwg.mxu0
  %v1333 = vunpack.c.l.b16 %v1217
  %v1334 = vunpack.c.h.b16 %v1217
  %v1335 = vunpack.c.l.b16 %v1218
  %v1336 = vunpack.c.h.b16 %v1218
  %v1337 = vunpack.c.l.b16 %v1219
  %v1338 = vunpack.c.h.b16 %v1219
  %v1339 = vunpack.c.l.b16 %v1220
  %v1340 = vunpack.c.h.b16 %v1220
  %v1341 = vpack.c.b16 %v1335, %v1333
  %v1342 = vpack.c.b16 %v1336, %v1334
  %v1343 = vpack.c.b16 %v1339, %v1337
  %v1344 = vpack.c.b16 %v1340, %v1338
  %v1349 = vsel %vm75, %v1233, 0
  %v1351 = vsel %vm75, %v1234, 0
  %1353 = vmatprep.subr.bf16.mxu0 %v1342
  %1354 = vmatpush1.bf16.msra.mxu0 %v1341
  %1355 = vmatprep.subr.bf16.mxu0 %v1344
  %1356 = vmatpush1.bf16.msra.mxu0 %v1343
  %1357 = vmatprep.subr.bf16.mxu0 0
  %1358 = vmatpush1.bf16.msra.mxu0 0
  %1359 = vmatprep.subr.bf16.mxu0 0
  %1360 = vmatpush1.bf16.msra.mxu0 0
  %1361 = vmatprep.subr.bf16.mxu0 0
  %1362 = vmatpush1.bf16.msra.mxu0 0
  %1363 = vmatprep.subr.bf16.mxu0 0
  %1364 = vmatpush1.bf16.msra.mxu0 0
  %1365 = vmatprep.subr.bf16.mxu0 0
  %1366 = vmatpush1.bf16.msra.mxu0 0
  %1367 = vmatprep.subr.bf16.mxu0 0
  %1368 = vmatpush1.bf16.msra.mxu0 0
  %1369 = vmatprep.subr.bf16.mxu0 0
  %1370 = vmatpush1.bf16.msra.mxu0 0
  %1371 = vmatprep.subr.bf16.mxu0 0
  %1372 = vmatpush1.bf16.msra.mxu0 0
  %1373 = vmatprep.subr.bf16.mxu0 0
  %1374 = vmatpush1.bf16.msra.mxu0 0
  %1375 = vmatprep.subr.bf16.mxu0 0
  %1376 = vmatpush1.bf16.msra.mxu0 0
  %1377 = vmatprep.subr.bf16.mxu0 0
  %1378 = vmatpush1.bf16.msra.mxu0 0
  %1379 = vmatprep.subr.bf16.mxu0 0
  %1380 = vmatpush1.bf16.msra.mxu0 0
  %1381 = vmatprep.subr.bf16.mxu0 0
  %1382 = vmatpush1.bf16.msra.mxu0 0
  %1383 = vmatprep.subr.bf16.mxu0 0
  %1384 = vmatpush1.bf16.msra.mxu0 0
  %1385 = vmatprep.mubr.bf16.mxu0 0
  %1386 = vmatmul.mubr.bf16.gmra.mrb[0].mxu0 %v1349
  %v1387 = vpop.f32.mrb[0].mxu0
  %v1388 = vadd.f32 %v1311, %v1387
  %v1389 = vpop.f32.mrb[0].mxu0
  %v1390 = vadd.f32 %v1313, %v1389
  %v1391 = vpop.f32.mrb[0].mxu0
  %v1392 = vadd.f32 %v1315, %v1391
  %v1393 = vpop.f32.mrb[0].mxu0
  %v1394 = vadd.f32 %v1317, %v1393
  %1395 = vmatprep.mubr.bf16.mxu0 0
  %1396 = vmatmul.mubr.bf16.gmra.mrb[0].mxu0 %v1351
  %v1397 = vpop.f32.mrb[0].mxu0
  %v1398 = vadd.f32 %v1321, %v1397
  %v1399 = vpop.f32.mrb[0].mxu0
  %v1400 = vadd.f32 %v1323, %v1399
  %v1401 = vpop.f32.mrb[0].mxu0
  %v1402 = vadd.f32 %v1325, %v1401
  %v1403 = vpop.f32.mrb[0].mxu0
  %v1404 = vadd.f32 %v1327, %v1403
  %1405 = vdwg.mxu0
  %v1406 = vld [vmem:[%s212] sm:$0xff]
  %v1407 = vld [vmem:[%s212 + $0x8] sm:$0xff]
  %v1408 = vld [vmem:[%s212 + $0x10] sm:$0xff]
  %v1409 = vld [vmem:[%s212 + $0x18] sm:$0xff]
  %v1410 = vrot.slane %v1233, 1
  %v1411 = vrot.slane %v1234, 1
  %v1412 = vsel %vm217, %v1410, %v1411
  %v1417 = vunpack.c.l.b16 %v1406
  %v1418 = vunpack.c.h.b16 %v1406
  %v1419 = vunpack.c.l.b16 %v1407
  %v1420 = vunpack.c.h.b16 %v1407
  %v1421 = vunpack.c.l.b16 %v1408
  %v1422 = vunpack.c.h.b16 %v1408
  %v1423 = vunpack.c.l.b16 %v1409
  %v1424 = vunpack.c.h.b16 %v1409
  %v1425 = vpack.c.b16 %v1419, %v1417
  %v1426 = vpack.c.b16 %v1420, %v1418
  %v1427 = vpack.c.b16 %v1423, %v1421
  %v1428 = vpack.c.b16 %v1424, %v1422
  %v1434 = vsel %vm75, %v1412, 0
  %v1437 = vsel %vm75, %v1411, 0
  %1439 = vmatprep.subr.bf16.mxu0 %v1426
  %1440 = vmatpush1.bf16.msra.mxu0 %v1425
  %1441 = vmatprep.subr.bf16.mxu0 %v1428
  %1442 = vmatpush1.bf16.msra.mxu0 %v1427
  %1443 = vmatprep.subr.bf16.mxu0 0
  %1444 = vmatpush1.bf16.msra.mxu0 0
  %1445 = vmatprep.subr.bf16.mxu0 0
  %1446 = vmatpush1.bf16.msra.mxu0 0
  %1447 = vmatprep.subr.bf16.mxu0 0
  %1448 = vmatpush1.bf16.msra.mxu0 0
  %1449 = vmatprep.subr.bf16.mxu0 0
  %1450 = vmatpush1.bf16.msra.mxu0 0
  %1451 = vmatprep.subr.bf16.mxu0 0
  %1452 = vmatpush1.bf16.msra.mxu0 0
  %1453 = vmatprep.subr.bf16.mxu0 0
  %1454 = vmatpush1.bf16.msra.mxu0 0
  %1455 = vmatprep.subr.bf16.mxu0 0
  %1456 = vmatpush1.bf16.msra.mxu0 0
  %1457 = vmatprep.subr.bf16.mxu0 0
  %1458 = vmatpush1.bf16.msra.mxu0 0
  %1459 = vmatprep.subr.bf16.mxu0 0
  %1460 = vmatpush1.bf16.msra.mxu0 0
  %1461 = vmatprep.subr.bf16.mxu0 0
  %1462 = vmatpush1.bf16.msra.mxu0 0
  %1463 = vmatprep.subr.bf16.mxu0 0
  %1464 = vmatpush1.bf16.msra.mxu0 0
  %1465 = vmatprep.subr.bf16.mxu0 0
  %1466 = vmatpush1.bf16.msra.mxu0 0
  %1467 = vmatprep.subr.bf16.mxu0 0
  %1468 = vmatpush1.bf16.msra.mxu0 0
  %1469 = vmatprep.subr.bf16.mxu0 0
  %1470 = vmatpush1.bf16.msra.mxu0 0
  %1471 = vmatprep.mubr.bf16.mxu0 0
  %1472 = vmatmul.mubr.bf16.gmra.mrb[0].mxu0 %v1434
  %v1473 = vpop.f32.mrb[0].mxu0
  %v1474 = vadd.f32 0.0, %v1473
  %v1475 = vpop.f32.mrb[0].mxu0
  %v1476 = vadd.f32 0.0, %v1475
  %v1477 = vpop.f32.mrb[0].mxu0
  %v1478 = vadd.f32 0.0, %v1477
  %v1479 = vpop.f32.mrb[0].mxu0
  %v1480 = vadd.f32 0.0, %v1479
  %1481 = vmatprep.mubr.bf16.mxu0 0
  %1482 = vmatmul.mubr.bf16.gmra.mrb[0].mxu0 %v1437
  %v1483 = vpop.f32.mrb[0].mxu0
  %v1484 = vadd.f32 0.0, %v1483
  %v1485 = vpop.f32.mrb[0].mxu0
  %v1486 = vadd.f32 0.0, %v1485
  %v1487 = vpop.f32.mrb[0].mxu0
  %v1488 = vadd.f32 0.0, %v1487
  %v1489 = vpop.f32.mrb[0].mxu0
  %v1490 = vadd.f32 0.0, %v1489
  %1491 = vdwg.mxu0
  %v1492 = vadd.f32 %v1388, %v1474
  %v1493 = vadd.f32 %v1390, %v1476
  %v1494 = vadd.f32 %v1392, %v1478
  %v1495 = vadd.f32 %v1394, %v1480
  %v1496 = vadd.f32 %v1398, %v1484
  %v1497 = vadd.f32 %v1400, %v1486
  %v1498 = vadd.f32 %v1402, %v1488
  %v1499 = vadd.f32 %v1404, %v1490
  %v1500 = vld [vmem:[%s308] sm:$0xff]
  %v1501 = vld [vmem:[%s308 + $0x8] sm:$0xff]
  %v1502 = vld [vmem:[%s308 + $0x10] sm:$0xff]
  %v1503 = vld [vmem:[%s308 + $0x18] sm:$0xff]
  %v1504 = vrot.slane %v1236, 1
  %v1505 = vrot.slane %v1238, 2
  %v1506 = vor.u32 %v1504, %v1505
  %v1507 = vrot.slane %v1247, 1
  %v1508 = vrot.slane %v1243, 2
  %v1509 = vor.u32 %v1507, %v1508
  %v1510 = vsel %vm313, %v1506, %v1509
  %v1515 = vunpack.c.l.b16 %v1500
  %v1516 = vunpack.c.h.b16 %v1500
  %v1517 = vunpack.c.l.b16 %v1501
  %v1518 = vunpack.c.h.b16 %v1501
  %v1519 = vunpack.c.l.b16 %v1502
  %v1520 = vunpack.c.h.b16 %v1502
  %v1521 = vunpack.c.l.b16 %v1503
  %v1522 = vunpack.c.h.b16 %v1503
  %v1523 = vpack.c.b16 %v1517, %v1515
  %v1524 = vpack.c.b16 %v1518, %v1516
  %v1525 = vpack.c.b16 %v1521, %v1519
  %v1526 = vpack.c.b16 %v1522, %v1520
  %v1532 = vsel %vm75, %v1510, 0
  %v1535 = vsel %vm75, %v1509, 0
  %1537 = vmatprep.subr.bf16.mxu0 %v1524
  %1538 = vmatpush1.bf16.msra.mxu0 %v1523
  %1539 = vmatprep.subr.bf16.mxu0 %v1526
  %1540 = vmatpush1.bf16.msra.mxu0 %v1525
  %1541 = vmatprep.subr.bf16.mxu0 0
  %1542 = vmatpush1.bf16.msra.mxu0 0
  %1543 = vmatprep.subr.bf16.mxu0 0
  %1544 = vmatpush1.bf16.msra.mxu0 0
  %1545 = vmatprep.subr.bf16.mxu0 0
  %1546 = vmatpush1.bf16.msra.mxu0 0
  %1547 = vmatprep.subr.bf16.mxu0 0
  %1548 = vmatpush1.bf16.msra.mxu0 0
  %1549 = vmatprep.subr.bf16.mxu0 0
  %1550 = vmatpush1.bf16.msra.mxu0 0
  %1551 = vmatprep.subr.bf16.mxu0 0
  %1552 = vmatpush1.bf16.msra.mxu0 0
  %1553 = vmatprep.subr.bf16.mxu0 0
  %1554 = vmatpush1.bf16.msra.mxu0 0
  %1555 = vmatprep.subr.bf16.mxu0 0
  %1556 = vmatpush1.bf16.msra.mxu0 0
  %1557 = vmatprep.subr.bf16.mxu0 0
  %1558 = vmatpush1.bf16.msra.mxu0 0
  %1559 = vmatprep.subr.bf16.mxu0 0
  %1560 = vmatpush1.bf16.msra.mxu0 0
  %1561 = vmatprep.subr.bf16.mxu0 0
  %1562 = vmatpush1.bf16.msra.mxu0 0
  %1563 = vmatprep.subr.bf16.mxu0 0
  %1564 = vmatpush1.bf16.msra.mxu0 0
  %1565 = vmatprep.subr.bf16.mxu0 0
  %1566 = vmatpush1.bf16.msra.mxu0 0
  %1567 = vmatprep.subr.bf16.mxu0 0
  %1568 = vmatpush1.bf16.msra.mxu0 0
  %1569 = vmatprep.mubr.bf16.mxu0 0
  %1570 = vmatmul.mubr.bf16.gmra.mrb[0].mxu0 %v1532
  %v1571 = vpop.f32.mrb[0].mxu0
  %v1572 = vadd.f32 0.0, %v1571
  %v1573 = vpop.f32.mrb[0].mxu0
  %v1574 = vadd.f32 0.0, %v1573
  %v1575 = vpop.f32.mrb[0].mxu0
  %v1576 = vadd.f32 0.0, %v1575
  %v1577 = vpop.f32.mrb[0].mxu0
  %v1578 = vadd.f32 0.0, %v1577
  %1579 = vmatprep.mubr.bf16.mxu0 0
  %1580 = vmatmul.mubr.bf16.gmra.mrb[0].mxu0 %v1535
  %v1581 = vpop.f32.mrb[0].mxu0
  %v1582 = vadd.f32 0.0, %v1581
  %v1583 = vpop.f32.mrb[0].mxu0
  %v1584 = vadd.f32 0.0, %v1583
  %v1585 = vpop.f32.mrb[0].mxu0
  %v1586 = vadd.f32 0.0, %v1585
  %v1587 = vpop.f32.mrb[0].mxu0
  %v1588 = vadd.f32 0.0, %v1587
  %1589 = vdwg.mxu0
  %v1590 = vadd.f32 %v1492, %v1572
  %v1591 = vadd.f32 %v1493, %v1574
  %v1592 = vadd.f32 %v1494, %v1576
  %v1593 = vadd.f32 %v1495, %v1578
  %v1594 = vadd.f32 %v1496, %v1582
  %v1595 = vadd.f32 %v1497, %v1584
  %v1596 = vadd.f32 %v1498, %v1586
  %v1597 = vadd.f32 %v1499, %v1588
  %v1598 = vld [vmem:[%s408] sm:$0xff]
  %v1599 = vld [vmem:[%s408 + $0x8] sm:$0xff]
  %v1600 = vld [vmem:[%s408 + $0x10] sm:$0xff]
  %v1601 = vld [vmem:[%s408 + $0x18] sm:$0xff]
  %v1602 = vrot.slane %v1233, 2
  %v1603 = vrot.slane %v1234, 2
  %v1604 = vsel %vm413, %v1602, %v1603
  %v1609 = vunpack.c.l.b16 %v1598
  %v1610 = vunpack.c.h.b16 %v1598
  %v1611 = vunpack.c.l.b16 %v1599
  %v1612 = vunpack.c.h.b16 %v1599
  %v1613 = vunpack.c.l.b16 %v1600
  %v1614 = vunpack.c.h.b16 %v1600
  %v1615 = vunpack.c.l.b16 %v1601
  %v1616 = vunpack.c.h.b16 %v1601
  %v1617 = vpack.c.b16 %v1611, %v1609
  %v1618 = vpack.c.b16 %v1612, %v1610
  %v1619 = vpack.c.b16 %v1615, %v1613
  %v1620 = vpack.c.b16 %v1616, %v1614
  %v1626 = vsel %vm75, %v1604, 0
  %v1629 = vsel %vm75, %v1603, 0
  %1631 = vmatprep.subr.bf16.mxu0 %v1618
  %1632 = vmatpush1.bf16.msra.mxu0 %v1617
  %1633 = vmatprep.subr.bf16.mxu0 %v1620
  %1634 = vmatpush1.bf16.msra.mxu0 %v1619
  %1635 = vmatprep.subr.bf16.mxu0 0
  %1636 = vmatpush1.bf16.msra.mxu0 0
  %1637 = vmatprep.subr.bf16.mxu0 0
  %1638 = vmatpush1.bf16.msra.mxu0 0
  %1639 = vmatprep.subr.bf16.mxu0 0
  %1640 = vmatpush1.bf16.msra.mxu0 0
  %1641 = vmatprep.subr.bf16.mxu0 0
  %1642 = vmatpush1.bf16.msra.mxu0 0
  %1643 = vmatprep.subr.bf16.mxu0 0
  %1644 = vmatpush1.bf16.msra.mxu0 0
  %1645 = vmatprep.subr.bf16.mxu0 0
  %1646 = vmatpush1.bf16.msra.mxu0 0
  %1647 = vmatprep.subr.bf16.mxu0 0
  %1648 = vmatpush1.bf16.msra.mxu0 0
  %1649 = vmatprep.subr.bf16.mxu0 0
  %1650 = vmatpush1.bf16.msra.mxu0 0
  %1651 = vmatprep.subr.bf16.mxu0 0
  %1652 = vmatpush1.bf16.msra.mxu0 0
  %1653 = vmatprep.subr.bf16.mxu0 0
  %1654 = vmatpush1.bf16.msra.mxu0 0
  %1655 = vmatprep.subr.bf16.mxu0 0
  %1656 = vmatpush1.bf16.msra.mxu0 0
  %1657 = vmatprep.subr.bf16.mxu0 0
  %1658 = vmatpush1.bf16.msra.mxu0 0
  %1659 = vmatprep.subr.bf16.mxu0 0
  %1660 = vmatpush1.bf16.msra.mxu0 0
  %1661 = vmatprep.subr.bf16.mxu0 0
  %1662 = vmatpush1.bf16.msra.mxu0 0
  %1663 = vmatprep.mubr.bf16.mxu0 0
  %1664 = vmatmul.mubr.bf16.gmra.mrb[0].mxu0 %v1626
  %v1665 = vpop.f32.mrb[0].mxu0
  %v1666 = vadd.f32 0.0, %v1665
  %v1667 = vpop.f32.mrb[0].mxu0
  %v1668 = vadd.f32 0.0, %v1667
  %v1669 = vpop.f32.mrb[0].mxu0
  %v1670 = vadd.f32 0.0, %v1669
  %v1671 = vpop.f32.mrb[0].mxu0
  %v1672 = vadd.f32 0.0, %v1671
  %1673 = vmatprep.mubr.bf16.mxu0 0
  %1674 = vmatmul.mubr.bf16.gmra.mrb[0].mxu0 %v1629
  %v1675 = vpop.f32.mrb[0].mxu0
  %v1676 = vadd.f32 0.0, %v1675
  %v1677 = vpop.f32.mrb[0].mxu0
  %v1678 = vadd.f32 0.0, %v1677
  %v1679 = vpop.f32.mrb[0].mxu0
  %v1680 = vadd.f32 0.0, %v1679
  %v1681 = vpop.f32.mrb[0].mxu0
  %v1682 = vadd.f32 0.0, %v1681
  %1683 = vdwg.mxu0
  %v1684 = vadd.f32 %v1590, %v1666
  %v1685 = vadd.f32 %v1591, %v1668
  %v1686 = vadd.f32 %v1592, %v1670
  %v1687 = vadd.f32 %v1593, %v1672
  %v1688 = vadd.f32 %v1594, %v1676
  %v1689 = vadd.f32 %v1595, %v1678
  %v1690 = vadd.f32 %v1596, %v1680
  %v1691 = vadd.f32 %v1597, %v1682
  %v1692 = vadd.f32 %v1684, %v508
  %v1693 = vadd.f32 %v1685, %v512
  %v1694 = vadd.f32 %v1686, %v508
  %v1695 = vadd.f32 %v1687, %v512
  %v1696 = vadd.f32 %v1688, %v508
  %v1697 = vadd.f32 %v1689, %v512
  %v1698 = vadd.f32 %v1690, %v508
  %v1699 = vadd.f32 %v1691, %v512
  %v1700 = vmax.f32 %v1692, 0.0
  %v1701 = vmax.f32 %v1693, 0.0
  %v1702 = vmax.f32 %v1694, 0.0
  %v1703 = vmax.f32 %v1695, 0.0
  %v1704 = vmax.f32 %v1696, 0.0
  %v1705 = vmax.f32 %v1697, 0.0
  %v1706 = vmax.f32 %v1698, 0.0
  %v1707 = vmax.f32 %v1699, 0.0
  %v1716 = vrot.slane %v1700, 1
  %v1717 = vrot.slane %v1702, 1
  %v1718 = vsel %vm539, %v1716, %v1717
  %v1719 = vrot.slane %v1701, 1
  %v1720 = vrot.slane %v1703, 1
  %v1721 = vsel %vm539, %v1719, %v1720
  %v1722 = vrot.slane %v1704, 1
  %v1723 = vsel %vm539, %v1717, %v1722
  %v1724 = vrot.slane %v1705, 1
  %v1725 = vsel %vm539, %v1720, %v1724
  %v1726 = vrot.slane %v1706, 1
  %v1727 = vsel %vm539, %v1722, %v1726
  %v1728 = vrot.slane %v1707, 1
  %v1729 = vsel %vm539, %v1724, %v1728
  %v1738 = vmax.f32 %v1700, %v1718
  %v1739 = vmax.f32 %v1701, %v1721
  %v1740 = vmax.f32 %v1702, %v1723
  %v1741 = vmax.f32 %v1703, %v1725
  %v1742 = vmax.f32 %v1704, %v1727
  %v1743 = vmax.f32 %v1705, %v1729
  %v1744 = vmax.f32 %v1706, %v1726
  %v1745 = vmax.f32 %v1707, %v1728
  %1754 = vrot.lane.b32.xlu0 %v1738, 122
  %v1755 = vpop.permute.xlu0 %1754
  %1756 = vrot.lane.b32.xlu0 %v1739, 122
  %v1757 = vpop.permute.xlu0 %1756
  %1758 = vrot.lane.b32.xlu0 %v1740, 122
  %v1759 = vpop.permute.xlu0 %1758
  %1760 = vrot.lane.b32.xlu0 %v1741, 122
  %v1761 = vpop.permute.xlu0 %1760
  %1762 = vrot.lane.b32.xlu0 %v1742, 122
  %v1763 = vpop.permute.xlu0 %1762
  %1764 = vrot.lane.b32.xlu0 %v1743, 122
  %v1765 = vpop.permute.xlu0 %1764
  %1766 = vrot.lane.b32.xlu0 %v1744, 122
  %v1767 = vpop.permute.xlu0 %1766
  %1768 = vrot.lane.b32.xlu0 %v1745, 122
  %v1769 = vpop.permute.xlu0 %1768
  %v1770 = vsel %vm594, %v1755, %v1757
  %v1771 = vsel %vm594, %v1759, %v1761
  %v1772 = vsel %vm594, %v1763, %v1765
  %v1773 = vsel %vm594, %v1767, %v1769
  %v1782 = vmax.f32 %v1738, %v1770
  %v1783 = vmax.f32 %v1739, %v1757
  %v1784 = vmax.f32 %v1740, %v1771
  %v1785 = vmax.f32 %v1741, %v1761
  %v1786 = vmax.f32 %v1742, %v1772
  %v1787 = vmax.f32 %v1743, %v1765
  %v1788 = vmax.f32 %v1744, %v1773
  %v1789 = vmax.f32 %v1745, %v1769
  %s1790 = scalar_lea.vmem %s3, 128
  %1791 = vst [vmem:[%s1790] sm:$0xff] %v1782
  %1792 = vst.msk [vmem:[%s1790 + $0x8] sm:$0xff] %vm616, %v1783
  %1793 = vst [vmem:[%s1790 + $0x10] sm:$0xff] %v1784
  %1794 = vst.msk [vmem:[%s1790 + $0x18] sm:$0xff] %vm616, %v1785
  %1795 = vst [vmem:[%s1790 + $0x20] sm:$0xff] %v1786
  %1796 = vst.msk [vmem:[%s1790 + $0x28] sm:$0xff] %vm616, %v1787
  %1797 = vst [vmem:[%s1790 + $0x30] sm:$0x7] %v1788
  %1798 = vst.msk [vmem:[%s1790 + $0x38] sm:$0x7] %vm623, %v1789
  %s1799 = scalar_lea.vmem %s0, 48
  %v1800 = vld [vmem:[%s1799] sm:$0xf]
  %v1801 = vld [vmem:[%s1799 + $0x4] sm:$0xf]
  %v1802 = vld [vmem:[%s1799 + $0x8] sm:$0xf]
  %v1803 = vld [vmem:[%s1799 + $0xc] sm:$0xf]
  %v1804 = vld [vmem:[%s1] sm:$0xff]
  %v1805 = vld [vmem:[%s1 + $0x8] sm:$0xff]
  %v1806 = vld [vmem:[%s1 + $0x10] sm:$0xff]
  %v1807 = vld [vmem:[%s1 + $0x18] sm:$0xff]
  %v1808 = vld [vmem:[%s24] sm:$0xff]
  %v1809 = vld [vmem:[%s24 + $0x8] sm:$0xff]
  %v1810 = vld [vmem:[%s24 + $0x10] sm:$0xff]
  %v1811 = vld [vmem:[%s24 + $0x18] sm:$0xff]
  %v1816 = vunpack.c.l.b16 %v1800
  %v1817 = vunpack.c.l.b16 %v1801
  %v1818 = vunpack.c.l.b16 %v1802
  %v1819 = vunpack.c.l.b16 %v1803
  %v1820 = vpack.c.b16 %v1817, %v1816
  %v1821 = vpack.c.b16 %v1819, %v1818
  %v1823 = vshrl.u32 %v1820, 16
  %v1825 = vshll.u32 %v1820, 16
  %v1827 = vrot.slane %v1825, 1
  %v1828 = vor.u32 %v1823, %v1827
  %v1830 = vshll.u32 %v1821, 16
  %v1832 = vrot.slane %v1830, 1
  %v1833 = vsel %vm39, %v1828, %v1832
  %v1834 = vshrl.u32 %v1821, 16
  %v1836 = vor.u32 %v1834, %v1832
  %v1841 = vunpack.c.l.b16 %v1808
  %v1842 = vunpack.c.h.b16 %v1808
  %v1843 = vunpack.c.l.b16 %v1809
  %v1844 = vunpack.c.h.b16 %v1809
  %v1845 = vunpack.c.l.b16 %v1810
  %v1846 = vunpack.c.h.b16 %v1810
  %v1847 = vunpack.c.l.b16 %v1811
  %v1848 = vunpack.c.h.b16 %v1811
  %v1849 = vpack.c.b16 %v1843, %v1841
  %v1850 = vpack.c.b16 %v1844, %v1842
  %v1851 = vpack.c.b16 %v1847, %v1845
  %v1852 = vpack.c.b16 %v1848, %v1846
  %v1858 = vsel %vm75, %v1833, 0
  %v1861 = vsel %vm75, %v1836, 0
  %1863 = vmatprep.subr.bf16.mxu0 %v1850
  %1864 = vmatpush1.bf16.msra.mxu0 %v1849
  %1865 = vmatprep.subr.bf16.mxu0 %v1852
  %1866 = vmatpush1.bf16.msra.mxu0 %v1851
  %1867 = vmatprep.subr.bf16.mxu0 0
  %1868 = vmatpush1.bf16.msra.mxu0 0
  %1869 = vmatprep.subr.bf16.mxu0 0
  %1870 = vmatpush1.bf16.msra.mxu0 0
  %1871 = vmatprep.subr.bf16.mxu0 0
  %1872 = vmatpush1.bf16.msra.mxu0 0
  %1873 = vmatprep.subr.bf16.mxu0 0
  %1874 = vmatpush1.bf16.msra.mxu0 0
  %1875 = vmatprep.subr.bf16.mxu0 0
  %1876 = vmatpush1.bf16.msra.mxu0 0
  %1877 = vmatprep.subr.bf16.mxu0 0
  %1878 = vmatpush1.bf16.msra.mxu0 0
  %1879 = vmatprep.subr.bf16.mxu0 0
  %1880 = vmatpush1.bf16.msra.mxu0 0
  %1881 = vmatprep.subr.bf16.mxu0 0
  %1882 = vmatpush1.bf16.msra.mxu0 0
  %1883 = vmatprep.subr.bf16.mxu0 0
  %1884 = vmatpush1.bf16.msra.mxu0 0
  %1885 = vmatprep.subr.bf16.mxu0 0
  %1886 = vmatpush1.bf16.msra.mxu0 0
  %1887 = vmatprep.subr.bf16.mxu0 0
  %1888 = vmatpush1.bf16.msra.mxu0 0
  %1889 = vmatprep.subr.bf16.mxu0 0
  %1890 = vmatpush1.bf16.msra.mxu0 0
  %1891 = vmatprep.subr.bf16.mxu0 0
  %1892 = vmatpush1.bf16.msra.mxu0 0
  %1893 = vmatprep.subr.bf16.mxu0 0
  %1894 = vmatpush1.bf16.msra.mxu0 0
  %1895 = vmatprep.mubr.bf16.mxu0 0
  %1896 = vmatmul.mubr.bf16.gmra.mrb[0].mxu0 %v1858
  %v1897 = vpop.f32.mrb[0].mxu0
  %v1898 = vadd.f32 0.0, %v1897
  %v1899 = vpop.f32.mrb[0].mxu0
  %v1900 = vadd.f32 0.0, %v1899
  %v1901 = vpop.f32.mrb[0].mxu0
  %v1902 = vadd.f32 0.0, %v1901
  %v1903 = vpop.f32.mrb[0].mxu0
  %v1904 = vadd.f32 0.0, %v1903
  %1905 = vmatprep.mubr.bf16.mxu0 0
  %1906 = vmatmul.mubr.bf16.gmra.mrb[0].mxu0 %v1861
  %v1907 = vpop.f32.mrb[0].mxu0
  %v1908 = vadd.f32 0.0, %v1907
  %v1909 = vpop.f32.mrb[0].mxu0
  %v1910 = vadd.f32 0.0, %v1909
  %v1911 = vpop.f32.mrb[0].mxu0
  %v1912 = vadd.f32 0.0, %v1911
  %v1913 = vpop.f32.mrb[0].mxu0
  %v1914 = vadd.f32 0.0, %v1913
  %1915 = vdwg.mxu0
  %v1920 = vunpack.c.l.b16 %v1804
  %v1921 = vunpack.c.h.b16 %v1804
  %v1922 = vunpack.c.l.b16 %v1805
  %v1923 = vunpack.c.h.b16 %v1805
  %v1924 = vunpack.c.l.b16 %v1806
  %v1925 = vunpack.c.h.b16 %v1806
  %v1926 = vunpack.c.l.b16 %v1807
  %v1927 = vunpack.c.h.b16 %v1807
  %v1928 = vpack.c.b16 %v1922, %v1920
  %v1929 = vpack.c.b16 %v1923, %v1921
  %v1930 = vpack.c.b16 %v1926, %v1924
  %v1931 = vpack.c.b16 %v1927, %v1925
  %v1936 = vsel %vm75, %v1820, 0
  %v1938 = vsel %vm75, %v1821, 0
  %1940 = vmatprep.subr.bf16.mxu0 %v1929
  %1941 = vmatpush1.bf16.msra.mxu0 %v1928
  %1942 = vmatprep.subr.bf16.mxu0 %v1931
  %1943 = vmatpush1.bf16.msra.mxu0 %v1930
  %1944 = vmatprep.subr.bf16.mxu0 0
  %1945 = vmatpush1.bf16.msra.mxu0 0
  %1946 = vmatprep.subr.bf16.mxu0 0
  %1947 = vmatpush1.bf16.msra.mxu0 0
  %1948 = vmatprep.subr.bf16.mxu0 0
  %1949 = vmatpush1.bf16.msra.mxu0 0
  %1950 = vmatprep.subr.bf16.mxu0 0
  %1951 = vmatpush1.bf16.msra.mxu0 0
  %1952 = vmatprep.subr.bf16.mxu0 0
  %1953 = vmatpush1.bf16.msra.mxu0 0
  %1954 = vmatprep.subr.bf16.mxu0 0
  %1955 = vmatpush1.bf16.msra.mxu0 0
  %1956 = vmatprep.subr.bf16.mxu0 0
  %1957 = vmatpush1.bf16.msra.mxu0 0
  %1958 = vmatprep.subr.bf16.mxu0 0
  %1959 = vmatpush1.bf16.msra.mxu0 0
  %1960 = vmatprep.subr.bf16.mxu0 0
  %1961 = vmatpush1.bf16.msra.mxu0 0
  %1962 = vmatprep.subr.bf16.mxu0 0
  %1963 = vmatpush1.bf16.msra.mxu0 0
  %1964 = vmatprep.subr.bf16.mxu0 0
  %1965 = vmatpush1.bf16.msra.mxu0 0
  %1966 = vmatprep.subr.bf16.mxu0 0
  %1967 = vmatpush1.bf16.msra.mxu0 0
  %1968 = vmatprep.subr.bf16.mxu0 0
  %1969 = vmatpush1.bf16.msra.mxu0 0
  %1970 = vmatprep.subr.bf16.mxu0 0
  %1971 = vmatpush1.bf16.msra.mxu0 0
  %1972 = vmatprep.mubr.bf16.mxu0 0
  %1973 = vmatmul.mubr.bf16.gmra.mrb[0].mxu0 %v1936
  %v1974 = vpop.f32.mrb[0].mxu0
  %v1975 = vadd.f32 %v1898, %v1974
  %v1976 = vpop.f32.mrb[0].mxu0
  %v1977 = vadd.f32 %v1900, %v1976
  %v1978 = vpop.f32.mrb[0].mxu0
  %v1979 = vadd.f32 %v1902, %v1978
  %v1980 = vpop.f32.mrb[0].mxu0
  %v1981 = vadd.f32 %v1904, %v1980
  %1982 = vmatprep.mubr.bf16.mxu0 0
  %1983 = vmatmul.mubr.bf16.gmra.mrb[0].mxu0 %v1938
  %v1984 = vpop.f32.mrb[0].mxu0
  %v1985 = vadd.f32 %v1908, %v1984
  %v1986 = vpop.f32.mrb[0].mxu0
  %v1987 = vadd.f32 %v1910, %v1986
  %v1988 = vpop.f32.mrb[0].mxu0
  %v1989 = vadd.f32 %v1912, %v1988
  %v1990 = vpop.f32.mrb[0].mxu0
  %v1991 = vadd.f32 %v1914, %v1990
  %1992 = vdwg.mxu0
  %v1993 = vld [vmem:[%s212] sm:$0xff]
  %v1994 = vld [vmem:[%s212 + $0x8] sm:$0xff]
  %v1995 = vld [vmem:[%s212 + $0x10] sm:$0xff]
  %v1996 = vld [vmem:[%s212 + $0x18] sm:$0xff]
  %v1997 = vrot.slane %v1820, 1
  %v1998 = vrot.slane %v1821, 1
  %v1999 = vsel %vm217, %v1997, %v1998
  %v2004 = vunpack.c.l.b16 %v1993
  %v2005 = vunpack.c.h.b16 %v1993
  %v2006 = vunpack.c.l.b16 %v1994
  %v2007 = vunpack.c.h.b16 %v1994
  %v2008 = vunpack.c.l.b16 %v1995
  %v2009 = vunpack.c.h.b16 %v1995
  %v2010 = vunpack.c.l.b16 %v1996
  %v2011 = vunpack.c.h.b16 %v1996
  %v2012 = vpack.c.b16 %v2006, %v2004
  %v2013 = vpack.c.b16 %v2007, %v2005
  %v2014 = vpack.c.b16 %v2010, %v2008
  %v2015 = vpack.c.b16 %v2011, %v2009
  %v2021 = vsel %vm75, %v1999, 0
  %v2024 = vsel %vm75, %v1998, 0
  %2026 = vmatprep.subr.bf16.mxu0 %v2013
  %2027 = vmatpush1.bf16.msra.mxu0 %v2012
  %2028 = vmatprep.subr.bf16.mxu0 %v2015
  %2029 = vmatpush1.bf16.msra.mxu0 %v2014
  %2030 = vmatprep.subr.bf16.mxu0 0
  %2031 = vmatpush1.bf16.msra.mxu0 0
  %2032 = vmatprep.subr.bf16.mxu0 0
  %2033 = vmatpush1.bf16.msra.mxu0 0
  %2034 = vmatprep.subr.bf16.mxu0 0
  %2035 = vmatpush1.bf16.msra.mxu0 0
  %2036 = vmatprep.subr.bf16.mxu0 0
  %2037 = vmatpush1.bf16.msra.mxu0 0
  %2038 = vmatprep.subr.bf16.mxu0 0
  %2039 = vmatpush1.bf16.msra.mxu0 0
  %2040 = vmatprep.subr.bf16.mxu0 0
  %2041 = vmatpush1.bf16.msra.mxu0 0
  %2042 = vmatprep.subr.bf16.mxu0 0
  %2043 = vmatpush1.bf16.msra.mxu0 0
  %2044 = vmatprep.subr.bf16.mxu0 0
  %2045 = vmatpush1.bf16.msra.mxu0 0
  %2046 = vmatprep.subr.bf16.mxu0 0
  %2047 = vmatpush1.bf16.msra.mxu0 0
  %2048 = vmatprep.subr.bf16.mxu0 0
  %2049 = vmatpush1.bf16.msra.mxu0 0
  %2050 = vmatprep.subr.bf16.mxu0 0
  %2051 = vmatpush1.bf16.msra.mxu0 0
  %2052 = vmatprep.subr.bf16.mxu0 0
  %2053 = vmatpush1.bf16.msra.mxu0 0
  %2054 = vmatprep.subr.bf16.mxu0 0
  %2055 = vmatpush1.bf16.msra.mxu0 0
  %2056 = vmatprep.subr.bf16.mxu0 0
  %2057 = vmatpush1.bf16.msra.mxu0 0
  %2058 = vmatprep.mubr.bf16.mxu0 0
  %2059 = vmatmul.mubr.bf16.gmra.mrb[0].mxu0 %v2021
  %v2060 = vpop.f32.mrb[0].mxu0
  %v2061 = vadd.f32 0.0, %v2060
  %v2062 = vpop.f32.mrb[0].mxu0
  %v2063 = vadd.f32 0.0, %v2062
  %v2064 = vpop.f32.mrb[0].mxu0
  %v2065 = vadd.f32 0.0, %v2064
  %v2066 = vpop.f32.mrb[0].mxu0
  %v2067 = vadd.f32 0.0, %v2066
  %2068 = vmatprep.mubr.bf16.mxu0 0
  %2069 = vmatmul.mubr.bf16.gmra.mrb[0].mxu0 %v2024
  %v2070 = vpop.f32.mrb[0].mxu0
  %v2071 = vadd.f32 0.0, %v2070
  %v2072 = vpop.f32.mrb[0].mxu0
  %v2073 = vadd.f32 0.0, %v2072
  %v2074 = vpop.f32.mrb[0].mxu0
  %v2075 = vadd.f32 0.0, %v2074
  %v2076 = vpop.f32.mrb[0].mxu0
  %v2077 = vadd.f32 0.0, %v2076
  %2078 = vdwg.mxu0
  %v2079 = vadd.f32 %v1975, %v2061
  %v2080 = vadd.f32 %v1977, %v2063
  %v2081 = vadd.f32 %v1979, %v2065
  %v2082 = vadd.f32 %v1981, %v2067
  %v2083 = vadd.f32 %v1985, %v2071
  %v2084 = vadd.f32 %v1987, %v2073
  %v2085 = vadd.f32 %v1989, %v2075
  %v2086 = vadd.f32 %v1991, %v2077
  %v2087 = vld [vmem:[%s308] sm:$0xff]
  %v2088 = vld [vmem:[%s308 + $0x8] sm:$0xff]
  %v2089 = vld [vmem:[%s308 + $0x10] sm:$0xff]
  %v2090 = vld [vmem:[%s308 + $0x18] sm:$0xff]
  %v2091 = vrot.slane %v1823, 1
  %v2092 = vrot.slane %v1825, 2
  %v2093 = vor.u32 %v2091, %v2092
  %v2094 = vrot.slane %v1834, 1
  %v2095 = vrot.slane %v1830, 2
  %v2096 = vor.u32 %v2094, %v2095
  %v2097 = vsel %vm313, %v2093, %v2096
  %v2102 = vunpack.c.l.b16 %v2087
  %v2103 = vunpack.c.h.b16 %v2087
  %v2104 = vunpack.c.l.b16 %v2088
  %v2105 = vunpack.c.h.b16 %v2088
  %v2106 = vunpack.c.l.b16 %v2089
  %v2107 = vunpack.c.h.b16 %v2089
  %v2108 = vunpack.c.l.b16 %v2090
  %v2109 = vunpack.c.h.b16 %v2090
  %v2110 = vpack.c.b16 %v2104, %v2102
  %v2111 = vpack.c.b16 %v2105, %v2103
  %v2112 = vpack.c.b16 %v2108, %v2106
  %v2113 = vpack.c.b16 %v2109, %v2107
  %v2119 = vsel %vm75, %v2097, 0
  %v2122 = vsel %vm75, %v2096, 0
  %2124 = vmatprep.subr.bf16.mxu0 %v2111
  %2125 = vmatpush1.bf16.msra.mxu0 %v2110
  %2126 = vmatprep.subr.bf16.mxu0 %v2113
  %2127 = vmatpush1.bf16.msra.mxu0 %v2112
  %2128 = vmatprep.subr.bf16.mxu0 0
  %2129 = vmatpush1.bf16.msra.mxu0 0
  %2130 = vmatprep.subr.bf16.mxu0 0
  %2131 = vmatpush1.bf16.msra.mxu0 0
  %2132 = vmatprep.subr.bf16.mxu0 0
  %2133 = vmatpush1.bf16.msra.mxu0 0
  %2134 = vmatprep.subr.bf16.mxu0 0
  %2135 = vmatpush1.bf16.msra.mxu0 0
  %2136 = vmatprep.subr.bf16.mxu0 0
  %2137 = vmatpush1.bf16.msra.mxu0 0
  %2138 = vmatprep.subr.bf16.mxu0 0
  %2139 = vmatpush1.bf16.msra.mxu0 0
  %2140 = vmatprep.subr.bf16.mxu0 0
  %2141 = vmatpush1.bf16.msra.mxu0 0
  %2142 = vmatprep.subr.bf16.mxu0 0
  %2143 = vmatpush1.bf16.msra.mxu0 0
  %2144 = vmatprep.subr.bf16.mxu0 0
  %2145 = vmatpush1.bf16.msra.mxu0 0
  %2146 = vmatprep.subr.bf16.mxu0 0
  %2147 = vmatpush1.bf16.msra.mxu0 0
  %2148 = vmatprep.subr.bf16.mxu0 0
  %2149 = vmatpush1.bf16.msra.mxu0 0
  %2150 = vmatprep.subr.bf16.mxu0 0
  %2151 = vmatpush1.bf16.msra.mxu0 0
  %2152 = vmatprep.subr.bf16.mxu0 0
  %2153 = vmatpush1.bf16.msra.mxu0 0
  %2154 = vmatprep.subr.bf16.mxu0 0
  %2155 = vmatpush1.bf16.msra.mxu0 0
  %2156 = vmatprep.mubr.bf16.mxu0 0
  %2157 = vmatmul.mubr.bf16.gmra.mrb[0].mxu0 %v2119
  %v2158 = vpop.f32.mrb[0].mxu0
  %v2159 = vadd.f32 0.0, %v2158
  %v2160 = vpop.f32.mrb[0].mxu0
  %v2161 = vadd.f32 0.0, %v2160
  %v2162 = vpop.f32.mrb[0].mxu0
  %v2163 = vadd.f32 0.0, %v2162
  %v2164 = vpop.f32.mrb[0].mxu0
  %v2165 = vadd.f32 0.0, %v2164
  %2166 = vmatprep.mubr.bf16.mxu0 0
  %2167 = vmatmul.mubr.bf16.gmra.mrb[0].mxu0 %v2122
  %v2168 = vpop.f32.mrb[0].mxu0
  %v2169 = vadd.f32 0.0, %v2168
  %v2170 = vpop.f32.mrb[0].mxu0
  %v2171 = vadd.f32 0.0, %v2170
  %v2172 = vpop.f32.mrb[0].mxu0
  %v2173 = vadd.f32 0.0, %v2172
  %v2174 = vpop.f32.mrb[0].mxu0
  %v2175 = vadd.f32 0.0, %v2174
  %2176 = vdwg.mxu0
  %v2177 = vadd.f32 %v2079, %v2159
  %v2178 = vadd.f32 %v2080, %v2161
  %v2179 = vadd.f32 %v2081, %v2163
  %v2180 = vadd.f32 %v2082, %v2165
  %v2181 = vadd.f32 %v2083, %v2169
  %v2182 = vadd.f32 %v2084, %v2171
  %v2183 = vadd.f32 %v2085, %v2173
  %v2184 = vadd.f32 %v2086, %v2175
  %v2185 = vld [vmem:[%s408] sm:$0xff]
  %v2186 = vld [vmem:[%s408 + $0x8] sm:$0xff]
  %v2187 = vld [vmem:[%s408 + $0x10] sm:$0xff]
  %v2188 = vld [vmem:[%s408 + $0x18] sm:$0xff]
  %v2189 = vrot.slane %v1820, 2
  %v2190 = vrot.slane %v1821, 2
  %v2191 = vsel %vm413, %v2189, %v2190
  %v2196 = vunpack.c.l.b16 %v2185
  %v2197 = vunpack.c.h.b16 %v2185
  %v2198 = vunpack.c.l.b16 %v2186
  %v2199 = vunpack.c.h.b16 %v2186
  %v2200 = vunpack.c.l.b16 %v2187
  %v2201 = vunpack.c.h.b16 %v2187
  %v2202 = vunpack.c.l.b16 %v2188
  %v2203 = vunpack.c.h.b16 %v2188
  %v2204 = vpack.c.b16 %v2198, %v2196
  %v2205 = vpack.c.b16 %v2199, %v2197
  %v2206 = vpack.c.b16 %v2202, %v2200
  %v2207 = vpack.c.b16 %v2203, %v2201
  %v2213 = vsel %vm75, %v2191, 0
  %v2216 = vsel %vm75, %v2190, 0
  %2218 = vmatprep.subr.bf16.mxu0 %v2205
  %2219 = vmatpush1.bf16.msra.mxu0 %v2204
  %2220 = vmatprep.subr.bf16.mxu0 %v2207
  %2221 = vmatpush1.bf16.msra.mxu0 %v2206
  %2222 = vmatprep.subr.bf16.mxu0 0
  %2223 = vmatpush1.bf16.msra.mxu0 0
  %2224 = vmatprep.subr.bf16.mxu0 0
  %2225 = vmatpush1.bf16.msra.mxu0 0
  %2226 = vmatprep.subr.bf16.mxu0 0
  %2227 = vmatpush1.bf16.msra.mxu0 0
  %2228 = vmatprep.subr.bf16.mxu0 0
  %2229 = vmatpush1.bf16.msra.mxu0 0
  %2230 = vmatprep.subr.bf16.mxu0 0
  %2231 = vmatpush1.bf16.msra.mxu0 0
  %2232 = vmatprep.subr.bf16.mxu0 0
  %2233 = vmatpush1.bf16.msra.mxu0 0
  %2234 = vmatprep.subr.bf16.mxu0 0
  %2235 = vmatpush1.bf16.msra.mxu0 0
  %2236 = vmatprep.subr.bf16.mxu0 0
  %2237 = vmatpush1.bf16.msra.mxu0 0
  %2238 = vmatprep.subr.bf16.mxu0 0
  %2239 = vmatpush1.bf16.msra.mxu0 0
  %2240 = vmatprep.subr.bf16.mxu0 0
  %2241 = vmatpush1.bf16.msra.mxu0 0
  %2242 = vmatprep.subr.bf16.mxu0 0
  %2243 = vmatpush1.bf16.msra.mxu0 0
  %2244 = vmatprep.subr.bf16.mxu0 0
  %2245 = vmatpush1.bf16.msra.mxu0 0
  %2246 = vmatprep.subr.bf16.mxu0 0
  %2247 = vmatpush1.bf16.msra.mxu0 0
  %2248 = vmatprep.subr.bf16.mxu0 0
  %2249 = vmatpush1.bf16.msra.mxu0 0
  %2250 = vmatprep.mubr.bf16.mxu0 0
  %2251 = vmatmul.mubr.bf16.gmra.mrb[0].mxu0 %v2213
  %v2252 = vpop.f32.mrb[0].mxu0
  %v2253 = vadd.f32 0.0, %v2252
  %v2254 = vpop.f32.mrb[0].mxu0
  %v2255 = vadd.f32 0.0, %v2254
  %v2256 = vpop.f32.mrb[0].mxu0
  %v2257 = vadd.f32 0.0, %v2256
  %v2258 = vpop.f32.mrb[0].mxu0
  %v2259 = vadd.f32 0.0, %v2258
  %2260 = vmatprep.mubr.bf16.mxu0 0
  %2261 = vmatmul.mubr.bf16.gmra.mrb[0].mxu0 %v2216
  %v2262 = vpop.f32.mrb[0].mxu0
  %v2263 = vadd.f32 0.0, %v2262
  %v2264 = vpop.f32.mrb[0].mxu0
  %v2265 = vadd.f32 0.0, %v2264
  %v2266 = vpop.f32.mrb[0].mxu0
  %v2267 = vadd.f32 0.0, %v2266
  %v2268 = vpop.f32.mrb[0].mxu0
  %v2269 = vadd.f32 0.0, %v2268
  %2270 = vdwg.mxu0
  %v2271 = vadd.f32 %v2177, %v2253
  %v2272 = vadd.f32 %v2178, %v2255
  %v2273 = vadd.f32 %v2179, %v2257
  %v2274 = vadd.f32 %v2180, %v2259
  %v2275 = vadd.f32 %v2181, %v2263
  %v2276 = vadd.f32 %v2182, %v2265
  %v2277 = vadd.f32 %v2183, %v2267
  %v2278 = vadd.f32 %v2184, %v2269
  %v2279 = vadd.f32 %v2271, %v508
  %v2280 = vadd.f32 %v2272, %v512
  %v2281 = vadd.f32 %v2273, %v508
  %v2282 = vadd.f32 %v2274, %v512
  %v2283 = vadd.f32 %v2275, %v508
  %v2284 = vadd.f32 %v2276, %v512
  %v2285 = vadd.f32 %v2277, %v508
  %v2286 = vadd.f32 %v2278, %v512
  %v2287 = vmax.f32 %v2279, 0.0
  %v2288 = vmax.f32 %v2280, 0.0
  %v2289 = vmax.f32 %v2281, 0.0
  %v2290 = vmax.f32 %v2282, 0.0
  %v2291 = vmax.f32 %v2283, 0.0
  %v2292 = vmax.f32 %v2284, 0.0
  %v2293 = vmax.f32 %v2285, 0.0
  %v2294 = vmax.f32 %v2286, 0.0
  %v2303 = vrot.slane %v2287, 1
  %v2304 = vrot.slane %v2289, 1
  %v2305 = vsel %vm539, %v2303, %v2304
  %v2306 = vrot.slane %v2288, 1
  %v2307 = vrot.slane %v2290, 1
  %v2308 = vsel %vm539, %v2306, %v2307
  %v2309 = vrot.slane %v2291, 1
  %v2310 = vsel %vm539, %v2304, %v2309
  %v2311 = vrot.slane %v2292, 1
  %v2312 = vsel %vm539, %v2307, %v2311
  %v2313 = vrot.slane %v2293, 1
  %v2314 = vsel %vm539, %v2309, %v2313
  %v2315 = vrot.slane %v2294, 1
  %v2316 = vsel %vm539, %v2311, %v2315
  %v2325 = vmax.f32 %v2287, %v2305
  %v2326 = vmax.f32 %v2288, %v2308
  %v2327 = vmax.f32 %v2289, %v2310
  %v2328 = vmax.f32 %v2290, %v2312
  %v2329 = vmax.f32 %v2291, %v2314
  %v2330 = vmax.f32 %v2292, %v2316
  %v2331 = vmax.f32 %v2293, %v2313
  %v2332 = vmax.f32 %v2294, %v2315
  %2341 = vrot.lane.b32.xlu0 %v2325, 122
  %v2342 = vpop.permute.xlu0 %2341
  %2343 = vrot.lane.b32.xlu0 %v2326, 122
  %v2344 = vpop.permute.xlu0 %2343
  %2345 = vrot.lane.b32.xlu0 %v2327, 122
  %v2346 = vpop.permute.xlu0 %2345
  %2347 = vrot.lane.b32.xlu0 %v2328, 122
  %v2348 = vpop.permute.xlu0 %2347
  %2349 = vrot.lane.b32.xlu0 %v2329, 122
  %v2350 = vpop.permute.xlu0 %2349
  %2351 = vrot.lane.b32.xlu0 %v2330, 122
  %v2352 = vpop.permute.xlu0 %2351
  %2353 = vrot.lane.b32.xlu0 %v2331, 122
  %v2354 = vpop.permute.xlu0 %2353
  %2355 = vrot.lane.b32.xlu0 %v2332, 122
  %v2356 = vpop.permute.xlu0 %2355
  %v2357 = vsel %vm594, %v2342, %v2344
  %v2358 = vsel %vm594, %v2346, %v2348
  %v2359 = vsel %vm594, %v2350, %v2352
  %v2360 = vsel %vm594, %v2354, %v2356
  %v2369 = vmax.f32 %v2325, %v2357
  %v2370 = vmax.f32 %v2326, %v2344
  %v2371 = vmax.f32 %v2327, %v2358
  %v2372 = vmax.f32 %v2328, %v2348
  %v2373 = vmax.f32 %v2329, %v2359
  %v2374 = vmax.f32 %v2330, %v2352
  %v2375 = vmax.f32 %v2331, %v2360
  %v2376 = vmax.f32 %v2332, %v2356
  %s2377 = scalar_lea.vmem %s3, 192
  %2378 = vst [vmem:[%s2377] sm:$0xff] %v2369
  %2379 = vst.msk [vmem:[%s2377 + $0x8] sm:$0xff] %vm616, %v2370
  %2380 = vst [vmem:[%s2377 + $0x10] sm:$0xff] %v2371
  %2381 = vst.msk [vmem:[%s2377 + $0x18] sm:$0xff] %vm616, %v2372
  %2382 = vst [vmem:[%s2377 + $0x20] sm:$0xff] %v2373
  %2383 = vst.msk [vmem:[%s2377 + $0x28] sm:$0xff] %vm616, %v2374
  %2384 = vst [vmem:[%s2377 + $0x30] sm:$0x7] %v2375
  %2385 = vst.msk [vmem:[%s2377 + $0x38] sm:$0x7] %vm623, %v2376
  %s2386 = scalar_lea.vmem %s0, 64
  %v2387 = vld [vmem:[%s2386] sm:$0xf]
  %v2388 = vld [vmem:[%s2386 + $0x4] sm:$0xf]
  %v2389 = vld [vmem:[%s2386 + $0x8] sm:$0xf]
  %v2390 = vld [vmem:[%s2386 + $0xc] sm:$0xf]
  %v2391 = vld [vmem:[%s1] sm:$0xff]
  %v2392 = vld [vmem:[%s1 + $0x8] sm:$0xff]
  %v2393 = vld [vmem:[%s1 + $0x10] sm:$0xff]
  %v2394 = vld [vmem:[%s1 + $0x18] sm:$0xff]
  %v2395 = vld [vmem:[%s24] sm:$0xff]
  %v2396 = vld [vmem:[%s24 + $0x8] sm:$0xff]
  %v2397 = vld [vmem:[%s24 + $0x10] sm:$0xff]
  %v2398 = vld [vmem:[%s24 + $0x18] sm:$0xff]
  %v2403 = vunpack.c.l.b16 %v2387
  %v2404 = vunpack.c.l.b16 %v2388
  %v2405 = vunpack.c.l.b16 %v2389
  %v2406 = vunpack.c.l.b16 %v2390
  %v2407 = vpack.c.b16 %v2404, %v2403
  %v2408 = vpack.c.b16 %v2406, %v2405
  %v2410 = vshrl.u32 %v2407, 16
  %v2412 = vshll.u32 %v2407, 16
  %v2414 = vrot.slane %v2412, 1
  %v2415 = vor.u32 %v2410, %v2414
  %v2417 = vshll.u32 %v2408, 16
  %v2419 = vrot.slane %v2417, 1
  %v2420 = vsel %vm39, %v2415, %v2419
  %v2421 = vshrl.u32 %v2408, 16
  %v2423 = vor.u32 %v2421, %v2419
  %v2428 = vunpack.c.l.b16 %v2395
  %v2429 = vunpack.c.h.b16 %v2395
  %v2430 = vunpack.c.l.b16 %v2396
  %v2431 = vunpack.c.h.b16 %v2396
  %v2432 = vunpack.c.l.b16 %v2397
  %v2433 = vunpack.c.h.b16 %v2397
  %v2434 = vunpack.c.l.b16 %v2398
  %v2435 = vunpack.c.h.b16 %v2398
  %v2436 = vpack.c.b16 %v2430, %v2428
  %v2437 = vpack.c.b16 %v2431, %v2429
  %v2438 = vpack.c.b16 %v2434, %v2432
  %v2439 = vpack.c.b16 %v2435, %v2433
  %v2445 = vsel %vm75, %v2420, 0
  %v2448 = vsel %vm75, %v2423, 0
  %2450 = vmatprep.subr.bf16.mxu0 %v2437
  %2451 = vmatpush1.bf16.msra.mxu0 %v2436
  %2452 = vmatprep.subr.bf16.mxu0 %v2439
  %2453 = vmatpush1.bf16.msra.mxu0 %v2438
  %2454 = vmatprep.subr.bf16.mxu0 0
  %2455 = vmatpush1.bf16.msra.mxu0 0
  %2456 = vmatprep.subr.bf16.mxu0 0
  %2457 = vmatpush1.bf16.msra.mxu0 0
  %2458 = vmatprep.subr.bf16.mxu0 0
  %2459 = vmatpush1.bf16.msra.mxu0 0
  %2460 = vmatprep.subr.bf16.mxu0 0
  %2461 = vmatpush1.bf16.msra.mxu0 0
  %2462 = vmatprep.subr.bf16.mxu0 0
  %2463 = vmatpush1.bf16.msra.mxu0 0
  %2464 = vmatprep.subr.bf16.mxu0 0
  %2465 = vmatpush1.bf16.msra.mxu0 0
  %2466 = vmatprep.subr.bf16.mxu0 0
  %2467 = vmatpush1.bf16.msra.mxu0 0
  %2468 = vmatprep.subr.bf16.mxu0 0
  %2469 = vmatpush1.bf16.msra.mxu0 0
  %2470 = vmatprep.subr.bf16.mxu0 0
  %2471 = vmatpush1.bf16.msra.mxu0 0
  %2472 = vmatprep.subr.bf16.mxu0 0
  %2473 = vmatpush1.bf16.msra.mxu0 0
  %2474 = vmatprep.subr.bf16.mxu0 0
  %2475 = vmatpush1.bf16.msra.mxu0 0
  %2476 = vmatprep.subr.bf16.mxu0 0
  %2477 = vmatpush1.bf16.msra.mxu0 0
  %2478 = vmatprep.subr.bf16.mxu0 0
  %2479 = vmatpush1.bf16.msra.mxu0 0
  %2480 = vmatprep.subr.bf16.mxu0 0
  %2481 = vmatpush1.bf16.msra.mxu0 0
  %2482 = vmatprep.mubr.bf16.mxu0 0
  %2483 = vmatmul.mubr.bf16.gmra.mrb[0].mxu0 %v2445
  %v2484 = vpop.f32.mrb[0].mxu0
  %v2485 = vadd.f32 0.0, %v2484
  %v2486 = vpop.f32.mrb[0].mxu0
  %v2487 = vadd.f32 0.0, %v2486
  %v2488 = vpop.f32.mrb[0].mxu0
  %v2489 = vadd.f32 0.0, %v2488
  %v2490 = vpop.f32.mrb[0].mxu0
  %v2491 = vadd.f32 0.0, %v2490
  %2492 = vmatprep.mubr.bf16.mxu0 0
  %2493 = vmatmul.mubr.bf16.gmra.mrb[0].mxu0 %v2448
  %v2494 = vpop.f32.mrb[0].mxu0
  %v2495 = vadd.f32 0.0, %v2494
  %v2496 = vpop.f32.mrb[0].mxu0
  %v2497 = vadd.f32 0.0, %v2496
  %v2498 = vpop.f32.mrb[0].mxu0
  %v2499 = vadd.f32 0.0, %v2498
  %v2500 = vpop.f32.mrb[0].mxu0
  %v2501 = vadd.f32 0.0, %v2500
  %2502 = vdwg.mxu0
  %v2507 = vunpack.c.l.b16 %v2391
  %v2508 = vunpack.c.h.b16 %v2391
  %v2509 = vunpack.c.l.b16 %v2392
  %v2510 = vunpack.c.h.b16 %v2392
  %v2511 = vunpack.c.l.b16 %v2393
  %v2512 = vunpack.c.h.b16 %v2393
  %v2513 = vunpack.c.l.b16 %v2394
  %v2514 = vunpack.c.h.b16 %v2394
  %v2515 = vpack.c.b16 %v2509, %v2507
  %v2516 = vpack.c.b16 %v2510, %v2508
  %v2517 = vpack.c.b16 %v2513, %v2511
  %v2518 = vpack.c.b16 %v2514, %v2512
  %v2523 = vsel %vm75, %v2407, 0
  %v2525 = vsel %vm75, %v2408, 0
  %2527 = vmatprep.subr.bf16.mxu0 %v2516
  %2528 = vmatpush1.bf16.msra.mxu0 %v2515
  %2529 = vmatprep.subr.bf16.mxu0 %v2518
  %2530 = vmatpush1.bf16.msra.mxu0 %v2517
  %2531 = vmatprep.subr.bf16.mxu0 0
  %2532 = vmatpush1.bf16.msra.mxu0 0
  %2533 = vmatprep.subr.bf16.mxu0 0
  %2534 = vmatpush1.bf16.msra.mxu0 0
  %2535 = vmatprep.subr.bf16.mxu0 0
  %2536 = vmatpush1.bf16.msra.mxu0 0
  %2537 = vmatprep.subr.bf16.mxu0 0
  %2538 = vmatpush1.bf16.msra.mxu0 0
  %2539 = vmatprep.subr.bf16.mxu0 0
  %2540 = vmatpush1.bf16.msra.mxu0 0
  %2541 = vmatprep.subr.bf16.mxu0 0
  %2542 = vmatpush1.bf16.msra.mxu0 0
  %2543 = vmatprep.subr.bf16.mxu0 0
  %2544 = vmatpush1.bf16.msra.mxu0 0
  %2545 = vmatprep.subr.bf16.mxu0 0
  %2546 = vmatpush1.bf16.msra.mxu0 0
  %2547 = vmatprep.subr.bf16.mxu0 0
  %2548 = vmatpush1.bf16.msra.mxu0 0
  %2549 = vmatprep.subr.bf16.mxu0 0
  %2550 = vmatpush1.bf16.msra.mxu0 0
  %2551 = vmatprep.subr.bf16.mxu0 0
  %2552 = vmatpush1.bf16.msra.mxu0 0
  %2553 = vmatprep.subr.bf16.mxu0 0
  %2554 = vmatpush1.bf16.msra.mxu0 0
  %2555 = vmatprep.subr.bf16.mxu0 0
  %2556 = vmatpush1.bf16.msra.mxu0 0
  %2557 = vmatprep.subr.bf16.mxu0 0
  %2558 = vmatpush1.bf16.msra.mxu0 0
  %2559 = vmatprep.mubr.bf16.mxu0 0
  %2560 = vmatmul.mubr.bf16.gmra.mrb[0].mxu0 %v2523
  %v2561 = vpop.f32.mrb[0].mxu0
  %v2562 = vadd.f32 %v2485, %v2561
  %v2563 = vpop.f32.mrb[0].mxu0
  %v2564 = vadd.f32 %v2487, %v2563
  %v2565 = vpop.f32.mrb[0].mxu0
  %v2566 = vadd.f32 %v2489, %v2565
  %v2567 = vpop.f32.mrb[0].mxu0
  %v2568 = vadd.f32 %v2491, %v2567
  %2569 = vmatprep.mubr.bf16.mxu0 0
  %2570 = vmatmul.mubr.bf16.gmra.mrb[0].mxu0 %v2525
  %v2571 = vpop.f32.mrb[0].mxu0
  %v2572 = vadd.f32 %v2495, %v2571
  %v2573 = vpop.f32.mrb[0].mxu0
  %v2574 = vadd.f32 %v2497, %v2573
  %v2575 = vpop.f32.mrb[0].mxu0
  %v2576 = vadd.f32 %v2499, %v2575
  %v2577 = vpop.f32.mrb[0].mxu0
  %v2578 = vadd.f32 %v2501, %v2577
  %2579 = vdwg.mxu0
  %v2580 = vld [vmem:[%s212] sm:$0xff]
  %v2581 = vld [vmem:[%s212 + $0x8] sm:$0xff]
  %v2582 = vld [vmem:[%s212 + $0x10] sm:$0xff]
  %v2583 = vld [vmem:[%s212 + $0x18] sm:$0xff]
  %v2584 = vrot.slane %v2407, 1
  %v2585 = vrot.slane %v2408, 1
  %v2586 = vsel %vm217, %v2584, %v2585
  %v2591 = vunpack.c.l.b16 %v2580
  %v2592 = vunpack.c.h.b16 %v2580
  %v2593 = vunpack.c.l.b16 %v2581
  %v2594 = vunpack.c.h.b16 %v2581
  %v2595 = vunpack.c.l.b16 %v2582
  %v2596 = vunpack.c.h.b16 %v2582
  %v2597 = vunpack.c.l.b16 %v2583
  %v2598 = vunpack.c.h.b16 %v2583
  %v2599 = vpack.c.b16 %v2593, %v2591
  %v2600 = vpack.c.b16 %v2594, %v2592
  %v2601 = vpack.c.b16 %v2597, %v2595
  %v2602 = vpack.c.b16 %v2598, %v2596
  %v2608 = vsel %vm75, %v2586, 0
  %v2611 = vsel %vm75, %v2585, 0
  %2613 = vmatprep.subr.bf16.mxu0 %v2600
  %2614 = vmatpush1.bf16.msra.mxu0 %v2599
  %2615 = vmatprep.subr.bf16.mxu0 %v2602
  %2616 = vmatpush1.bf16.msra.mxu0 %v2601
  %2617 = vmatprep.subr.bf16.mxu0 0
  %2618 = vmatpush1.bf16.msra.mxu0 0
  %2619 = vmatprep.subr.bf16.mxu0 0
  %2620 = vmatpush1.bf16.msra.mxu0 0
  %2621 = vmatprep.subr.bf16.mxu0 0
  %2622 = vmatpush1.bf16.msra.mxu0 0
  %2623 = vmatprep.subr.bf16.mxu0 0
  %2624 = vmatpush1.bf16.msra.mxu0 0
  %2625 = vmatprep.subr.bf16.mxu0 0
  %2626 = vmatpush1.bf16.msra.mxu0 0
  %2627 = vmatprep.subr.bf16.mxu0 0
  %2628 = vmatpush1.bf16.msra.mxu0 0
  %2629 = vmatprep.subr.bf16.mxu0 0
  %2630 = vmatpush1.bf16.msra.mxu0 0
  %2631 = vmatprep.subr.bf16.mxu0 0
  %2632 = vmatpush1.bf16.msra.mxu0 0
  %2633 = vmatprep.subr.bf16.mxu0 0
  %2634 = vmatpush1.bf16.msra.mxu0 0
  %2635 = vmatprep.subr.bf16.mxu0 0
  %2636 = vmatpush1.bf16.msra.mxu0 0
  %2637 = vmatprep.subr.bf16.mxu0 0
  %2638 = vmatpush1.bf16.msra.mxu0 0
  %2639 = vmatprep.subr.bf16.mxu0 0
  %2640 = vmatpush1.bf16.msra.mxu0 0
  %2641 = vmatprep.subr.bf16.mxu0 0
  %2642 = vmatpush1.bf16.msra.mxu0 0
  %2643 = vmatprep.subr.bf16.mxu0 0
  %2644 = vmatpush1.bf16.msra.mxu0 0
  %2645 = vmatprep.mubr.bf16.mxu0 0
  %2646 = vmatmul.mubr.bf16.gmra.mrb[0].mxu0 %v2608
  %v2647 = vpop.f32.mrb[0].mxu0
  %v2648 = vadd.f32 0.0, %v2647
  %v2649 = vpop.f32.mrb[0].mxu0
  %v2650 = vadd.f32 0.0, %v2649
  %v2651 = vpop.f32.mrb[0].mxu0
  %v2652 = vadd.f32 0.0, %v2651
  %v2653 = vpop.f32.mrb[0].mxu0
  %v2654 = vadd.f32 0.0, %v2653
  %2655 = vmatprep.mubr.bf16.mxu0 0
  %2656 = vmatmul.mubr.bf16.gmra.mrb[0].mxu0 %v2611
  %v2657 = vpop.f32.mrb[0].mxu0
  %v2658 = vadd.f32 0.0, %v2657
  %v2659 = vpop.f32.mrb[0].mxu0
  %v2660 = vadd.f32 0.0, %v2659
  %v2661 = vpop.f32.mrb[0].mxu0
  %v2662 = vadd.f32 0.0, %v2661
  %v2663 = vpop.f32.mrb[0].mxu0
  %v2664 = vadd.f32 0.0, %v2663
  %2665 = vdwg.mxu0
  %v2666 = vadd.f32 %v2562, %v2648
  %v2667 = vadd.f32 %v2564, %v2650
  %v2668 = vadd.f32 %v2566, %v2652
  %v2669 = vadd.f32 %v2568, %v2654
  %v2670 = vadd.f32 %v2572, %v2658
  %v2671 = vadd.f32 %v2574, %v2660
  %v2672 = vadd.f32 %v2576, %v2662
  %v2673 = vadd.f32 %v2578, %v2664
  %v2674 = vld [vmem:[%s308] sm:$0xff]
  %v2675 = vld [vmem:[%s308 + $0x8] sm:$0xff]
  %v2676 = vld [vmem:[%s308 + $0x10] sm:$0xff]
  %v2677 = vld [vmem:[%s308 + $0x18] sm:$0xff]
  %v2678 = vrot.slane %v2410, 1
  %v2679 = vrot.slane %v2412, 2
  %v2680 = vor.u32 %v2678, %v2679
  %v2681 = vrot.slane %v2421, 1
  %v2682 = vrot.slane %v2417, 2
  %v2683 = vor.u32 %v2681, %v2682
  %v2684 = vsel %vm313, %v2680, %v2683
  %v2689 = vunpack.c.l.b16 %v2674
  %v2690 = vunpack.c.h.b16 %v2674
  %v2691 = vunpack.c.l.b16 %v2675
  %v2692 = vunpack.c.h.b16 %v2675
  %v2693 = vunpack.c.l.b16 %v2676
  %v2694 = vunpack.c.h.b16 %v2676
  %v2695 = vunpack.c.l.b16 %v2677
  %v2696 = vunpack.c.h.b16 %v2677
  %v2697 = vpack.c.b16 %v2691, %v2689
  %v2698 = vpack.c.b16 %v2692, %v2690
  %v2699 = vpack.c.b16 %v2695, %v2693
  %v2700 = vpack.c.b16 %v2696, %v2694
  %v2706 = vsel %vm75, %v2684, 0
  %v2709 = vsel %vm75, %v2683, 0
  %2711 = vmatprep.subr.bf16.mxu0 %v2698
  %2712 = vmatpush1.bf16.msra.mxu0 %v2697
  %2713 = vmatprep.subr.bf16.mxu0 %v2700
  %2714 = vmatpush1.bf16.msra.mxu0 %v2699
  %2715 = vmatprep.subr.bf16.mxu0 0
  %2716 = vmatpush1.bf16.msra.mxu0 0
  %2717 = vmatprep.subr.bf16.mxu0 0
  %2718 = vmatpush1.bf16.msra.mxu0 0
  %2719 = vmatprep.subr.bf16.mxu0 0
  %2720 = vmatpush1.bf16.msra.mxu0 0
  %2721 = vmatprep.subr.bf16.mxu0 0
  %2722 = vmatpush1.bf16.msra.mxu0 0
  %2723 = vmatprep.subr.bf16.mxu0 0
  %2724 = vmatpush1.bf16.msra.mxu0 0
  %2725 = vmatprep.subr.bf16.mxu0 0
  %2726 = vmatpush1.bf16.msra.mxu0 0
  %2727 = vmatprep.subr.bf16.mxu0 0
  %2728 = vmatpush1.bf16.msra.mxu0 0
  %2729 = vmatprep.subr.bf16.mxu0 0
  %2730 = vmatpush1.bf16.msra.mxu0 0
  %2731 = vmatprep.subr.bf16.mxu0 0
  %2732 = vmatpush1.bf16.msra.mxu0 0
  %2733 = vmatprep.subr.bf16.mxu0 0
  %2734 = vmatpush1.bf16.msra.mxu0 0
  %2735 = vmatprep.subr.bf16.mxu0 0
  %2736 = vmatpush1.bf16.msra.mxu0 0
  %2737 = vmatprep.subr.bf16.mxu0 0
  %2738 = vmatpush1.bf16.msra.mxu0 0
  %2739 = vmatprep.subr.bf16.mxu0 0
  %2740 = vmatpush1.bf16.msra.mxu0 0
  %2741 = vmatprep.subr.bf16.mxu0 0
  %2742 = vmatpush1.bf16.msra.mxu0 0
  %2743 = vmatprep.mubr.bf16.mxu0 0
  %2744 = vmatmul.mubr.bf16.gmra.mrb[0].mxu0 %v2706
  %v2745 = vpop.f32.mrb[0].mxu0
  %v2746 = vadd.f32 0.0, %v2745
  %v2747 = vpop.f32.mrb[0].mxu0
  %v2748 = vadd.f32 0.0, %v2747
  %v2749 = vpop.f32.mrb[0].mxu0
  %v2750 = vadd.f32 0.0, %v2749
  %v2751 = vpop.f32.mrb[0].mxu0
  %v2752 = vadd.f32 0.0, %v2751
  %2753 = vmatprep.mubr.bf16.mxu0 0
  %2754 = vmatmul.mubr.bf16.gmra.mrb[0].mxu0 %v2709
  %v2755 = vpop.f32.mrb[0].mxu0
  %v2756 = vadd.f32 0.0, %v2755
  %v2757 = vpop.f32.mrb[0].mxu0
  %v2758 = vadd.f32 0.0, %v2757
  %v2759 = vpop.f32.mrb[0].mxu0
  %v2760 = vadd.f32 0.0, %v2759
  %v2761 = vpop.f32.mrb[0].mxu0
  %v2762 = vadd.f32 0.0, %v2761
  %2763 = vdwg.mxu0
  %v2764 = vadd.f32 %v2666, %v2746
  %v2765 = vadd.f32 %v2667, %v2748
  %v2766 = vadd.f32 %v2668, %v2750
  %v2767 = vadd.f32 %v2669, %v2752
  %v2768 = vadd.f32 %v2670, %v2756
  %v2769 = vadd.f32 %v2671, %v2758
  %v2770 = vadd.f32 %v2672, %v2760
  %v2771 = vadd.f32 %v2673, %v2762
  %v2772 = vld [vmem:[%s408] sm:$0xff]
  %v2773 = vld [vmem:[%s408 + $0x8] sm:$0xff]
  %v2774 = vld [vmem:[%s408 + $0x10] sm:$0xff]
  %v2775 = vld [vmem:[%s408 + $0x18] sm:$0xff]
  %v2776 = vrot.slane %v2407, 2
  %v2777 = vrot.slane %v2408, 2
  %v2778 = vsel %vm413, %v2776, %v2777
  %v2783 = vunpack.c.l.b16 %v2772
  %v2784 = vunpack.c.h.b16 %v2772
  %v2785 = vunpack.c.l.b16 %v2773
  %v2786 = vunpack.c.h.b16 %v2773
  %v2787 = vunpack.c.l.b16 %v2774
  %v2788 = vunpack.c.h.b16 %v2774
  %v2789 = vunpack.c.l.b16 %v2775
  %v2790 = vunpack.c.h.b16 %v2775
  %v2791 = vpack.c.b16 %v2785, %v2783
  %v2792 = vpack.c.b16 %v2786, %v2784
  %v2793 = vpack.c.b16 %v2789, %v2787
  %v2794 = vpack.c.b16 %v2790, %v2788
  %v2800 = vsel %vm75, %v2778, 0
  %v2803 = vsel %vm75, %v2777, 0
  %2805 = vmatprep.subr.bf16.mxu0 %v2792
  %2806 = vmatpush1.bf16.msra.mxu0 %v2791
  %2807 = vmatprep.subr.bf16.mxu0 %v2794
  %2808 = vmatpush1.bf16.msra.mxu0 %v2793
  %2809 = vmatprep.subr.bf16.mxu0 0
  %2810 = vmatpush1.bf16.msra.mxu0 0
  %2811 = vmatprep.subr.bf16.mxu0 0
  %2812 = vmatpush1.bf16.msra.mxu0 0
  %2813 = vmatprep.subr.bf16.mxu0 0
  %2814 = vmatpush1.bf16.msra.mxu0 0
  %2815 = vmatprep.subr.bf16.mxu0 0
  %2816 = vmatpush1.bf16.msra.mxu0 0
  %2817 = vmatprep.subr.bf16.mxu0 0
  %2818 = vmatpush1.bf16.msra.mxu0 0
  %2819 = vmatprep.subr.bf16.mxu0 0
  %2820 = vmatpush1.bf16.msra.mxu0 0
  %2821 = vmatprep.subr.bf16.mxu0 0
  %2822 = vmatpush1.bf16.msra.mxu0 0
  %2823 = vmatprep.subr.bf16.mxu0 0
  %2824 = vmatpush1.bf16.msra.mxu0 0
  %2825 = vmatprep.subr.bf16.mxu0 0
  %2826 = vmatpush1.bf16.msra.mxu0 0
  %2827 = vmatprep.subr.bf16.mxu0 0
  %2828 = vmatpush1.bf16.msra.mxu0 0
  %2829 = vmatprep.subr.bf16.mxu0 0
  %2830 = vmatpush1.bf16.msra.mxu0 0
  %2831 = vmatprep.subr.bf16.mxu0 0
  %2832 = vmatpush1.bf16.msra.mxu0 0
  %2833 = vmatprep.subr.bf16.mxu0 0
  %2834 = vmatpush1.bf16.msra.mxu0 0
  %2835 = vmatprep.subr.bf16.mxu0 0
  %2836 = vmatpush1.bf16.msra.mxu0 0
  %2837 = vmatprep.mubr.bf16.mxu0 0
  %2838 = vmatmul.mubr.bf16.gmra.mrb[0].mxu0 %v2800
  %v2839 = vpop.f32.mrb[0].mxu0
  %v2840 = vadd.f32 0.0, %v2839
  %v2841 = vpop.f32.mrb[0].mxu0
  %v2842 = vadd.f32 0.0, %v2841
  %v2843 = vpop.f32.mrb[0].mxu0
  %v2844 = vadd.f32 0.0, %v2843
  %v2845 = vpop.f32.mrb[0].mxu0
  %v2846 = vadd.f32 0.0, %v2845
  %2847 = vmatprep.mubr.bf16.mxu0 0
  %2848 = vmatmul.mubr.bf16.gmra.mrb[0].mxu0 %v2803
  %v2849 = vpop.f32.mrb[0].mxu0
  %v2850 = vadd.f32 0.0, %v2849
  %v2851 = vpop.f32.mrb[0].mxu0
  %v2852 = vadd.f32 0.0, %v2851
  %v2853 = vpop.f32.mrb[0].mxu0
  %v2854 = vadd.f32 0.0, %v2853
  %v2855 = vpop.f32.mrb[0].mxu0
  %v2856 = vadd.f32 0.0, %v2855
  %2857 = vdwg.mxu0
  %v2858 = vadd.f32 %v2764, %v2840
  %v2859 = vadd.f32 %v2765, %v2842
  %v2860 = vadd.f32 %v2766, %v2844
  %v2861 = vadd.f32 %v2767, %v2846
  %v2862 = vadd.f32 %v2768, %v2850
  %v2863 = vadd.f32 %v2769, %v2852
  %v2864 = vadd.f32 %v2770, %v2854
  %v2865 = vadd.f32 %v2771, %v2856
  %v2866 = vadd.f32 %v2858, %v508
  %v2867 = vadd.f32 %v2859, %v512
  %v2868 = vadd.f32 %v2860, %v508
  %v2869 = vadd.f32 %v2861, %v512
  %v2870 = vadd.f32 %v2862, %v508
  %v2871 = vadd.f32 %v2863, %v512
  %v2872 = vadd.f32 %v2864, %v508
  %v2873 = vadd.f32 %v2865, %v512
  %v2874 = vmax.f32 %v2866, 0.0
  %v2875 = vmax.f32 %v2867, 0.0
  %v2876 = vmax.f32 %v2868, 0.0
  %v2877 = vmax.f32 %v2869, 0.0
  %v2878 = vmax.f32 %v2870, 0.0
  %v2879 = vmax.f32 %v2871, 0.0
  %v2880 = vmax.f32 %v2872, 0.0
  %v2881 = vmax.f32 %v2873, 0.0
  %v2890 = vrot.slane %v2874, 1
  %v2891 = vrot.slane %v2876, 1
  %v2892 = vsel %vm539, %v2890, %v2891
  %v2893 = vrot.slane %v2875, 1
  %v2894 = vrot.slane %v2877, 1
  %v2895 = vsel %vm539, %v2893, %v2894
  %v2896 = vrot.slane %v2878, 1
  %v2897 = vsel %vm539, %v2891, %v2896
  %v2898 = vrot.slane %v2879, 1
  %v2899 = vsel %vm539, %v2894, %v2898
  %v2900 = vrot.slane %v2880, 1
  %v2901 = vsel %vm539, %v2896, %v2900
  %v2902 = vrot.slane %v2881, 1
  %v2903 = vsel %vm539, %v2898, %v2902
  %v2912 = vmax.f32 %v2874, %v2892
  %v2913 = vmax.f32 %v2875, %v2895
  %v2914 = vmax.f32 %v2876, %v2897
  %v2915 = vmax.f32 %v2877, %v2899
  %v2916 = vmax.f32 %v2878, %v2901
  %v2917 = vmax.f32 %v2879, %v2903
  %v2918 = vmax.f32 %v2880, %v2900
  %v2919 = vmax.f32 %v2881, %v2902
  %2928 = vrot.lane.b32.xlu0 %v2912, 122
  %v2929 = vpop.permute.xlu0 %2928
  %2930 = vrot.lane.b32.xlu0 %v2913, 122
  %v2931 = vpop.permute.xlu0 %2930
  %2932 = vrot.lane.b32.xlu0 %v2914, 122
  %v2933 = vpop.permute.xlu0 %2932
  %2934 = vrot.lane.b32.xlu0 %v2915, 122
  %v2935 = vpop.permute.xlu0 %2934
  %2936 = vrot.lane.b32.xlu0 %v2916, 122
  %v2937 = vpop.permute.xlu0 %2936
  %2938 = vrot.lane.b32.xlu0 %v2917, 122
  %v2939 = vpop.permute.xlu0 %2938
  %2940 = vrot.lane.b32.xlu0 %v2918, 122
  %v2941 = vpop.permute.xlu0 %2940
  %2942 = vrot.lane.b32.xlu0 %v2919, 122
  %v2943 = vpop.permute.xlu0 %2942
  %v2944 = vsel %vm594, %v2929, %v2931
  %v2945 = vsel %vm594, %v2933, %v2935
  %v2946 = vsel %vm594, %v2937, %v2939
  %v2947 = vsel %vm594, %v2941, %v2943
  %v2956 = vmax.f32 %v2912, %v2944
  %v2957 = vmax.f32 %v2913, %v2931
  %v2958 = vmax.f32 %v2914, %v2945
  %v2959 = vmax.f32 %v2915, %v2935
  %v2960 = vmax.f32 %v2916, %v2946
  %v2961 = vmax.f32 %v2917, %v2939
  %v2962 = vmax.f32 %v2918, %v2947
  %v2963 = vmax.f32 %v2919, %v2943
  %s2964 = scalar_lea.vmem %s3, 256
  %2965 = vst [vmem:[%s2964] sm:$0xff] %v2956
  %2966 = vst.msk [vmem:[%s2964 + $0x8] sm:$0xff] %vm616, %v2957
  %2967 = vst [vmem:[%s2964 + $0x10] sm:$0xff] %v2958
  %2968 = vst.msk [vmem:[%s2964 + $0x18] sm:$0xff] %vm616, %v2959
  %2969 = vst [vmem:[%s2964 + $0x20] sm:$0xff] %v2960
  %2970 = vst.msk [vmem:[%s2964 + $0x28] sm:$0xff] %vm616, %v2961
  %2971 = vst [vmem:[%s2964 + $0x30] sm:$0x7] %v2962
  %2972 = vst.msk [vmem:[%s2964 + $0x38] sm:$0x7] %vm623, %v2963
  %s2973 = scalar_lea.vmem %s0, 80
  %v2974 = vld [vmem:[%s2973] sm:$0xf]
  %v2975 = vld [vmem:[%s2973 + $0x4] sm:$0xf]
  %v2976 = vld [vmem:[%s2973 + $0x8] sm:$0xf]
  %v2977 = vld [vmem:[%s2973 + $0xc] sm:$0xf]
  %v2978 = vld [vmem:[%s1] sm:$0xff]
  %v2979 = vld [vmem:[%s1 + $0x8] sm:$0xff]
  %v2980 = vld [vmem:[%s1 + $0x10] sm:$0xff]
  %v2981 = vld [vmem:[%s1 + $0x18] sm:$0xff]
  %v2982 = vld [vmem:[%s24] sm:$0xff]
  %v2983 = vld [vmem:[%s24 + $0x8] sm:$0xff]
  %v2984 = vld [vmem:[%s24 + $0x10] sm:$0xff]
  %v2985 = vld [vmem:[%s24 + $0x18] sm:$0xff]
  %v2990 = vunpack.c.l.b16 %v2974
  %v2991 = vunpack.c.l.b16 %v2975
  %v2992 = vunpack.c.l.b16 %v2976
  %v2993 = vunpack.c.l.b16 %v2977
  %v2994 = vpack.c.b16 %v2991, %v2990
  %v2995 = vpack.c.b16 %v2993, %v2992
  %v2997 = vshrl.u32 %v2994, 16
  %v2999 = vshll.u32 %v2994, 16
  %v3001 = vrot.slane %v2999, 1
  %v3002 = vor.u32 %v2997, %v3001
  %v3004 = vshll.u32 %v2995, 16
  %v3006 = vrot.slane %v3004, 1
  %v3007 = vsel %vm39, %v3002, %v3006
  %v3008 = vshrl.u32 %v2995, 16
  %v3010 = vor.u32 %v3008, %v3006
  %v3015 = vunpack.c.l.b16 %v2982
  %v3016 = vunpack.c.h.b16 %v2982
  %v3017 = vunpack.c.l.b16 %v2983
  %v3018 = vunpack.c.h.b16 %v2983
  %v3019 = vunpack.c.l.b16 %v2984
  %v3020 = vunpack.c.h.b16 %v2984
  %v3021 = vunpack.c.l.b16 %v2985
  %v3022 = vunpack.c.h.b16 %v2985
  %v3023 = vpack.c.b16 %v3017, %v3015
  %v3024 = vpack.c.b16 %v3018, %v3016
  %v3025 = vpack.c.b16 %v3021, %v3019
  %v3026 = vpack.c.b16 %v3022, %v3020
  %v3032 = vsel %vm75, %v3007, 0
  %v3035 = vsel %vm75, %v3010, 0
  %3037 = vmatprep.subr.bf16.mxu0 %v3024
  %3038 = vmatpush1.bf16.msra.mxu0 %v3023
  %3039 = vmatprep.subr.bf16.mxu0 %v3026
  %3040 = vmatpush1.bf16.msra.mxu0 %v3025
  %3041 = vmatprep.subr.bf16.mxu0 0
  %3042 = vmatpush1.bf16.msra.mxu0 0
  %3043 = vmatprep.subr.bf16.mxu0 0
  %3044 = vmatpush1.bf16.msra.mxu0 0
  %3045 = vmatprep.subr.bf16.mxu0 0
  %3046 = vmatpush1.bf16.msra.mxu0 0
  %3047 = vmatprep.subr.bf16.mxu0 0
  %3048 = vmatpush1.bf16.msra.mxu0 0
  %3049 = vmatprep.subr.bf16.mxu0 0
  %3050 = vmatpush1.bf16.msra.mxu0 0
  %3051 = vmatprep.subr.bf16.mxu0 0
  %3052 = vmatpush1.bf16.msra.mxu0 0
  %3053 = vmatprep.subr.bf16.mxu0 0
  %3054 = vmatpush1.bf16.msra.mxu0 0
  %3055 = vmatprep.subr.bf16.mxu0 0
  %3056 = vmatpush1.bf16.msra.mxu0 0
  %3057 = vmatprep.subr.bf16.mxu0 0
  %3058 = vmatpush1.bf16.msra.mxu0 0
  %3059 = vmatprep.subr.bf16.mxu0 0
  %3060 = vmatpush1.bf16.msra.mxu0 0
  %3061 = vmatprep.subr.bf16.mxu0 0
  %3062 = vmatpush1.bf16.msra.mxu0 0
  %3063 = vmatprep.subr.bf16.mxu0 0
  %3064 = vmatpush1.bf16.msra.mxu0 0
  %3065 = vmatprep.subr.bf16.mxu0 0
  %3066 = vmatpush1.bf16.msra.mxu0 0
  %3067 = vmatprep.subr.bf16.mxu0 0
  %3068 = vmatpush1.bf16.msra.mxu0 0
  %3069 = vmatprep.mubr.bf16.mxu0 0
  %3070 = vmatmul.mubr.bf16.gmra.mrb[0].mxu0 %v3032
  %v3071 = vpop.f32.mrb[0].mxu0
  %v3072 = vadd.f32 0.0, %v3071
  %v3073 = vpop.f32.mrb[0].mxu0
  %v3074 = vadd.f32 0.0, %v3073
  %v3075 = vpop.f32.mrb[0].mxu0
  %v3076 = vadd.f32 0.0, %v3075
  %v3077 = vpop.f32.mrb[0].mxu0
  %v3078 = vadd.f32 0.0, %v3077
  %3079 = vmatprep.mubr.bf16.mxu0 0
  %3080 = vmatmul.mubr.bf16.gmra.mrb[0].mxu0 %v3035
  %v3081 = vpop.f32.mrb[0].mxu0
  %v3082 = vadd.f32 0.0, %v3081
  %v3083 = vpop.f32.mrb[0].mxu0
  %v3084 = vadd.f32 0.0, %v3083
  %v3085 = vpop.f32.mrb[0].mxu0
  %v3086 = vadd.f32 0.0, %v3085
  %v3087 = vpop.f32.mrb[0].mxu0
  %v3088 = vadd.f32 0.0, %v3087
  %3089 = vdwg.mxu0
  %v3094 = vunpack.c.l.b16 %v2978
  %v3095 = vunpack.c.h.b16 %v2978
  %v3096 = vunpack.c.l.b16 %v2979
  %v3097 = vunpack.c.h.b16 %v2979
  %v3098 = vunpack.c.l.b16 %v2980
  %v3099 = vunpack.c.h.b16 %v2980
  %v3100 = vunpack.c.l.b16 %v2981
  %v3101 = vunpack.c.h.b16 %v2981
  %v3102 = vpack.c.b16 %v3096, %v3094
  %v3103 = vpack.c.b16 %v3097, %v3095
  %v3104 = vpack.c.b16 %v3100, %v3098
  %v3105 = vpack.c.b16 %v3101, %v3099
  %v3110 = vsel %vm75, %v2994, 0
  %v3112 = vsel %vm75, %v2995, 0
  %3114 = vmatprep.subr.bf16.mxu0 %v3103
  %3115 = vmatpush1.bf16.msra.mxu0 %v3102
  %3116 = vmatprep.subr.bf16.mxu0 %v3105
  %3117 = vmatpush1.bf16.msra.mxu0 %v3104
  %3118 = vmatprep.subr.bf16.mxu0 0
  %3119 = vmatpush1.bf16.msra.mxu0 0
  %3120 = vmatprep.subr.bf16.mxu0 0
  %3121 = vmatpush1.bf16.msra.mxu0 0
  %3122 = vmatprep.subr.bf16.mxu0 0
  %3123 = vmatpush1.bf16.msra.mxu0 0
  %3124 = vmatprep.subr.bf16.mxu0 0
  %3125 = vmatpush1.bf16.msra.mxu0 0
  %3126 = vmatprep.subr.bf16.mxu0 0
  %3127 = vmatpush1.bf16.msra.mxu0 0
  %3128 = vmatprep.subr.bf16.mxu0 0
  %3129 = vmatpush1.bf16.msra.mxu0 0
  %3130 = vmatprep.subr.bf16.mxu0 0
  %3131 = vmatpush1.bf16.msra.mxu0 0
  %3132 = vmatprep.subr.bf16.mxu0 0
  %3133 = vmatpush1.bf16.msra.mxu0 0
  %3134 = vmatprep.subr.bf16.mxu0 0
  %3135 = vmatpush1.bf16.msra.mxu0 0
  %3136 = vmatprep.subr.bf16.mxu0 0
  %3137 = vmatpush1.bf16.msra.mxu0 0
  %3138 = vmatprep.subr.bf16.mxu0 0
  %3139 = vmatpush1.bf16.msra.mxu0 0
  %3140 = vmatprep.subr.bf16.mxu0 0
  %3141 = vmatpush1.bf16.msra.mxu0 0
  %3142 = vmatprep.subr.bf16.mxu0 0
  %3143 = vmatpush1.bf16.msra.mxu0 0
  %3144 = vmatprep.subr.bf16.mxu0 0
  %3145 = vmatpush1.bf16.msra.mxu0 0
  %3146 = vmatprep.mubr.bf16.mxu0 0
  %3147 = vmatmul.mubr.bf16.gmra.mrb[0].mxu0 %v3110
  %v3148 = vpop.f32.mrb[0].mxu0
  %v3149 = vadd.f32 %v3072, %v3148
  %v3150 = vpop.f32.mrb[0].mxu0
  %v3151 = vadd.f32 %v3074, %v3150
  %v3152 = vpop.f32.mrb[0].mxu0
  %v3153 = vadd.f32 %v3076, %v3152
  %v3154 = vpop.f32.mrb[0].mxu0
  %v3155 = vadd.f32 %v3078, %v3154
  %3156 = vmatprep.mubr.bf16.mxu0 0
  %3157 = vmatmul.mubr.bf16.gmra.mrb[0].mxu0 %v3112
  %v3158 = vpop.f32.mrb[0].mxu0
  %v3159 = vadd.f32 %v3082, %v3158
  %v3160 = vpop.f32.mrb[0].mxu0
  %v3161 = vadd.f32 %v3084, %v3160
  %v3162 = vpop.f32.mrb[0].mxu0
  %v3163 = vadd.f32 %v3086, %v3162
  %v3164 = vpop.f32.mrb[0].mxu0
  %v3165 = vadd.f32 %v3088, %v3164
  %3166 = vdwg.mxu0
  %v3167 = vld [vmem:[%s212] sm:$0xff]
  %v3168 = vld [vmem:[%s212 + $0x8] sm:$0xff]
  %v3169 = vld [vmem:[%s212 + $0x10] sm:$0xff]
  %v3170 = vld [vmem:[%s212 + $0x18] sm:$0xff]
  %v3171 = vrot.slane %v2994, 1
  %v3172 = vrot.slane %v2995, 1
  %v3173 = vsel %vm217, %v3171, %v3172
  %v3178 = vunpack.c.l.b16 %v3167
  %v3179 = vunpack.c.h.b16 %v3167
  %v3180 = vunpack.c.l.b16 %v3168
  %v3181 = vunpack.c.h.b16 %v3168
  %v3182 = vunpack.c.l.b16 %v3169
  %v3183 = vunpack.c.h.b16 %v3169
  %v3184 = vunpack.c.l.b16 %v3170
  %v3185 = vunpack.c.h.b16 %v3170
  %v3186 = vpack.c.b16 %v3180, %v3178
  %v3187 = vpack.c.b16 %v3181, %v3179
  %v3188 = vpack.c.b16 %v3184, %v3182
  %v3189 = vpack.c.b16 %v3185, %v3183
  %v3195 = vsel %vm75, %v3173, 0
  %v3198 = vsel %vm75, %v3172, 0
  %3200 = vmatprep.subr.bf16.mxu0 %v3187
  %3201 = vmatpush1.bf16.msra.mxu0 %v3186
  %3202 = vmatprep.subr.bf16.mxu0 %v3189
  %3203 = vmatpush1.bf16.msra.mxu0 %v3188
  %3204 = vmatprep.subr.bf16.mxu0 0
  %3205 = vmatpush1.bf16.msra.mxu0 0
  %3206 = vmatprep.subr.bf16.mxu0 0
  %3207 = vmatpush1.bf16.msra.mxu0 0
  %3208 = vmatprep.subr.bf16.mxu0 0
  %3209 = vmatpush1.bf16.msra.mxu0 0
  %3210 = vmatprep.subr.bf16.mxu0 0
  %3211 = vmatpush1.bf16.msra.mxu0 0
  %3212 = vmatprep.subr.bf16.mxu0 0
  %3213 = vmatpush1.bf16.msra.mxu0 0
  %3214 = vmatprep.subr.bf16.mxu0 0
  %3215 = vmatpush1.bf16.msra.mxu0 0
  %3216 = vmatprep.subr.bf16.mxu0 0
  %3217 = vmatpush1.bf16.msra.mxu0 0
  %3218 = vmatprep.subr.bf16.mxu0 0
  %3219 = vmatpush1.bf16.msra.mxu0 0
  %3220 = vmatprep.subr.bf16.mxu0 0
  %3221 = vmatpush1.bf16.msra.mxu0 0
  %3222 = vmatprep.subr.bf16.mxu0 0
  %3223 = vmatpush1.bf16.msra.mxu0 0
  %3224 = vmatprep.subr.bf16.mxu0 0
  %3225 = vmatpush1.bf16.msra.mxu0 0
  %3226 = vmatprep.subr.bf16.mxu0 0
  %3227 = vmatpush1.bf16.msra.mxu0 0
  %3228 = vmatprep.subr.bf16.mxu0 0
  %3229 = vmatpush1.bf16.msra.mxu0 0
  %3230 = vmatprep.subr.bf16.mxu0 0
  %3231 = vmatpush1.bf16.msra.mxu0 0
  %3232 = vmatprep.mubr.bf16.mxu0 0
  %3233 = vmatmul.mubr.bf16.gmra.mrb[0].mxu0 %v3195
  %v3234 = vpop.f32.mrb[0].mxu0
  %v3235 = vadd.f32 0.0, %v3234
  %v3236 = vpop.f32.mrb[0].mxu0
  %v3237 = vadd.f32 0.0, %v3236
  %v3238 = vpop.f32.mrb[0].mxu0
  %v3239 = vadd.f32 0.0, %v3238
  %v3240 = vpop.f32.mrb[0].mxu0
  %v3241 = vadd.f32 0.0, %v3240
  %3242 = vmatprep.mubr.bf16.mxu0 0
  %3243 = vmatmul.mubr.bf16.gmra.mrb[0].mxu0 %v3198
  %v3244 = vpop.f32.mrb[0].mxu0
  %v3245 = vadd.f32 0.0, %v3244
  %v3246 = vpop.f32.mrb[0].mxu0
  %v3247 = vadd.f32 0.0, %v3246
  %v3248 = vpop.f32.mrb[0].mxu0
  %v3249 = vadd.f32 0.0, %v3248
  %v3250 = vpop.f32.mrb[0].mxu0
  %v3251 = vadd.f32 0.0, %v3250
  %3252 = vdwg.mxu0
  %v3253 = vadd.f32 %v3149, %v3235
  %v3254 = vadd.f32 %v3151, %v3237
  %v3255 = vadd.f32 %v3153, %v3239
  %v3256 = vadd.f32 %v3155, %v3241
  %v3257 = vadd.f32 %v3159, %v3245
  %v3258 = vadd.f32 %v3161, %v3247
  %v3259 = vadd.f32 %v3163, %v3249
  %v3260 = vadd.f32 %v3165, %v3251
  %v3261 = vld [vmem:[%s308] sm:$0xff]
  %v3262 = vld [vmem:[%s308 + $0x8] sm:$0xff]
  %v3263 = vld [vmem:[%s308 + $0x10] sm:$0xff]
  %v3264 = vld [vmem:[%s308 + $0x18] sm:$0xff]
  %v3265 = vrot.slane %v2997, 1
  %v3266 = vrot.slane %v2999, 2
  %v3267 = vor.u32 %v3265, %v3266
  %v3268 = vrot.slane %v3008, 1
  %v3269 = vrot.slane %v3004, 2
  %v3270 = vor.u32 %v3268, %v3269
  %v3271 = vsel %vm313, %v3267, %v3270
  %v3276 = vunpack.c.l.b16 %v3261
  %v3277 = vunpack.c.h.b16 %v3261
  %v3278 = vunpack.c.l.b16 %v3262
  %v3279 = vunpack.c.h.b16 %v3262
  %v3280 = vunpack.c.l.b16 %v3263
  %v3281 = vunpack.c.h.b16 %v3263
  %v3282 = vunpack.c.l.b16 %v3264
  %v3283 = vunpack.c.h.b16 %v3264
  %v3284 = vpack.c.b16 %v3278, %v3276
  %v3285 = vpack.c.b16 %v3279, %v3277
  %v3286 = vpack.c.b16 %v3282, %v3280
  %v3287 = vpack.c.b16 %v3283, %v3281
  %v3293 = vsel %vm75, %v3271, 0
  %v3296 = vsel %vm75, %v3270, 0
  %3298 = vmatprep.subr.bf16.mxu0 %v3285
  %3299 = vmatpush1.bf16.msra.mxu0 %v3284
  %3300 = vmatprep.subr.bf16.mxu0 %v3287
  %3301 = vmatpush1.bf16.msra.mxu0 %v3286
  %3302 = vmatprep.subr.bf16.mxu0 0
  %3303 = vmatpush1.bf16.msra.mxu0 0
  %3304 = vmatprep.subr.bf16.mxu0 0
  %3305 = vmatpush1.bf16.msra.mxu0 0
  %3306 = vmatprep.subr.bf16.mxu0 0
  %3307 = vmatpush1.bf16.msra.mxu0 0
  %3308 = vmatprep.subr.bf16.mxu0 0
  %3309 = vmatpush1.bf16.msra.mxu0 0
  %3310 = vmatprep.subr.bf16.mxu0 0
  %3311 = vmatpush1.bf16.msra.mxu0 0
  %3312 = vmatprep.subr.bf16.mxu0 0
  %3313 = vmatpush1.bf16.msra.mxu0 0
  %3314 = vmatprep.subr.bf16.mxu0 0
  %3315 = vmatpush1.bf16.msra.mxu0 0
  %3316 = vmatprep.subr.bf16.mxu0 0
  %3317 = vmatpush1.bf16.msra.mxu0 0
  %3318 = vmatprep.subr.bf16.mxu0 0
  %3319 = vmatpush1.bf16.msra.mxu0 0
  %3320 = vmatprep.subr.bf16.mxu0 0
  %3321 = vmatpush1.bf16.msra.mxu0 0
  %3322 = vmatprep.subr.bf16.mxu0 0
  %3323 = vmatpush1.bf16.msra.mxu0 0
  %3324 = vmatprep.subr.bf16.mxu0 0
  %3325 = vmatpush1.bf16.msra.mxu0 0
  %3326 = vmatprep.subr.bf16.mxu0 0
  %3327 = vmatpush1.bf16.msra.mxu0 0
  %3328 = vmatprep.subr.bf16.mxu0 0
  %3329 = vmatpush1.bf16.msra.mxu0 0
  %3330 = vmatprep.mubr.bf16.mxu0 0
  %3331 = vmatmul.mubr.bf16.gmra.mrb[0].mxu0 %v3293
  %v3332 = vpop.f32.mrb[0].mxu0
  %v3333 = vadd.f32 0.0, %v3332
  %v3334 = vpop.f32.mrb[0].mxu0
  %v3335 = vadd.f32 0.0, %v3334
  %v3336 = vpop.f32.mrb[0].mxu0
  %v3337 = vadd.f32 0.0, %v3336
  %v3338 = vpop.f32.mrb[0].mxu0
  %v3339 = vadd.f32 0.0, %v3338
  %3340 = vmatprep.mubr.bf16.mxu0 0
  %3341 = vmatmul.mubr.bf16.gmra.mrb[0].mxu0 %v3296
  %v3342 = vpop.f32.mrb[0].mxu0
  %v3343 = vadd.f32 0.0, %v3342
  %v3344 = vpop.f32.mrb[0].mxu0
  %v3345 = vadd.f32 0.0, %v3344
  %v3346 = vpop.f32.mrb[0].mxu0
  %v3347 = vadd.f32 0.0, %v3346
  %v3348 = vpop.f32.mrb[0].mxu0
  %v3349 = vadd.f32 0.0, %v3348
  %3350 = vdwg.mxu0
  %v3351 = vadd.f32 %v3253, %v3333
  %v3352 = vadd.f32 %v3254, %v3335
  %v3353 = vadd.f32 %v3255, %v3337
  %v3354 = vadd.f32 %v3256, %v3339
  %v3355 = vadd.f32 %v3257, %v3343
  %v3356 = vadd.f32 %v3258, %v3345
  %v3357 = vadd.f32 %v3259, %v3347
  %v3358 = vadd.f32 %v3260, %v3349
  %v3359 = vld [vmem:[%s408] sm:$0xff]
  %v3360 = vld [vmem:[%s408 + $0x8] sm:$0xff]
  %v3361 = vld [vmem:[%s408 + $0x10] sm:$0xff]
  %v3362 = vld [vmem:[%s408 + $0x18] sm:$0xff]
  %v3363 = vrot.slane %v2994, 2
  %v3364 = vrot.slane %v2995, 2
  %v3365 = vsel %vm413, %v3363, %v3364
  %v3370 = vunpack.c.l.b16 %v3359
  %v3371 = vunpack.c.h.b16 %v3359
  %v3372 = vunpack.c.l.b16 %v3360
  %v3373 = vunpack.c.h.b16 %v3360
  %v3374 = vunpack.c.l.b16 %v3361
  %v3375 = vunpack.c.h.b16 %v3361
  %v3376 = vunpack.c.l.b16 %v3362
  %v3377 = vunpack.c.h.b16 %v3362
  %v3378 = vpack.c.b16 %v3372, %v3370
  %v3379 = vpack.c.b16 %v3373, %v3371
  %v3380 = vpack.c.b16 %v3376, %v3374
  %v3381 = vpack.c.b16 %v3377, %v3375
  %v3387 = vsel %vm75, %v3365, 0
  %v3390 = vsel %vm75, %v3364, 0
  %3392 = vmatprep.subr.bf16.mxu0 %v3379
  %3393 = vmatpush1.bf16.msra.mxu0 %v3378
  %3394 = vmatprep.subr.bf16.mxu0 %v3381
  %3395 = vmatpush1.bf16.msra.mxu0 %v3380
  %3396 = vmatprep.subr.bf16.mxu0 0
  %3397 = vmatpush1.bf16.msra.mxu0 0
  %3398 = vmatprep.subr.bf16.mxu0 0
  %3399 = vmatpush1.bf16.msra.mxu0 0
  %3400 = vmatprep.subr.bf16.mxu0 0
  %3401 = vmatpush1.bf16.msra.mxu0 0
  %3402 = vmatprep.subr.bf16.mxu0 0
  %3403 = vmatpush1.bf16.msra.mxu0 0
  %3404 = vmatprep.subr.bf16.mxu0 0
  %3405 = vmatpush1.bf16.msra.mxu0 0
  %3406 = vmatprep.subr.bf16.mxu0 0
  %3407 = vmatpush1.bf16.msra.mxu0 0
  %3408 = vmatprep.subr.bf16.mxu0 0
  %3409 = vmatpush1.bf16.msra.mxu0 0
  %3410 = vmatprep.subr.bf16.mxu0 0
  %3411 = vmatpush1.bf16.msra.mxu0 0
  %3412 = vmatprep.subr.bf16.mxu0 0
  %3413 = vmatpush1.bf16.msra.mxu0 0
  %3414 = vmatprep.subr.bf16.mxu0 0
  %3415 = vmatpush1.bf16.msra.mxu0 0
  %3416 = vmatprep.subr.bf16.mxu0 0
  %3417 = vmatpush1.bf16.msra.mxu0 0
  %3418 = vmatprep.subr.bf16.mxu0 0
  %3419 = vmatpush1.bf16.msra.mxu0 0
  %3420 = vmatprep.subr.bf16.mxu0 0
  %3421 = vmatpush1.bf16.msra.mxu0 0
  %3422 = vmatprep.subr.bf16.mxu0 0
  %3423 = vmatpush1.bf16.msra.mxu0 0
  %3424 = vmatprep.mubr.bf16.mxu0 0
  %3425 = vmatmul.mubr.bf16.gmra.mrb[0].mxu0 %v3387
  %v3426 = vpop.f32.mrb[0].mxu0
  %v3427 = vadd.f32 0.0, %v3426
  %v3428 = vpop.f32.mrb[0].mxu0
  %v3429 = vadd.f32 0.0, %v3428
  %v3430 = vpop.f32.mrb[0].mxu0
  %v3431 = vadd.f32 0.0, %v3430
  %v3432 = vpop.f32.mrb[0].mxu0
  %v3433 = vadd.f32 0.0, %v3432
  %3434 = vmatprep.mubr.bf16.mxu0 0
  %3435 = vmatmul.mubr.bf16.gmra.mrb[0].mxu0 %v3390
  %v3436 = vpop.f32.mrb[0].mxu0
  %v3437 = vadd.f32 0.0, %v3436
  %v3438 = vpop.f32.mrb[0].mxu0
  %v3439 = vadd.f32 0.0, %v3438
  %v3440 = vpop.f32.mrb[0].mxu0
  %v3441 = vadd.f32 0.0, %v3440
  %v3442 = vpop.f32.mrb[0].mxu0
  %v3443 = vadd.f32 0.0, %v3442
  %3444 = vdwg.mxu0
  %v3445 = vadd.f32 %v3351, %v3427
  %v3446 = vadd.f32 %v3352, %v3429
  %v3447 = vadd.f32 %v3353, %v3431
  %v3448 = vadd.f32 %v3354, %v3433
  %v3449 = vadd.f32 %v3355, %v3437
  %v3450 = vadd.f32 %v3356, %v3439
  %v3451 = vadd.f32 %v3357, %v3441
  %v3452 = vadd.f32 %v3358, %v3443
  %v3453 = vadd.f32 %v3445, %v508
  %v3454 = vadd.f32 %v3446, %v512
  %v3455 = vadd.f32 %v3447, %v508
  %v3456 = vadd.f32 %v3448, %v512
  %v3457 = vadd.f32 %v3449, %v508
  %v3458 = vadd.f32 %v3450, %v512
  %v3459 = vadd.f32 %v3451, %v508
  %v3460 = vadd.f32 %v3452, %v512
  %v3461 = vmax.f32 %v3453, 0.0
  %v3462 = vmax.f32 %v3454, 0.0
  %v3463 = vmax.f32 %v3455, 0.0
  %v3464 = vmax.f32 %v3456, 0.0
  %v3465 = vmax.f32 %v3457, 0.0
  %v3466 = vmax.f32 %v3458, 0.0
  %v3467 = vmax.f32 %v3459, 0.0
  %v3468 = vmax.f32 %v3460, 0.0
  %v3477 = vrot.slane %v3461, 1
  %v3478 = vrot.slane %v3463, 1
  %v3479 = vsel %vm539, %v3477, %v3478
  %v3480 = vrot.slane %v3462, 1
  %v3481 = vrot.slane %v3464, 1
  %v3482 = vsel %vm539, %v3480, %v3481
  %v3483 = vrot.slane %v3465, 1
  %v3484 = vsel %vm539, %v3478, %v3483
  %v3485 = vrot.slane %v3466, 1
  %v3486 = vsel %vm539, %v3481, %v3485
  %v3487 = vrot.slane %v3467, 1
  %v3488 = vsel %vm539, %v3483, %v3487
  %v3489 = vrot.slane %v3468, 1
  %v3490 = vsel %vm539, %v3485, %v3489
  %v3499 = vmax.f32 %v3461, %v3479
  %v3500 = vmax.f32 %v3462, %v3482
  %v3501 = vmax.f32 %v3463, %v3484
  %v3502 = vmax.f32 %v3464, %v3486
  %v3503 = vmax.f32 %v3465, %v3488
  %v3504 = vmax.f32 %v3466, %v3490
  %v3505 = vmax.f32 %v3467, %v3487
  %v3506 = vmax.f32 %v3468, %v3489
  %3515 = vrot.lane.b32.xlu0 %v3499, 122
  %v3516 = vpop.permute.xlu0 %3515
  %3517 = vrot.lane.b32.xlu0 %v3500, 122
  %v3518 = vpop.permute.xlu0 %3517
  %3519 = vrot.lane.b32.xlu0 %v3501, 122
  %v3520 = vpop.permute.xlu0 %3519
  %3521 = vrot.lane.b32.xlu0 %v3502, 122
  %v3522 = vpop.permute.xlu0 %3521
  %3523 = vrot.lane.b32.xlu0 %v3503, 122
  %v3524 = vpop.permute.xlu0 %3523
  %3525 = vrot.lane.b32.xlu0 %v3504, 122
  %v3526 = vpop.permute.xlu0 %3525
  %3527 = vrot.lane.b32.xlu0 %v3505, 122
  %v3528 = vpop.permute.xlu0 %3527
  %3529 = vrot.lane.b32.xlu0 %v3506, 122
  %v3530 = vpop.permute.xlu0 %3529
  %v3531 = vsel %vm594, %v3516, %v3518
  %v3532 = vsel %vm594, %v3520, %v3522
  %v3533 = vsel %vm594, %v3524, %v3526
  %v3534 = vsel %vm594, %v3528, %v3530
  %v3543 = vmax.f32 %v3499, %v3531
  %v3544 = vmax.f32 %v3500, %v3518
  %v3545 = vmax.f32 %v3501, %v3532
  %v3546 = vmax.f32 %v3502, %v3522
  %v3547 = vmax.f32 %v3503, %v3533
  %v3548 = vmax.f32 %v3504, %v3526
  %v3549 = vmax.f32 %v3505, %v3534
  %v3550 = vmax.f32 %v3506, %v3530
  %s3551 = scalar_lea.vmem %s3, 320
  %3552 = vst [vmem:[%s3551] sm:$0xff] %v3543
  %3553 = vst.msk [vmem:[%s3551 + $0x8] sm:$0xff] %vm616, %v3544
  %3554 = vst [vmem:[%s3551 + $0x10] sm:$0xff] %v3545
  %3555 = vst.msk [vmem:[%s3551 + $0x18] sm:$0xff] %vm616, %v3546
  %3556 = vst [vmem:[%s3551 + $0x20] sm:$0xff] %v3547
  %3557 = vst.msk [vmem:[%s3551 + $0x28] sm:$0xff] %vm616, %v3548
  %3558 = vst [vmem:[%s3551 + $0x30] sm:$0x7] %v3549
  %3559 = vst.msk [vmem:[%s3551 + $0x38] sm:$0x7] %vm623, %v3550
  %s3560 = scalar_lea.vmem %s0, 96
  %v3561 = vld [vmem:[%s3560] sm:$0xf]
  %v3562 = vld [vmem:[%s3560 + $0x4] sm:$0xf]
  %v3563 = vld [vmem:[%s3560 + $0x8] sm:$0xf]
  %v3564 = vld [vmem:[%s3560 + $0xc] sm:$0xf]
  %v3565 = vld [vmem:[%s1] sm:$0xff]
  %v3566 = vld [vmem:[%s1 + $0x8] sm:$0xff]
  %v3567 = vld [vmem:[%s1 + $0x10] sm:$0xff]
  %v3568 = vld [vmem:[%s1 + $0x18] sm:$0xff]
  %v3569 = vld [vmem:[%s24] sm:$0xff]
  %v3570 = vld [vmem:[%s24 + $0x8] sm:$0xff]
  %v3571 = vld [vmem:[%s24 + $0x10] sm:$0xff]
  %v3572 = vld [vmem:[%s24 + $0x18] sm:$0xff]
  %v3577 = vunpack.c.l.b16 %v3561
  %v3578 = vunpack.c.l.b16 %v3562
  %v3579 = vunpack.c.l.b16 %v3563
  %v3580 = vunpack.c.l.b16 %v3564
  %v3581 = vpack.c.b16 %v3578, %v3577
  %v3582 = vpack.c.b16 %v3580, %v3579
  %v3584 = vshrl.u32 %v3581, 16
  %v3586 = vshll.u32 %v3581, 16
  %v3588 = vrot.slane %v3586, 1
  %v3589 = vor.u32 %v3584, %v3588
  %v3591 = vshll.u32 %v3582, 16
  %v3593 = vrot.slane %v3591, 1
  %v3594 = vsel %vm39, %v3589, %v3593
  %v3595 = vshrl.u32 %v3582, 16
  %v3597 = vor.u32 %v3595, %v3593
  %v3602 = vunpack.c.l.b16 %v3569
  %v3603 = vunpack.c.h.b16 %v3569
  %v3604 = vunpack.c.l.b16 %v3570
  %v3605 = vunpack.c.h.b16 %v3570
  %v3606 = vunpack.c.l.b16 %v3571
  %v3607 = vunpack.c.h.b16 %v3571
  %v3608 = vunpack.c.l.b16 %v3572
  %v3609 = vunpack.c.h.b16 %v3572
  %v3610 = vpack.c.b16 %v3604, %v3602
  %v3611 = vpack.c.b16 %v3605, %v3603
  %v3612 = vpack.c.b16 %v3608, %v3606
  %v3613 = vpack.c.b16 %v3609, %v3607
  %v3619 = vsel %vm75, %v3594, 0
  %v3622 = vsel %vm75, %v3597, 0
  %3624 = vmatprep.subr.bf16.mxu0 %v3611
  %3625 = vmatpush1.bf16.msra.mxu0 %v3610
  %3626 = vmatprep.subr.bf16.mxu0 %v3613
  %3627 = vmatpush1.bf16.msra.mxu0 %v3612
  %3628 = vmatprep.subr.bf16.mxu0 0
  %3629 = vmatpush1.bf16.msra.mxu0 0
  %3630 = vmatprep.subr.bf16.mxu0 0
  %3631 = vmatpush1.bf16.msra.mxu0 0
  %3632 = vmatprep.subr.bf16.mxu0 0
  %3633 = vmatpush1.bf16.msra.mxu0 0
  %3634 = vmatprep.subr.bf16.mxu0 0
  %3635 = vmatpush1.bf16.msra.mxu0 0
  %3636 = vmatprep.subr.bf16.mxu0 0
  %3637 = vmatpush1.bf16.msra.mxu0 0
  %3638 = vmatprep.subr.bf16.mxu0 0
  %3639 = vmatpush1.bf16.msra.mxu0 0
  %3640 = vmatprep.subr.bf16.mxu0 0
  %3641 = vmatpush1.bf16.msra.mxu0 0
  %3642 = vmatprep.subr.bf16.mxu0 0
  %3643 = vmatpush1.bf16.msra.mxu0 0
  %3644 = vmatprep.subr.bf16.mxu0 0
  %3645 = vmatpush1.bf16.msra.mxu0 0
  %3646 = vmatprep.subr.bf16.mxu0 0
  %3647 = vmatpush1.bf16.msra.mxu0 0
  %3648 = vmatprep.subr.bf16.mxu0 0
  %3649 = vmatpush1.bf16.msra.mxu0 0
  %3650 = vmatprep.subr.bf16.mxu0 0
  %3651 = vmatpush1.bf16.msra.mxu0 0
  %3652 = vmatprep.subr.bf16.mxu0 0
  %3653 = vmatpush1.bf16.msra.mxu0 0
  %3654 = vmatprep.subr.bf16.mxu0 0
  %3655 = vmatpush1.bf16.msra.mxu0 0
  %3656 = vmatprep.mubr.bf16.mxu0 0
  %3657 = vmatmul.mubr.bf16.gmra.mrb[0].mxu0 %v3619
  %v3658 = vpop.f32.mrb[0].mxu0
  %v3659 = vadd.f32 0.0, %v3658
  %v3660 = vpop.f32.mrb[0].mxu0
  %v3661 = vadd.f32 0.0, %v3660
  %v3662 = vpop.f32.mrb[0].mxu0
  %v3663 = vadd.f32 0.0, %v3662
  %v3664 = vpop.f32.mrb[0].mxu0
  %v3665 = vadd.f32 0.0, %v3664
  %3666 = vmatprep.mubr.bf16.mxu0 0
  %3667 = vmatmul.mubr.bf16.gmra.mrb[0].mxu0 %v3622
  %v3668 = vpop.f32.mrb[0].mxu0
  %v3669 = vadd.f32 0.0, %v3668
  %v3670 = vpop.f32.mrb[0].mxu0
  %v3671 = vadd.f32 0.0, %v3670
  %v3672 = vpop.f32.mrb[0].mxu0
  %v3673 = vadd.f32 0.0, %v3672
  %v3674 = vpop.f32.mrb[0].mxu0
  %v3675 = vadd.f32 0.0, %v3674
  %3676 = vdwg.mxu0
  %v3681 = vunpack.c.l.b16 %v3565
  %v3682 = vunpack.c.h.b16 %v3565
  %v3683 = vunpack.c.l.b16 %v3566
  %v3684 = vunpack.c.h.b16 %v3566
  %v3685 = vunpack.c.l.b16 %v3567
  %v3686 = vunpack.c.h.b16 %v3567
  %v3687 = vunpack.c.l.b16 %v3568
  %v3688 = vunpack.c.h.b16 %v3568
  %v3689 = vpack.c.b16 %v3683, %v3681
  %v3690 = vpack.c.b16 %v3684, %v3682
  %v3691 = vpack.c.b16 %v3687, %v3685
  %v3692 = vpack.c.b16 %v3688, %v3686
  %v3697 = vsel %vm75, %v3581, 0
  %v3699 = vsel %vm75, %v3582, 0
  %3701 = vmatprep.subr.bf16.mxu0 %v3690
  %3702 = vmatpush1.bf16.msra.mxu0 %v3689
  %3703 = vmatprep.subr.bf16.mxu0 %v3692
  %3704 = vmatpush1.bf16.msra.mxu0 %v3691
  %3705 = vmatprep.subr.bf16.mxu0 0
  %3706 = vmatpush1.bf16.msra.mxu0 0
  %3707 = vmatprep.subr.bf16.mxu0 0
  %3708 = vmatpush1.bf16.msra.mxu0 0
  %3709 = vmatprep.subr.bf16.mxu0 0
  %3710 = vmatpush1.bf16.msra.mxu0 0
  %3711 = vmatprep.subr.bf16.mxu0 0
  %3712 = vmatpush1.bf16.msra.mxu0 0
  %3713 = vmatprep.subr.bf16.mxu0 0
  %3714 = vmatpush1.bf16.msra.mxu0 0
  %3715 = vmatprep.subr.bf16.mxu0 0
  %3716 = vmatpush1.bf16.msra.mxu0 0
  %3717 = vmatprep.subr.bf16.mxu0 0
  %3718 = vmatpush1.bf16.msra.mxu0 0
  %3719 = vmatprep.subr.bf16.mxu0 0
  %3720 = vmatpush1.bf16.msra.mxu0 0
  %3721 = vmatprep.subr.bf16.mxu0 0
  %3722 = vmatpush1.bf16.msra.mxu0 0
  %3723 = vmatprep.subr.bf16.mxu0 0
  %3724 = vmatpush1.bf16.msra.mxu0 0
  %3725 = vmatprep.subr.bf16.mxu0 0
  %3726 = vmatpush1.bf16.msra.mxu0 0
  %3727 = vmatprep.subr.bf16.mxu0 0
  %3728 = vmatpush1.bf16.msra.mxu0 0
  %3729 = vmatprep.subr.bf16.mxu0 0
  %3730 = vmatpush1.bf16.msra.mxu0 0
  %3731 = vmatprep.subr.bf16.mxu0 0
  %3732 = vmatpush1.bf16.msra.mxu0 0
  %3733 = vmatprep.mubr.bf16.mxu0 0
  %3734 = vmatmul.mubr.bf16.gmra.mrb[0].mxu0 %v3697
  %v3735 = vpop.f32.mrb[0].mxu0
  %v3736 = vadd.f32 %v3659, %v3735
  %v3737 = vpop.f32.mrb[0].mxu0
  %v3738 = vadd.f32 %v3661, %v3737
  %v3739 = vpop.f32.mrb[0].mxu0
  %v3740 = vadd.f32 %v3663, %v3739
  %v3741 = vpop.f32.mrb[0].mxu0
  %v3742 = vadd.f32 %v3665, %v3741
  %3743 = vmatprep.mubr.bf16.mxu0 0
  %3744 = vmatmul.mubr.bf16.gmra.mrb[0].mxu0 %v3699
  %v3745 = vpop.f32.mrb[0].mxu0
  %v3746 = vadd.f32 %v3669, %v3745
  %v3747 = vpop.f32.mrb[0].mxu0
  %v3748 = vadd.f32 %v3671, %v3747
  %v3749 = vpop.f32.mrb[0].mxu0
  %v3750 = vadd.f32 %v3673, %v3749
  %v3751 = vpop.f32.mrb[0].mxu0
  %v3752 = vadd.f32 %v3675, %v3751
  %3753 = vdwg.mxu0
  %v3754 = vld [vmem:[%s212] sm:$0xff]
  %v3755 = vld [vmem:[%s212 + $0x8] sm:$0xff]
  %v3756 = vld [vmem:[%s212 + $0x10] sm:$0xff]
  %v3757 = vld [vmem:[%s212 + $0x18] sm:$0xff]
  %v3758 = vrot.slane %v3581, 1
  %v3759 = vrot.slane %v3582, 1
  %v3760 = vsel %vm217, %v3758, %v3759
  %v3765 = vunpack.c.l.b16 %v3754
  %v3766 = vunpack.c.h.b16 %v3754
  %v3767 = vunpack.c.l.b16 %v3755
  %v3768 = vunpack.c.h.b16 %v3755
  %v3769 = vunpack.c.l.b16 %v3756
  %v3770 = vunpack.c.h.b16 %v3756
  %v3771 = vunpack.c.l.b16 %v3757
  %v3772 = vunpack.c.h.b16 %v3757
  %v3773 = vpack.c.b16 %v3767, %v3765
  %v3774 = vpack.c.b16 %v3768, %v3766
  %v3775 = vpack.c.b16 %v3771, %v3769
  %v3776 = vpack.c.b16 %v3772, %v3770
  %v3782 = vsel %vm75, %v3760, 0
  %v3785 = vsel %vm75, %v3759, 0
  %3787 = vmatprep.subr.bf16.mxu0 %v3774
  %3788 = vmatpush1.bf16.msra.mxu0 %v3773
  %3789 = vmatprep.subr.bf16.mxu0 %v3776
  %3790 = vmatpush1.bf16.msra.mxu0 %v3775
  %3791 = vmatprep.subr.bf16.mxu0 0
  %3792 = vmatpush1.bf16.msra.mxu0 0
  %3793 = vmatprep.subr.bf16.mxu0 0
  %3794 = vmatpush1.bf16.msra.mxu0 0
  %3795 = vmatprep.subr.bf16.mxu0 0
  %3796 = vmatpush1.bf16.msra.mxu0 0
  %3797 = vmatprep.subr.bf16.mxu0 0
  %3798 = vmatpush1.bf16.msra.mxu0 0
  %3799 = vmatprep.subr.bf16.mxu0 0
  %3800 = vmatpush1.bf16.msra.mxu0 0
  %3801 = vmatprep.subr.bf16.mxu0 0
  %3802 = vmatpush1.bf16.msra.mxu0 0
  %3803 = vmatprep.subr.bf16.mxu0 0
  %3804 = vmatpush1.bf16.msra.mxu0 0
  %3805 = vmatprep.subr.bf16.mxu0 0
  %3806 = vmatpush1.bf16.msra.mxu0 0
  %3807 = vmatprep.subr.bf16.mxu0 0
  %3808 = vmatpush1.bf16.msra.mxu0 0
  %3809 = vmatprep.subr.bf16.mxu0 0
  %3810 = vmatpush1.bf16.msra.mxu0 0
  %3811 = vmatprep.subr.bf16.mxu0 0
  %3812 = vmatpush1.bf16.msra.mxu0 0
  %3813 = vmatprep.subr.bf16.mxu0 0
  %3814 = vmatpush1.bf16.msra.mxu0 0
  %3815 = vmatprep.subr.bf16.mxu0 0
  %3816 = vmatpush1.bf16.msra.mxu0 0
  %3817 = vmatprep.subr.bf16.mxu0 0
  %3818 = vmatpush1.bf16.msra.mxu0 0
  %3819 = vmatprep.mubr.bf16.mxu0 0
  %3820 = vmatmul.mubr.bf16.gmra.mrb[0].mxu0 %v3782
  %v3821 = vpop.f32.mrb[0].mxu0
  %v3822 = vadd.f32 0.0, %v3821
  %v3823 = vpop.f32.mrb[0].mxu0
  %v3824 = vadd.f32 0.0, %v3823
  %v3825 = vpop.f32.mrb[0].mxu0
  %v3826 = vadd.f32 0.0, %v3825
  %v3827 = vpop.f32.mrb[0].mxu0
  %v3828 = vadd.f32 0.0, %v3827
  %3829 = vmatprep.mubr.bf16.mxu0 0
  %3830 = vmatmul.mubr.bf16.gmra.mrb[0].mxu0 %v3785
  %v3831 = vpop.f32.mrb[0].mxu0
  %v3832 = vadd.f32 0.0, %v3831
  %v3833 = vpop.f32.mrb[0].mxu0
  %v3834 = vadd.f32 0.0, %v3833
  %v3835 = vpop.f32.mrb[0].mxu0
  %v3836 = vadd.f32 0.0, %v3835
  %v3837 = vpop.f32.mrb[0].mxu0
  %v3838 = vadd.f32 0.0, %v3837
  %3839 = vdwg.mxu0
  %v3840 = vadd.f32 %v3736, %v3822
  %v3841 = vadd.f32 %v3738, %v3824
  %v3842 = vadd.f32 %v3740, %v3826
  %v3843 = vadd.f32 %v3742, %v3828
  %v3844 = vadd.f32 %v3746, %v3832
  %v3845 = vadd.f32 %v3748, %v3834
  %v3846 = vadd.f32 %v3750, %v3836
  %v3847 = vadd.f32 %v3752, %v3838
  %v3848 = vld [vmem:[%s308] sm:$0xff]
  %v3849 = vld [vmem:[%s308 + $0x8] sm:$0xff]
  %v3850 = vld [vmem:[%s308 + $0x10] sm:$0xff]
  %v3851 = vld [vmem:[%s308 + $0x18] sm:$0xff]
  %v3852 = vrot.slane %v3584, 1
  %v3853 = vrot.slane %v3586, 2
  %v3854 = vor.u32 %v3852, %v3853
  %v3855 = vrot.slane %v3595, 1
  %v3856 = vrot.slane %v3591, 2
  %v3857 = vor.u32 %v3855, %v3856
  %v3858 = vsel %vm313, %v3854, %v3857
  %v3863 = vunpack.c.l.b16 %v3848
  %v3864 = vunpack.c.h.b16 %v3848
  %v3865 = vunpack.c.l.b16 %v3849
  %v3866 = vunpack.c.h.b16 %v3849
  %v3867 = vunpack.c.l.b16 %v3850
  %v3868 = vunpack.c.h.b16 %v3850
  %v3869 = vunpack.c.l.b16 %v3851
  %v3870 = vunpack.c.h.b16 %v3851
  %v3871 = vpack.c.b16 %v3865, %v3863
  %v3872 = vpack.c.b16 %v3866, %v3864
  %v3873 = vpack.c.b16 %v3869, %v3867
  %v3874 = vpack.c.b16 %v3870, %v3868
  %v3880 = vsel %vm75, %v3858, 0
  %v3883 = vsel %vm75, %v3857, 0
  %3885 = vmatprep.subr.bf16.mxu0 %v3872
  %3886 = vmatpush1.bf16.msra.mxu0 %v3871
  %3887 = vmatprep.subr.bf16.mxu0 %v3874
  %3888 = vmatpush1.bf16.msra.mxu0 %v3873
  %3889 = vmatprep.subr.bf16.mxu0 0
  %3890 = vmatpush1.bf16.msra.mxu0 0
  %3891 = vmatprep.subr.bf16.mxu0 0
  %3892 = vmatpush1.bf16.msra.mxu0 0
  %3893 = vmatprep.subr.bf16.mxu0 0
  %3894 = vmatpush1.bf16.msra.mxu0 0
  %3895 = vmatprep.subr.bf16.mxu0 0
  %3896 = vmatpush1.bf16.msra.mxu0 0
  %3897 = vmatprep.subr.bf16.mxu0 0
  %3898 = vmatpush1.bf16.msra.mxu0 0
  %3899 = vmatprep.subr.bf16.mxu0 0
  %3900 = vmatpush1.bf16.msra.mxu0 0
  %3901 = vmatprep.subr.bf16.mxu0 0
  %3902 = vmatpush1.bf16.msra.mxu0 0
  %3903 = vmatprep.subr.bf16.mxu0 0
  %3904 = vmatpush1.bf16.msra.mxu0 0
  %3905 = vmatprep.subr.bf16.mxu0 0
  %3906 = vmatpush1.bf16.msra.mxu0 0
  %3907 = vmatprep.subr.bf16.mxu0 0
  %3908 = vmatpush1.bf16.msra.mxu0 0
  %3909 = vmatprep.subr.bf16.mxu0 0
  %3910 = vmatpush1.bf16.msra.mxu0 0
  %3911 = vmatprep.subr.bf16.mxu0 0
  %3912 = vmatpush1.bf16.msra.mxu0 0
  %3913 = vmatprep.subr.bf16.mxu0 0
  %3914 = vmatpush1.bf16.msra.mxu0 0
  %3915 = vmatprep.subr.bf16.mxu0 0
  %3916 = vmatpush1.bf16.msra.mxu0 0
  %3917 = vmatprep.mubr.bf16.mxu0 0
  %3918 = vmatmul.mubr.bf16.gmra.mrb[0].mxu0 %v3880
  %v3919 = vpop.f32.mrb[0].mxu0
  %v3920 = vadd.f32 0.0, %v3919
  %v3921 = vpop.f32.mrb[0].mxu0
  %v3922 = vadd.f32 0.0, %v3921
  %v3923 = vpop.f32.mrb[0].mxu0
  %v3924 = vadd.f32 0.0, %v3923
  %v3925 = vpop.f32.mrb[0].mxu0
  %v3926 = vadd.f32 0.0, %v3925
  %3927 = vmatprep.mubr.bf16.mxu0 0
  %3928 = vmatmul.mubr.bf16.gmra.mrb[0].mxu0 %v3883
  %v3929 = vpop.f32.mrb[0].mxu0
  %v3930 = vadd.f32 0.0, %v3929
  %v3931 = vpop.f32.mrb[0].mxu0
  %v3932 = vadd.f32 0.0, %v3931
  %v3933 = vpop.f32.mrb[0].mxu0
  %v3934 = vadd.f32 0.0, %v3933
  %v3935 = vpop.f32.mrb[0].mxu0
  %v3936 = vadd.f32 0.0, %v3935
  %3937 = vdwg.mxu0
  %v3938 = vadd.f32 %v3840, %v3920
  %v3939 = vadd.f32 %v3841, %v3922
  %v3940 = vadd.f32 %v3842, %v3924
  %v3941 = vadd.f32 %v3843, %v3926
  %v3942 = vadd.f32 %v3844, %v3930
  %v3943 = vadd.f32 %v3845, %v3932
  %v3944 = vadd.f32 %v3846, %v3934
  %v3945 = vadd.f32 %v3847, %v3936
  %v3946 = vld [vmem:[%s408] sm:$0xff]
  %v3947 = vld [vmem:[%s408 + $0x8] sm:$0xff]
  %v3948 = vld [vmem:[%s408 + $0x10] sm:$0xff]
  %v3949 = vld [vmem:[%s408 + $0x18] sm:$0xff]
  %v3950 = vrot.slane %v3581, 2
  %v3951 = vrot.slane %v3582, 2
  %v3952 = vsel %vm413, %v3950, %v3951
  %v3957 = vunpack.c.l.b16 %v3946
  %v3958 = vunpack.c.h.b16 %v3946
  %v3959 = vunpack.c.l.b16 %v3947
  %v3960 = vunpack.c.h.b16 %v3947
  %v3961 = vunpack.c.l.b16 %v3948
  %v3962 = vunpack.c.h.b16 %v3948
  %v3963 = vunpack.c.l.b16 %v3949
  %v3964 = vunpack.c.h.b16 %v3949
  %v3965 = vpack.c.b16 %v3959, %v3957
  %v3966 = vpack.c.b16 %v3960, %v3958
  %v3967 = vpack.c.b16 %v3963, %v3961
  %v3968 = vpack.c.b16 %v3964, %v3962
  %v3974 = vsel %vm75, %v3952, 0
  %v3977 = vsel %vm75, %v3951, 0
  %3979 = vmatprep.subr.bf16.mxu0 %v3966
  %3980 = vmatpush1.bf16.msra.mxu0 %v3965
  %3981 = vmatprep.subr.bf16.mxu0 %v3968
  %3982 = vmatpush1.bf16.msra.mxu0 %v3967
  %3983 = vmatprep.subr.bf16.mxu0 0
  %3984 = vmatpush1.bf16.msra.mxu0 0
  %3985 = vmatprep.subr.bf16.mxu0 0
  %3986 = vmatpush1.bf16.msra.mxu0 0
  %3987 = vmatprep.subr.bf16.mxu0 0
  %3988 = vmatpush1.bf16.msra.mxu0 0
  %3989 = vmatprep.subr.bf16.mxu0 0
  %3990 = vmatpush1.bf16.msra.mxu0 0
  %3991 = vmatprep.subr.bf16.mxu0 0
  %3992 = vmatpush1.bf16.msra.mxu0 0
  %3993 = vmatprep.subr.bf16.mxu0 0
  %3994 = vmatpush1.bf16.msra.mxu0 0
  %3995 = vmatprep.subr.bf16.mxu0 0
  %3996 = vmatpush1.bf16.msra.mxu0 0
  %3997 = vmatprep.subr.bf16.mxu0 0
  %3998 = vmatpush1.bf16.msra.mxu0 0
  %3999 = vmatprep.subr.bf16.mxu0 0
  %4000 = vmatpush1.bf16.msra.mxu0 0
  %4001 = vmatprep.subr.bf16.mxu0 0
  %4002 = vmatpush1.bf16.msra.mxu0 0
  %4003 = vmatprep.subr.bf16.mxu0 0
  %4004 = vmatpush1.bf16.msra.mxu0 0
  %4005 = vmatprep.subr.bf16.mxu0 0
  %4006 = vmatpush1.bf16.msra.mxu0 0
  %4007 = vmatprep.subr.bf16.mxu0 0
  %4008 = vmatpush1.bf16.msra.mxu0 0
  %4009 = vmatprep.subr.bf16.mxu0 0
  %4010 = vmatpush1.bf16.msra.mxu0 0
  %4011 = vmatprep.mubr.bf16.mxu0 0
  %4012 = vmatmul.mubr.bf16.gmra.mrb[0].mxu0 %v3974
  %v4013 = vpop.f32.mrb[0].mxu0
  %v4014 = vadd.f32 0.0, %v4013
  %v4015 = vpop.f32.mrb[0].mxu0
  %v4016 = vadd.f32 0.0, %v4015
  %v4017 = vpop.f32.mrb[0].mxu0
  %v4018 = vadd.f32 0.0, %v4017
  %v4019 = vpop.f32.mrb[0].mxu0
  %v4020 = vadd.f32 0.0, %v4019
  %4021 = vmatprep.mubr.bf16.mxu0 0
  %4022 = vmatmul.mubr.bf16.gmra.mrb[0].mxu0 %v3977
  %v4023 = vpop.f32.mrb[0].mxu0
  %v4024 = vadd.f32 0.0, %v4023
  %v4025 = vpop.f32.mrb[0].mxu0
  %v4026 = vadd.f32 0.0, %v4025
  %v4027 = vpop.f32.mrb[0].mxu0
  %v4028 = vadd.f32 0.0, %v4027
  %v4029 = vpop.f32.mrb[0].mxu0
  %v4030 = vadd.f32 0.0, %v4029
  %4031 = vdwg.mxu0
  %v4032 = vadd.f32 %v3938, %v4014
  %v4033 = vadd.f32 %v3939, %v4016
  %v4034 = vadd.f32 %v3940, %v4018
  %v4035 = vadd.f32 %v3941, %v4020
  %v4036 = vadd.f32 %v3942, %v4024
  %v4037 = vadd.f32 %v3943, %v4026
  %v4038 = vadd.f32 %v3944, %v4028
  %v4039 = vadd.f32 %v3945, %v4030
  %v4040 = vadd.f32 %v4032, %v508
  %v4041 = vadd.f32 %v4033, %v512
  %v4042 = vadd.f32 %v4034, %v508
  %v4043 = vadd.f32 %v4035, %v512
  %v4044 = vadd.f32 %v4036, %v508
  %v4045 = vadd.f32 %v4037, %v512
  %v4046 = vadd.f32 %v4038, %v508
  %v4047 = vadd.f32 %v4039, %v512
  %v4048 = vmax.f32 %v4040, 0.0
  %v4049 = vmax.f32 %v4041, 0.0
  %v4050 = vmax.f32 %v4042, 0.0
  %v4051 = vmax.f32 %v4043, 0.0
  %v4052 = vmax.f32 %v4044, 0.0
  %v4053 = vmax.f32 %v4045, 0.0
  %v4054 = vmax.f32 %v4046, 0.0
  %v4055 = vmax.f32 %v4047, 0.0
  %v4064 = vrot.slane %v4048, 1
  %v4065 = vrot.slane %v4050, 1
  %v4066 = vsel %vm539, %v4064, %v4065
  %v4067 = vrot.slane %v4049, 1
  %v4068 = vrot.slane %v4051, 1
  %v4069 = vsel %vm539, %v4067, %v4068
  %v4070 = vrot.slane %v4052, 1
  %v4071 = vsel %vm539, %v4065, %v4070
  %v4072 = vrot.slane %v4053, 1
  %v4073 = vsel %vm539, %v4068, %v4072
  %v4074 = vrot.slane %v4054, 1
  %v4075 = vsel %vm539, %v4070, %v4074
  %v4076 = vrot.slane %v4055, 1
  %v4077 = vsel %vm539, %v4072, %v4076
  %v4086 = vmax.f32 %v4048, %v4066
  %v4087 = vmax.f32 %v4049, %v4069
  %v4088 = vmax.f32 %v4050, %v4071
  %v4089 = vmax.f32 %v4051, %v4073
  %v4090 = vmax.f32 %v4052, %v4075
  %v4091 = vmax.f32 %v4053, %v4077
  %v4092 = vmax.f32 %v4054, %v4074
  %v4093 = vmax.f32 %v4055, %v4076
  %4102 = vrot.lane.b32.xlu0 %v4086, 122
  %v4103 = vpop.permute.xlu0 %4102
  %4104 = vrot.lane.b32.xlu0 %v4087, 122
  %v4105 = vpop.permute.xlu0 %4104
  %4106 = vrot.lane.b32.xlu0 %v4088, 122
  %v4107 = vpop.permute.xlu0 %4106
  %4108 = vrot.lane.b32.xlu0 %v4089, 122
  %v4109 = vpop.permute.xlu0 %4108
  %4110 = vrot.lane.b32.xlu0 %v4090, 122
  %v4111 = vpop.permute.xlu0 %4110
  %4112 = vrot.lane.b32.xlu0 %v4091, 122
  %v4113 = vpop.permute.xlu0 %4112
  %4114 = vrot.lane.b32.xlu0 %v4092, 122
  %v4115 = vpop.permute.xlu0 %4114
  %4116 = vrot.lane.b32.xlu0 %v4093, 122
  %v4117 = vpop.permute.xlu0 %4116
  %v4118 = vsel %vm594, %v4103, %v4105
  %v4119 = vsel %vm594, %v4107, %v4109
  %v4120 = vsel %vm594, %v4111, %v4113
  %v4121 = vsel %vm594, %v4115, %v4117
  %v4130 = vmax.f32 %v4086, %v4118
  %v4131 = vmax.f32 %v4087, %v4105
  %v4132 = vmax.f32 %v4088, %v4119
  %v4133 = vmax.f32 %v4089, %v4109
  %v4134 = vmax.f32 %v4090, %v4120
  %v4135 = vmax.f32 %v4091, %v4113
  %v4136 = vmax.f32 %v4092, %v4121
  %v4137 = vmax.f32 %v4093, %v4117
  %s4138 = scalar_lea.vmem %s3, 384
  %4139 = vst [vmem:[%s4138] sm:$0xff] %v4130
  %4140 = vst.msk [vmem:[%s4138 + $0x8] sm:$0xff] %vm616, %v4131
  %4141 = vst [vmem:[%s4138 + $0x10] sm:$0xff] %v4132
  %4142 = vst.msk [vmem:[%s4138 + $0x18] sm:$0xff] %vm616, %v4133
  %4143 = vst [vmem:[%s4138 + $0x20] sm:$0xff] %v4134
  %4144 = vst.msk [vmem:[%s4138 + $0x28] sm:$0xff] %vm616, %v4135
  %4145 = vst [vmem:[%s4138 + $0x30] sm:$0x7] %v4136
  %4146 = vst.msk [vmem:[%s4138 + $0x38] sm:$0x7] %vm623, %v4137
  %s4147 = scalar_lea.vmem %s0, 112
  %v4148 = vld [vmem:[%s4147] sm:$0xf]
  %v4149 = vld [vmem:[%s4147 + $0x4] sm:$0xf]
  %v4150 = vld [vmem:[%s4147 + $0x8] sm:$0xf]
  %v4151 = vld [vmem:[%s4147 + $0xc] sm:$0xf]
  %v4152 = vld [vmem:[%s1] sm:$0xff]
  %v4153 = vld [vmem:[%s1 + $0x8] sm:$0xff]
  %v4154 = vld [vmem:[%s1 + $0x10] sm:$0xff]
  %v4155 = vld [vmem:[%s1 + $0x18] sm:$0xff]
  %v4156 = vld [vmem:[%s24] sm:$0xff]
  %v4157 = vld [vmem:[%s24 + $0x8] sm:$0xff]
  %v4158 = vld [vmem:[%s24 + $0x10] sm:$0xff]
  %v4159 = vld [vmem:[%s24 + $0x18] sm:$0xff]
  %v4164 = vunpack.c.l.b16 %v4148
  %v4165 = vunpack.c.l.b16 %v4149
  %v4166 = vunpack.c.l.b16 %v4150
  %v4167 = vunpack.c.l.b16 %v4151
  %v4168 = vpack.c.b16 %v4165, %v4164
  %v4169 = vpack.c.b16 %v4167, %v4166
  %v4171 = vshrl.u32 %v4168, 16
  %v4173 = vshll.u32 %v4168, 16
  %v4175 = vrot.slane %v4173, 1
  %v4176 = vor.u32 %v4171, %v4175
  %v4178 = vshll.u32 %v4169, 16
  %v4180 = vrot.slane %v4178, 1
  %v4181 = vsel %vm39, %v4176, %v4180
  %v4182 = vshrl.u32 %v4169, 16
  %v4184 = vor.u32 %v4182, %v4180
  %v4189 = vunpack.c.l.b16 %v4156
  %v4190 = vunpack.c.h.b16 %v4156
  %v4191 = vunpack.c.l.b16 %v4157
  %v4192 = vunpack.c.h.b16 %v4157
  %v4193 = vunpack.c.l.b16 %v4158
  %v4194 = vunpack.c.h.b16 %v4158
  %v4195 = vunpack.c.l.b16 %v4159
  %v4196 = vunpack.c.h.b16 %v4159
  %v4197 = vpack.c.b16 %v4191, %v4189
  %v4198 = vpack.c.b16 %v4192, %v4190
  %v4199 = vpack.c.b16 %v4195, %v4193
  %v4200 = vpack.c.b16 %v4196, %v4194
  %v4206 = vsel %vm75, %v4181, 0
  %v4209 = vsel %vm75, %v4184, 0
  %4211 = vmatprep.subr.bf16.mxu0 %v4198
  %4212 = vmatpush1.bf16.msra.mxu0 %v4197
  %4213 = vmatprep.subr.bf16.mxu0 %v4200
  %4214 = vmatpush1.bf16.msra.mxu0 %v4199
  %4215 = vmatprep.subr.bf16.mxu0 0
  %4216 = vmatpush1.bf16.msra.mxu0 0
  %4217 = vmatprep.subr.bf16.mxu0 0
  %4218 = vmatpush1.bf16.msra.mxu0 0
  %4219 = vmatprep.subr.bf16.mxu0 0
  %4220 = vmatpush1.bf16.msra.mxu0 0
  %4221 = vmatprep.subr.bf16.mxu0 0
  %4222 = vmatpush1.bf16.msra.mxu0 0
  %4223 = vmatprep.subr.bf16.mxu0 0
  %4224 = vmatpush1.bf16.msra.mxu0 0
  %4225 = vmatprep.subr.bf16.mxu0 0
  %4226 = vmatpush1.bf16.msra.mxu0 0
  %4227 = vmatprep.subr.bf16.mxu0 0
  %4228 = vmatpush1.bf16.msra.mxu0 0
  %4229 = vmatprep.subr.bf16.mxu0 0
  %4230 = vmatpush1.bf16.msra.mxu0 0
  %4231 = vmatprep.subr.bf16.mxu0 0
  %4232 = vmatpush1.bf16.msra.mxu0 0
  %4233 = vmatprep.subr.bf16.mxu0 0
  %4234 = vmatpush1.bf16.msra.mxu0 0
  %4235 = vmatprep.subr.bf16.mxu0 0
  %4236 = vmatpush1.bf16.msra.mxu0 0
  %4237 = vmatprep.subr.bf16.mxu0 0
  %4238 = vmatpush1.bf16.msra.mxu0 0
  %4239 = vmatprep.subr.bf16.mxu0 0
  %4240 = vmatpush1.bf16.msra.mxu0 0
  %4241 = vmatprep.subr.bf16.mxu0 0
  %4242 = vmatpush1.bf16.msra.mxu0 0
  %4243 = vmatprep.mubr.bf16.mxu0 0
  %4244 = vmatmul.mubr.bf16.gmra.mrb[0].mxu0 %v4206
  %v4245 = vpop.f32.mrb[0].mxu0
  %v4246 = vadd.f32 0.0, %v4245
  %v4247 = vpop.f32.mrb[0].mxu0
  %v4248 = vadd.f32 0.0, %v4247
  %v4249 = vpop.f32.mrb[0].mxu0
  %v4250 = vadd.f32 0.0, %v4249
  %v4251 = vpop.f32.mrb[0].mxu0
  %v4252 = vadd.f32 0.0, %v4251
  %4253 = vmatprep.mubr.bf16.mxu0 0
  %4254 = vmatmul.mubr.bf16.gmra.mrb[0].mxu0 %v4209
  %v4255 = vpop.f32.mrb[0].mxu0
  %v4256 = vadd.f32 0.0, %v4255
  %v4257 = vpop.f32.mrb[0].mxu0
  %v4258 = vadd.f32 0.0, %v4257
  %v4259 = vpop.f32.mrb[0].mxu0
  %v4260 = vadd.f32 0.0, %v4259
  %v4261 = vpop.f32.mrb[0].mxu0
  %v4262 = vadd.f32 0.0, %v4261
  %4263 = vdwg.mxu0
  %v4268 = vunpack.c.l.b16 %v4152
  %v4269 = vunpack.c.h.b16 %v4152
  %v4270 = vunpack.c.l.b16 %v4153
  %v4271 = vunpack.c.h.b16 %v4153
  %v4272 = vunpack.c.l.b16 %v4154
  %v4273 = vunpack.c.h.b16 %v4154
  %v4274 = vunpack.c.l.b16 %v4155
  %v4275 = vunpack.c.h.b16 %v4155
  %v4276 = vpack.c.b16 %v4270, %v4268
  %v4277 = vpack.c.b16 %v4271, %v4269
  %v4278 = vpack.c.b16 %v4274, %v4272
  %v4279 = vpack.c.b16 %v4275, %v4273
  %v4284 = vsel %vm75, %v4168, 0
  %v4286 = vsel %vm75, %v4169, 0
  %4288 = vmatprep.subr.bf16.mxu0 %v4277
  %4289 = vmatpush1.bf16.msra.mxu0 %v4276
  %4290 = vmatprep.subr.bf16.mxu0 %v4279
  %4291 = vmatpush1.bf16.msra.mxu0 %v4278
  %4292 = vmatprep.subr.bf16.mxu0 0
  %4293 = vmatpush1.bf16.msra.mxu0 0
  %4294 = vmatprep.subr.bf16.mxu0 0
  %4295 = vmatpush1.bf16.msra.mxu0 0
  %4296 = vmatprep.subr.bf16.mxu0 0
  %4297 = vmatpush1.bf16.msra.mxu0 0
  %4298 = vmatprep.subr.bf16.mxu0 0
  %4299 = vmatpush1.bf16.msra.mxu0 0
  %4300 = vmatprep.subr.bf16.mxu0 0
  %4301 = vmatpush1.bf16.msra.mxu0 0
  %4302 = vmatprep.subr.bf16.mxu0 0
  %4303 = vmatpush1.bf16.msra.mxu0 0
  %4304 = vmatprep.subr.bf16.mxu0 0
  %4305 = vmatpush1.bf16.msra.mxu0 0
  %4306 = vmatprep.subr.bf16.mxu0 0
  %4307 = vmatpush1.bf16.msra.mxu0 0
  %4308 = vmatprep.subr.bf16.mxu0 0
  %4309 = vmatpush1.bf16.msra.mxu0 0
  %4310 = vmatprep.subr.bf16.mxu0 0
  %4311 = vmatpush1.bf16.msra.mxu0 0
  %4312 = vmatprep.subr.bf16.mxu0 0
  %4313 = vmatpush1.bf16.msra.mxu0 0
  %4314 = vmatprep.subr.bf16.mxu0 0
  %4315 = vmatpush1.bf16.msra.mxu0 0
  %4316 = vmatprep.subr.bf16.mxu0 0
  %4317 = vmatpush1.bf16.msra.mxu0 0
  %4318 = vmatprep.subr.bf16.mxu0 0
  %4319 = vmatpush1.bf16.msra.mxu0 0
  %4320 = vmatprep.mubr.bf16.mxu0 0
  %4321 = vmatmul.mubr.bf16.gmra.mrb[0].mxu0 %v4284
  %v4322 = vpop.f32.mrb[0].mxu0
  %v4323 = vadd.f32 %v4246, %v4322
  %v4324 = vpop.f32.mrb[0].mxu0
  %v4325 = vadd.f32 %v4248, %v4324
  %v4326 = vpop.f32.mrb[0].mxu0
  %v4327 = vadd.f32 %v4250, %v4326
  %v4328 = vpop.f32.mrb[0].mxu0
  %v4329 = vadd.f32 %v4252, %v4328
  %4330 = vmatprep.mubr.bf16.mxu0 0
  %4331 = vmatmul.mubr.bf16.gmra.mrb[0].mxu0 %v4286
  %v4332 = vpop.f32.mrb[0].mxu0
  %v4333 = vadd.f32 %v4256, %v4332
  %v4334 = vpop.f32.mrb[0].mxu0
  %v4335 = vadd.f32 %v4258, %v4334
  %v4336 = vpop.f32.mrb[0].mxu0
  %v4337 = vadd.f32 %v4260, %v4336
  %v4338 = vpop.f32.mrb[0].mxu0
  %v4339 = vadd.f32 %v4262, %v4338
  %4340 = vdwg.mxu0
  %v4341 = vld [vmem:[%s212] sm:$0xff]
  %v4342 = vld [vmem:[%s212 + $0x8] sm:$0xff]
  %v4343 = vld [vmem:[%s212 + $0x10] sm:$0xff]
  %v4344 = vld [vmem:[%s212 + $0x18] sm:$0xff]
  %v4345 = vrot.slane %v4168, 1
  %v4346 = vrot.slane %v4169, 1
  %v4347 = vsel %vm217, %v4345, %v4346
  %v4352 = vunpack.c.l.b16 %v4341
  %v4353 = vunpack.c.h.b16 %v4341
  %v4354 = vunpack.c.l.b16 %v4342
  %v4355 = vunpack.c.h.b16 %v4342
  %v4356 = vunpack.c.l.b16 %v4343
  %v4357 = vunpack.c.h.b16 %v4343
  %v4358 = vunpack.c.l.b16 %v4344
  %v4359 = vunpack.c.h.b16 %v4344
  %v4360 = vpack.c.b16 %v4354, %v4352
  %v4361 = vpack.c.b16 %v4355, %v4353
  %v4362 = vpack.c.b16 %v4358, %v4356
  %v4363 = vpack.c.b16 %v4359, %v4357
  %v4369 = vsel %vm75, %v4347, 0
  %v4372 = vsel %vm75, %v4346, 0
  %4374 = vmatprep.subr.bf16.mxu0 %v4361
  %4375 = vmatpush1.bf16.msra.mxu0 %v4360
  %4376 = vmatprep.subr.bf16.mxu0 %v4363
  %4377 = vmatpush1.bf16.msra.mxu0 %v4362
  %4378 = vmatprep.subr.bf16.mxu0 0
  %4379 = vmatpush1.bf16.msra.mxu0 0
  %4380 = vmatprep.subr.bf16.mxu0 0
  %4381 = vmatpush1.bf16.msra.mxu0 0
  %4382 = vmatprep.subr.bf16.mxu0 0
  %4383 = vmatpush1.bf16.msra.mxu0 0
  %4384 = vmatprep.subr.bf16.mxu0 0
  %4385 = vmatpush1.bf16.msra.mxu0 0
  %4386 = vmatprep.subr.bf16.mxu0 0
  %4387 = vmatpush1.bf16.msra.mxu0 0
  %4388 = vmatprep.subr.bf16.mxu0 0
  %4389 = vmatpush1.bf16.msra.mxu0 0
  %4390 = vmatprep.subr.bf16.mxu0 0
  %4391 = vmatpush1.bf16.msra.mxu0 0
  %4392 = vmatprep.subr.bf16.mxu0 0
  %4393 = vmatpush1.bf16.msra.mxu0 0
  %4394 = vmatprep.subr.bf16.mxu0 0
  %4395 = vmatpush1.bf16.msra.mxu0 0
  %4396 = vmatprep.subr.bf16.mxu0 0
  %4397 = vmatpush1.bf16.msra.mxu0 0
  %4398 = vmatprep.subr.bf16.mxu0 0
  %4399 = vmatpush1.bf16.msra.mxu0 0
  %4400 = vmatprep.subr.bf16.mxu0 0
  %4401 = vmatpush1.bf16.msra.mxu0 0
  %4402 = vmatprep.subr.bf16.mxu0 0
  %4403 = vmatpush1.bf16.msra.mxu0 0
  %4404 = vmatprep.subr.bf16.mxu0 0
  %4405 = vmatpush1.bf16.msra.mxu0 0
  %4406 = vmatprep.mubr.bf16.mxu0 0
  %4407 = vmatmul.mubr.bf16.gmra.mrb[0].mxu0 %v4369
  %v4408 = vpop.f32.mrb[0].mxu0
  %v4409 = vadd.f32 0.0, %v4408
  %v4410 = vpop.f32.mrb[0].mxu0
  %v4411 = vadd.f32 0.0, %v4410
  %v4412 = vpop.f32.mrb[0].mxu0
  %v4413 = vadd.f32 0.0, %v4412
  %v4414 = vpop.f32.mrb[0].mxu0
  %v4415 = vadd.f32 0.0, %v4414
  %4416 = vmatprep.mubr.bf16.mxu0 0
  %4417 = vmatmul.mubr.bf16.gmra.mrb[0].mxu0 %v4372
  %v4418 = vpop.f32.mrb[0].mxu0
  %v4419 = vadd.f32 0.0, %v4418
  %v4420 = vpop.f32.mrb[0].mxu0
  %v4421 = vadd.f32 0.0, %v4420
  %v4422 = vpop.f32.mrb[0].mxu0
  %v4423 = vadd.f32 0.0, %v4422
  %v4424 = vpop.f32.mrb[0].mxu0
  %v4425 = vadd.f32 0.0, %v4424
  %4426 = vdwg.mxu0
  %v4427 = vadd.f32 %v4323, %v4409
  %v4428 = vadd.f32 %v4325, %v4411
  %v4429 = vadd.f32 %v4327, %v4413
  %v4430 = vadd.f32 %v4329, %v4415
  %v4431 = vadd.f32 %v4333, %v4419
  %v4432 = vadd.f32 %v4335, %v4421
  %v4433 = vadd.f32 %v4337, %v4423
  %v4434 = vadd.f32 %v4339, %v4425
  %v4435 = vld [vmem:[%s308] sm:$0xff]
  %v4436 = vld [vmem:[%s308 + $0x8] sm:$0xff]
  %v4437 = vld [vmem:[%s308 + $0x10] sm:$0xff]
  %v4438 = vld [vmem:[%s308 + $0x18] sm:$0xff]
  %v4439 = vrot.slane %v4171, 1
  %v4440 = vrot.slane %v4173, 2
  %v4441 = vor.u32 %v4439, %v4440
  %v4442 = vrot.slane %v4182, 1
  %v4443 = vrot.slane %v4178, 2
  %v4444 = vor.u32 %v4442, %v4443
  %v4445 = vsel %vm313, %v4441, %v4444
  %v4450 = vunpack.c.l.b16 %v4435
  %v4451 = vunpack.c.h.b16 %v4435
  %v4452 = vunpack.c.l.b16 %v4436
  %v4453 = vunpack.c.h.b16 %v4436
  %v4454 = vunpack.c.l.b16 %v4437
  %v4455 = vunpack.c.h.b16 %v4437
  %v4456 = vunpack.c.l.b16 %v4438
  %v4457 = vunpack.c.h.b16 %v4438
  %v4458 = vpack.c.b16 %v4452, %v4450
  %v4459 = vpack.c.b16 %v4453, %v4451
  %v4460 = vpack.c.b16 %v4456, %v4454
  %v4461 = vpack.c.b16 %v4457, %v4455
  %v4467 = vsel %vm75, %v4445, 0
  %v4470 = vsel %vm75, %v4444, 0
  %4472 = vmatprep.subr.bf16.mxu0 %v4459
  %4473 = vmatpush1.bf16.msra.mxu0 %v4458
  %4474 = vmatprep.subr.bf16.mxu0 %v4461
  %4475 = vmatpush1.bf16.msra.mxu0 %v4460
  %4476 = vmatprep.subr.bf16.mxu0 0
  %4477 = vmatpush1.bf16.msra.mxu0 0
  %4478 = vmatprep.subr.bf16.mxu0 0
  %4479 = vmatpush1.bf16.msra.mxu0 0
  %4480 = vmatprep.subr.bf16.mxu0 0
  %4481 = vmatpush1.bf16.msra.mxu0 0
  %4482 = vmatprep.subr.bf16.mxu0 0
  %4483 = vmatpush1.bf16.msra.mxu0 0
  %4484 = vmatprep.subr.bf16.mxu0 0
  %4485 = vmatpush1.bf16.msra.mxu0 0
  %4486 = vmatprep.subr.bf16.mxu0 0
  %4487 = vmatpush1.bf16.msra.mxu0 0
  %4488 = vmatprep.subr.bf16.mxu0 0
  %4489 = vmatpush1.bf16.msra.mxu0 0
  %4490 = vmatprep.subr.bf16.mxu0 0
  %4491 = vmatpush1.bf16.msra.mxu0 0
  %4492 = vmatprep.subr.bf16.mxu0 0
  %4493 = vmatpush1.bf16.msra.mxu0 0
  %4494 = vmatprep.subr.bf16.mxu0 0
  %4495 = vmatpush1.bf16.msra.mxu0 0
  %4496 = vmatprep.subr.bf16.mxu0 0
  %4497 = vmatpush1.bf16.msra.mxu0 0
  %4498 = vmatprep.subr.bf16.mxu0 0
  %4499 = vmatpush1.bf16.msra.mxu0 0
  %4500 = vmatprep.subr.bf16.mxu0 0
  %4501 = vmatpush1.bf16.msra.mxu0 0
  %4502 = vmatprep.subr.bf16.mxu0 0
  %4503 = vmatpush1.bf16.msra.mxu0 0
  %4504 = vmatprep.mubr.bf16.mxu0 0
  %4505 = vmatmul.mubr.bf16.gmra.mrb[0].mxu0 %v4467
  %v4506 = vpop.f32.mrb[0].mxu0
  %v4507 = vadd.f32 0.0, %v4506
  %v4508 = vpop.f32.mrb[0].mxu0
  %v4509 = vadd.f32 0.0, %v4508
  %v4510 = vpop.f32.mrb[0].mxu0
  %v4511 = vadd.f32 0.0, %v4510
  %v4512 = vpop.f32.mrb[0].mxu0
  %v4513 = vadd.f32 0.0, %v4512
  %4514 = vmatprep.mubr.bf16.mxu0 0
  %4515 = vmatmul.mubr.bf16.gmra.mrb[0].mxu0 %v4470
  %v4516 = vpop.f32.mrb[0].mxu0
  %v4517 = vadd.f32 0.0, %v4516
  %v4518 = vpop.f32.mrb[0].mxu0
  %v4519 = vadd.f32 0.0, %v4518
  %v4520 = vpop.f32.mrb[0].mxu0
  %v4521 = vadd.f32 0.0, %v4520
  %v4522 = vpop.f32.mrb[0].mxu0
  %v4523 = vadd.f32 0.0, %v4522
  %4524 = vdwg.mxu0
  %v4525 = vadd.f32 %v4427, %v4507
  %v4526 = vadd.f32 %v4428, %v4509
  %v4527 = vadd.f32 %v4429, %v4511
  %v4528 = vadd.f32 %v4430, %v4513
  %v4529 = vadd.f32 %v4431, %v4517
  %v4530 = vadd.f32 %v4432, %v4519
  %v4531 = vadd.f32 %v4433, %v4521
  %v4532 = vadd.f32 %v4434, %v4523
  %v4533 = vld [vmem:[%s408] sm:$0xff]
  %v4534 = vld [vmem:[%s408 + $0x8] sm:$0xff]
  %v4535 = vld [vmem:[%s408 + $0x10] sm:$0xff]
  %v4536 = vld [vmem:[%s408 + $0x18] sm:$0xff]
  %v4537 = vrot.slane %v4168, 2
  %v4538 = vrot.slane %v4169, 2
  %v4539 = vsel %vm413, %v4537, %v4538
  %v4544 = vunpack.c.l.b16 %v4533
  %v4545 = vunpack.c.h.b16 %v4533
  %v4546 = vunpack.c.l.b16 %v4534
  %v4547 = vunpack.c.h.b16 %v4534
  %v4548 = vunpack.c.l.b16 %v4535
  %v4549 = vunpack.c.h.b16 %v4535
  %v4550 = vunpack.c.l.b16 %v4536
  %v4551 = vunpack.c.h.b16 %v4536
  %v4552 = vpack.c.b16 %v4546, %v4544
  %v4553 = vpack.c.b16 %v4547, %v4545
  %v4554 = vpack.c.b16 %v4550, %v4548
  %v4555 = vpack.c.b16 %v4551, %v4549
  %v4561 = vsel %vm75, %v4539, 0
  %v4564 = vsel %vm75, %v4538, 0
  %4566 = vmatprep.subr.bf16.mxu0 %v4553
  %4567 = vmatpush1.bf16.msra.mxu0 %v4552
  %4568 = vmatprep.subr.bf16.mxu0 %v4555
  %4569 = vmatpush1.bf16.msra.mxu0 %v4554
  %4570 = vmatprep.subr.bf16.mxu0 0
  %4571 = vmatpush1.bf16.msra.mxu0 0
  %4572 = vmatprep.subr.bf16.mxu0 0
  %4573 = vmatpush1.bf16.msra.mxu0 0
  %4574 = vmatprep.subr.bf16.mxu0 0
  %4575 = vmatpush1.bf16.msra.mxu0 0
  %4576 = vmatprep.subr.bf16.mxu0 0
  %4577 = vmatpush1.bf16.msra.mxu0 0
  %4578 = vmatprep.subr.bf16.mxu0 0
  %4579 = vmatpush1.bf16.msra.mxu0 0
  %4580 = vmatprep.subr.bf16.mxu0 0
  %4581 = vmatpush1.bf16.msra.mxu0 0
  %4582 = vmatprep.subr.bf16.mxu0 0
  %4583 = vmatpush1.bf16.msra.mxu0 0
  %4584 = vmatprep.subr.bf16.mxu0 0
  %4585 = vmatpush1.bf16.msra.mxu0 0
  %4586 = vmatprep.subr.bf16.mxu0 0
  %4587 = vmatpush1.bf16.msra.mxu0 0
  %4588 = vmatprep.subr.bf16.mxu0 0
  %4589 = vmatpush1.bf16.msra.mxu0 0
  %4590 = vmatprep.subr.bf16.mxu0 0
  %4591 = vmatpush1.bf16.msra.mxu0 0
  %4592 = vmatprep.subr.bf16.mxu0 0
  %4593 = vmatpush1.bf16.msra.mxu0 0
  %4594 = vmatprep.subr.bf16.mxu0 0
  %4595 = vmatpush1.bf16.msra.mxu0 0
  %4596 = vmatprep.subr.bf16.mxu0 0
  %4597 = vmatpush1.bf16.msra.mxu0 0
  %4598 = vmatprep.mubr.bf16.mxu0 0
  %4599 = vmatmul.mubr.bf16.gmra.mrb[0].mxu0 %v4561
  %v4600 = vpop.f32.mrb[0].mxu0
  %v4601 = vadd.f32 0.0, %v4600
  %v4602 = vpop.f32.mrb[0].mxu0
  %v4603 = vadd.f32 0.0, %v4602
  %v4604 = vpop.f32.mrb[0].mxu0
  %v4605 = vadd.f32 0.0, %v4604
  %v4606 = vpop.f32.mrb[0].mxu0
  %v4607 = vadd.f32 0.0, %v4606
  %4608 = vmatprep.mubr.bf16.mxu0 0
  %4609 = vmatmul.mubr.bf16.gmra.mrb[0].mxu0 %v4564
  %v4610 = vpop.f32.mrb[0].mxu0
  %v4611 = vadd.f32 0.0, %v4610
  %v4612 = vpop.f32.mrb[0].mxu0
  %v4613 = vadd.f32 0.0, %v4612
  %v4614 = vpop.f32.mrb[0].mxu0
  %v4615 = vadd.f32 0.0, %v4614
  %v4616 = vpop.f32.mrb[0].mxu0
  %v4617 = vadd.f32 0.0, %v4616
  %4618 = vdwg.mxu0
  %v4619 = vadd.f32 %v4525, %v4601
  %v4620 = vadd.f32 %v4526, %v4603
  %v4621 = vadd.f32 %v4527, %v4605
  %v4622 = vadd.f32 %v4528, %v4607
  %v4623 = vadd.f32 %v4529, %v4611
  %v4624 = vadd.f32 %v4530, %v4613
  %v4625 = vadd.f32 %v4531, %v4615
  %v4626 = vadd.f32 %v4532, %v4617
  %v4627 = vadd.f32 %v4619, %v508
  %v4628 = vadd.f32 %v4620, %v512
  %v4629 = vadd.f32 %v4621, %v508
  %v4630 = vadd.f32 %v4622, %v512
  %v4631 = vadd.f32 %v4623, %v508
  %v4632 = vadd.f32 %v4624, %v512
  %v4633 = vadd.f32 %v4625, %v508
  %v4634 = vadd.f32 %v4626, %v512
  %v4635 = vmax.f32 %v4627, 0.0
  %v4636 = vmax.f32 %v4628, 0.0
  %v4637 = vmax.f32 %v4629, 0.0
  %v4638 = vmax.f32 %v4630, 0.0
  %v4639 = vmax.f32 %v4631, 0.0
  %v4640 = vmax.f32 %v4632, 0.0
  %v4641 = vmax.f32 %v4633, 0.0
  %v4642 = vmax.f32 %v4634, 0.0
  %v4651 = vrot.slane %v4635, 1
  %v4652 = vrot.slane %v4637, 1
  %v4653 = vsel %vm539, %v4651, %v4652
  %v4654 = vrot.slane %v4636, 1
  %v4655 = vrot.slane %v4638, 1
  %v4656 = vsel %vm539, %v4654, %v4655
  %v4657 = vrot.slane %v4639, 1
  %v4658 = vsel %vm539, %v4652, %v4657
  %v4659 = vrot.slane %v4640, 1
  %v4660 = vsel %vm539, %v4655, %v4659
  %v4661 = vrot.slane %v4641, 1
  %v4662 = vsel %vm539, %v4657, %v4661
  %v4663 = vrot.slane %v4642, 1
  %v4664 = vsel %vm539, %v4659, %v4663
  %v4673 = vmax.f32 %v4635, %v4653
  %v4674 = vmax.f32 %v4636, %v4656
  %v4675 = vmax.f32 %v4637, %v4658
  %v4676 = vmax.f32 %v4638, %v4660
  %v4677 = vmax.f32 %v4639, %v4662
  %v4678 = vmax.f32 %v4640, %v4664
  %v4679 = vmax.f32 %v4641, %v4661
  %v4680 = vmax.f32 %v4642, %v4663
  %4689 = vrot.lane.b32.xlu0 %v4673, 122
  %v4690 = vpop.permute.xlu0 %4689
  %4691 = vrot.lane.b32.xlu0 %v4674, 122
  %v4692 = vpop.permute.xlu0 %4691
  %4693 = vrot.lane.b32.xlu0 %v4675, 122
  %v4694 = vpop.permute.xlu0 %4693
  %4695 = vrot.lane.b32.xlu0 %v4676, 122
  %v4696 = vpop.permute.xlu0 %4695
  %4697 = vrot.lane.b32.xlu0 %v4677, 122
  %v4698 = vpop.permute.xlu0 %4697
  %4699 = vrot.lane.b32.xlu0 %v4678, 122
  %v4700 = vpop.permute.xlu0 %4699
  %4701 = vrot.lane.b32.xlu0 %v4679, 122
  %v4702 = vpop.permute.xlu0 %4701
  %4703 = vrot.lane.b32.xlu0 %v4680, 122
  %v4704 = vpop.permute.xlu0 %4703
  %v4705 = vsel %vm594, %v4690, %v4692
  %v4706 = vsel %vm594, %v4694, %v4696
  %v4707 = vsel %vm594, %v4698, %v4700
  %v4708 = vsel %vm594, %v4702, %v4704
  %v4717 = vmax.f32 %v4673, %v4705
  %v4718 = vmax.f32 %v4674, %v4692
  %v4719 = vmax.f32 %v4675, %v4706
  %v4720 = vmax.f32 %v4676, %v4696
  %v4721 = vmax.f32 %v4677, %v4707
  %v4722 = vmax.f32 %v4678, %v4700
  %v4723 = vmax.f32 %v4679, %v4708
  %v4724 = vmax.f32 %v4680, %v4704
  %s4725 = scalar_lea.vmem %s3, 448
  %4726 = vst [vmem:[%s4725] sm:$0xff] %v4717
  %4727 = vst.msk [vmem:[%s4725 + $0x8] sm:$0xff] %vm616, %v4718
  %4728 = vst [vmem:[%s4725 + $0x10] sm:$0xff] %v4719
  %4729 = vst.msk [vmem:[%s4725 + $0x18] sm:$0xff] %vm616, %v4720
  %4730 = vst [vmem:[%s4725 + $0x20] sm:$0xff] %v4721
  %4731 = vst.msk [vmem:[%s4725 + $0x28] sm:$0xff] %vm616, %v4722
  %4732 = vst [vmem:[%s4725 + $0x30] sm:$0x7] %v4723
  %4733 = vst.msk [vmem:[%s4725 + $0x38] sm:$0x7] %vm623, %v4724
  // Predicated region
  $region14: #{lenet_forward.3} parent=0 // pred_check
    _
  $region15: #{lenet_forward.3} parent=0 // pred_check_branch
    %4735 = sbr.rel (0) target = $region17
  $region16: #{lenet_forward.3} parent=0 // pred_region
    _
  $region17: #{lenet_forward.3} parent=0 // pred_fallthru
    _
  // Predicated region
  $region18: #{lenet_forward.3} parent=0 // pred_check
    _
  $region19: #{lenet_forward.3} parent=0 // pred_check_branch
    %4737 = sbr.rel (0) target = $region21
  $region20: #{lenet_forward.3} parent=0 // pred_region
    _
  $region21: #{lenet_forward.3} parent=0 // pred_fallthru
    _

// kernel: lenet_forward.5
$region0: #{lenet_forward.5}
  #allocation0 [shape = 'u32[]', space=smem, size = 0x4, offset = 0x4, fixed_abs, tag = 'smem constant byte address 0x4 - core index']
  #allocation1 [shape = 'u32[144,128]{1,0:T(1,128)}', space=vmem, size = 0x12000, scoped, tag = 'internal scratch']
  %s0 = inlined_call_operand.vmem [shape: bf16[8,512], index: 0, kind: input, shape index: {}]
  %s1 = inlined_call_operand.vmem [shape: bf16[512,128], index: 1, kind: input, shape index: {}]
  %s2 = inlined_call_operand.vmem [shape: f32[1,128], index: 2, kind: input, shape index: {}]
  %s3 = inlined_call_operand.vmem [shape: bf16[128,128], index: 3, kind: input, shape index: {}]
  %s4 = inlined_call_operand.vmem [shape: f32[1,128], index: 4, kind: input, shape index: {}]
  %s5 = inlined_call_operand.vmem [shape: bf16[128,128], index: 5, kind: input, shape index: {}]
  %s6 = inlined_call_operand.vmem [shape: f32[1,128], index: 6, kind: input, shape index: {}]
  %s7 = inlined_call_operand.vmem [shape: f32[8,128], index: 7, kind: output, shape index: {}]
  %s8 = sld [smem:[#allocation0]]
  $region38: #{lenet_forward.5} parent=0
    _
  %s10 = ssub.s32 1, %s8
  %s11 = scalar_select 0, %s10, %s8
  // Predicated region
  $region2: #{lenet_forward.5} parent=0 // pred_check
    _
  $region3: #{lenet_forward.5} parent=0 // pred_check_branch
    %13 = sbr.rel (0) target = $region5
  $region4: #{lenet_forward.5} parent=0 // pred_region
    _
  $region5: #{lenet_forward.5} parent=0 // pred_fallthru
    _
  // Predicated region
  $region6: #{lenet_forward.5} parent=0 // pred_check
    _
  $region7: #{lenet_forward.5} parent=0 // pred_check_branch
    %15 = sbr.rel (0) target = $region9
  $region8: #{lenet_forward.5} parent=0 // pred_region
    _
  $region9: #{lenet_forward.5} parent=0 // pred_fallthru
    _
  // Predicated region
  $region10: #{lenet_forward.5} parent=0 // pred_check
    _
  $region11: #{lenet_forward.5} parent=0 // pred_check_branch
    %17 = sbr.rel (0) target = $region13
  $region12: #{lenet_forward.5} parent=0 // pred_region
    _
  $region13: #{lenet_forward.5} parent=0 // pred_fallthru
    _
  // Predicated region
  $region14: #{lenet_forward.5} parent=0 // pred_check
    _
  $region15: #{lenet_forward.5} parent=0 // pred_check_branch
    %19 = sbr.rel (0) target = $region17
  $region16: #{lenet_forward.5} parent=0 // pred_region
    _
  $region17: #{lenet_forward.5} parent=0 // pred_fallthru
    _
  // Predicated region
  $region18: #{lenet_forward.5} parent=0 // pred_check
    _
  $region19: #{lenet_forward.5} parent=0 // pred_check_branch
    %21 = sbr.rel (0) target = $region21
  $region20: #{lenet_forward.5} parent=0 // pred_region
    _
  $region21: #{lenet_forward.5} parent=0 // pred_fallthru
    _
  // Predicated region
  $region22: #{lenet_forward.5} parent=0 // pred_check
    _
  $region23: #{lenet_forward.5} parent=0 // pred_check_branch
    %23 = sbr.rel (0) target = $region25
  $region24: #{lenet_forward.5} parent=0 // pred_region
    _
  $region25: #{lenet_forward.5} parent=0 // pred_fallthru
    _
  // Predicated region
  $region26: #{lenet_forward.5} parent=0 // pred_check
    _
  $region27: #{lenet_forward.5} parent=0 // pred_check_branch
    %25 = sbr.rel (0) target = $region29
  $region28: #{lenet_forward.5} parent=0 // pred_region
    _
  $region29: #{lenet_forward.5} parent=0 // pred_fallthru
    _
  %v27 = vld [vmem:[%s0] sm:$0xff]
  %v28 = vld [vmem:[%s0 + $0x8] sm:$0xff]
  %v29 = vld [vmem:[%s1] sm:$0xf]
  %v30 = vld [vmem:[%s1 + $0x4] sm:$0xf]
  %v31 = vld [vmem:[%s1 + $0x8] sm:$0xf]
  %v32 = vld [vmem:[%s1 + $0xc] sm:$0xf]
  %v33 = vld [vmem:[%s1 + $0x10] sm:$0xf]
  %v34 = vld [vmem:[%s1 + $0x14] sm:$0xf]
  %v35 = vld [vmem:[%s1 + $0x18] sm:$0xf]
  %v36 = vld [vmem:[%s1 + $0x1c] sm:$0xf]
  %v37 = vld [vmem:[%s1 + $0x20] sm:$0xf]
  %v38 = vld [vmem:[%s1 + $0x24] sm:$0xf]
  %v39 = vld [vmem:[%s1 + $0x28] sm:$0xf]
  %v40 = vld [vmem:[%s1 + $0x2c] sm:$0xf]
  %v41 = vld [vmem:[%s1 + $0x30] sm:$0xf]
  %v42 = vld [vmem:[%s1 + $0x34] sm:$0xf]
  %v43 = vld [vmem:[%s1 + $0x38] sm:$0xf]
  %v44 = vld [vmem:[%s1 + $0x3c] sm:$0xf]
  %v45 = vld [vmem:[%s1 + $0x40] sm:$0xf]
  %v46 = vld [vmem:[%s1 + $0x44] sm:$0xf]
  %v47 = vld [vmem:[%s1 + $0x48] sm:$0xf]
  %v48 = vld [vmem:[%s1 + $0x4c] sm:$0xf]
  %v49 = vld [vmem:[%s1 + $0x50] sm:$0xf]
  %v50 = vld [vmem:[%s1 + $0x54] sm:$0xf]
  %v51 = vld [vmem:[%s1 + $0x58] sm:$0xf]
  %v52 = vld [vmem:[%s1 + $0x5c] sm:$0xf]
  %v53 = vld [vmem:[%s1 + $0x60] sm:$0xf]
  %v54 = vld [vmem:[%s1 + $0x64] sm:$0xf]
  %v55 = vld [vmem:[%s1 + $0x68] sm:$0xf]
  %v56 = vld [vmem:[%s1 + $0x6c] sm:$0xf]
  %v57 = vld [vmem:[%s1 + $0x70] sm:$0xf]
  %v58 = vld [vmem:[%s1 + $0x74] sm:$0xf]
  %v59 = vld [vmem:[%s1 + $0x78] sm:$0xf]
  %v60 = vld [vmem:[%s1 + $0x7c] sm:$0xf]
  %v61 = vld [vmem:[%s1 + $0x80] sm:$0xf]
  %v62 = vld [vmem:[%s1 + $0x84] sm:$0xf]
  %v63 = vld [vmem:[%s1 + $0x88] sm:$0xf]
  %v64 = vld [vmem:[%s1 + $0x8c] sm:$0xf]
  %v65 = vld [vmem:[%s1 + $0x90] sm:$0xf]
  %v66 = vld [vmem:[%s1 + $0x94] sm:$0xf]
  %v67 = vld [vmem:[%s1 + $0x98] sm:$0xf]
  %v68 = vld [vmem:[%s1 + $0x9c] sm:$0xf]
  %v69 = vld [vmem:[%s1 + $0xa0] sm:$0xf]
  %v70 = vld [vmem:[%s1 + $0xa4] sm:$0xf]
  %v71 = vld [vmem:[%s1 + $0xa8] sm:$0xf]
  %v72 = vld [vmem:[%s1 + $0xac] sm:$0xf]
  %v73 = vld [vmem:[%s1 + $0xb0] sm:$0xf]
  %v74 = vld [vmem:[%s1 + $0xb4] sm:$0xf]
  %v75 = vld [vmem:[%s1 + $0xb8] sm:$0xf]
  %v76 = vld [vmem:[%s1 + $0xbc] sm:$0xf]
  %v77 = vld [vmem:[%s1 + $0xc0] sm:$0xf]
  %v78 = vld [vmem:[%s1 + $0xc4] sm:$0xf]
  %v79 = vld [vmem:[%s1 + $0xc8] sm:$0xf]
  %v80 = vld [vmem:[%s1 + $0xcc] sm:$0xf]
  %v81 = vld [vmem:[%s1 + $0xd0] sm:$0xf]
  %v82 = vld [vmem:[%s1 + $0xd4] sm:$0xf]
  %v83 = vld [vmem:[%s1 + $0xd8] sm:$0xf]
  %v84 = vld [vmem:[%s1 + $0xdc] sm:$0xf]
  %v85 = vld [vmem:[%s1 + $0xe0] sm:$0xf]
  %v86 = vld [vmem:[%s1 + $0xe4] sm:$0xf]
  %v87 = vld [vmem:[%s1 + $0xe8] sm:$0xf]
  %v88 = vld [vmem:[%s1 + $0xec] sm:$0xf]
  %v89 = vld [vmem:[%s1 + $0xf0] sm:$0xf]
  %v90 = vld [vmem:[%s1 + $0xf4] sm:$0xf]
  %v91 = vld [vmem:[%s1 + $0xf8] sm:$0xf]
  %v92 = vld [vmem:[%s1 + $0xfc] sm:$0xf]
  %v93 = vld [vmem:[%s2] sm:$0x1]
  %v95 = vlaneseq
  %v96 = vshrl.u32 %v95, 7
  %v97 = vsub.s32 0, %v96
  %v98 = vrot.slane %v93, %v97
  %v102 = vunpack.c.l.b16 %v27
  %v103 = vunpack.c.h.b16 %v27
  %v104 = vunpack.c.l.b16 %v28
  %v105 = vunpack.c.h.b16 %v28
  %v106 = vpack.c.b16 %v102, %v102
  %v107 = vpack.c.b16 %v103, %v103
  %v108 = vpack.c.b16 %v104, %v104
  %v109 = vpack.c.b16 %v105, %v105
  %v178 = vunpack.c.l.b16 %v29
  %v179 = vunpack.c.l.b16 %v30
  %v180 = vunpack.c.l.b16 %v31
  %v181 = vunpack.c.l.b16 %v32
  %v182 = vunpack.c.l.b16 %v33
  %v183 = vunpack.c.l.b16 %v34
  %v184 = vunpack.c.l.b16 %v35
  %v185 = vunpack.c.l.b16 %v36
  %v186 = vunpack.c.l.b16 %v37
  %v187 = vunpack.c.l.b16 %v38
  %v188 = vunpack.c.l.b16 %v39
  %v189 = vunpack.c.l.b16 %v40
  %v190 = vunpack.c.l.b16 %v41
  %v191 = vunpack.c.l.b16 %v42
  %v192 = vunpack.c.l.b16 %v43
  %v193 = vunpack.c.l.b16 %v44
  %v194 = vunpack.c.l.b16 %v45
  %v195 = vunpack.c.l.b16 %v46
  %v196 = vunpack.c.l.b16 %v47
  %v197 = vunpack.c.l.b16 %v48
  %v198 = vunpack.c.l.b16 %v49
  %v199 = vunpack.c.l.b16 %v50
  %v200 = vunpack.c.l.b16 %v51
  %v201 = vunpack.c.l.b16 %v52
  %v202 = vunpack.c.l.b16 %v53
  %v203 = vunpack.c.l.b16 %v54
  %v204 = vunpack.c.l.b16 %v55
  %v205 = vunpack.c.l.b16 %v56
  %v206 = vunpack.c.l.b16 %v57
  %v207 = vunpack.c.l.b16 %v58
  %v208 = vunpack.c.l.b16 %v59
  %v209 = vunpack.c.l.b16 %v60
  %v210 = vunpack.c.l.b16 %v61
  %v211 = vunpack.c.l.b16 %v62
  %v212 = vunpack.c.l.b16 %v63
  %v213 = vunpack.c.l.b16 %v64
  %v214 = vunpack.c.l.b16 %v65
  %v215 = vunpack.c.l.b16 %v66
  %v216 = vunpack.c.l.b16 %v67
  %v217 = vunpack.c.l.b16 %v68
  %v218 = vunpack.c.l.b16 %v69
  %v219 = vunpack.c.l.b16 %v70
  %v220 = vunpack.c.l.b16 %v71
  %v221 = vunpack.c.l.b16 %v72
  %v222 = vunpack.c.l.b16 %v73
  %v223 = vunpack.c.l.b16 %v74
  %v224 = vunpack.c.l.b16 %v75
  %v225 = vunpack.c.l.b16 %v76
  %v226 = vunpack.c.l.b16 %v77
  %v227 = vunpack.c.l.b16 %v78
  %v228 = vunpack.c.l.b16 %v79
  %v229 = vunpack.c.l.b16 %v80
  %v230 = vunpack.c.l.b16 %v81
  %v231 = vunpack.c.l.b16 %v82
  %v232 = vunpack.c.l.b16 %v83
  %v233 = vunpack.c.l.b16 %v84
  %v234 = vunpack.c.l.b16 %v85
  %v235 = vunpack.c.l.b16 %v86
  %v236 = vunpack.c.l.b16 %v87
  %v237 = vunpack.c.l.b16 %v88
  %v238 = vunpack.c.l.b16 %v89
  %v239 = vunpack.c.l.b16 %v90
  %v240 = vunpack.c.l.b16 %v91
  %v241 = vunpack.c.l.b16 %v92
  %v242 = vpack.c.b16 %v179, %v178
  %v243 = vpack.c.b16 %v181, %v180
  %v244 = vpack.c.b16 %v183, %v182
  %v245 = vpack.c.b16 %v185, %v184
  %v246 = vpack.c.b16 %v187, %v186
  %v247 = vpack.c.b16 %v189, %v188
  %v248 = vpack.c.b16 %v191, %v190
  %v249 = vpack.c.b16 %v193, %v192
  %v250 = vpack.c.b16 %v195, %v194
  %v251 = vpack.c.b16 %v197, %v196
  %v252 = vpack.c.b16 %v199, %v198
  %v253 = vpack.c.b16 %v201, %v200
  %v254 = vpack.c.b16 %v203, %v202
  %v255 = vpack.c.b16 %v205, %v204
  %v256 = vpack.c.b16 %v207, %v206
  %v257 = vpack.c.b16 %v209, %v208
  %v258 = vpack.c.b16 %v211, %v210
  %v259 = vpack.c.b16 %v213, %v212
  %v260 = vpack.c.b16 %v215, %v214
  %v261 = vpack.c.b16 %v217, %v216
  %v262 = vpack.c.b16 %v219, %v218
  %v263 = vpack.c.b16 %v221, %v220
  %v264 = vpack.c.b16 %v223, %v222
  %v265 = vpack.c.b16 %v225, %v224
  %v266 = vpack.c.b16 %v227, %v226
  %v267 = vpack.c.b16 %v229, %v228
  %v268 = vpack.c.b16 %v231, %v230
  %v269 = vpack.c.b16 %v233, %v232
  %v270 = vpack.c.b16 %v235, %v234
  %v271 = vpack.c.b16 %v237, %v236
  %v272 = vpack.c.b16 %v239, %v238
  %v273 = vpack.c.b16 %v241, %v240
  %306 = vmatprep.subr.bf16.mxu0 0
  %307 = vmatpush1.bf16.msra.mxu0 %v242
  %308 = vmatprep.subr.bf16.mxu0 0
  %309 = vmatpush1.bf16.msra.mxu0 %v243
  %310 = vmatprep.subr.bf16.mxu0 0
  %311 = vmatpush1.bf16.msra.mxu0 %v244
  %312 = vmatprep.subr.bf16.mxu0 0
  %313 = vmatpush1.bf16.msra.mxu0 %v245
  %314 = vmatprep.subr.bf16.mxu0 0
  %315 = vmatpush1.bf16.msra.mxu0 %v246
  %316 = vmatprep.subr.bf16.mxu0 0
  %317 = vmatpush1.bf16.msra.mxu0 %v247
  %318 = vmatprep.subr.bf16.mxu0 0
  %319 = vmatpush1.bf16.msra.mxu0 %v248
  %320 = vmatprep.subr.bf16.mxu0 0
  %321 = vmatpush1.bf16.msra.mxu0 %v249
  %322 = vmatprep.subr.bf16.mxu0 0
  %323 = vmatpush1.bf16.msra.mxu0 %v250
  %324 = vmatprep.subr.bf16.mxu0 0
  %325 = vmatpush1.bf16.msra.mxu0 %v251
  %326 = vmatprep.subr.bf16.mxu0 0
  %327 = vmatpush1.bf16.msra.mxu0 %v252
  %328 = vmatprep.subr.bf16.mxu0 0
  %329 = vmatpush1.bf16.msra.mxu0 %v253
  %330 = vmatprep.subr.bf16.mxu0 0
  %331 = vmatpush1.bf16.msra.mxu0 %v254
  %332 = vmatprep.subr.bf16.mxu0 0
  %333 = vmatpush1.bf16.msra.mxu0 %v255
  %334 = vmatprep.subr.bf16.mxu0 0
  %335 = vmatpush1.bf16.msra.mxu0 %v256
  %336 = vmatprep.subr.bf16.mxu0 0
  %337 = vmatpush1.bf16.msra.mxu0 %v257
  %338 = vmatprep.mubr.bf16.mxu0 %v107
  %339 = vmatmul.mubr.bf16.gmra.mrb[0].mxu0 %v106
  %v340 = vpop.f32.mrb[0].mxu0
  %v341 = vadd.f32 %v98, %v340
  %v342 = vpop.f32.mrb[0].mxu0
  %v343 = vpop.f32.mrb[0].mxu0
  %v344 = vpop.f32.mrb[0].mxu0
  %345 = vdwg.mxu0
  %346 = vmatprep.subr.bf16.mxu0 0
  %347 = vmatpush1.bf16.msra.mxu0 %v258
  %348 = vmatprep.subr.bf16.mxu0 0
  %349 = vmatpush1.bf16.msra.mxu0 %v259
  %350 = vmatprep.subr.bf16.mxu0 0
  %351 = vmatpush1.bf16.msra.mxu0 %v260
  %352 = vmatprep.subr.bf16.mxu0 0
  %353 = vmatpush1.bf16.msra.mxu0 %v261
  %354 = vmatprep.subr.bf16.mxu0 0
  %355 = vmatpush1.bf16.msra.mxu0 %v262
  %356 = vmatprep.subr.bf16.mxu0 0
  %357 = vmatpush1.bf16.msra.mxu0 %v263
  %358 = vmatprep.subr.bf16.mxu0 0
  %359 = vmatpush1.bf16.msra.mxu0 %v264
  %360 = vmatprep.subr.bf16.mxu0 0
  %361 = vmatpush1.bf16.msra.mxu0 %v265
  %362 = vmatprep.subr.bf16.mxu0 0
  %363 = vmatpush1.bf16.msra.mxu0 %v266
  %364 = vmatprep.subr.bf16.mxu0 0
  %365 = vmatpush1.bf16.msra.mxu0 %v267
  %366 = vmatprep.subr.bf16.mxu0 0
  %367 = vmatpush1.bf16.msra.mxu0 %v268
  %368 = vmatprep.subr.bf16.mxu0 0
  %369 = vmatpush1.bf16.msra.mxu0 %v269
  %370 = vmatprep.subr.bf16.mxu0 0
  %371 = vmatpush1.bf16.msra.mxu0 %v270
  %372 = vmatprep.subr.bf16.mxu0 0
  %373 = vmatpush1.bf16.msra.mxu0 %v271
  %374 = vmatprep.subr.bf16.mxu0 0
  %375 = vmatpush1.bf16.msra.mxu0 %v272
  %376 = vmatprep.subr.bf16.mxu0 0
  %377 = vmatpush1.bf16.msra.mxu0 %v273
  %378 = vmatprep.mubr.bf16.mxu0 %v109
  %379 = vmatmul.mubr.bf16.gmra.mrb[0].mxu0 %v108
  %v380 = vpop.f32.mrb[0].mxu0
  %v381 = vadd.f32 %v341, %v380
  %v382 = vpop.f32.mrb[0].mxu0
  %v383 = vpop.f32.mrb[0].mxu0
  %v384 = vpop.f32.mrb[0].mxu0
  %385 = vdwg.mxu0
  %v386 = vmax.f32 %v381, 0.0
  %v387 = vpack.c.bf16 %v386, %v386
  %v388 = vld [vmem:[%s3] sm:$0xf]
  %v389 = vld [vmem:[%s3 + $0x4] sm:$0xf]
  %v390 = vld [vmem:[%s3 + $0x8] sm:$0xf]
  %v391 = vld [vmem:[%s3 + $0xc] sm:$0xf]
  %v392 = vld [vmem:[%s3 + $0x10] sm:$0xf]
  %v393 = vld [vmem:[%s3 + $0x14] sm:$0xf]
  %v394 = vld [vmem:[%s3 + $0x18] sm:$0xf]
  %v395 = vld [vmem:[%s3 + $0x1c] sm:$0xf]
  %v396 = vld [vmem:[%s3 + $0x20] sm:$0xf]
  %v397 = vld [vmem:[%s3 + $0x24] sm:$0xf]
  %v398 = vld [vmem:[%s3 + $0x28] sm:$0xf]
  %v399 = vld [vmem:[%s3 + $0x2c] sm:$0xf]
  %v400 = vld [vmem:[%s3 + $0x30] sm:$0xf]
  %v401 = vld [vmem:[%s3 + $0x34] sm:$0xf]
  %v402 = vld [vmem:[%s3 + $0x38] sm:$0xf]
  %v403 = vld [vmem:[%s3 + $0x3c] sm:$0xf]
  %v404 = vld [vmem:[%s4] sm:$0x1]
  %v406 = vlaneseq
  %v407 = vshrl.u32 %v406, 7
  %v408 = vsub.s32 0, %v407
  %v409 = vrot.slane %v404, %v408
  %v427 = vunpack.c.l.b16 %v388
  %v428 = vunpack.c.l.b16 %v389
  %v429 = vunpack.c.l.b16 %v390
  %v430 = vunpack.c.l.b16 %v391
  %v431 = vunpack.c.l.b16 %v392
  %v432 = vunpack.c.l.b16 %v393
  %v433 = vunpack.c.l.b16 %v394
  %v434 = vunpack.c.l.b16 %v395
  %v435 = vunpack.c.l.b16 %v396
  %v436 = vunpack.c.l.b16 %v397
  %v437 = vunpack.c.l.b16 %v398
  %v438 = vunpack.c.l.b16 %v399
  %v439 = vunpack.c.l.b16 %v400
  %v440 = vunpack.c.l.b16 %v401
  %v441 = vunpack.c.l.b16 %v402
  %v442 = vunpack.c.l.b16 %v403
  %v443 = vpack.c.b16 %v428, %v427
  %v444 = vpack.c.b16 %v430, %v429
  %v445 = vpack.c.b16 %v432, %v431
  %v446 = vpack.c.b16 %v434, %v433
  %v447 = vpack.c.b16 %v436, %v435
  %v448 = vpack.c.b16 %v438, %v437
  %v449 = vpack.c.b16 %v440, %v439
  %v450 = vpack.c.b16 %v442, %v441
  %459 = vmatprep.subr.bf16.mxu0 0
  %460 = vmatpush1.bf16.msra.mxu0 %v443
  %461 = vmatprep.subr.bf16.mxu0 0
  %462 = vmatpush1.bf16.msra.mxu0 %v444
  %463 = vmatprep.subr.bf16.mxu0 0
  %464 = vmatpush1.bf16.msra.mxu0 %v445
  %465 = vmatprep.subr.bf16.mxu0 0
  %466 = vmatpush1.bf16.msra.mxu0 %v446
  %467 = vmatprep.subr.bf16.mxu0 0
  %468 = vmatpush1.bf16.msra.mxu0 %v447
  %469 = vmatprep.subr.bf16.mxu0 0
  %470 = vmatpush1.bf16.msra.mxu0 %v448
  %471 = vmatprep.subr.bf16.mxu0 0
  %472 = vmatpush1.bf16.msra.mxu0 %v449
  %473 = vmatprep.subr.bf16.mxu0 0
  %474 = vmatpush1.bf16.msra.mxu0 %v450
  %475 = vmatprep.subr.bf16.mxu0 0
  %476 = vmatpush1.bf16.msra.mxu0 0
  %477 = vmatprep.subr.bf16.mxu0 0
  %478 = vmatpush1.bf16.msra.mxu0 0
  %479 = vmatprep.subr.bf16.mxu0 0
  %480 = vmatpush1.bf16.msra.mxu0 0
  %481 = vmatprep.subr.bf16.mxu0 0
  %482 = vmatpush1.bf16.msra.mxu0 0
  %483 = vmatprep.subr.bf16.mxu0 0
  %484 = vmatpush1.bf16.msra.mxu0 0
  %485 = vmatprep.subr.bf16.mxu0 0
  %486 = vmatpush1.bf16.msra.mxu0 0
  %487 = vmatprep.subr.bf16.mxu0 0
  %488 = vmatpush1.bf16.msra.mxu0 0
  %489 = vmatprep.subr.bf16.mxu0 0
  %490 = vmatpush1.bf16.msra.mxu0 0
  %491 = vmatprep.mubr.bf16.mxu0 0
  %492 = vmatmul.mubr.bf16.gmra.mrb[0].mxu0 %v387
  %v493 = vpop.f32.mrb[0].mxu0
  %v494 = vadd.f32 %v409, %v493
  %v495 = vpop.f32.mrb[0].mxu0
  %v496 = vpop.f32.mrb[0].mxu0
  %v497 = vpop.f32.mrb[0].mxu0
  %498 = vdwg.mxu0
  %v499 = vmax.f32 %v494, 0.0
  %v500 = vpack.c.bf16 %v499, %v499
  %v501 = vld [vmem:[%s5] sm:$0xf]
  %v502 = vld [vmem:[%s5 + $0x4] sm:$0xf]
  %v503 = vld [vmem:[%s5 + $0x8] sm:$0xf]
  %v504 = vld [vmem:[%s5 + $0xc] sm:$0xf]
  %v505 = vld [vmem:[%s5 + $0x10] sm:$0xf]
  %v506 = vld [vmem:[%s5 + $0x14] sm:$0xf]
  %v507 = vld [vmem:[%s5 + $0x18] sm:$0xf]
  %v508 = vld [vmem:[%s5 + $0x1c] sm:$0xf]
  %v509 = vld [vmem:[%s5 + $0x20] sm:$0xf]
  %v510 = vld [vmem:[%s5 + $0x24] sm:$0xf]
  %v511 = vld [vmem:[%s5 + $0x28] sm:$0xf]
  %v512 = vld [vmem:[%s5 + $0x2c] sm:$0xf]
  %v513 = vld [vmem:[%s5 + $0x30] sm:$0xf]
  %v514 = vld [vmem:[%s5 + $0x34] sm:$0xf]
  %v515 = vld [vmem:[%s5 + $0x38] sm:$0xf]
  %v516 = vld [vmem:[%s5 + $0x3c] sm:$0xf]
  %v517 = vld [vmem:[%s6] sm:$0x1]
  %v519 = vlaneseq
  %v520 = vshrl.u32 %v519, 7
  %v521 = vsub.s32 0, %v520
  %v522 = vrot.slane %v517, %v521
  %v540 = vunpack.c.l.b16 %v501
  %v541 = vunpack.c.l.b16 %v502
  %v542 = vunpack.c.l.b16 %v503
  %v543 = vunpack.c.l.b16 %v504
  %v544 = vunpack.c.l.b16 %v505
  %v545 = vunpack.c.l.b16 %v506
  %v546 = vunpack.c.l.b16 %v507
  %v547 = vunpack.c.l.b16 %v508
  %v548 = vunpack.c.l.b16 %v509
  %v549 = vunpack.c.l.b16 %v510
  %v550 = vunpack.c.l.b16 %v511
  %v551 = vunpack.c.l.b16 %v512
  %v552 = vunpack.c.l.b16 %v513
  %v553 = vunpack.c.l.b16 %v514
  %v554 = vunpack.c.l.b16 %v515
  %v555 = vunpack.c.l.b16 %v516
  %v556 = vpack.c.b16 %v541, %v540
  %v557 = vpack.c.b16 %v543, %v542
  %v558 = vpack.c.b16 %v545, %v544
  %v559 = vpack.c.b16 %v547, %v546
  %v560 = vpack.c.b16 %v549, %v548
  %v561 = vpack.c.b16 %v551, %v550
  %v562 = vpack.c.b16 %v553, %v552
  %v563 = vpack.c.b16 %v555, %v554
  %572 = vmatprep.subr.bf16.mxu0 0
  %573 = vmatpush1.bf16.msra.mxu0 %v556
  %574 = vmatprep.subr.bf16.mxu0 0
  %575 = vmatpush1.bf16.msra.mxu0 %v557
  %576 = vmatprep.subr.bf16.mxu0 0
  %577 = vmatpush1.bf16.msra.mxu0 %v558
  %578 = vmatprep.subr.bf16.mxu0 0
  %579 = vmatpush1.bf16.msra.mxu0 %v559
  %580 = vmatprep.subr.bf16.mxu0 0
  %581 = vmatpush1.bf16.msra.mxu0 %v560
  %582 = vmatprep.subr.bf16.mxu0 0
  %583 = vmatpush1.bf16.msra.mxu0 %v561
  %584 = vmatprep.subr.bf16.mxu0 0
  %585 = vmatpush1.bf16.msra.mxu0 %v562
  %586 = vmatprep.subr.bf16.mxu0 0
  %587 = vmatpush1.bf16.msra.mxu0 %v563
  %588 = vmatprep.subr.bf16.mxu0 0
  %589 = vmatpush1.bf16.msra.mxu0 0
  %590 = vmatprep.subr.bf16.mxu0 0
  %591 = vmatpush1.bf16.msra.mxu0 0
  %592 = vmatprep.subr.bf16.mxu0 0
  %593 = vmatpush1.bf16.msra.mxu0 0
  %594 = vmatprep.subr.bf16.mxu0 0
  %595 = vmatpush1.bf16.msra.mxu0 0
  %596 = vmatprep.subr.bf16.mxu0 0
  %597 = vmatpush1.bf16.msra.mxu0 0
  %598 = vmatprep.subr.bf16.mxu0 0
  %599 = vmatpush1.bf16.msra.mxu0 0
  %600 = vmatprep.subr.bf16.mxu0 0
  %601 = vmatpush1.bf16.msra.mxu0 0
  %602 = vmatprep.subr.bf16.mxu0 0
  %603 = vmatpush1.bf16.msra.mxu0 0
  %604 = vmatprep.mubr.bf16.mxu0 0
  %605 = vmatmul.mubr.bf16.gmra.mrb[0].mxu0 %v500
  %v606 = vpop.f32.mrb[0].mxu0
  %v607 = vadd.f32 %v522, %v606
  %v608 = vpop.f32.mrb[0].mxu0
  %v609 = vpop.f32.mrb[0].mxu0
  %v610 = vpop.f32.mrb[0].mxu0
  %611 = vdwg.mxu0
  %612 = vst [vmem:[%s7] sm:$0xff] %v607
  // Predicated region
  $region30: #{lenet_forward.5} parent=0 // pred_check
    _
  $region31: #{lenet_forward.5} parent=0 // pred_check_branch
    %614 = sbr.rel (0) target = $region33
  $region32: #{lenet_forward.5} parent=0 // pred_region
    _
  $region33: #{lenet_forward.5} parent=0 // pred_fallthru
    _
  // Predicated region
  $region34: #{lenet_forward.5} parent=0 // pred_check
    _
  $region35: #{lenet_forward.5} parent=0 // pred_check_branch
    %616 = sbr.rel (0) target = $region37
  $region36: #{lenet_forward.5} parent=0 // pred_region
    _
  $region37: #{lenet_forward.5} parent=0 // pred_fallthru
    _

// kernel: lenet_forward.4
$region0: #{lenet_forward.4}
  #allocation0 [shape = 'u32[]', space=smem, size = 0x4, offset = 0x4, fixed_abs, tag = 'smem constant byte address 0x4 - core index']
  #allocation1 [shape = 'u32[144,128]{1,0:T(1,128)}', space=vmem, size = 0x12000, scoped, tag = 'internal scratch']
  %s0 = inlined_call_operand.vmem [shape: bf16[8,14,84], index: 0, kind: input, shape index: {}]
  %s1 = inlined_call_operand.vmem [shape: bf16[5,84,160], index: 1, kind: input, shape index: {}]
  %s2 = inlined_call_operand.vmem [shape: f32[1,160], index: 2, kind: input, shape index: {}]
  %s3 = inlined_call_operand.vmem [shape: f32[8,9,144], index: 3, kind: output, shape index: {}]
  %s4 = sld [smem:[#allocation0]]
  $region22: #{lenet_forward.4} parent=0
    _
  %s6 = ssub.s32 1, %s4
  %s7 = scalar_select 0, %s6, %s4
  // Predicated region
  $region2: #{lenet_forward.4} parent=0 // pred_check
    _
  $region3: #{lenet_forward.4} parent=0 // pred_check_branch
    %9 = sbr.rel (0) target = $region5
  $region4: #{lenet_forward.4} parent=0 // pred_region
    _
  $region5: #{lenet_forward.4} parent=0 // pred_fallthru
    _
  // Predicated region
  $region6: #{lenet_forward.4} parent=0 // pred_check
    _
  $region7: #{lenet_forward.4} parent=0 // pred_check_branch
    %11 = sbr.rel (0) target = $region9
  $region8: #{lenet_forward.4} parent=0 // pred_region
    _
  $region9: #{lenet_forward.4} parent=0 // pred_fallthru
    _
  // Predicated region
  $region10: #{lenet_forward.4} parent=0 // pred_check
    _
  $region11: #{lenet_forward.4} parent=0 // pred_check_branch
    %13 = sbr.rel (0) target = $region13
  $region12: #{lenet_forward.4} parent=0 // pred_region
    _
  $region13: #{lenet_forward.4} parent=0 // pred_fallthru
    _
  %v15 = vld [vmem:[%s2] sm:$0x3]
  %v16 = vld [vmem:[%s0] sm:$0xf]
  %v17 = vld [vmem:[%s0 + $0x4] sm:$0x7]
  %v18 = vld [vmem:[%s1] sm:$0xff]
  %v19 = vld [vmem:[%s1 + $0x8] sm:$0xff]
  %v20 = vld [vmem:[%s1 + $0x10] sm:$0xff]
  %v21 = vld [vmem:[%s1 + $0x18] sm:$0xff]
  %v22 = vld [vmem:[%s1 + $0x20] sm:$0xff]
  %v23 = vld [vmem:[%s1 + $0x28] sm:$0xff]
  %v24 = vld [vmem:[%s1 + $0x30] sm:$0xff]
  %v25 = vld [vmem:[%s1 + $0x38] sm:$0xff]
  %v26 = vld [vmem:[%s1 + $0x40] sm:$0xff]
  %v27 = vld [vmem:[%s1 + $0x48] sm:$0xff]
  %v28 = vld [vmem:[%s1 + $0x50] sm:$0x33]
  %s29 = scalar_lea.vmem %s1, 88
  %v30 = vld [vmem:[%s29] sm:$0xff]
  %v31 = vld [vmem:[%s29 + $0x8] sm:$0xff]
  %v32 = vld [vmem:[%s29 + $0x10] sm:$0xff]
  %v33 = vld [vmem:[%s29 + $0x18] sm:$0xff]
  %v34 = vld [vmem:[%s29 + $0x20] sm:$0xff]
  %v35 = vld [vmem:[%s29 + $0x28] sm:$0xff]
  %v36 = vld [vmem:[%s29 + $0x30] sm:$0xff]
  %v37 = vld [vmem:[%s29 + $0x38] sm:$0xff]
  %v38 = vld [vmem:[%s29 + $0x40] sm:$0xff]
  %v39 = vld [vmem:[%s29 + $0x48] sm:$0xff]
  %v40 = vld [vmem:[%s29 + $0x50] sm:$0x33]
  %v43 = vunpack.c.l.b16 %v16
  %v44 = vunpack.c.l.b16 %v17
  %v45 = vpack.c.b16 %v44, %v43
  %v47 = vshrl.u32 %v45, 16
  %v49 = vshll.u32 %v45, 16
  %v51 = vrot.slane %v49, 1
  %v52 = vor.u32 %v47, %v51
  %v64 = vunpack.c.l.b16 %v30
  %v65 = vunpack.c.h.b16 %v30
  %v66 = vunpack.c.l.b16 %v31
  %v67 = vunpack.c.h.b16 %v31
  %v68 = vunpack.c.l.b16 %v32
  %v69 = vunpack.c.h.b16 %v32
  %v70 = vunpack.c.l.b16 %v33
  %v71 = vunpack.c.h.b16 %v33
  %v72 = vunpack.c.l.b16 %v34
  %v73 = vunpack.c.h.b16 %v34
  %v74 = vunpack.c.l.b16 %v35
  %v75 = vunpack.c.h.b16 %v35
  %v76 = vunpack.c.l.b16 %v36
  %v77 = vunpack.c.h.b16 %v36
  %v78 = vunpack.c.l.b16 %v37
  %v79 = vunpack.c.h.b16 %v37
  %v80 = vunpack.c.l.b16 %v38
  %v81 = vunpack.c.h.b16 %v38
  %v82 = vunpack.c.l.b16 %v39
  %v83 = vunpack.c.h.b16 %v39
  %v84 = vunpack.c.l.b16 %v40
  %v85 = vunpack.c.h.b16 %v40
  %v86 = vpack.c.b16 %v66, %v64
  %v87 = vpack.c.b16 %v67, %v65
  %v88 = vpack.c.b16 %v70, %v68
  %v89 = vpack.c.b16 %v71, %v69
  %v90 = vpack.c.b16 %v74, %v72
  %v91 = vpack.c.b16 %v75, %v73
  %v92 = vpack.c.b16 %v78, %v76
  %v93 = vpack.c.b16 %v79, %v77
  %v94 = vpack.c.b16 %v82, %v80
  %v95 = vpack.c.b16 %v83, %v81
  %v96 = vpack.c.b16 %v84, %v84
  %v97 = vpack.c.b16 %v85, %v85
  %vm108 = vcmask 687104
  %v110 = vsel %vm108, %v52, 0
  %vm112 = vcmask 1041408
  %v114 = vsel %vm112, %v96, 0
  %v117 = vsel %vm112, %v97, 0
  %119 = vmatprep.subr.bf16.mxu0 %v87
  %120 = vmatpush1.bf16.msra.mxu0 %v86
  %121 = vmatprep.subr.bf16.mxu0 %v89
  %122 = vmatpush1.bf16.msra.mxu0 %v88
  %123 = vmatprep.subr.bf16.mxu0 %v91
  %124 = vmatpush1.bf16.msra.mxu0 %v90
  %125 = vmatprep.subr.bf16.mxu0 %v93
  %126 = vmatpush1.bf16.msra.mxu0 %v92
  %127 = vmatprep.subr.bf16.mxu0 %v95
  %128 = vmatpush1.bf16.msra.mxu0 %v94
  %129 = vmatprep.subr.bf16.mxu0 %v117
  %130 = vmatpush1.bf16.msra.mxu0 %v114
  %131 = vmatprep.subr.bf16.mxu0 0
  %132 = vmatpush1.bf16.msra.mxu0 0
  %133 = vmatprep.subr.bf16.mxu0 0
  %134 = vmatpush1.bf16.msra.mxu0 0
  %135 = vmatprep.subr.bf16.mxu0 0
  %136 = vmatpush1.bf16.msra.mxu0 0
  %137 = vmatprep.subr.bf16.mxu0 0
  %138 = vmatpush1.bf16.msra.mxu0 0
  %139 = vmatprep.subr.bf16.mxu0 0
  %140 = vmatpush1.bf16.msra.mxu0 0
  %141 = vmatprep.subr.bf16.mxu0 0
  %142 = vmatpush1.bf16.msra.mxu0 0
  %143 = vmatprep.subr.bf16.mxu0 0
  %144 = vmatpush1.bf16.msra.mxu0 0
  %145 = vmatprep.subr.bf16.mxu0 0
  %146 = vmatpush1.bf16.msra.mxu0 0
  %147 = vmatprep.subr.bf16.mxu0 0
  %148 = vmatpush1.bf16.msra.mxu0 0
  %149 = vmatprep.subr.bf16.mxu0 0
  %150 = vmatpush1.bf16.msra.mxu0 0
  %151 = vmatprep.mubr.bf16.mxu0 0
  %152 = vmatmul.mubr.bf16.gmra.mrb[0].mxu0 %v110
  %v153 = vpop.f32.mrb[0].mxu0
  %v154 = vadd.f32 0.0, %v153
  %v155 = vpop.f32.mrb[0].mxu0
  %v156 = vadd.f32 0.0, %v155
  %v157 = vpop.f32.mrb[0].mxu0
  %v158 = vadd.f32 0.0, %v157
  %v159 = vpop.f32.mrb[0].mxu0
  %v160 = vadd.f32 0.0, %v159
  %161 = vdwg.mxu0
  %v173 = vunpack.c.l.b16 %v18
  %v174 = vunpack.c.h.b16 %v18
  %v175 = vunpack.c.l.b16 %v19
  %v176 = vunpack.c.h.b16 %v19
  %v177 = vunpack.c.l.b16 %v20
  %v178 = vunpack.c.h.b16 %v20
  %v179 = vunpack.c.l.b16 %v21
  %v180 = vunpack.c.h.b16 %v21
  %v181 = vunpack.c.l.b16 %v22
  %v182 = vunpack.c.h.b16 %v22
  %v183 = vunpack.c.l.b16 %v23
  %v184 = vunpack.c.h.b16 %v23
  %v185 = vunpack.c.l.b16 %v24
  %v186 = vunpack.c.h.b16 %v24
  %v187 = vunpack.c.l.b16 %v25
  %v188 = vunpack.c.h.b16 %v25
  %v189 = vunpack.c.l.b16 %v26
  %v190 = vunpack.c.h.b16 %v26
  %v191 = vunpack.c.l.b16 %v27
  %v192 = vunpack.c.h.b16 %v27
  %v193 = vunpack.c.l.b16 %v28
  %v194 = vunpack.c.h.b16 %v28
  %v195 = vpack.c.b16 %v175, %v173
  %v196 = vpack.c.b16 %v176, %v174
  %v197 = vpack.c.b16 %v179, %v177
  %v198 = vpack.c.b16 %v180, %v178
  %v199 = vpack.c.b16 %v183, %v181
  %v200 = vpack.c.b16 %v184, %v182
  %v201 = vpack.c.b16 %v187, %v185
  %v202 = vpack.c.b16 %v188, %v186
  %v203 = vpack.c.b16 %v191, %v189
  %v204 = vpack.c.b16 %v192, %v190
  %v205 = vpack.c.b16 %v193, %v193
  %v206 = vpack.c.b16 %v194, %v194
  %v217 = vsel %vm108, %v45, 0
  %v220 = vsel %vm112, %v205, 0
  %v223 = vsel %vm112, %v206, 0
  %225 = vmatprep.subr.bf16.mxu0 %v196
  %226 = vmatpush1.bf16.msra.mxu0 %v195
  %227 = vmatprep.subr.bf16.mxu0 %v198
  %228 = vmatpush1.bf16.msra.mxu0 %v197
  %229 = vmatprep.subr.bf16.mxu0 %v200
  %230 = vmatpush1.bf16.msra.mxu0 %v199
  %231 = vmatprep.subr.bf16.mxu0 %v202
  %232 = vmatpush1.bf16.msra.mxu0 %v201
  %233 = vmatprep.subr.bf16.mxu0 %v204
  %234 = vmatpush1.bf16.msra.mxu0 %v203
  %235 = vmatprep.subr.bf16.mxu0 %v223
  %236 = vmatpush1.bf16.msra.mxu0 %v220
  %237 = vmatprep.subr.bf16.mxu0 0
  %238 = vmatpush1.bf16.msra.mxu0 0
  %239 = vmatprep.subr.bf16.mxu0 0
  %240 = vmatpush1.bf16.msra.mxu0 0
  %241 = vmatprep.subr.bf16.mxu0 0
  %242 = vmatpush1.bf16.msra.mxu0 0
  %243 = vmatprep.subr.bf16.mxu0 0
  %244 = vmatpush1.bf16.msra.mxu0 0
  %245 = vmatprep.subr.bf16.mxu0 0
  %246 = vmatpush1.bf16.msra.mxu0 0
  %247 = vmatprep.subr.bf16.mxu0 0
  %248 = vmatpush1.bf16.msra.mxu0 0
  %249 = vmatprep.subr.bf16.mxu0 0
  %250 = vmatpush1.bf16.msra.mxu0 0
  %251 = vmatprep.subr.bf16.mxu0 0
  %252 = vmatpush1.bf16.msra.mxu0 0
  %253 = vmatprep.subr.bf16.mxu0 0
  %254 = vmatpush1.bf16.msra.mxu0 0
  %255 = vmatprep.subr.bf16.mxu0 0
  %256 = vmatpush1.bf16.msra.mxu0 0
  %257 = vmatprep.mubr.bf16.mxu0 0
  %258 = vmatmul.mubr.bf16.gmra.mrb[0].mxu0 %v217
  %v259 = vpop.f32.mrb[0].mxu0
  %v260 = vadd.f32 %v154, %v259
  %v261 = vpop.f32.mrb[0].mxu0
  %v262 = vadd.f32 %v156, %v261
  %v263 = vpop.f32.mrb[0].mxu0
  %v264 = vadd.f32 %v158, %v263
  %v265 = vpop.f32.mrb[0].mxu0
  %v266 = vadd.f32 %v160, %v265
  %267 = vdwg.mxu0
  %s268 = scalar_lea.vmem %s1, 176
  %v269 = vld [vmem:[%s268] sm:$0xff]
  %v270 = vld [vmem:[%s268 + $0x8] sm:$0xff]
  %v271 = vld [vmem:[%s268 + $0x10] sm:$0xff]
  %v272 = vld [vmem:[%s268 + $0x18] sm:$0xff]
  %v273 = vld [vmem:[%s268 + $0x20] sm:$0xff]
  %v274 = vld [vmem:[%s268 + $0x28] sm:$0xff]
  %v275 = vld [vmem:[%s268 + $0x30] sm:$0xff]
  %v276 = vld [vmem:[%s268 + $0x38] sm:$0xff]
  %v277 = vld [vmem:[%s268 + $0x40] sm:$0xff]
  %v278 = vld [vmem:[%s268 + $0x48] sm:$0xff]
  %v279 = vld [vmem:[%s268 + $0x50] sm:$0x33]
  %v280 = vrot.slane %v45, 1
  %v292 = vunpack.c.l.b16 %v269
  %v293 = vunpack.c.h.b16 %v269
  %v294 = vunpack.c.l.b16 %v270
  %v295 = vunpack.c.h.b16 %v270
  %v296 = vunpack.c.l.b16 %v271
  %v297 = vunpack.c.h.b16 %v271
  %v298 = vunpack.c.l.b16 %v272
  %v299 = vunpack.c.h.b16 %v272
  %v300 = vunpack.c.l.b16 %v273
  %v301 = vunpack.c.h.b16 %v273
  %v302 = vunpack.c.l.b16 %v274
  %v303 = vunpack.c.h.b16 %v274
  %v304 = vunpack.c.l.b16 %v275
  %v305 = vunpack.c.h.b16 %v275
  %v306 = vunpack.c.l.b16 %v276
  %v307 = vunpack.c.h.b16 %v276
  %v308 = vunpack.c.l.b16 %v277
  %v309 = vunpack.c.h.b16 %v277
  %v310 = vunpack.c.l.b16 %v278
  %v311 = vunpack.c.h.b16 %v278
  %v312 = vunpack.c.l.b16 %v279
  %v313 = vunpack.c.h.b16 %v279
  %v314 = vpack.c.b16 %v294, %v292
  %v315 = vpack.c.b16 %v295, %v293
  %v316 = vpack.c.b16 %v298, %v296
  %v317 = vpack.c.b16 %v299, %v297
  %v318 = vpack.c.b16 %v302, %v300
  %v319 = vpack.c.b16 %v303, %v301
  %v320 = vpack.c.b16 %v306, %v304
  %v321 = vpack.c.b16 %v307, %v305
  %v322 = vpack.c.b16 %v310, %v308
  %v323 = vpack.c.b16 %v311, %v309
  %v324 = vpack.c.b16 %v312, %v312
  %v325 = vpack.c.b16 %v313, %v313
  %v337 = vsel %vm108, %v280, 0
  %v340 = vsel %vm112, %v324, 0
  %v343 = vsel %vm112, %v325, 0
  %345 = vmatprep.subr.bf16.mxu0 %v315
  %346 = vmatpush1.bf16.msra.mxu0 %v314
  %347 = vmatprep.subr.bf16.mxu0 %v317
  %348 = vmatpush1.bf16.msra.mxu0 %v316
  %349 = vmatprep.subr.bf16.mxu0 %v319
  %350 = vmatpush1.bf16.msra.mxu0 %v318
  %351 = vmatprep.subr.bf16.mxu0 %v321
  %352 = vmatpush1.bf16.msra.mxu0 %v320
  %353 = vmatprep.subr.bf16.mxu0 %v323
  %354 = vmatpush1.bf16.msra.mxu0 %v322
  %355 = vmatprep.subr.bf16.mxu0 %v343
  %356 = vmatpush1.bf16.msra.mxu0 %v340
  %357 = vmatprep.subr.bf16.mxu0 0
  %358 = vmatpush1.bf16.msra.mxu0 0
  %359 = vmatprep.subr.bf16.mxu0 0
  %360 = vmatpush1.bf16.msra.mxu0 0
  %361 = vmatprep.subr.bf16.mxu0 0
  %362 = vmatpush1.bf16.msra.mxu0 0
  %363 = vmatprep.subr.bf16.mxu0 0
  %364 = vmatpush1.bf16.msra.mxu0 0
  %365 = vmatprep.subr.bf16.mxu0 0
  %366 = vmatpush1.bf16.msra.mxu0 0
  %367 = vmatprep.subr.bf16.mxu0 0
  %368 = vmatpush1.bf16.msra.mxu0 0
  %369 = vmatprep.subr.bf16.mxu0 0
  %370 = vmatpush1.bf16.msra.mxu0 0
  %371 = vmatprep.subr.bf16.mxu0 0
  %372 = vmatpush1.bf16.msra.mxu0 0
  %373 = vmatprep.subr.bf16.mxu0 0
  %374 = vmatpush1.bf16.msra.mxu0 0
  %375 = vmatprep.subr.bf16.mxu0 0
  %376 = vmatpush1.bf16.msra.mxu0 0
  %377 = vmatprep.mubr.bf16.mxu0 0
  %378 = vmatmul.mubr.bf16.gmra.mrb[0].mxu0 %v337
  %v379 = vpop.f32.mrb[0].mxu0
  %v380 = vadd.f32 0.0, %v379
  %v381 = vpop.f32.mrb[0].mxu0
  %v382 = vadd.f32 0.0, %v381
  %v383 = vpop.f32.mrb[0].mxu0
  %v384 = vadd.f32 0.0, %v383
  %v385 = vpop.f32.mrb[0].mxu0
  %v386 = vadd.f32 0.0, %v385
  %387 = vdwg.mxu0
  %v388 = vadd.f32 %v260, %v380
  %v389 = vadd.f32 %v262, %v382
  %v390 = vadd.f32 %v264, %v384
  %v391 = vadd.f32 %v266, %v386
  %s392 = scalar_lea.vmem %s1, 264
  %v393 = vld [vmem:[%s392] sm:$0xff]
  %v394 = vld [vmem:[%s392 + $0x8] sm:$0xff]
  %v395 = vld [vmem:[%s392 + $0x10] sm:$0xff]
  %v396 = vld [vmem:[%s392 + $0x18] sm:$0xff]
  %v397 = vld [vmem:[%s392 + $0x20] sm:$0xff]
  %v398 = vld [vmem:[%s392 + $0x28] sm:$0xff]
  %v399 = vld [vmem:[%s392 + $0x30] sm:$0xff]
  %v400 = vld [vmem:[%s392 + $0x38] sm:$0xff]
  %v401 = vld [vmem:[%s392 + $0x40] sm:$0xff]
  %v402 = vld [vmem:[%s392 + $0x48] sm:$0xff]
  %v403 = vld [vmem:[%s392 + $0x50] sm:$0x33]
  %v404 = vrot.slane %v47, 1
  %v405 = vrot.slane %v49, 2
  %v406 = vor.u32 %v404, %v405
  %v418 = vunpack.c.l.b16 %v393
  %v419 = vunpack.c.h.b16 %v393
  %v420 = vunpack.c.l.b16 %v394
  %v421 = vunpack.c.h.b16 %v394
  %v422 = vunpack.c.l.b16 %v395
  %v423 = vunpack.c.h.b16 %v395
  %v424 = vunpack.c.l.b16 %v396
  %v425 = vunpack.c.h.b16 %v396
  %v426 = vunpack.c.l.b16 %v397
  %v427 = vunpack.c.h.b16 %v397
  %v428 = vunpack.c.l.b16 %v398
  %v429 = vunpack.c.h.b16 %v398
  %v430 = vunpack.c.l.b16 %v399
  %v431 = vunpack.c.h.b16 %v399
  %v432 = vunpack.c.l.b16 %v400
  %v433 = vunpack.c.h.b16 %v400
  %v434 = vunpack.c.l.b16 %v401
  %v435 = vunpack.c.h.b16 %v401
  %v436 = vunpack.c.l.b16 %v402
  %v437 = vunpack.c.h.b16 %v402
  %v438 = vunpack.c.l.b16 %v403
  %v439 = vunpack.c.h.b16 %v403
  %v440 = vpack.c.b16 %v420, %v418
  %v441 = vpack.c.b16 %v421, %v419
  %v442 = vpack.c.b16 %v424, %v422
  %v443 = vpack.c.b16 %v425, %v423
  %v444 = vpack.c.b16 %v428, %v426
  %v445 = vpack.c.b16 %v429, %v427
  %v446 = vpack.c.b16 %v432, %v430
  %v447 = vpack.c.b16 %v433, %v431
  %v448 = vpack.c.b16 %v436, %v434
  %v449 = vpack.c.b16 %v437, %v435
  %v450 = vpack.c.b16 %v438, %v438
  %v451 = vpack.c.b16 %v439, %v439
  %v463 = vsel %vm108, %v406, 0
  %v466 = vsel %vm112, %v450, 0
  %v469 = vsel %vm112, %v451, 0
  %471 = vmatprep.subr.bf16.mxu0 %v441
  %472 = vmatpush1.bf16.msra.mxu0 %v440
  %473 = vmatprep.subr.bf16.mxu0 %v443
  %474 = vmatpush1.bf16.msra.mxu0 %v442
  %475 = vmatprep.subr.bf16.mxu0 %v445
  %476 = vmatpush1.bf16.msra.mxu0 %v444
  %477 = vmatprep.subr.bf16.mxu0 %v447
  %478 = vmatpush1.bf16.msra.mxu0 %v446
  %479 = vmatprep.subr.bf16.mxu0 %v449
  %480 = vmatpush1.bf16.msra.mxu0 %v448
  %481 = vmatprep.subr.bf16.mxu0 %v469
  %482 = vmatpush1.bf16.msra.mxu0 %v466
  %483 = vmatprep.subr.bf16.mxu0 0
  %484 = vmatpush1.bf16.msra.mxu0 0
  %485 = vmatprep.subr.bf16.mxu0 0
  %486 = vmatpush1.bf16.msra.mxu0 0
  %487 = vmatprep.subr.bf16.mxu0 0
  %488 = vmatpush1.bf16.msra.mxu0 0
  %489 = vmatprep.subr.bf16.mxu0 0
  %490 = vmatpush1.bf16.msra.mxu0 0
  %491 = vmatprep.subr.bf16.mxu0 0
  %492 = vmatpush1.bf16.msra.mxu0 0
  %493 = vmatprep.subr.bf16.mxu0 0
  %494 = vmatpush1.bf16.msra.mxu0 0
  %495 = vmatprep.subr.bf16.mxu0 0
  %496 = vmatpush1.bf16.msra.mxu0 0
  %497 = vmatprep.subr.bf16.mxu0 0
  %498 = vmatpush1.bf16.msra.mxu0 0
  %499 = vmatprep.subr.bf16.mxu0 0
  %500 = vmatpush1.bf16.msra.mxu0 0
  %501 = vmatprep.subr.bf16.mxu0 0
  %502 = vmatpush1.bf16.msra.mxu0 0
  %503 = vmatprep.mubr.bf16.mxu0 0
  %504 = vmatmul.mubr.bf16.gmra.mrb[0].mxu0 %v463
  %v505 = vpop.f32.mrb[0].mxu0
  %v506 = vadd.f32 0.0, %v505
  %v507 = vpop.f32.mrb[0].mxu0
  %v508 = vadd.f32 0.0, %v507
  %v509 = vpop.f32.mrb[0].mxu0
  %v510 = vadd.f32 0.0, %v509
  %v511 = vpop.f32.mrb[0].mxu0
  %v512 = vadd.f32 0.0, %v511
  %513 = vdwg.mxu0
  %v514 = vadd.f32 %v388, %v506
  %v515 = vadd.f32 %v389, %v508
  %v516 = vadd.f32 %v390, %v510
  %v517 = vadd.f32 %v391, %v512
  %s518 = scalar_lea.vmem %s1, 352
  %v519 = vld [vmem:[%s518] sm:$0xff]
  %v520 = vld [vmem:[%s518 + $0x8] sm:$0xff]
  %v521 = vld [vmem:[%s518 + $0x10] sm:$0xff]
  %v522 = vld [vmem:[%s518 + $0x18] sm:$0xff]
  %v523 = vld [vmem:[%s518 + $0x20] sm:$0xff]
  %v524 = vld [vmem:[%s518 + $0x28] sm:$0xff]
  %v525 = vld [vmem:[%s518 + $0x30] sm:$0xff]
  %v526 = vld [vmem:[%s518 + $0x38] sm:$0xff]
  %v527 = vld [vmem:[%s518 + $0x40] sm:$0xff]
  %v528 = vld [vmem:[%s518 + $0x48] sm:$0xff]
  %v529 = vld [vmem:[%s518 + $0x50] sm:$0x33]
  %v530 = vrot.slane %v45, 2
  %v542 = vunpack.c.l.b16 %v519
  %v543 = vunpack.c.h.b16 %v519
  %v544 = vunpack.c.l.b16 %v520
  %v545 = vunpack.c.h.b16 %v520
  %v546 = vunpack.c.l.b16 %v521
  %v547 = vunpack.c.h.b16 %v521
  %v548 = vunpack.c.l.b16 %v522
  %v549 = vunpack.c.h.b16 %v522
  %v550 = vunpack.c.l.b16 %v523
  %v551 = vunpack.c.h.b16 %v523
  %v552 = vunpack.c.l.b16 %v524
  %v553 = vunpack.c.h.b16 %v524
  %v554 = vunpack.c.l.b16 %v525
  %v555 = vunpack.c.h.b16 %v525
  %v556 = vunpack.c.l.b16 %v526
  %v557 = vunpack.c.h.b16 %v526
  %v558 = vunpack.c.l.b16 %v527
  %v559 = vunpack.c.h.b16 %v527
  %v560 = vunpack.c.l.b16 %v528
  %v561 = vunpack.c.h.b16 %v528
  %v562 = vunpack.c.l.b16 %v529
  %v563 = vunpack.c.h.b16 %v529
  %v564 = vpack.c.b16 %v544, %v542
  %v565 = vpack.c.b16 %v545, %v543
  %v566 = vpack.c.b16 %v548, %v546
  %v567 = vpack.c.b16 %v549, %v547
  %v568 = vpack.c.b16 %v552, %v550
  %v569 = vpack.c.b16 %v553, %v551
  %v570 = vpack.c.b16 %v556, %v554
  %v571 = vpack.c.b16 %v557, %v555
  %v572 = vpack.c.b16 %v560, %v558
  %v573 = vpack.c.b16 %v561, %v559
  %v574 = vpack.c.b16 %v562, %v562
  %v575 = vpack.c.b16 %v563, %v563
  %v587 = vsel %vm108, %v530, 0
  %v590 = vsel %vm112, %v574, 0
  %v593 = vsel %vm112, %v575, 0
  %595 = vmatprep.subr.bf16.mxu0 %v565
  %596 = vmatpush1.bf16.msra.mxu0 %v564
  %597 = vmatprep.subr.bf16.mxu0 %v567
  %598 = vmatpush1.bf16.msra.mxu0 %v566
  %599 = vmatprep.subr.bf16.mxu0 %v569
  %600 = vmatpush1.bf16.msra.mxu0 %v568
  %601 = vmatprep.subr.bf16.mxu0 %v571
  %602 = vmatpush1.bf16.msra.mxu0 %v570
  %603 = vmatprep.subr.bf16.mxu0 %v573
  %604 = vmatpush1.bf16.msra.mxu0 %v572
  %605 = vmatprep.subr.bf16.mxu0 %v593
  %606 = vmatpush1.bf16.msra.mxu0 %v590
  %607 = vmatprep.subr.bf16.mxu0 0
  %608 = vmatpush1.bf16.msra.mxu0 0
  %609 = vmatprep.subr.bf16.mxu0 0
  %610 = vmatpush1.bf16.msra.mxu0 0
  %611 = vmatprep.subr.bf16.mxu0 0
  %612 = vmatpush1.bf16.msra.mxu0 0
  %613 = vmatprep.subr.bf16.mxu0 0
  %614 = vmatpush1.bf16.msra.mxu0 0
  %615 = vmatprep.subr.bf16.mxu0 0
  %616 = vmatpush1.bf16.msra.mxu0 0
  %617 = vmatprep.subr.bf16.mxu0 0
  %618 = vmatpush1.bf16.msra.mxu0 0
  %619 = vmatprep.subr.bf16.mxu0 0
  %620 = vmatpush1.bf16.msra.mxu0 0
  %621 = vmatprep.subr.bf16.mxu0 0
  %622 = vmatpush1.bf16.msra.mxu0 0
  %623 = vmatprep.subr.bf16.mxu0 0
  %624 = vmatpush1.bf16.msra.mxu0 0
  %625 = vmatprep.subr.bf16.mxu0 0
  %626 = vmatpush1.bf16.msra.mxu0 0
  %627 = vmatprep.mubr.bf16.mxu0 0
  %628 = vmatmul.mubr.bf16.gmra.mrb[0].mxu0 %v587
  %v629 = vpop.f32.mrb[0].mxu0
  %v630 = vadd.f32 0.0, %v629
  %v631 = vpop.f32.mrb[0].mxu0
  %v632 = vadd.f32 0.0, %v631
  %v633 = vpop.f32.mrb[0].mxu0
  %v634 = vadd.f32 0.0, %v633
  %v635 = vpop.f32.mrb[0].mxu0
  %v636 = vadd.f32 0.0, %v635
  %637 = vdwg.mxu0
  %v638 = vadd.f32 %v514, %v630
  %v639 = vadd.f32 %v515, %v632
  %v640 = vadd.f32 %v516, %v634
  %v641 = vadd.f32 %v517, %v636
  %v643 = vlaneseq
  %v644 = vshrl.u32 %v643, 7
  %v645 = vsub.s32 0, %v644
  %v646 = vrot.slane %v15, %v645
  %v647 = vlaneseq
  %v648 = vshrl.u32 %v647, 7
  %v649 = vsub.s32 1, %v648
  %v650 = vrot.slane %v15, %v649
  %v653 = vadd.f32 %v638, %v646
  %v654 = vadd.f32 %v639, %v650
  %v655 = vadd.f32 %v640, %v646
  %v656 = vadd.f32 %v641, %v650
  %v657 = vmax.f32 %v653, 0.0
  %v658 = vmax.f32 %v654, 0.0
  %v659 = vmax.f32 %v655, 0.0
  %v660 = vmax.f32 %v656, 0.0
  %vm665 = vcmask 1046528
  %v666 = vrot.slane %v657, 1
  %v667 = vrot.slane %v659, 1
  %v668 = vsel %vm665, %v666, %v667
  %v669 = vrot.slane %v658, 1
  %v670 = vrot.slane %v660, 1
  %v671 = vsel %vm665, %v669, %v670
  %v676 = vmax.f32 %v657, %v668
  %v677 = vmax.f32 %v658, %v671
  %v678 = vmax.f32 %v659, %v667
  %v679 = vmax.f32 %v660, %v670
  %684 = vrot.lane.b32.xlu0 %v676, 112
  %v685 = vpop.permute.xlu0 %684
  %686 = vrot.lane.b32.xlu0 %v677, 112
  %v687 = vpop.permute.xlu0 %686
  %688 = vrot.lane.b32.xlu0 %v678, 112
  %v689 = vpop.permute.xlu0 %688
  %690 = vrot.lane.b32.xlu0 %v679, 112
  %v691 = vpop.permute.xlu0 %690
  %vm692 = vcmask 916480
  %v693 = vsel %vm692, %v685, %v687
  %v694 = vsel %vm692, %v689, %v691
  %v699 = vmax.f32 %v676, %v693
  %v700 = vmax.f32 %v677, %v687
  %v701 = vmax.f32 %v678, %v694
  %v702 = vmax.f32 %v679, %v691
  %703 = vst [vmem:[%s3] sm:$0xff] %v699
  %vm704 = vcmask 130048
  %705 = vst.msk [vmem:[%s3 + $0x8] sm:$0xff] %vm704, %v700
  %706 = vst [vmem:[%s3 + $0x10] sm:$0x1] %v701
  %vm707 = vcmask 122880
  %708 = vst.msk [vmem:[%s3 + $0x18] sm:$0x1] %vm707, %v702
  %s709 = scalar_lea.vmem %s0, 8
  %v710 = vld [vmem:[%s709] sm:$0xf]
  %v711 = vld [vmem:[%s709 + $0x4] sm:$0x7]
  %v712 = vld [vmem:[%s1] sm:$0xff]
  %v713 = vld [vmem:[%s1 + $0x8] sm:$0xff]
  %v714 = vld [vmem:[%s1 + $0x10] sm:$0xff]
  %v715 = vld [vmem:[%s1 + $0x18] sm:$0xff]
  %v716 = vld [vmem:[%s1 + $0x20] sm:$0xff]
  %v717 = vld [vmem:[%s1 + $0x28] sm:$0xff]
  %v718 = vld [vmem:[%s1 + $0x30] sm:$0xff]
  %v719 = vld [vmem:[%s1 + $0x38] sm:$0xff]
  %v720 = vld [vmem:[%s1 + $0x40] sm:$0xff]
  %v721 = vld [vmem:[%s1 + $0x48] sm:$0xff]
  %v722 = vld [vmem:[%s1 + $0x50] sm:$0x33]
  %v723 = vld [vmem:[%s29] sm:$0xff]
  %v724 = vld [vmem:[%s29 + $0x8] sm:$0xff]
  %v725 = vld [vmem:[%s29 + $0x10] sm:$0xff]
  %v726 = vld [vmem:[%s29 + $0x18] sm:$0xff]
  %v727 = vld [vmem:[%s29 + $0x20] sm:$0xff]
  %v728 = vld [vmem:[%s29 + $0x28] sm:$0xff]
  %v729 = vld [vmem:[%s29 + $0x30] sm:$0xff]
  %v730 = vld [vmem:[%s29 + $0x38] sm:$0xff]
  %v731 = vld [vmem:[%s29 + $0x40] sm:$0xff]
  %v732 = vld [vmem:[%s29 + $0x48] sm:$0xff]
  %v733 = vld [vmem:[%s29 + $0x50] sm:$0x33]
  %v736 = vunpack.c.l.b16 %v710
  %v737 = vunpack.c.l.b16 %v711
  %v738 = vpack.c.b16 %v737, %v736
  %v740 = vshrl.u32 %v738, 16
  %v742 = vshll.u32 %v738, 16
  %v744 = vrot.slane %v742, 1
  %v745 = vor.u32 %v740, %v744
  %v757 = vunpack.c.l.b16 %v723
  %v758 = vunpack.c.h.b16 %v723
  %v759 = vunpack.c.l.b16 %v724
  %v760 = vunpack.c.h.b16 %v724
  %v761 = vunpack.c.l.b16 %v725
  %v762 = vunpack.c.h.b16 %v725
  %v763 = vunpack.c.l.b16 %v726
  %v764 = vunpack.c.h.b16 %v726
  %v765 = vunpack.c.l.b16 %v727
  %v766 = vunpack.c.h.b16 %v727
  %v767 = vunpack.c.l.b16 %v728
  %v768 = vunpack.c.h.b16 %v728
  %v769 = vunpack.c.l.b16 %v729
  %v770 = vunpack.c.h.b16 %v729
  %v771 = vunpack.c.l.b16 %v730
  %v772 = vunpack.c.h.b16 %v730
  %v773 = vunpack.c.l.b16 %v731
  %v774 = vunpack.c.h.b16 %v731
  %v775 = vunpack.c.l.b16 %v732
  %v776 = vunpack.c.h.b16 %v732
  %v777 = vunpack.c.l.b16 %v733
  %v778 = vunpack.c.h.b16 %v733
  %v779 = vpack.c.b16 %v759, %v757
  %v780 = vpack.c.b16 %v760, %v758
  %v781 = vpack.c.b16 %v763, %v761
  %v782 = vpack.c.b16 %v764, %v762
  %v783 = vpack.c.b16 %v767, %v765
  %v784 = vpack.c.b16 %v768, %v766
  %v785 = vpack.c.b16 %v771, %v769
  %v786 = vpack.c.b16 %v772, %v770
  %v787 = vpack.c.b16 %v775, %v773
  %v788 = vpack.c.b16 %v776, %v774
  %v789 = vpack.c.b16 %v777, %v777
  %v790 = vpack.c.b16 %v778, %v778
  %v802 = vsel %vm108, %v745, 0
  %v805 = vsel %vm112, %v789, 0
  %v808 = vsel %vm112, %v790, 0
  %810 = vmatprep.subr.bf16.mxu0 %v780
  %811 = vmatpush1.bf16.msra.mxu0 %v779
  %812 = vmatprep.subr.bf16.mxu0 %v782
  %813 = vmatpush1.bf16.msra.mxu0 %v781
  %814 = vmatprep.subr.bf16.mxu0 %v784
  %815 = vmatpush1.bf16.msra.mxu0 %v783
  %816 = vmatprep.subr.bf16.mxu0 %v786
  %817 = vmatpush1.bf16.msra.mxu0 %v785
  %818 = vmatprep.subr.bf16.mxu0 %v788
  %819 = vmatpush1.bf16.msra.mxu0 %v787
  %820 = vmatprep.subr.bf16.mxu0 %v808
  %821 = vmatpush1.bf16.msra.mxu0 %v805
  %822 = vmatprep.subr.bf16.mxu0 0
  %823 = vmatpush1.bf16.msra.mxu0 0
  %824 = vmatprep.subr.bf16.mxu0 0
  %825 = vmatpush1.bf16.msra.mxu0 0
  %826 = vmatprep.subr.bf16.mxu0 0
  %827 = vmatpush1.bf16.msra.mxu0 0
  %828 = vmatprep.subr.bf16.mxu0 0
  %829 = vmatpush1.bf16.msra.mxu0 0
  %830 = vmatprep.subr.bf16.mxu0 0
  %831 = vmatpush1.bf16.msra.mxu0 0
  %832 = vmatprep.subr.bf16.mxu0 0
  %833 = vmatpush1.bf16.msra.mxu0 0
  %834 = vmatprep.subr.bf16.mxu0 0
  %835 = vmatpush1.bf16.msra.mxu0 0
  %836 = vmatprep.subr.bf16.mxu0 0
  %837 = vmatpush1.bf16.msra.mxu0 0
  %838 = vmatprep.subr.bf16.mxu0 0
  %839 = vmatpush1.bf16.msra.mxu0 0
  %840 = vmatprep.subr.bf16.mxu0 0
  %841 = vmatpush1.bf16.msra.mxu0 0
  %842 = vmatprep.mubr.bf16.mxu0 0
  %843 = vmatmul.mubr.bf16.gmra.mrb[0].mxu0 %v802
  %v844 = vpop.f32.mrb[0].mxu0
  %v845 = vadd.f32 0.0, %v844
  %v846 = vpop.f32.mrb[0].mxu0
  %v847 = vadd.f32 0.0, %v846
  %v848 = vpop.f32.mrb[0].mxu0
  %v849 = vadd.f32 0.0, %v848
  %v850 = vpop.f32.mrb[0].mxu0
  %v851 = vadd.f32 0.0, %v850
  %852 = vdwg.mxu0
  %v864 = vunpack.c.l.b16 %v712
  %v865 = vunpack.c.h.b16 %v712
  %v866 = vunpack.c.l.b16 %v713
  %v867 = vunpack.c.h.b16 %v713
  %v868 = vunpack.c.l.b16 %v714
  %v869 = vunpack.c.h.b16 %v714
  %v870 = vunpack.c.l.b16 %v715
  %v871 = vunpack.c.h.b16 %v715
  %v872 = vunpack.c.l.b16 %v716
  %v873 = vunpack.c.h.b16 %v716
  %v874 = vunpack.c.l.b16 %v717
  %v875 = vunpack.c.h.b16 %v717
  %v876 = vunpack.c.l.b16 %v718
  %v877 = vunpack.c.h.b16 %v718
  %v878 = vunpack.c.l.b16 %v719
  %v879 = vunpack.c.h.b16 %v719
  %v880 = vunpack.c.l.b16 %v720
  %v881 = vunpack.c.h.b16 %v720
  %v882 = vunpack.c.l.b16 %v721
  %v883 = vunpack.c.h.b16 %v721
  %v884 = vunpack.c.l.b16 %v722
  %v885 = vunpack.c.h.b16 %v722
  %v886 = vpack.c.b16 %v866, %v864
  %v887 = vpack.c.b16 %v867, %v865
  %v888 = vpack.c.b16 %v870, %v868
  %v889 = vpack.c.b16 %v871, %v869
  %v890 = vpack.c.b16 %v874, %v872
  %v891 = vpack.c.b16 %v875, %v873
  %v892 = vpack.c.b16 %v878, %v876
  %v893 = vpack.c.b16 %v879, %v877
  %v894 = vpack.c.b16 %v882, %v880
  %v895 = vpack.c.b16 %v883, %v881
  %v896 = vpack.c.b16 %v884, %v884
  %v897 = vpack.c.b16 %v885, %v885
  %v908 = vsel %vm108, %v738, 0
  %v911 = vsel %vm112, %v896, 0
  %v914 = vsel %vm112, %v897, 0
  %916 = vmatprep.subr.bf16.mxu0 %v887
  %917 = vmatpush1.bf16.msra.mxu0 %v886
  %918 = vmatprep.subr.bf16.mxu0 %v889
  %919 = vmatpush1.bf16.msra.mxu0 %v888
  %920 = vmatprep.subr.bf16.mxu0 %v891
  %921 = vmatpush1.bf16.msra.mxu0 %v890
  %922 = vmatprep.subr.bf16.mxu0 %v893
  %923 = vmatpush1.bf16.msra.mxu0 %v892
  %924 = vmatprep.subr.bf16.mxu0 %v895
  %925 = vmatpush1.bf16.msra.mxu0 %v894
  %926 = vmatprep.subr.bf16.mxu0 %v914
  %927 = vmatpush1.bf16.msra.mxu0 %v911
  %928 = vmatprep.subr.bf16.mxu0 0
  %929 = vmatpush1.bf16.msra.mxu0 0
  %930 = vmatprep.subr.bf16.mxu0 0
  %931 = vmatpush1.bf16.msra.mxu0 0
  %932 = vmatprep.subr.bf16.mxu0 0
  %933 = vmatpush1.bf16.msra.mxu0 0
  %934 = vmatprep.subr.bf16.mxu0 0
  %935 = vmatpush1.bf16.msra.mxu0 0
  %936 = vmatprep.subr.bf16.mxu0 0
  %937 = vmatpush1.bf16.msra.mxu0 0
  %938 = vmatprep.subr.bf16.mxu0 0
  %939 = vmatpush1.bf16.msra.mxu0 0
  %940 = vmatprep.subr.bf16.mxu0 0
  %941 = vmatpush1.bf16.msra.mxu0 0
  %942 = vmatprep.subr.bf16.mxu0 0
  %943 = vmatpush1.bf16.msra.mxu0 0
  %944 = vmatprep.subr.bf16.mxu0 0
  %945 = vmatpush1.bf16.msra.mxu0 0
  %946 = vmatprep.subr.bf16.mxu0 0
  %947 = vmatpush1.bf16.msra.mxu0 0
  %948 = vmatprep.mubr.bf16.mxu0 0
  %949 = vmatmul.mubr.bf16.gmra.mrb[0].mxu0 %v908
  %v950 = vpop.f32.mrb[0].mxu0
  %v951 = vadd.f32 %v845, %v950
  %v952 = vpop.f32.mrb[0].mxu0
  %v953 = vadd.f32 %v847, %v952
  %v954 = vpop.f32.mrb[0].mxu0
  %v955 = vadd.f32 %v849, %v954
  %v956 = vpop.f32.mrb[0].mxu0
  %v957 = vadd.f32 %v851, %v956
  %958 = vdwg.mxu0
  %v959 = vld [vmem:[%s268] sm:$0xff]
  %v960 = vld [vmem:[%s268 + $0x8] sm:$0xff]
  %v961 = vld [vmem:[%s268 + $0x10] sm:$0xff]
  %v962 = vld [vmem:[%s268 + $0x18] sm:$0xff]
  %v963 = vld [vmem:[%s268 + $0x20] sm:$0xff]
  %v964 = vld [vmem:[%s268 + $0x28] sm:$0xff]
  %v965 = vld [vmem:[%s268 + $0x30] sm:$0xff]
  %v966 = vld [vmem:[%s268 + $0x38] sm:$0xff]
  %v967 = vld [vmem:[%s268 + $0x40] sm:$0xff]
  %v968 = vld [vmem:[%s268 + $0x48] sm:$0xff]
  %v969 = vld [vmem:[%s268 + $0x50] sm:$0x33]
  %v970 = vrot.slane %v738, 1
  %v982 = vunpack.c.l.b16 %v959
  %v983 = vunpack.c.h.b16 %v959
  %v984 = vunpack.c.l.b16 %v960
  %v985 = vunpack.c.h.b16 %v960
  %v986 = vunpack.c.l.b16 %v961
  %v987 = vunpack.c.h.b16 %v961
  %v988 = vunpack.c.l.b16 %v962
  %v989 = vunpack.c.h.b16 %v962
  %v990 = vunpack.c.l.b16 %v963
  %v991 = vunpack.c.h.b16 %v963
  %v992 = vunpack.c.l.b16 %v964
  %v993 = vunpack.c.h.b16 %v964
  %v994 = vunpack.c.l.b16 %v965
  %v995 = vunpack.c.h.b16 %v965
  %v996 = vunpack.c.l.b16 %v966
  %v997 = vunpack.c.h.b16 %v966
  %v998 = vunpack.c.l.b16 %v967
  %v999 = vunpack.c.h.b16 %v967
  %v1000 = vunpack.c.l.b16 %v968
  %v1001 = vunpack.c.h.b16 %v968
  %v1002 = vunpack.c.l.b16 %v969
  %v1003 = vunpack.c.h.b16 %v969
  %v1004 = vpack.c.b16 %v984, %v982
  %v1005 = vpack.c.b16 %v985, %v983
  %v1006 = vpack.c.b16 %v988, %v986
  %v1007 = vpack.c.b16 %v989, %v987
  %v1008 = vpack.c.b16 %v992, %v990
  %v1009 = vpack.c.b16 %v993, %v991
  %v1010 = vpack.c.b16 %v996, %v994
  %v1011 = vpack.c.b16 %v997, %v995
  %v1012 = vpack.c.b16 %v1000, %v998
  %v1013 = vpack.c.b16 %v1001, %v999
  %v1014 = vpack.c.b16 %v1002, %v1002
  %v1015 = vpack.c.b16 %v1003, %v1003
  %v1027 = vsel %vm108, %v970, 0
  %v1030 = vsel %vm112, %v1014, 0
  %v1033 = vsel %vm112, %v1015, 0
  %1035 = vmatprep.subr.bf16.mxu0 %v1005
  %1036 = vmatpush1.bf16.msra.mxu0 %v1004
  %1037 = vmatprep.subr.bf16.mxu0 %v1007
  %1038 = vmatpush1.bf16.msra.mxu0 %v1006
  %1039 = vmatprep.subr.bf16.mxu0 %v1009
  %1040 = vmatpush1.bf16.msra.mxu0 %v1008
  %1041 = vmatprep.subr.bf16.mxu0 %v1011
  %1042 = vmatpush1.bf16.msra.mxu0 %v1010
  %1043 = vmatprep.subr.bf16.mxu0 %v1013
  %1044 = vmatpush1.bf16.msra.mxu0 %v1012
  %1045 = vmatprep.subr.bf16.mxu0 %v1033
  %1046 = vmatpush1.bf16.msra.mxu0 %v1030
  %1047 = vmatprep.subr.bf16.mxu0 0
  %1048 = vmatpush1.bf16.msra.mxu0 0
  %1049 = vmatprep.subr.bf16.mxu0 0
  %1050 = vmatpush1.bf16.msra.mxu0 0
  %1051 = vmatprep.subr.bf16.mxu0 0
  %1052 = vmatpush1.bf16.msra.mxu0 0
  %1053 = vmatprep.subr.bf16.mxu0 0
  %1054 = vmatpush1.bf16.msra.mxu0 0
  %1055 = vmatprep.subr.bf16.mxu0 0
  %1056 = vmatpush1.bf16.msra.mxu0 0
  %1057 = vmatprep.subr.bf16.mxu0 0
  %1058 = vmatpush1.bf16.msra.mxu0 0
  %1059 = vmatprep.subr.bf16.mxu0 0
  %1060 = vmatpush1.bf16.msra.mxu0 0
  %1061 = vmatprep.subr.bf16.mxu0 0
  %1062 = vmatpush1.bf16.msra.mxu0 0
  %1063 = vmatprep.subr.bf16.mxu0 0
  %1064 = vmatpush1.bf16.msra.mxu0 0
  %1065 = vmatprep.subr.bf16.mxu0 0
  %1066 = vmatpush1.bf16.msra.mxu0 0
  %1067 = vmatprep.mubr.bf16.mxu0 0
  %1068 = vmatmul.mubr.bf16.gmra.mrb[0].mxu0 %v1027
  %v1069 = vpop.f32.mrb[0].mxu0
  %v1070 = vadd.f32 0.0, %v1069
  %v1071 = vpop.f32.mrb[0].mxu0
  %v1072 = vadd.f32 0.0, %v1071
  %v1073 = vpop.f32.mrb[0].mxu0
  %v1074 = vadd.f32 0.0, %v1073
  %v1075 = vpop.f32.mrb[0].mxu0
  %v1076 = vadd.f32 0.0, %v1075
  %1077 = vdwg.mxu0
  %v1078 = vadd.f32 %v951, %v1070
  %v1079 = vadd.f32 %v953, %v1072
  %v1080 = vadd.f32 %v955, %v1074
  %v1081 = vadd.f32 %v957, %v1076
  %v1082 = vld [vmem:[%s392] sm:$0xff]
  %v1083 = vld [vmem:[%s392 + $0x8] sm:$0xff]
  %v1084 = vld [vmem:[%s392 + $0x10] sm:$0xff]
  %v1085 = vld [vmem:[%s392 + $0x18] sm:$0xff]
  %v1086 = vld [vmem:[%s392 + $0x20] sm:$0xff]
  %v1087 = vld [vmem:[%s392 + $0x28] sm:$0xff]
  %v1088 = vld [vmem:[%s392 + $0x30] sm:$0xff]
  %v1089 = vld [vmem:[%s392 + $0x38] sm:$0xff]
  %v1090 = vld [vmem:[%s392 + $0x40] sm:$0xff]
  %v1091 = vld [vmem:[%s392 + $0x48] sm:$0xff]
  %v1092 = vld [vmem:[%s392 + $0x50] sm:$0x33]
  %v1093 = vrot.slane %v740, 1
  %v1094 = vrot.slane %v742, 2
  %v1095 = vor.u32 %v1093, %v1094
  %v1107 = vunpack.c.l.b16 %v1082
  %v1108 = vunpack.c.h.b16 %v1082
  %v1109 = vunpack.c.l.b16 %v1083
  %v1110 = vunpack.c.h.b16 %v1083
  %v1111 = vunpack.c.l.b16 %v1084
  %v1112 = vunpack.c.h.b16 %v1084
  %v1113 = vunpack.c.l.b16 %v1085
  %v1114 = vunpack.c.h.b16 %v1085
  %v1115 = vunpack.c.l.b16 %v1086
  %v1116 = vunpack.c.h.b16 %v1086
  %v1117 = vunpack.c.l.b16 %v1087
  %v1118 = vunpack.c.h.b16 %v1087
  %v1119 = vunpack.c.l.b16 %v1088
  %v1120 = vunpack.c.h.b16 %v1088
  %v1121 = vunpack.c.l.b16 %v1089
  %v1122 = vunpack.c.h.b16 %v1089
  %v1123 = vunpack.c.l.b16 %v1090
  %v1124 = vunpack.c.h.b16 %v1090
  %v1125 = vunpack.c.l.b16 %v1091
  %v1126 = vunpack.c.h.b16 %v1091
  %v1127 = vunpack.c.l.b16 %v1092
  %v1128 = vunpack.c.h.b16 %v1092
  %v1129 = vpack.c.b16 %v1109, %v1107
  %v1130 = vpack.c.b16 %v1110, %v1108
  %v1131 = vpack.c.b16 %v1113, %v1111
  %v1132 = vpack.c.b16 %v1114, %v1112
  %v1133 = vpack.c.b16 %v1117, %v1115
  %v1134 = vpack.c.b16 %v1118, %v1116
  %v1135 = vpack.c.b16 %v1121, %v1119
  %v1136 = vpack.c.b16 %v1122, %v1120
  %v1137 = vpack.c.b16 %v1125, %v1123
  %v1138 = vpack.c.b16 %v1126, %v1124
  %v1139 = vpack.c.b16 %v1127, %v1127
  %v1140 = vpack.c.b16 %v1128, %v1128
  %v1152 = vsel %vm108, %v1095, 0
  %v1155 = vsel %vm112, %v1139, 0
  %v1158 = vsel %vm112, %v1140, 0
  %1160 = vmatprep.subr.bf16.mxu0 %v1130
  %1161 = vmatpush1.bf16.msra.mxu0 %v1129
  %1162 = vmatprep.subr.bf16.mxu0 %v1132
  %1163 = vmatpush1.bf16.msra.mxu0 %v1131
  %1164 = vmatprep.subr.bf16.mxu0 %v1134
  %1165 = vmatpush1.bf16.msra.mxu0 %v1133
  %1166 = vmatprep.subr.bf16.mxu0 %v1136
  %1167 = vmatpush1.bf16.msra.mxu0 %v1135
  %1168 = vmatprep.subr.bf16.mxu0 %v1138
  %1169 = vmatpush1.bf16.msra.mxu0 %v1137
  %1170 = vmatprep.subr.bf16.mxu0 %v1158
  %1171 = vmatpush1.bf16.msra.mxu0 %v1155
  %1172 = vmatprep.subr.bf16.mxu0 0
  %1173 = vmatpush1.bf16.msra.mxu0 0
  %1174 = vmatprep.subr.bf16.mxu0 0
  %1175 = vmatpush1.bf16.msra.mxu0 0
  %1176 = vmatprep.subr.bf16.mxu0 0
  %1177 = vmatpush1.bf16.msra.mxu0 0
  %1178 = vmatprep.subr.bf16.mxu0 0
  %1179 = vmatpush1.bf16.msra.mxu0 0
  %1180 = vmatprep.subr.bf16.mxu0 0
  %1181 = vmatpush1.bf16.msra.mxu0 0
  %1182 = vmatprep.subr.bf16.mxu0 0
  %1183 = vmatpush1.bf16.msra.mxu0 0
  %1184 = vmatprep.subr.bf16.mxu0 0
  %1185 = vmatpush1.bf16.msra.mxu0 0
  %1186 = vmatprep.subr.bf16.mxu0 0
  %1187 = vmatpush1.bf16.msra.mxu0 0
  %1188 = vmatprep.subr.bf16.mxu0 0
  %1189 = vmatpush1.bf16.msra.mxu0 0
  %1190 = vmatprep.subr.bf16.mxu0 0
  %1191 = vmatpush1.bf16.msra.mxu0 0
  %1192 = vmatprep.mubr.bf16.mxu0 0
  %1193 = vmatmul.mubr.bf16.gmra.mrb[0].mxu0 %v1152
  %v1194 = vpop.f32.mrb[0].mxu0
  %v1195 = vadd.f32 0.0, %v1194
  %v1196 = vpop.f32.mrb[0].mxu0
  %v1197 = vadd.f32 0.0, %v1196
  %v1198 = vpop.f32.mrb[0].mxu0
  %v1199 = vadd.f32 0.0, %v1198
  %v1200 = vpop.f32.mrb[0].mxu0
  %v1201 = vadd.f32 0.0, %v1200
  %1202 = vdwg.mxu0
  %v1203 = vadd.f32 %v1078, %v1195
  %v1204 = vadd.f32 %v1079, %v1197
  %v1205 = vadd.f32 %v1080, %v1199
  %v1206 = vadd.f32 %v1081, %v1201
  %v1207 = vld [vmem:[%s518] sm:$0xff]
  %v1208 = vld [vmem:[%s518 + $0x8] sm:$0xff]
  %v1209 = vld [vmem:[%s518 + $0x10] sm:$0xff]
  %v1210 = vld [vmem:[%s518 + $0x18] sm:$0xff]
  %v1211 = vld [vmem:[%s518 + $0x20] sm:$0xff]
  %v1212 = vld [vmem:[%s518 + $0x28] sm:$0xff]
  %v1213 = vld [vmem:[%s518 + $0x30] sm:$0xff]
  %v1214 = vld [vmem:[%s518 + $0x38] sm:$0xff]
  %v1215 = vld [vmem:[%s518 + $0x40] sm:$0xff]
  %v1216 = vld [vmem:[%s518 + $0x48] sm:$0xff]
  %v1217 = vld [vmem:[%s518 + $0x50] sm:$0x33]
  %v1218 = vrot.slane %v738, 2
  %v1230 = vunpack.c.l.b16 %v1207
  %v1231 = vunpack.c.h.b16 %v1207
  %v1232 = vunpack.c.l.b16 %v1208
  %v1233 = vunpack.c.h.b16 %v1208
  %v1234 = vunpack.c.l.b16 %v1209
  %v1235 = vunpack.c.h.b16 %v1209
  %v1236 = vunpack.c.l.b16 %v1210
  %v1237 = vunpack.c.h.b16 %v1210
  %v1238 = vunpack.c.l.b16 %v1211
  %v1239 = vunpack.c.h.b16 %v1211
  %v1240 = vunpack.c.l.b16 %v1212
  %v1241 = vunpack.c.h.b16 %v1212
  %v1242 = vunpack.c.l.b16 %v1213
  %v1243 = vunpack.c.h.b16 %v1213
  %v1244 = vunpack.c.l.b16 %v1214
  %v1245 = vunpack.c.h.b16 %v1214
  %v1246 = vunpack.c.l.b16 %v1215
  %v1247 = vunpack.c.h.b16 %v1215
  %v1248 = vunpack.c.l.b16 %v1216
  %v1249 = vunpack.c.h.b16 %v1216
  %v1250 = vunpack.c.l.b16 %v1217
  %v1251 = vunpack.c.h.b16 %v1217
  %v1252 = vpack.c.b16 %v1232, %v1230
  %v1253 = vpack.c.b16 %v1233, %v1231
  %v1254 = vpack.c.b16 %v1236, %v1234
  %v1255 = vpack.c.b16 %v1237, %v1235
  %v1256 = vpack.c.b16 %v1240, %v1238
  %v1257 = vpack.c.b16 %v1241, %v1239
  %v1258 = vpack.c.b16 %v1244, %v1242
  %v1259 = vpack.c.b16 %v1245, %v1243
  %v1260 = vpack.c.b16 %v1248, %v1246
  %v1261 = vpack.c.b16 %v1249, %v1247
  %v1262 = vpack.c.b16 %v1250, %v1250
  %v1263 = vpack.c.b16 %v1251, %v1251
  %v1275 = vsel %vm108, %v1218, 0
  %v1278 = vsel %vm112, %v1262, 0
  %v1281 = vsel %vm112, %v1263, 0
  %1283 = vmatprep.subr.bf16.mxu0 %v1253
  %1284 = vmatpush1.bf16.msra.mxu0 %v1252
  %1285 = vmatprep.subr.bf16.mxu0 %v1255
  %1286 = vmatpush1.bf16.msra.mxu0 %v1254
  %1287 = vmatprep.subr.bf16.mxu0 %v1257
  %1288 = vmatpush1.bf16.msra.mxu0 %v1256
  %1289 = vmatprep.subr.bf16.mxu0 %v1259
  %1290 = vmatpush1.bf16.msra.mxu0 %v1258
  %1291 = vmatprep.subr.bf16.mxu0 %v1261
  %1292 = vmatpush1.bf16.msra.mxu0 %v1260
  %1293 = vmatprep.subr.bf16.mxu0 %v1281
  %1294 = vmatpush1.bf16.msra.mxu0 %v1278
  %1295 = vmatprep.subr.bf16.mxu0 0
  %1296 = vmatpush1.bf16.msra.mxu0 0
  %1297 = vmatprep.subr.bf16.mxu0 0
  %1298 = vmatpush1.bf16.msra.mxu0 0
  %1299 = vmatprep.subr.bf16.mxu0 0
  %1300 = vmatpush1.bf16.msra.mxu0 0
  %1301 = vmatprep.subr.bf16.mxu0 0
  %1302 = vmatpush1.bf16.msra.mxu0 0
  %1303 = vmatprep.subr.bf16.mxu0 0
  %1304 = vmatpush1.bf16.msra.mxu0 0
  %1305 = vmatprep.subr.bf16.mxu0 0
  %1306 = vmatpush1.bf16.msra.mxu0 0
  %1307 = vmatprep.subr.bf16.mxu0 0
  %1308 = vmatpush1.bf16.msra.mxu0 0
  %1309 = vmatprep.subr.bf16.mxu0 0
  %1310 = vmatpush1.bf16.msra.mxu0 0
  %1311 = vmatprep.subr.bf16.mxu0 0
  %1312 = vmatpush1.bf16.msra.mxu0 0
  %1313 = vmatprep.subr.bf16.mxu0 0
  %1314 = vmatpush1.bf16.msra.mxu0 0
  %1315 = vmatprep.mubr.bf16.mxu0 0
  %1316 = vmatmul.mubr.bf16.gmra.mrb[0].mxu0 %v1275
  %v1317 = vpop.f32.mrb[0].mxu0
  %v1318 = vadd.f32 0.0, %v1317
  %v1319 = vpop.f32.mrb[0].mxu0
  %v1320 = vadd.f32 0.0, %v1319
  %v1321 = vpop.f32.mrb[0].mxu0
  %v1322 = vadd.f32 0.0, %v1321
  %v1323 = vpop.f32.mrb[0].mxu0
  %v1324 = vadd.f32 0.0, %v1323
  %1325 = vdwg.mxu0
  %v1326 = vadd.f32 %v1203, %v1318
  %v1327 = vadd.f32 %v1204, %v1320
  %v1328 = vadd.f32 %v1205, %v1322
  %v1329 = vadd.f32 %v1206, %v1324
  %v1330 = vadd.f32 %v1326, %v646
  %v1331 = vadd.f32 %v1327, %v650
  %v1332 = vadd.f32 %v1328, %v646
  %v1333 = vadd.f32 %v1329, %v650
  %v1334 = vmax.f32 %v1330, 0.0
  %v1335 = vmax.f32 %v1331, 0.0
  %v1336 = vmax.f32 %v1332, 0.0
  %v1337 = vmax.f32 %v1333, 0.0
  %v1342 = vrot.slane %v1334, 1
  %v1343 = vrot.slane %v1336, 1
  %v1344 = vsel %vm665, %v1342, %v1343
  %v1345 = vrot.slane %v1335, 1
  %v1346 = vrot.slane %v1337, 1
  %v1347 = vsel %vm665, %v1345, %v1346
  %v1352 = vmax.f32 %v1334, %v1344
  %v1353 = vmax.f32 %v1335, %v1347
  %v1354 = vmax.f32 %v1336, %v1343
  %v1355 = vmax.f32 %v1337, %v1346
  %1360 = vrot.lane.b32.xlu0 %v1352, 112
  %v1361 = vpop.permute.xlu0 %1360
  %1362 = vrot.lane.b32.xlu0 %v1353, 112
  %v1363 = vpop.permute.xlu0 %1362
  %1364 = vrot.lane.b32.xlu0 %v1354, 112
  %v1365 = vpop.permute.xlu0 %1364
  %1366 = vrot.lane.b32.xlu0 %v1355, 112
  %v1367 = vpop.permute.xlu0 %1366
  %v1368 = vsel %vm692, %v1361, %v1363
  %v1369 = vsel %vm692, %v1365, %v1367
  %v1374 = vmax.f32 %v1352, %v1368
  %v1375 = vmax.f32 %v1353, %v1363
  %v1376 = vmax.f32 %v1354, %v1369
  %v1377 = vmax.f32 %v1355, %v1367
  %s1378 = scalar_lea.vmem %s3, 32
  %1379 = vst [vmem:[%s1378] sm:$0xff] %v1374
  %1380 = vst.msk [vmem:[%s1378 + $0x8] sm:$0xff] %vm704, %v1375
  %1381 = vst [vmem:[%s1378 + $0x10] sm:$0x1] %v1376
  %1382 = vst.msk [vmem:[%s1378 + $0x18] sm:$0x1] %vm707, %v1377
  %s1383 = scalar_lea.vmem %s0, 16
  %v1384 = vld [vmem:[%s1383] sm:$0xf]
  %v1385 = vld [vmem:[%s1383 + $0x4] sm:$0x7]
  %v1386 = vld [vmem:[%s1] sm:$0xff]
  %v1387 = vld [vmem:[%s1 + $0x8] sm:$0xff]
  %v1388 = vld [vmem:[%s1 + $0x10] sm:$0xff]
  %v1389 = vld [vmem:[%s1 + $0x18] sm:$0xff]
  %v1390 = vld [vmem:[%s1 + $0x20] sm:$0xff]
  %v1391 = vld [vmem:[%s1 + $0x28] sm:$0xff]
  %v1392 = vld [vmem:[%s1 + $0x30] sm:$0xff]
  %v1393 = vld [vmem:[%s1 + $0x38] sm:$0xff]
  %v1394 = vld [vmem:[%s1 + $0x40] sm:$0xff]
  %v1395 = vld [vmem:[%s1 + $0x48] sm:$0xff]
  %v1396 = vld [vmem:[%s1 + $0x50] sm:$0x33]
  %v1397 = vld [vmem:[%s29] sm:$0xff]
  %v1398 = vld [vmem:[%s29 + $0x8] sm:$0xff]
  %v1399 = vld [vmem:[%s29 + $0x10] sm:$0xff]
  %v1400 = vld [vmem:[%s29 + $0x18] sm:$0xff]
  %v1401 = vld [vmem:[%s29 + $0x20] sm:$0xff]
  %v1402 = vld [vmem:[%s29 + $0x28] sm:$0xff]
  %v1403 = vld [vmem:[%s29 + $0x30] sm:$0xff]
  %v1404 = vld [vmem:[%s29 + $0x38] sm:$0xff]
  %v1405 = vld [vmem:[%s29 + $0x40] sm:$0xff]
  %v1406 = vld [vmem:[%s29 + $0x48] sm:$0xff]
  %v1407 = vld [vmem:[%s29 + $0x50] sm:$0x33]
  %v1410 = vunpack.c.l.b16 %v1384
  %v1411 = vunpack.c.l.b16 %v1385
  %v1412 = vpack.c.b16 %v1411, %v1410
  %v1414 = vshrl.u32 %v1412, 16
  %v1416 = vshll.u32 %v1412, 16
  %v1418 = vrot.slane %v1416, 1
  %v1419 = vor.u32 %v1414, %v1418
  %v1431 = vunpack.c.l.b16 %v1397
  %v1432 = vunpack.c.h.b16 %v1397
  %v1433 = vunpack.c.l.b16 %v1398
  %v1434 = vunpack.c.h.b16 %v1398
  %v1435 = vunpack.c.l.b16 %v1399
  %v1436 = vunpack.c.h.b16 %v1399
  %v1437 = vunpack.c.l.b16 %v1400
  %v1438 = vunpack.c.h.b16 %v1400
  %v1439 = vunpack.c.l.b16 %v1401
  %v1440 = vunpack.c.h.b16 %v1401
  %v1441 = vunpack.c.l.b16 %v1402
  %v1442 = vunpack.c.h.b16 %v1402
  %v1443 = vunpack.c.l.b16 %v1403
  %v1444 = vunpack.c.h.b16 %v1403
  %v1445 = vunpack.c.l.b16 %v1404
  %v1446 = vunpack.c.h.b16 %v1404
  %v1447 = vunpack.c.l.b16 %v1405
  %v1448 = vunpack.c.h.b16 %v1405
  %v1449 = vunpack.c.l.b16 %v1406
  %v1450 = vunpack.c.h.b16 %v1406
  %v1451 = vunpack.c.l.b16 %v1407
  %v1452 = vunpack.c.h.b16 %v1407
  %v1453 = vpack.c.b16 %v1433, %v1431
  %v1454 = vpack.c.b16 %v1434, %v1432
  %v1455 = vpack.c.b16 %v1437, %v1435
  %v1456 = vpack.c.b16 %v1438, %v1436
  %v1457 = vpack.c.b16 %v1441, %v1439
  %v1458 = vpack.c.b16 %v1442, %v1440
  %v1459 = vpack.c.b16 %v1445, %v1443
  %v1460 = vpack.c.b16 %v1446, %v1444
  %v1461 = vpack.c.b16 %v1449, %v1447
  %v1462 = vpack.c.b16 %v1450, %v1448
  %v1463 = vpack.c.b16 %v1451, %v1451
  %v1464 = vpack.c.b16 %v1452, %v1452
  %v1476 = vsel %vm108, %v1419, 0
  %v1479 = vsel %vm112, %v1463, 0
  %v1482 = vsel %vm112, %v1464, 0
  %1484 = vmatprep.subr.bf16.mxu0 %v1454
  %1485 = vmatpush1.bf16.msra.mxu0 %v1453
  %1486 = vmatprep.subr.bf16.mxu0 %v1456
  %1487 = vmatpush1.bf16.msra.mxu0 %v1455
  %1488 = vmatprep.subr.bf16.mxu0 %v1458
  %1489 = vmatpush1.bf16.msra.mxu0 %v1457
  %1490 = vmatprep.subr.bf16.mxu0 %v1460
  %1491 = vmatpush1.bf16.msra.mxu0 %v1459
  %1492 = vmatprep.subr.bf16.mxu0 %v1462
  %1493 = vmatpush1.bf16.msra.mxu0 %v1461
  %1494 = vmatprep.subr.bf16.mxu0 %v1482
  %1495 = vmatpush1.bf16.msra.mxu0 %v1479
  %1496 = vmatprep.subr.bf16.mxu0 0
  %1497 = vmatpush1.bf16.msra.mxu0 0
  %1498 = vmatprep.subr.bf16.mxu0 0
  %1499 = vmatpush1.bf16.msra.mxu0 0
  %1500 = vmatprep.subr.bf16.mxu0 0
  %1501 = vmatpush1.bf16.msra.mxu0 0
  %1502 = vmatprep.subr.bf16.mxu0 0
  %1503 = vmatpush1.bf16.msra.mxu0 0
  %1504 = vmatprep.subr.bf16.mxu0 0
  %1505 = vmatpush1.bf16.msra.mxu0 0
  %1506 = vmatprep.subr.bf16.mxu0 0
  %1507 = vmatpush1.bf16.msra.mxu0 0
  %1508 = vmatprep.subr.bf16.mxu0 0
  %1509 = vmatpush1.bf16.msra.mxu0 0
  %1510 = vmatprep.subr.bf16.mxu0 0
  %1511 = vmatpush1.bf16.msra.mxu0 0
  %1512 = vmatprep.subr.bf16.mxu0 0
  %1513 = vmatpush1.bf16.msra.mxu0 0
  %1514 = vmatprep.subr.bf16.mxu0 0
  %1515 = vmatpush1.bf16.msra.mxu0 0
  %1516 = vmatprep.mubr.bf16.mxu0 0
  %1517 = vmatmul.mubr.bf16.gmra.mrb[0].mxu0 %v1476
  %v1518 = vpop.f32.mrb[0].mxu0
  %v1519 = vadd.f32 0.0, %v1518
  %v1520 = vpop.f32.mrb[0].mxu0
  %v1521 = vadd.f32 0.0, %v1520
  %v1522 = vpop.f32.mrb[0].mxu0
  %v1523 = vadd.f32 0.0, %v1522
  %v1524 = vpop.f32.mrb[0].mxu0
  %v1525 = vadd.f32 0.0, %v1524
  %1526 = vdwg.mxu0
  %v1538 = vunpack.c.l.b16 %v1386
  %v1539 = vunpack.c.h.b16 %v1386
  %v1540 = vunpack.c.l.b16 %v1387
  %v1541 = vunpack.c.h.b16 %v1387
  %v1542 = vunpack.c.l.b16 %v1388
  %v1543 = vunpack.c.h.b16 %v1388
  %v1544 = vunpack.c.l.b16 %v1389
  %v1545 = vunpack.c.h.b16 %v1389
  %v1546 = vunpack.c.l.b16 %v1390
  %v1547 = vunpack.c.h.b16 %v1390
  %v1548 = vunpack.c.l.b16 %v1391
  %v1549 = vunpack.c.h.b16 %v1391
  %v1550 = vunpack.c.l.b16 %v1392
  %v1551 = vunpack.c.h.b16 %v1392
  %v1552 = vunpack.c.l.b16 %v1393
  %v1553 = vunpack.c.h.b16 %v1393
  %v1554 = vunpack.c.l.b16 %v1394
  %v1555 = vunpack.c.h.b16 %v1394
  %v1556 = vunpack.c.l.b16 %v1395
  %v1557 = vunpack.c.h.b16 %v1395
  %v1558 = vunpack.c.l.b16 %v1396
  %v1559 = vunpack.c.h.b16 %v1396
  %v1560 = vpack.c.b16 %v1540, %v1538
  %v1561 = vpack.c.b16 %v1541, %v1539
  %v1562 = vpack.c.b16 %v1544, %v1542
  %v1563 = vpack.c.b16 %v1545, %v1543
  %v1564 = vpack.c.b16 %v1548, %v1546
  %v1565 = vpack.c.b16 %v1549, %v1547
  %v1566 = vpack.c.b16 %v1552, %v1550
  %v1567 = vpack.c.b16 %v1553, %v1551
  %v1568 = vpack.c.b16 %v1556, %v1554
  %v1569 = vpack.c.b16 %v1557, %v1555
  %v1570 = vpack.c.b16 %v1558, %v1558
  %v1571 = vpack.c.b16 %v1559, %v1559
  %v1582 = vsel %vm108, %v1412, 0
  %v1585 = vsel %vm112, %v1570, 0
  %v1588 = vsel %vm112, %v1571, 0
  %1590 = vmatprep.subr.bf16.mxu0 %v1561
  %1591 = vmatpush1.bf16.msra.mxu0 %v1560
  %1592 = vmatprep.subr.bf16.mxu0 %v1563
  %1593 = vmatpush1.bf16.msra.mxu0 %v1562
  %1594 = vmatprep.subr.bf16.mxu0 %v1565
  %1595 = vmatpush1.bf16.msra.mxu0 %v1564
  %1596 = vmatprep.subr.bf16.mxu0 %v1567
  %1597 = vmatpush1.bf16.msra.mxu0 %v1566
  %1598 = vmatprep.subr.bf16.mxu0 %v1569
  %1599 = vmatpush1.bf16.msra.mxu0 %v1568
  %1600 = vmatprep.subr.bf16.mxu0 %v1588
  %1601 = vmatpush1.bf16.msra.mxu0 %v1585
  %1602 = vmatprep.subr.bf16.mxu0 0
  %1603 = vmatpush1.bf16.msra.mxu0 0
  %1604 = vmatprep.subr.bf16.mxu0 0
  %1605 = vmatpush1.bf16.msra.mxu0 0
  %1606 = vmatprep.subr.bf16.mxu0 0
  %1607 = vmatpush1.bf16.msra.mxu0 0
  %1608 = vmatprep.subr.bf16.mxu0 0
  %1609 = vmatpush1.bf16.msra.mxu0 0
  %1610 = vmatprep.subr.bf16.mxu0 0
  %1611 = vmatpush1.bf16.msra.mxu0 0
  %1612 = vmatprep.subr.bf16.mxu0 0
  %1613 = vmatpush1.bf16.msra.mxu0 0
  %1614 = vmatprep.subr.bf16.mxu0 0
  %1615 = vmatpush1.bf16.msra.mxu0 0
  %1616 = vmatprep.subr.bf16.mxu0 0
  %1617 = vmatpush1.bf16.msra.mxu0 0
  %1618 = vmatprep.subr.bf16.mxu0 0
  %1619 = vmatpush1.bf16.msra.mxu0 0
  %1620 = vmatprep.subr.bf16.mxu0 0
  %1621 = vmatpush1.bf16.msra.mxu0 0
  %1622 = vmatprep.mubr.bf16.mxu0 0
  %1623 = vmatmul.mubr.bf16.gmra.mrb[0].mxu0 %v1582
  %v1624 = vpop.f32.mrb[0].mxu0
  %v1625 = vadd.f32 %v1519, %v1624
  %v1626 = vpop.f32.mrb[0].mxu0
  %v1627 = vadd.f32 %v1521, %v1626
  %v1628 = vpop.f32.mrb[0].mxu0
  %v1629 = vadd.f32 %v1523, %v1628
  %v1630 = vpop.f32.mrb[0].mxu0
  %v1631 = vadd.f32 %v1525, %v1630
  %1632 = vdwg.mxu0
  %v1633 = vld [vmem:[%s268] sm:$0xff]
  %v1634 = vld [vmem:[%s268 + $0x8] sm:$0xff]
  %v1635 = vld [vmem:[%s268 + $0x10] sm:$0xff]
  %v1636 = vld [vmem:[%s268 + $0x18] sm:$0xff]
  %v1637 = vld [vmem:[%s268 + $0x20] sm:$0xff]
  %v1638 = vld [vmem:[%s268 + $0x28] sm:$0xff]
  %v1639 = vld [vmem:[%s268 + $0x30] sm:$0xff]
  %v1640 = vld [vmem:[%s268 + $0x38] sm:$0xff]
  %v1641 = vld [vmem:[%s268 + $0x40] sm:$0xff]
  %v1642 = vld [vmem:[%s268 + $0x48] sm:$0xff]
  %v1643 = vld [vmem:[%s268 + $0x50] sm:$0x33]
  %v1644 = vrot.slane %v1412, 1
  %v1656 = vunpack.c.l.b16 %v1633
  %v1657 = vunpack.c.h.b16 %v1633
  %v1658 = vunpack.c.l.b16 %v1634
  %v1659 = vunpack.c.h.b16 %v1634
  %v1660 = vunpack.c.l.b16 %v1635
  %v1661 = vunpack.c.h.b16 %v1635
  %v1662 = vunpack.c.l.b16 %v1636
  %v1663 = vunpack.c.h.b16 %v1636
  %v1664 = vunpack.c.l.b16 %v1637
  %v1665 = vunpack.c.h.b16 %v1637
  %v1666 = vunpack.c.l.b16 %v1638
  %v1667 = vunpack.c.h.b16 %v1638
  %v1668 = vunpack.c.l.b16 %v1639
  %v1669 = vunpack.c.h.b16 %v1639
  %v1670 = vunpack.c.l.b16 %v1640
  %v1671 = vunpack.c.h.b16 %v1640
  %v1672 = vunpack.c.l.b16 %v1641
  %v1673 = vunpack.c.h.b16 %v1641
  %v1674 = vunpack.c.l.b16 %v1642
  %v1675 = vunpack.c.h.b16 %v1642
  %v1676 = vunpack.c.l.b16 %v1643
  %v1677 = vunpack.c.h.b16 %v1643
  %v1678 = vpack.c.b16 %v1658, %v1656
  %v1679 = vpack.c.b16 %v1659, %v1657
  %v1680 = vpack.c.b16 %v1662, %v1660
  %v1681 = vpack.c.b16 %v1663, %v1661
  %v1682 = vpack.c.b16 %v1666, %v1664
  %v1683 = vpack.c.b16 %v1667, %v1665
  %v1684 = vpack.c.b16 %v1670, %v1668
  %v1685 = vpack.c.b16 %v1671, %v1669
  %v1686 = vpack.c.b16 %v1674, %v1672
  %v1687 = vpack.c.b16 %v1675, %v1673
  %v1688 = vpack.c.b16 %v1676, %v1676
  %v1689 = vpack.c.b16 %v1677, %v1677
  %v1701 = vsel %vm108, %v1644, 0
  %v1704 = vsel %vm112, %v1688, 0
  %v1707 = vsel %vm112, %v1689, 0
  %1709 = vmatprep.subr.bf16.mxu0 %v1679
  %1710 = vmatpush1.bf16.msra.mxu0 %v1678
  %1711 = vmatprep.subr.bf16.mxu0 %v1681
  %1712 = vmatpush1.bf16.msra.mxu0 %v1680
  %1713 = vmatprep.subr.bf16.mxu0 %v1683
  %1714 = vmatpush1.bf16.msra.mxu0 %v1682
  %1715 = vmatprep.subr.bf16.mxu0 %v1685
  %1716 = vmatpush1.bf16.msra.mxu0 %v1684
  %1717 = vmatprep.subr.bf16.mxu0 %v1687
  %1718 = vmatpush1.bf16.msra.mxu0 %v1686
  %1719 = vmatprep.subr.bf16.mxu0 %v1707
  %1720 = vmatpush1.bf16.msra.mxu0 %v1704
  %1721 = vmatprep.subr.bf16.mxu0 0
  %1722 = vmatpush1.bf16.msra.mxu0 0
  %1723 = vmatprep.subr.bf16.mxu0 0
  %1724 = vmatpush1.bf16.msra.mxu0 0
  %1725 = vmatprep.subr.bf16.mxu0 0
  %1726 = vmatpush1.bf16.msra.mxu0 0
  %1727 = vmatprep.subr.bf16.mxu0 0
  %1728 = vmatpush1.bf16.msra.mxu0 0
  %1729 = vmatprep.subr.bf16.mxu0 0
  %1730 = vmatpush1.bf16.msra.mxu0 0
  %1731 = vmatprep.subr.bf16.mxu0 0
  %1732 = vmatpush1.bf16.msra.mxu0 0
  %1733 = vmatprep.subr.bf16.mxu0 0
  %1734 = vmatpush1.bf16.msra.mxu0 0
  %1735 = vmatprep.subr.bf16.mxu0 0
  %1736 = vmatpush1.bf16.msra.mxu0 0
  %1737 = vmatprep.subr.bf16.mxu0 0
  %1738 = vmatpush1.bf16.msra.mxu0 0
  %1739 = vmatprep.subr.bf16.mxu0 0
  %1740 = vmatpush1.bf16.msra.mxu0 0
  %1741 = vmatprep.mubr.bf16.mxu0 0
  %1742 = vmatmul.mubr.bf16.gmra.mrb[0].mxu0 %v1701
  %v1743 = vpop.f32.mrb[0].mxu0
  %v1744 = vadd.f32 0.0, %v1743
  %v1745 = vpop.f32.mrb[0].mxu0
  %v1746 = vadd.f32 0.0, %v1745
  %v1747 = vpop.f32.mrb[0].mxu0
  %v1748 = vadd.f32 0.0, %v1747
  %v1749 = vpop.f32.mrb[0].mxu0
  %v1750 = vadd.f32 0.0, %v1749
  %1751 = vdwg.mxu0
  %v1752 = vadd.f32 %v1625, %v1744
  %v1753 = vadd.f32 %v1627, %v1746
  %v1754 = vadd.f32 %v1629, %v1748
  %v1755 = vadd.f32 %v1631, %v1750
  %v1756 = vld [vmem:[%s392] sm:$0xff]
  %v1757 = vld [vmem:[%s392 + $0x8] sm:$0xff]
  %v1758 = vld [vmem:[%s392 + $0x10] sm:$0xff]
  %v1759 = vld [vmem:[%s392 + $0x18] sm:$0xff]
  %v1760 = vld [vmem:[%s392 + $0x20] sm:$0xff]
  %v1761 = vld [vmem:[%s392 + $0x28] sm:$0xff]
  %v1762 = vld [vmem:[%s392 + $0x30] sm:$0xff]
  %v1763 = vld [vmem:[%s392 + $0x38] sm:$0xff]
  %v1764 = vld [vmem:[%s392 + $0x40] sm:$0xff]
  %v1765 = vld [vmem:[%s392 + $0x48] sm:$0xff]
  %v1766 = vld [vmem:[%s392 + $0x50] sm:$0x33]
  %v1767 = vrot.slane %v1414, 1
  %v1768 = vrot.slane %v1416, 2
  %v1769 = vor.u32 %v1767, %v1768
  %v1781 = vunpack.c.l.b16 %v1756
  %v1782 = vunpack.c.h.b16 %v1756
  %v1783 = vunpack.c.l.b16 %v1757
  %v1784 = vunpack.c.h.b16 %v1757
  %v1785 = vunpack.c.l.b16 %v1758
  %v1786 = vunpack.c.h.b16 %v1758
  %v1787 = vunpack.c.l.b16 %v1759
  %v1788 = vunpack.c.h.b16 %v1759
  %v1789 = vunpack.c.l.b16 %v1760
  %v1790 = vunpack.c.h.b16 %v1760
  %v1791 = vunpack.c.l.b16 %v1761
  %v1792 = vunpack.c.h.b16 %v1761
  %v1793 = vunpack.c.l.b16 %v1762
  %v1794 = vunpack.c.h.b16 %v1762
  %v1795 = vunpack.c.l.b16 %v1763
  %v1796 = vunpack.c.h.b16 %v1763
  %v1797 = vunpack.c.l.b16 %v1764
  %v1798 = vunpack.c.h.b16 %v1764
  %v1799 = vunpack.c.l.b16 %v1765
  %v1800 = vunpack.c.h.b16 %v1765
  %v1801 = vunpack.c.l.b16 %v1766
  %v1802 = vunpack.c.h.b16 %v1766
  %v1803 = vpack.c.b16 %v1783, %v1781
  %v1804 = vpack.c.b16 %v1784, %v1782
  %v1805 = vpack.c.b16 %v1787, %v1785
  %v1806 = vpack.c.b16 %v1788, %v1786
  %v1807 = vpack.c.b16 %v1791, %v1789
  %v1808 = vpack.c.b16 %v1792, %v1790
  %v1809 = vpack.c.b16 %v1795, %v1793
  %v1810 = vpack.c.b16 %v1796, %v1794
  %v1811 = vpack.c.b16 %v1799, %v1797
  %v1812 = vpack.c.b16 %v1800, %v1798
  %v1813 = vpack.c.b16 %v1801, %v1801
  %v1814 = vpack.c.b16 %v1802, %v1802
  %v1826 = vsel %vm108, %v1769, 0
  %v1829 = vsel %vm112, %v1813, 0
  %v1832 = vsel %vm112, %v1814, 0
  %1834 = vmatprep.subr.bf16.mxu0 %v1804
  %1835 = vmatpush1.bf16.msra.mxu0 %v1803
  %1836 = vmatprep.subr.bf16.mxu0 %v1806
  %1837 = vmatpush1.bf16.msra.mxu0 %v1805
  %1838 = vmatprep.subr.bf16.mxu0 %v1808
  %1839 = vmatpush1.bf16.msra.mxu0 %v1807
  %1840 = vmatprep.subr.bf16.mxu0 %v1810
  %1841 = vmatpush1.bf16.msra.mxu0 %v1809
  %1842 = vmatprep.subr.bf16.mxu0 %v1812
  %1843 = vmatpush1.bf16.msra.mxu0 %v1811
  %1844 = vmatprep.subr.bf16.mxu0 %v1832
  %1845 = vmatpush1.bf16.msra.mxu0 %v1829
  %1846 = vmatprep.subr.bf16.mxu0 0
  %1847 = vmatpush1.bf16.msra.mxu0 0
  %1848 = vmatprep.subr.bf16.mxu0 0
  %1849 = vmatpush1.bf16.msra.mxu0 0
  %1850 = vmatprep.subr.bf16.mxu0 0
  %1851 = vmatpush1.bf16.msra.mxu0 0
  %1852 = vmatprep.subr.bf16.mxu0 0
  %1853 = vmatpush1.bf16.msra.mxu0 0
  %1854 = vmatprep.subr.bf16.mxu0 0
  %1855 = vmatpush1.bf16.msra.mxu0 0
  %1856 = vmatprep.subr.bf16.mxu0 0
  %1857 = vmatpush1.bf16.msra.mxu0 0
  %1858 = vmatprep.subr.bf16.mxu0 0
  %1859 = vmatpush1.bf16.msra.mxu0 0
  %1860 = vmatprep.subr.bf16.mxu0 0
  %1861 = vmatpush1.bf16.msra.mxu0 0
  %1862 = vmatprep.subr.bf16.mxu0 0
  %1863 = vmatpush1.bf16.msra.mxu0 0
  %1864 = vmatprep.subr.bf16.mxu0 0
  %1865 = vmatpush1.bf16.msra.mxu0 0
  %1866 = vmatprep.mubr.bf16.mxu0 0
  %1867 = vmatmul.mubr.bf16.gmra.mrb[0].mxu0 %v1826
  %v1868 = vpop.f32.mrb[0].mxu0
  %v1869 = vadd.f32 0.0, %v1868
  %v1870 = vpop.f32.mrb[0].mxu0
  %v1871 = vadd.f32 0.0, %v1870
  %v1872 = vpop.f32.mrb[0].mxu0
  %v1873 = vadd.f32 0.0, %v1872
  %v1874 = vpop.f32.mrb[0].mxu0
  %v1875 = vadd.f32 0.0, %v1874
  %1876 = vdwg.mxu0
  %v1877 = vadd.f32 %v1752, %v1869
  %v1878 = vadd.f32 %v1753, %v1871
  %v1879 = vadd.f32 %v1754, %v1873
  %v1880 = vadd.f32 %v1755, %v1875
  %v1881 = vld [vmem:[%s518] sm:$0xff]
  %v1882 = vld [vmem:[%s518 + $0x8] sm:$0xff]
  %v1883 = vld [vmem:[%s518 + $0x10] sm:$0xff]
  %v1884 = vld [vmem:[%s518 + $0x18] sm:$0xff]
  %v1885 = vld [vmem:[%s518 + $0x20] sm:$0xff]
  %v1886 = vld [vmem:[%s518 + $0x28] sm:$0xff]
  %v1887 = vld [vmem:[%s518 + $0x30] sm:$0xff]
  %v1888 = vld [vmem:[%s518 + $0x38] sm:$0xff]
  %v1889 = vld [vmem:[%s518 + $0x40] sm:$0xff]
  %v1890 = vld [vmem:[%s518 + $0x48] sm:$0xff]
  %v1891 = vld [vmem:[%s518 + $0x50] sm:$0x33]
  %v1892 = vrot.slane %v1412, 2
  %v1904 = vunpack.c.l.b16 %v1881
  %v1905 = vunpack.c.h.b16 %v1881
  %v1906 = vunpack.c.l.b16 %v1882
  %v1907 = vunpack.c.h.b16 %v1882
  %v1908 = vunpack.c.l.b16 %v1883
  %v1909 = vunpack.c.h.b16 %v1883
  %v1910 = vunpack.c.l.b16 %v1884
  %v1911 = vunpack.c.h.b16 %v1884
  %v1912 = vunpack.c.l.b16 %v1885
  %v1913 = vunpack.c.h.b16 %v1885
  %v1914 = vunpack.c.l.b16 %v1886
  %v1915 = vunpack.c.h.b16 %v1886
  %v1916 = vunpack.c.l.b16 %v1887
  %v1917 = vunpack.c.h.b16 %v1887
  %v1918 = vunpack.c.l.b16 %v1888
  %v1919 = vunpack.c.h.b16 %v1888
  %v1920 = vunpack.c.l.b16 %v1889
  %v1921 = vunpack.c.h.b16 %v1889
  %v1922 = vunpack.c.l.b16 %v1890
  %v1923 = vunpack.c.h.b16 %v1890
  %v1924 = vunpack.c.l.b16 %v1891
  %v1925 = vunpack.c.h.b16 %v1891
  %v1926 = vpack.c.b16 %v1906, %v1904
  %v1927 = vpack.c.b16 %v1907, %v1905
  %v1928 = vpack.c.b16 %v1910, %v1908
  %v1929 = vpack.c.b16 %v1911, %v1909
  %v1930 = vpack.c.b16 %v1914, %v1912
  %v1931 = vpack.c.b16 %v1915, %v1913
  %v1932 = vpack.c.b16 %v1918, %v1916
  %v1933 = vpack.c.b16 %v1919, %v1917
  %v1934 = vpack.c.b16 %v1922, %v1920
  %v1935 = vpack.c.b16 %v1923, %v1921
  %v1936 = vpack.c.b16 %v1924, %v1924
  %v1937 = vpack.c.b16 %v1925, %v1925
  %v1949 = vsel %vm108, %v1892, 0
  %v1952 = vsel %vm112, %v1936, 0
  %v1955 = vsel %vm112, %v1937, 0
  %1957 = vmatprep.subr.bf16.mxu0 %v1927
  %1958 = vmatpush1.bf16.msra.mxu0 %v1926
  %1959 = vmatprep.subr.bf16.mxu0 %v1929
  %1960 = vmatpush1.bf16.msra.mxu0 %v1928
  %1961 = vmatprep.subr.bf16.mxu0 %v1931
  %1962 = vmatpush1.bf16.msra.mxu0 %v1930
  %1963 = vmatprep.subr.bf16.mxu0 %v1933
  %1964 = vmatpush1.bf16.msra.mxu0 %v1932
  %1965 = vmatprep.subr.bf16.mxu0 %v1935
  %1966 = vmatpush1.bf16.msra.mxu0 %v1934
  %1967 = vmatprep.subr.bf16.mxu0 %v1955
  %1968 = vmatpush1.bf16.msra.mxu0 %v1952
  %1969 = vmatprep.subr.bf16.mxu0 0
  %1970 = vmatpush1.bf16.msra.mxu0 0
  %1971 = vmatprep.subr.bf16.mxu0 0
  %1972 = vmatpush1.bf16.msra.mxu0 0
  %1973 = vmatprep.subr.bf16.mxu0 0
  %1974 = vmatpush1.bf16.msra.mxu0 0
  %1975 = vmatprep.subr.bf16.mxu0 0
  %1976 = vmatpush1.bf16.msra.mxu0 0
  %1977 = vmatprep.subr.bf16.mxu0 0
  %1978 = vmatpush1.bf16.msra.mxu0 0
  %1979 = vmatprep.subr.bf16.mxu0 0
  %1980 = vmatpush1.bf16.msra.mxu0 0
  %1981 = vmatprep.subr.bf16.mxu0 0
  %1982 = vmatpush1.bf16.msra.mxu0 0
  %1983 = vmatprep.subr.bf16.mxu0 0
  %1984 = vmatpush1.bf16.msra.mxu0 0
  %1985 = vmatprep.subr.bf16.mxu0 0
  %1986 = vmatpush1.bf16.msra.mxu0 0
  %1987 = vmatprep.subr.bf16.mxu0 0
  %1988 = vmatpush1.bf16.msra.mxu0 0
  %1989 = vmatprep.mubr.bf16.mxu0 0
  %1990 = vmatmul.mubr.bf16.gmra.mrb[0].mxu0 %v1949
  %v1991 = vpop.f32.mrb[0].mxu0
  %v1992 = vadd.f32 0.0, %v1991
  %v1993 = vpop.f32.mrb[0].mxu0
  %v1994 = vadd.f32 0.0, %v1993
  %v1995 = vpop.f32.mrb[0].mxu0
  %v1996 = vadd.f32 0.0, %v1995
  %v1997 = vpop.f32.mrb[0].mxu0
  %v1998 = vadd.f32 0.0, %v1997
  %1999 = vdwg.mxu0
  %v2000 = vadd.f32 %v1877, %v1992
  %v2001 = vadd.f32 %v1878, %v1994
  %v2002 = vadd.f32 %v1879, %v1996
  %v2003 = vadd.f32 %v1880, %v1998
  %v2004 = vadd.f32 %v2000, %v646
  %v2005 = vadd.f32 %v2001, %v650
  %v2006 = vadd.f32 %v2002, %v646
  %v2007 = vadd.f32 %v2003, %v650
  %v2008 = vmax.f32 %v2004, 0.0
  %v2009 = vmax.f32 %v2005, 0.0
  %v2010 = vmax.f32 %v2006, 0.0
  %v2011 = vmax.f32 %v2007, 0.0
  %v2016 = vrot.slane %v2008, 1
  %v2017 = vrot.slane %v2010, 1
  %v2018 = vsel %vm665, %v2016, %v2017
  %v2019 = vrot.slane %v2009, 1
  %v2020 = vrot.slane %v2011, 1
  %v2021 = vsel %vm665, %v2019, %v2020
  %v2026 = vmax.f32 %v2008, %v2018
  %v2027 = vmax.f32 %v2009, %v2021
  %v2028 = vmax.f32 %v2010, %v2017
  %v2029 = vmax.f32 %v2011, %v2020
  %2034 = vrot.lane.b32.xlu0 %v2026, 112
  %v2035 = vpop.permute.xlu0 %2034
  %2036 = vrot.lane.b32.xlu0 %v2027, 112
  %v2037 = vpop.permute.xlu0 %2036
  %2038 = vrot.lane.b32.xlu0 %v2028, 112
  %v2039 = vpop.permute.xlu0 %2038
  %2040 = vrot.lane.b32.xlu0 %v2029, 112
  %v2041 = vpop.permute.xlu0 %2040
  %v2042 = vsel %vm692, %v2035, %v2037
  %v2043 = vsel %vm692, %v2039, %v2041
  %v2048 = vmax.f32 %v2026, %v2042
  %v2049 = vmax.f32 %v2027, %v2037
  %v2050 = vmax.f32 %v2028, %v2043
  %v2051 = vmax.f32 %v2029, %v2041
  %s2052 = scalar_lea.vmem %s3, 64
  %2053 = vst [vmem:[%s2052] sm:$0xff] %v2048
  %2054 = vst.msk [vmem:[%s2052 + $0x8] sm:$0xff] %vm704, %v2049
  %2055 = vst [vmem:[%s2052 + $0x10] sm:$0x1] %v2050
  %2056 = vst.msk [vmem:[%s2052 + $0x18] sm:$0x1] %vm707, %v2051
  %s2057 = scalar_lea.vmem %s0, 24
  %v2058 = vld [vmem:[%s2057] sm:$0xf]
  %v2059 = vld [vmem:[%s2057 + $0x4] sm:$0x7]
  %v2060 = vld [vmem:[%s1] sm:$0xff]
  %v2061 = vld [vmem:[%s1 + $0x8] sm:$0xff]
  %v2062 = vld [vmem:[%s1 + $0x10] sm:$0xff]
  %v2063 = vld [vmem:[%s1 + $0x18] sm:$0xff]
  %v2064 = vld [vmem:[%s1 + $0x20] sm:$0xff]
  %v2065 = vld [vmem:[%s1 + $0x28] sm:$0xff]
  %v2066 = vld [vmem:[%s1 + $0x30] sm:$0xff]
  %v2067 = vld [vmem:[%s1 + $0x38] sm:$0xff]
  %v2068 = vld [vmem:[%s1 + $0x40] sm:$0xff]
  %v2069 = vld [vmem:[%s1 + $0x48] sm:$0xff]
  %v2070 = vld [vmem:[%s1 + $0x50] sm:$0x33]
  %v2071 = vld [vmem:[%s29] sm:$0xff]
  %v2072 = vld [vmem:[%s29 + $0x8] sm:$0xff]
  %v2073 = vld [vmem:[%s29 + $0x10] sm:$0xff]
  %v2074 = vld [vmem:[%s29 + $0x18] sm:$0xff]
  %v2075 = vld [vmem:[%s29 + $0x20] sm:$0xff]
  %v2076 = vld [vmem:[%s29 + $0x28] sm:$0xff]
  %v2077 = vld [vmem:[%s29 + $0x30] sm:$0xff]
  %v2078 = vld [vmem:[%s29 + $0x38] sm:$0xff]
  %v2079 = vld [vmem:[%s29 + $0x40] sm:$0xff]
  %v2080 = vld [vmem:[%s29 + $0x48] sm:$0xff]
  %v2081 = vld [vmem:[%s29 + $0x50] sm:$0x33]
  %v2084 = vunpack.c.l.b16 %v2058
  %v2085 = vunpack.c.l.b16 %v2059
  %v2086 = vpack.c.b16 %v2085, %v2084
  %v2088 = vshrl.u32 %v2086, 16
  %v2090 = vshll.u32 %v2086, 16
  %v2092 = vrot.slane %v2090, 1
  %v2093 = vor.u32 %v2088, %v2092
  %v2105 = vunpack.c.l.b16 %v2071
  %v2106 = vunpack.c.h.b16 %v2071
  %v2107 = vunpack.c.l.b16 %v2072
  %v2108 = vunpack.c.h.b16 %v2072
  %v2109 = vunpack.c.l.b16 %v2073
  %v2110 = vunpack.c.h.b16 %v2073
  %v2111 = vunpack.c.l.b16 %v2074
  %v2112 = vunpack.c.h.b16 %v2074
  %v2113 = vunpack.c.l.b16 %v2075
  %v2114 = vunpack.c.h.b16 %v2075
  %v2115 = vunpack.c.l.b16 %v2076
  %v2116 = vunpack.c.h.b16 %v2076
  %v2117 = vunpack.c.l.b16 %v2077
  %v2118 = vunpack.c.h.b16 %v2077
  %v2119 = vunpack.c.l.b16 %v2078
  %v2120 = vunpack.c.h.b16 %v2078
  %v2121 = vunpack.c.l.b16 %v2079
  %v2122 = vunpack.c.h.b16 %v2079
  %v2123 = vunpack.c.l.b16 %v2080
  %v2124 = vunpack.c.h.b16 %v2080
  %v2125 = vunpack.c.l.b16 %v2081
  %v2126 = vunpack.c.h.b16 %v2081
  %v2127 = vpack.c.b16 %v2107, %v2105
  %v2128 = vpack.c.b16 %v2108, %v2106
  %v2129 = vpack.c.b16 %v2111, %v2109
  %v2130 = vpack.c.b16 %v2112, %v2110
  %v2131 = vpack.c.b16 %v2115, %v2113
  %v2132 = vpack.c.b16 %v2116, %v2114
  %v2133 = vpack.c.b16 %v2119, %v2117
  %v2134 = vpack.c.b16 %v2120, %v2118
  %v2135 = vpack.c.b16 %v2123, %v2121
  %v2136 = vpack.c.b16 %v2124, %v2122
  %v2137 = vpack.c.b16 %v2125, %v2125
  %v2138 = vpack.c.b16 %v2126, %v2126
  %v2150 = vsel %vm108, %v2093, 0
  %v2153 = vsel %vm112, %v2137, 0
  %v2156 = vsel %vm112, %v2138, 0
  %2158 = vmatprep.subr.bf16.mxu0 %v2128
  %2159 = vmatpush1.bf16.msra.mxu0 %v2127
  %2160 = vmatprep.subr.bf16.mxu0 %v2130
  %2161 = vmatpush1.bf16.msra.mxu0 %v2129
  %2162 = vmatprep.subr.bf16.mxu0 %v2132
  %2163 = vmatpush1.bf16.msra.mxu0 %v2131
  %2164 = vmatprep.subr.bf16.mxu0 %v2134
  %2165 = vmatpush1.bf16.msra.mxu0 %v2133
  %2166 = vmatprep.subr.bf16.mxu0 %v2136
  %2167 = vmatpush1.bf16.msra.mxu0 %v2135
  %2168 = vmatprep.subr.bf16.mxu0 %v2156
  %2169 = vmatpush1.bf16.msra.mxu0 %v2153
  %2170 = vmatprep.subr.bf16.mxu0 0
  %2171 = vmatpush1.bf16.msra.mxu0 0
  %2172 = vmatprep.subr.bf16.mxu0 0
  %2173 = vmatpush1.bf16.msra.mxu0 0
  %2174 = vmatprep.subr.bf16.mxu0 0
  %2175 = vmatpush1.bf16.msra.mxu0 0
  %2176 = vmatprep.subr.bf16.mxu0 0
  %2177 = vmatpush1.bf16.msra.mxu0 0
  %2178 = vmatprep.subr.bf16.mxu0 0
  %2179 = vmatpush1.bf16.msra.mxu0 0
  %2180 = vmatprep.subr.bf16.mxu0 0
  %2181 = vmatpush1.bf16.msra.mxu0 0
  %2182 = vmatprep.subr.bf16.mxu0 0
  %2183 = vmatpush1.bf16.msra.mxu0 0
  %2184 = vmatprep.subr.bf16.mxu0 0
  %2185 = vmatpush1.bf16.msra.mxu0 0
  %2186 = vmatprep.subr.bf16.mxu0 0
  %2187 = vmatpush1.bf16.msra.mxu0 0
  %2188 = vmatprep.subr.bf16.mxu0 0
  %2189 = vmatpush1.bf16.msra.mxu0 0
  %2190 = vmatprep.mubr.bf16.mxu0 0
  %2191 = vmatmul.mubr.bf16.gmra.mrb[0].mxu0 %v2150
  %v2192 = vpop.f32.mrb[0].mxu0
  %v2193 = vadd.f32 0.0, %v2192
  %v2194 = vpop.f32.mrb[0].mxu0
  %v2195 = vadd.f32 0.0, %v2194
  %v2196 = vpop.f32.mrb[0].mxu0
  %v2197 = vadd.f32 0.0, %v2196
  %v2198 = vpop.f32.mrb[0].mxu0
  %v2199 = vadd.f32 0.0, %v2198
  %2200 = vdwg.mxu0
  %v2212 = vunpack.c.l.b16 %v2060
  %v2213 = vunpack.c.h.b16 %v2060
  %v2214 = vunpack.c.l.b16 %v2061
  %v2215 = vunpack.c.h.b16 %v2061
  %v2216 = vunpack.c.l.b16 %v2062
  %v2217 = vunpack.c.h.b16 %v2062
  %v2218 = vunpack.c.l.b16 %v2063
  %v2219 = vunpack.c.h.b16 %v2063
  %v2220 = vunpack.c.l.b16 %v2064
  %v2221 = vunpack.c.h.b16 %v2064
  %v2222 = vunpack.c.l.b16 %v2065
  %v2223 = vunpack.c.h.b16 %v2065
  %v2224 = vunpack.c.l.b16 %v2066
  %v2225 = vunpack.c.h.b16 %v2066
  %v2226 = vunpack.c.l.b16 %v2067
  %v2227 = vunpack.c.h.b16 %v2067
  %v2228 = vunpack.c.l.b16 %v2068
  %v2229 = vunpack.c.h.b16 %v2068
  %v2230 = vunpack.c.l.b16 %v2069
  %v2231 = vunpack.c.h.b16 %v2069
  %v2232 = vunpack.c.l.b16 %v2070
  %v2233 = vunpack.c.h.b16 %v2070
  %v2234 = vpack.c.b16 %v2214, %v2212
  %v2235 = vpack.c.b16 %v2215, %v2213
  %v2236 = vpack.c.b16 %v2218, %v2216
  %v2237 = vpack.c.b16 %v2219, %v2217
  %v2238 = vpack.c.b16 %v2222, %v2220
  %v2239 = vpack.c.b16 %v2223, %v2221
  %v2240 = vpack.c.b16 %v2226, %v2224
  %v2241 = vpack.c.b16 %v2227, %v2225
  %v2242 = vpack.c.b16 %v2230, %v2228
  %v2243 = vpack.c.b16 %v2231, %v2229
  %v2244 = vpack.c.b16 %v2232, %v2232
  %v2245 = vpack.c.b16 %v2233, %v2233
  %v2256 = vsel %vm108, %v2086, 0
  %v2259 = vsel %vm112, %v2244, 0
  %v2262 = vsel %vm112, %v2245, 0
  %2264 = vmatprep.subr.bf16.mxu0 %v2235
  %2265 = vmatpush1.bf16.msra.mxu0 %v2234
  %2266 = vmatprep.subr.bf16.mxu0 %v2237
  %2267 = vmatpush1.bf16.msra.mxu0 %v2236
  %2268 = vmatprep.subr.bf16.mxu0 %v2239
  %2269 = vmatpush1.bf16.msra.mxu0 %v2238
  %2270 = vmatprep.subr.bf16.mxu0 %v2241
  %2271 = vmatpush1.bf16.msra.mxu0 %v2240
  %2272 = vmatprep.subr.bf16.mxu0 %v2243
  %2273 = vmatpush1.bf16.msra.mxu0 %v2242
  %2274 = vmatprep.subr.bf16.mxu0 %v2262
  %2275 = vmatpush1.bf16.msra.mxu0 %v2259
  %2276 = vmatprep.subr.bf16.mxu0 0
  %2277 = vmatpush1.bf16.msra.mxu0 0
  %2278 = vmatprep.subr.bf16.mxu0 0
  %2279 = vmatpush1.bf16.msra.mxu0 0
  %2280 = vmatprep.subr.bf16.mxu0 0
  %2281 = vmatpush1.bf16.msra.mxu0 0
  %2282 = vmatprep.subr.bf16.mxu0 0
  %2283 = vmatpush1.bf16.msra.mxu0 0
  %2284 = vmatprep.subr.bf16.mxu0 0
  %2285 = vmatpush1.bf16.msra.mxu0 0
  %2286 = vmatprep.subr.bf16.mxu0 0
  %2287 = vmatpush1.bf16.msra.mxu0 0
  %2288 = vmatprep.subr.bf16.mxu0 0
  %2289 = vmatpush1.bf16.msra.mxu0 0
  %2290 = vmatprep.subr.bf16.mxu0 0
  %2291 = vmatpush1.bf16.msra.mxu0 0
  %2292 = vmatprep.subr.bf16.mxu0 0
  %2293 = vmatpush1.bf16.msra.mxu0 0
  %2294 = vmatprep.subr.bf16.mxu0 0
  %2295 = vmatpush1.bf16.msra.mxu0 0
  %2296 = vmatprep.mubr.bf16.mxu0 0
  %2297 = vmatmul.mubr.bf16.gmra.mrb[0].mxu0 %v2256
  %v2298 = vpop.f32.mrb[0].mxu0
  %v2299 = vadd.f32 %v2193, %v2298
  %v2300 = vpop.f32.mrb[0].mxu0
  %v2301 = vadd.f32 %v2195, %v2300
  %v2302 = vpop.f32.mrb[0].mxu0
  %v2303 = vadd.f32 %v2197, %v2302
  %v2304 = vpop.f32.mrb[0].mxu0
  %v2305 = vadd.f32 %v2199, %v2304
  %2306 = vdwg.mxu0
  %v2307 = vld [vmem:[%s268] sm:$0xff]
  %v2308 = vld [vmem:[%s268 + $0x8] sm:$0xff]
  %v2309 = vld [vmem:[%s268 + $0x10] sm:$0xff]
  %v2310 = vld [vmem:[%s268 + $0x18] sm:$0xff]
  %v2311 = vld [vmem:[%s268 + $0x20] sm:$0xff]
  %v2312 = vld [vmem:[%s268 + $0x28] sm:$0xff]
  %v2313 = vld [vmem:[%s268 + $0x30] sm:$0xff]
  %v2314 = vld [vmem:[%s268 + $0x38] sm:$0xff]
  %v2315 = vld [vmem:[%s268 + $0x40] sm:$0xff]
  %v2316 = vld [vmem:[%s268 + $0x48] sm:$0xff]
  %v2317 = vld [vmem:[%s268 + $0x50] sm:$0x33]
  %v2318 = vrot.slane %v2086, 1
  %v2330 = vunpack.c.l.b16 %v2307
  %v2331 = vunpack.c.h.b16 %v2307
  %v2332 = vunpack.c.l.b16 %v2308
  %v2333 = vunpack.c.h.b16 %v2308
  %v2334 = vunpack.c.l.b16 %v2309
  %v2335 = vunpack.c.h.b16 %v2309
  %v2336 = vunpack.c.l.b16 %v2310
  %v2337 = vunpack.c.h.b16 %v2310
  %v2338 = vunpack.c.l.b16 %v2311
  %v2339 = vunpack.c.h.b16 %v2311
  %v2340 = vunpack.c.l.b16 %v2312
  %v2341 = vunpack.c.h.b16 %v2312
  %v2342 = vunpack.c.l.b16 %v2313
  %v2343 = vunpack.c.h.b16 %v2313
  %v2344 = vunpack.c.l.b16 %v2314
  %v2345 = vunpack.c.h.b16 %v2314
  %v2346 = vunpack.c.l.b16 %v2315
  %v2347 = vunpack.c.h.b16 %v2315
  %v2348 = vunpack.c.l.b16 %v2316
  %v2349 = vunpack.c.h.b16 %v2316
  %v2350 = vunpack.c.l.b16 %v2317
  %v2351 = vunpack.c.h.b16 %v2317
  %v2352 = vpack.c.b16 %v2332, %v2330
  %v2353 = vpack.c.b16 %v2333, %v2331
  %v2354 = vpack.c.b16 %v2336, %v2334
  %v2355 = vpack.c.b16 %v2337, %v2335
  %v2356 = vpack.c.b16 %v2340, %v2338
  %v2357 = vpack.c.b16 %v2341, %v2339
  %v2358 = vpack.c.b16 %v2344, %v2342
  %v2359 = vpack.c.b16 %v2345, %v2343
  %v2360 = vpack.c.b16 %v2348, %v2346
  %v2361 = vpack.c.b16 %v2349, %v2347
  %v2362 = vpack.c.b16 %v2350, %v2350
  %v2363 = vpack.c.b16 %v2351, %v2351
  %v2375 = vsel %vm108, %v2318, 0
  %v2378 = vsel %vm112, %v2362, 0
  %v2381 = vsel %vm112, %v2363, 0
  %2383 = vmatprep.subr.bf16.mxu0 %v2353
  %2384 = vmatpush1.bf16.msra.mxu0 %v2352
  %2385 = vmatprep.subr.bf16.mxu0 %v2355
  %2386 = vmatpush1.bf16.msra.mxu0 %v2354
  %2387 = vmatprep.subr.bf16.mxu0 %v2357
  %2388 = vmatpush1.bf16.msra.mxu0 %v2356
  %2389 = vmatprep.subr.bf16.mxu0 %v2359
  %2390 = vmatpush1.bf16.msra.mxu0 %v2358
  %2391 = vmatprep.subr.bf16.mxu0 %v2361
  %2392 = vmatpush1.bf16.msra.mxu0 %v2360
  %2393 = vmatprep.subr.bf16.mxu0 %v2381
  %2394 = vmatpush1.bf16.msra.mxu0 %v2378
  %2395 = vmatprep.subr.bf16.mxu0 0
  %2396 = vmatpush1.bf16.msra.mxu0 0
  %2397 = vmatprep.subr.bf16.mxu0 0
  %2398 = vmatpush1.bf16.msra.mxu0 0
  %2399 = vmatprep.subr.bf16.mxu0 0
  %2400 = vmatpush1.bf16.msra.mxu0 0
  %2401 = vmatprep.subr.bf16.mxu0 0
  %2402 = vmatpush1.bf16.msra.mxu0 0
  %2403 = vmatprep.subr.bf16.mxu0 0
  %2404 = vmatpush1.bf16.msra.mxu0 0
  %2405 = vmatprep.subr.bf16.mxu0 0
  %2406 = vmatpush1.bf16.msra.mxu0 0
  %2407 = vmatprep.subr.bf16.mxu0 0
  %2408 = vmatpush1.bf16.msra.mxu0 0
  %2409 = vmatprep.subr.bf16.mxu0 0
  %2410 = vmatpush1.bf16.msra.mxu0 0
  %2411 = vmatprep.subr.bf16.mxu0 0
  %2412 = vmatpush1.bf16.msra.mxu0 0
  %2413 = vmatprep.subr.bf16.mxu0 0
  %2414 = vmatpush1.bf16.msra.mxu0 0
  %2415 = vmatprep.mubr.bf16.mxu0 0
  %2416 = vmatmul.mubr.bf16.gmra.mrb[0].mxu0 %v2375
  %v2417 = vpop.f32.mrb[0].mxu0
  %v2418 = vadd.f32 0.0, %v2417
  %v2419 = vpop.f32.mrb[0].mxu0
  %v2420 = vadd.f32 0.0, %v2419
  %v2421 = vpop.f32.mrb[0].mxu0
  %v2422 = vadd.f32 0.0, %v2421
  %v2423 = vpop.f32.mrb[0].mxu0
  %v2424 = vadd.f32 0.0, %v2423
  %2425 = vdwg.mxu0
  %v2426 = vadd.f32 %v2299, %v2418
  %v2427 = vadd.f32 %v2301, %v2420
  %v2428 = vadd.f32 %v2303, %v2422
  %v2429 = vadd.f32 %v2305, %v2424
  %v2430 = vld [vmem:[%s392] sm:$0xff]
  %v2431 = vld [vmem:[%s392 + $0x8] sm:$0xff]
  %v2432 = vld [vmem:[%s392 + $0x10] sm:$0xff]
  %v2433 = vld [vmem:[%s392 + $0x18] sm:$0xff]
  %v2434 = vld [vmem:[%s392 + $0x20] sm:$0xff]
  %v2435 = vld [vmem:[%s392 + $0x28] sm:$0xff]
  %v2436 = vld [vmem:[%s392 + $0x30] sm:$0xff]
  %v2437 = vld [vmem:[%s392 + $0x38] sm:$0xff]
  %v2438 = vld [vmem:[%s392 + $0x40] sm:$0xff]
  %v2439 = vld [vmem:[%s392 + $0x48] sm:$0xff]
  %v2440 = vld [vmem:[%s392 + $0x50] sm:$0x33]
  %v2441 = vrot.slane %v2088, 1
  %v2442 = vrot.slane %v2090, 2
  %v2443 = vor.u32 %v2441, %v2442
  %v2455 = vunpack.c.l.b16 %v2430
  %v2456 = vunpack.c.h.b16 %v2430
  %v2457 = vunpack.c.l.b16 %v2431
  %v2458 = vunpack.c.h.b16 %v2431
  %v2459 = vunpack.c.l.b16 %v2432
  %v2460 = vunpack.c.h.b16 %v2432
  %v2461 = vunpack.c.l.b16 %v2433
  %v2462 = vunpack.c.h.b16 %v2433
  %v2463 = vunpack.c.l.b16 %v2434
  %v2464 = vunpack.c.h.b16 %v2434
  %v2465 = vunpack.c.l.b16 %v2435
  %v2466 = vunpack.c.h.b16 %v2435
  %v2467 = vunpack.c.l.b16 %v2436
  %v2468 = vunpack.c.h.b16 %v2436
  %v2469 = vunpack.c.l.b16 %v2437
  %v2470 = vunpack.c.h.b16 %v2437
  %v2471 = vunpack.c.l.b16 %v2438
  %v2472 = vunpack.c.h.b16 %v2438
  %v2473 = vunpack.c.l.b16 %v2439
  %v2474 = vunpack.c.h.b16 %v2439
  %v2475 = vunpack.c.l.b16 %v2440
  %v2476 = vunpack.c.h.b16 %v2440
  %v2477 = vpack.c.b16 %v2457, %v2455
  %v2478 = vpack.c.b16 %v2458, %v2456
  %v2479 = vpack.c.b16 %v2461, %v2459
  %v2480 = vpack.c.b16 %v2462, %v2460
  %v2481 = vpack.c.b16 %v2465, %v2463
  %v2482 = vpack.c.b16 %v2466, %v2464
  %v2483 = vpack.c.b16 %v2469, %v2467
  %v2484 = vpack.c.b16 %v2470, %v2468
  %v2485 = vpack.c.b16 %v2473, %v2471
  %v2486 = vpack.c.b16 %v2474, %v2472
  %v2487 = vpack.c.b16 %v2475, %v2475
  %v2488 = vpack.c.b16 %v2476, %v2476
  %v2500 = vsel %vm108, %v2443, 0
  %v2503 = vsel %vm112, %v2487, 0
  %v2506 = vsel %vm112, %v2488, 0
  %2508 = vmatprep.subr.bf16.mxu0 %v2478
  %2509 = vmatpush1.bf16.msra.mxu0 %v2477
  %2510 = vmatprep.subr.bf16.mxu0 %v2480
  %2511 = vmatpush1.bf16.msra.mxu0 %v2479
  %2512 = vmatprep.subr.bf16.mxu0 %v2482
  %2513 = vmatpush1.bf16.msra.mxu0 %v2481
  %2514 = vmatprep.subr.bf16.mxu0 %v2484
  %2515 = vmatpush1.bf16.msra.mxu0 %v2483
  %2516 = vmatprep.subr.bf16.mxu0 %v2486
  %2517 = vmatpush1.bf16.msra.mxu0 %v2485
  %2518 = vmatprep.subr.bf16.mxu0 %v2506
  %2519 = vmatpush1.bf16.msra.mxu0 %v2503
  %2520 = vmatprep.subr.bf16.mxu0 0
  %2521 = vmatpush1.bf16.msra.mxu0 0
  %2522 = vmatprep.subr.bf16.mxu0 0
  %2523 = vmatpush1.bf16.msra.mxu0 0
  %2524 = vmatprep.subr.bf16.mxu0 0
  %2525 = vmatpush1.bf16.msra.mxu0 0
  %2526 = vmatprep.subr.bf16.mxu0 0
  %2527 = vmatpush1.bf16.msra.mxu0 0
  %2528 = vmatprep.subr.bf16.mxu0 0
  %2529 = vmatpush1.bf16.msra.mxu0 0
  %2530 = vmatprep.subr.bf16.mxu0 0
  %2531 = vmatpush1.bf16.msra.mxu0 0
  %2532 = vmatprep.subr.bf16.mxu0 0
  %2533 = vmatpush1.bf16.msra.mxu0 0
  %2534 = vmatprep.subr.bf16.mxu0 0
  %2535 = vmatpush1.bf16.msra.mxu0 0
  %2536 = vmatprep.subr.bf16.mxu0 0
  %2537 = vmatpush1.bf16.msra.mxu0 0
  %2538 = vmatprep.subr.bf16.mxu0 0
  %2539 = vmatpush1.bf16.msra.mxu0 0
  %2540 = vmatprep.mubr.bf16.mxu0 0
  %2541 = vmatmul.mubr.bf16.gmra.mrb[0].mxu0 %v2500
  %v2542 = vpop.f32.mrb[0].mxu0
  %v2543 = vadd.f32 0.0, %v2542
  %v2544 = vpop.f32.mrb[0].mxu0
  %v2545 = vadd.f32 0.0, %v2544
  %v2546 = vpop.f32.mrb[0].mxu0
  %v2547 = vadd.f32 0.0, %v2546
  %v2548 = vpop.f32.mrb[0].mxu0
  %v2549 = vadd.f32 0.0, %v2548
  %2550 = vdwg.mxu0
  %v2551 = vadd.f32 %v2426, %v2543
  %v2552 = vadd.f32 %v2427, %v2545
  %v2553 = vadd.f32 %v2428, %v2547
  %v2554 = vadd.f32 %v2429, %v2549
  %v2555 = vld [vmem:[%s518] sm:$0xff]
  %v2556 = vld [vmem:[%s518 + $0x8] sm:$0xff]
  %v2557 = vld [vmem:[%s518 + $0x10] sm:$0xff]
  %v2558 = vld [vmem:[%s518 + $0x18] sm:$0xff]
  %v2559 = vld [vmem:[%s518 + $0x20] sm:$0xff]
  %v2560 = vld [vmem:[%s518 + $0x28] sm:$0xff]
  %v2561 = vld [vmem:[%s518 + $0x30] sm:$0xff]
  %v2562 = vld [vmem:[%s518 + $0x38] sm:$0xff]
  %v2563 = vld [vmem:[%s518 + $0x40] sm:$0xff]
  %v2564 = vld [vmem:[%s518 + $0x48] sm:$0xff]
  %v2565 = vld [vmem:[%s518 + $0x50] sm:$0x33]
  %v2566 = vrot.slane %v2086, 2
  %v2578 = vunpack.c.l.b16 %v2555
  %v2579 = vunpack.c.h.b16 %v2555
  %v2580 = vunpack.c.l.b16 %v2556
  %v2581 = vunpack.c.h.b16 %v2556
  %v2582 = vunpack.c.l.b16 %v2557
  %v2583 = vunpack.c.h.b16 %v2557
  %v2584 = vunpack.c.l.b16 %v2558
  %v2585 = vunpack.c.h.b16 %v2558
  %v2586 = vunpack.c.l.b16 %v2559
  %v2587 = vunpack.c.h.b16 %v2559
  %v2588 = vunpack.c.l.b16 %v2560
  %v2589 = vunpack.c.h.b16 %v2560
  %v2590 = vunpack.c.l.b16 %v2561
  %v2591 = vunpack.c.h.b16 %v2561
  %v2592 = vunpack.c.l.b16 %v2562
  %v2593 = vunpack.c.h.b16 %v2562
  %v2594 = vunpack.c.l.b16 %v2563
  %v2595 = vunpack.c.h.b16 %v2563
  %v2596 = vunpack.c.l.b16 %v2564
  %v2597 = vunpack.c.h.b16 %v2564
  %v2598 = vunpack.c.l.b16 %v2565
  %v2599 = vunpack.c.h.b16 %v2565
  %v2600 = vpack.c.b16 %v2580, %v2578
  %v2601 = vpack.c.b16 %v2581, %v2579
  %v2602 = vpack.c.b16 %v2584, %v2582
  %v2603 = vpack.c.b16 %v2585, %v2583
  %v2604 = vpack.c.b16 %v2588, %v2586
  %v2605 = vpack.c.b16 %v2589, %v2587
  %v2606 = vpack.c.b16 %v2592, %v2590
  %v2607 = vpack.c.b16 %v2593, %v2591
  %v2608 = vpack.c.b16 %v2596, %v2594
  %v2609 = vpack.c.b16 %v2597, %v2595
  %v2610 = vpack.c.b16 %v2598, %v2598
  %v2611 = vpack.c.b16 %v2599, %v2599
  %v2623 = vsel %vm108, %v2566, 0
  %v2626 = vsel %vm112, %v2610, 0
  %v2629 = vsel %vm112, %v2611, 0
  %2631 = vmatprep.subr.bf16.mxu0 %v2601
  %2632 = vmatpush1.bf16.msra.mxu0 %v2600
  %2633 = vmatprep.subr.bf16.mxu0 %v2603
  %2634 = vmatpush1.bf16.msra.mxu0 %v2602
  %2635 = vmatprep.subr.bf16.mxu0 %v2605
  %2636 = vmatpush1.bf16.msra.mxu0 %v2604
  %2637 = vmatprep.subr.bf16.mxu0 %v2607
  %2638 = vmatpush1.bf16.msra.mxu0 %v2606
  %2639 = vmatprep.subr.bf16.mxu0 %v2609
  %2640 = vmatpush1.bf16.msra.mxu0 %v2608
  %2641 = vmatprep.subr.bf16.mxu0 %v2629
  %2642 = vmatpush1.bf16.msra.mxu0 %v2626
  %2643 = vmatprep.subr.bf16.mxu0 0
  %2644 = vmatpush1.bf16.msra.mxu0 0
  %2645 = vmatprep.subr.bf16.mxu0 0
  %2646 = vmatpush1.bf16.msra.mxu0 0
  %2647 = vmatprep.subr.bf16.mxu0 0
  %2648 = vmatpush1.bf16.msra.mxu0 0
  %2649 = vmatprep.subr.bf16.mxu0 0
  %2650 = vmatpush1.bf16.msra.mxu0 0
  %2651 = vmatprep.subr.bf16.mxu0 0
  %2652 = vmatpush1.bf16.msra.mxu0 0
  %2653 = vmatprep.subr.bf16.mxu0 0
  %2654 = vmatpush1.bf16.msra.mxu0 0
  %2655 = vmatprep.subr.bf16.mxu0 0
  %2656 = vmatpush1.bf16.msra.mxu0 0
  %2657 = vmatprep.subr.bf16.mxu0 0
  %2658 = vmatpush1.bf16.msra.mxu0 0
  %2659 = vmatprep.subr.bf16.mxu0 0
  %2660 = vmatpush1.bf16.msra.mxu0 0
  %2661 = vmatprep.subr.bf16.mxu0 0
  %2662 = vmatpush1.bf16.msra.mxu0 0
  %2663 = vmatprep.mubr.bf16.mxu0 0
  %2664 = vmatmul.mubr.bf16.gmra.mrb[0].mxu0 %v2623
  %v2665 = vpop.f32.mrb[0].mxu0
  %v2666 = vadd.f32 0.0, %v2665
  %v2667 = vpop.f32.mrb[0].mxu0
  %v2668 = vadd.f32 0.0, %v2667
  %v2669 = vpop.f32.mrb[0].mxu0
  %v2670 = vadd.f32 0.0, %v2669
  %v2671 = vpop.f32.mrb[0].mxu0
  %v2672 = vadd.f32 0.0, %v2671
  %2673 = vdwg.mxu0
  %v2674 = vadd.f32 %v2551, %v2666
  %v2675 = vadd.f32 %v2552, %v2668
  %v2676 = vadd.f32 %v2553, %v2670
  %v2677 = vadd.f32 %v2554, %v2672
  %v2678 = vadd.f32 %v2674, %v646
  %v2679 = vadd.f32 %v2675, %v650
  %v2680 = vadd.f32 %v2676, %v646
  %v2681 = vadd.f32 %v2677, %v650
  %v2682 = vmax.f32 %v2678, 0.0
  %v2683 = vmax.f32 %v2679, 0.0
  %v2684 = vmax.f32 %v2680, 0.0
  %v2685 = vmax.f32 %v2681, 0.0
  %v2690 = vrot.slane %v2682, 1
  %v2691 = vrot.slane %v2684, 1
  %v2692 = vsel %vm665, %v2690, %v2691
  %v2693 = vrot.slane %v2683, 1
  %v2694 = vrot.slane %v2685, 1
  %v2695 = vsel %vm665, %v2693, %v2694
  %v2700 = vmax.f32 %v2682, %v2692
  %v2701 = vmax.f32 %v2683, %v2695
  %v2702 = vmax.f32 %v2684, %v2691
  %v2703 = vmax.f32 %v2685, %v2694
  %2708 = vrot.lane.b32.xlu0 %v2700, 112
  %v2709 = vpop.permute.xlu0 %2708
  %2710 = vrot.lane.b32.xlu0 %v2701, 112
  %v2711 = vpop.permute.xlu0 %2710
  %2712 = vrot.lane.b32.xlu0 %v2702, 112
  %v2713 = vpop.permute.xlu0 %2712
  %2714 = vrot.lane.b32.xlu0 %v2703, 112
  %v2715 = vpop.permute.xlu0 %2714
  %v2716 = vsel %vm692, %v2709, %v2711
  %v2717 = vsel %vm692, %v2713, %v2715
  %v2722 = vmax.f32 %v2700, %v2716
  %v2723 = vmax.f32 %v2701, %v2711
  %v2724 = vmax.f32 %v2702, %v2717
  %v2725 = vmax.f32 %v2703, %v2715
  %s2726 = scalar_lea.vmem %s3, 96
  %2727 = vst [vmem:[%s2726] sm:$0xff] %v2722
  %2728 = vst.msk [vmem:[%s2726 + $0x8] sm:$0xff] %vm704, %v2723
  %2729 = vst [vmem:[%s2726 + $0x10] sm:$0x1] %v2724
  %2730 = vst.msk [vmem:[%s2726 + $0x18] sm:$0x1] %vm707, %v2725
  %s2731 = scalar_lea.vmem %s0, 32
  %v2732 = vld [vmem:[%s2731] sm:$0xf]
  %v2733 = vld [vmem:[%s2731 + $0x4] sm:$0x7]
  %v2734 = vld [vmem:[%s1] sm:$0xff]
  %v2735 = vld [vmem:[%s1 + $0x8] sm:$0xff]
  %v2736 = vld [vmem:[%s1 + $0x10] sm:$0xff]
  %v2737 = vld [vmem:[%s1 + $0x18] sm:$0xff]
  %v2738 = vld [vmem:[%s1 + $0x20] sm:$0xff]
  %v2739 = vld [vmem:[%s1 + $0x28] sm:$0xff]
  %v2740 = vld [vmem:[%s1 + $0x30] sm:$0xff]
  %v2741 = vld [vmem:[%s1 + $0x38] sm:$0xff]
  %v2742 = vld [vmem:[%s1 + $0x40] sm:$0xff]
  %v2743 = vld [vmem:[%s1 + $0x48] sm:$0xff]
  %v2744 = vld [vmem:[%s1 + $0x50] sm:$0x33]
  %v2745 = vld [vmem:[%s29] sm:$0xff]
  %v2746 = vld [vmem:[%s29 + $0x8] sm:$0xff]
  %v2747 = vld [vmem:[%s29 + $0x10] sm:$0xff]
  %v2748 = vld [vmem:[%s29 + $0x18] sm:$0xff]
  %v2749 = vld [vmem:[%s29 + $0x20] sm:$0xff]
  %v2750 = vld [vmem:[%s29 + $0x28] sm:$0xff]
  %v2751 = vld [vmem:[%s29 + $0x30] sm:$0xff]
  %v2752 = vld [vmem:[%s29 + $0x38] sm:$0xff]
  %v2753 = vld [vmem:[%s29 + $0x40] sm:$0xff]
  %v2754 = vld [vmem:[%s29 + $0x48] sm:$0xff]
  %v2755 = vld [vmem:[%s29 + $0x50] sm:$0x33]
  %v2758 = vunpack.c.l.b16 %v2732
  %v2759 = vunpack.c.l.b16 %v2733
  %v2760 = vpack.c.b16 %v2759, %v2758
  %v2762 = vshrl.u32 %v2760, 16
  %v2764 = vshll.u32 %v2760, 16
  %v2766 = vrot.slane %v2764, 1
  %v2767 = vor.u32 %v2762, %v2766
  %v2779 = vunpack.c.l.b16 %v2745
  %v2780 = vunpack.c.h.b16 %v2745
  %v2781 = vunpack.c.l.b16 %v2746
  %v2782 = vunpack.c.h.b16 %v2746
  %v2783 = vunpack.c.l.b16 %v2747
  %v2784 = vunpack.c.h.b16 %v2747
  %v2785 = vunpack.c.l.b16 %v2748
  %v2786 = vunpack.c.h.b16 %v2748
  %v2787 = vunpack.c.l.b16 %v2749
  %v2788 = vunpack.c.h.b16 %v2749
  %v2789 = vunpack.c.l.b16 %v2750
  %v2790 = vunpack.c.h.b16 %v2750
  %v2791 = vunpack.c.l.b16 %v2751
  %v2792 = vunpack.c.h.b16 %v2751
  %v2793 = vunpack.c.l.b16 %v2752
  %v2794 = vunpack.c.h.b16 %v2752
  %v2795 = vunpack.c.l.b16 %v2753
  %v2796 = vunpack.c.h.b16 %v2753
  %v2797 = vunpack.c.l.b16 %v2754
  %v2798 = vunpack.c.h.b16 %v2754
  %v2799 = vunpack.c.l.b16 %v2755
  %v2800 = vunpack.c.h.b16 %v2755
  %v2801 = vpack.c.b16 %v2781, %v2779
  %v2802 = vpack.c.b16 %v2782, %v2780
  %v2803 = vpack.c.b16 %v2785, %v2783
  %v2804 = vpack.c.b16 %v2786, %v2784
  %v2805 = vpack.c.b16 %v2789, %v2787
  %v2806 = vpack.c.b16 %v2790, %v2788
  %v2807 = vpack.c.b16 %v2793, %v2791
  %v2808 = vpack.c.b16 %v2794, %v2792
  %v2809 = vpack.c.b16 %v2797, %v2795
  %v2810 = vpack.c.b16 %v2798, %v2796
  %v2811 = vpack.c.b16 %v2799, %v2799
  %v2812 = vpack.c.b16 %v2800, %v2800
  %v2824 = vsel %vm108, %v2767, 0
  %v2827 = vsel %vm112, %v2811, 0
  %v2830 = vsel %vm112, %v2812, 0
  %2832 = vmatprep.subr.bf16.mxu0 %v2802
  %2833 = vmatpush1.bf16.msra.mxu0 %v2801
  %2834 = vmatprep.subr.bf16.mxu0 %v2804
  %2835 = vmatpush1.bf16.msra.mxu0 %v2803
  %2836 = vmatprep.subr.bf16.mxu0 %v2806
  %2837 = vmatpush1.bf16.msra.mxu0 %v2805
  %2838 = vmatprep.subr.bf16.mxu0 %v2808
  %2839 = vmatpush1.bf16.msra.mxu0 %v2807
  %2840 = vmatprep.subr.bf16.mxu0 %v2810
  %2841 = vmatpush1.bf16.msra.mxu0 %v2809
  %2842 = vmatprep.subr.bf16.mxu0 %v2830
  %2843 = vmatpush1.bf16.msra.mxu0 %v2827
  %2844 = vmatprep.subr.bf16.mxu0 0
  %2845 = vmatpush1.bf16.msra.mxu0 0
  %2846 = vmatprep.subr.bf16.mxu0 0
  %2847 = vmatpush1.bf16.msra.mxu0 0
  %2848 = vmatprep.subr.bf16.mxu0 0
  %2849 = vmatpush1.bf16.msra.mxu0 0
  %2850 = vmatprep.subr.bf16.mxu0 0
  %2851 = vmatpush1.bf16.msra.mxu0 0
  %2852 = vmatprep.subr.bf16.mxu0 0
  %2853 = vmatpush1.bf16.msra.mxu0 0
  %2854 = vmatprep.subr.bf16.mxu0 0
  %2855 = vmatpush1.bf16.msra.mxu0 0
  %2856 = vmatprep.subr.bf16.mxu0 0
  %2857 = vmatpush1.bf16.msra.mxu0 0
  %2858 = vmatprep.subr.bf16.mxu0 0
  %2859 = vmatpush1.bf16.msra.mxu0 0
  %2860 = vmatprep.subr.bf16.mxu0 0
  %2861 = vmatpush1.bf16.msra.mxu0 0
  %2862 = vmatprep.subr.bf16.mxu0 0
  %2863 = vmatpush1.bf16.msra.mxu0 0
  %2864 = vmatprep.mubr.bf16.mxu0 0
  %2865 = vmatmul.mubr.bf16.gmra.mrb[0].mxu0 %v2824
  %v2866 = vpop.f32.mrb[0].mxu0
  %v2867 = vadd.f32 0.0, %v2866
  %v2868 = vpop.f32.mrb[0].mxu0
  %v2869 = vadd.f32 0.0, %v2868
  %v2870 = vpop.f32.mrb[0].mxu0
  %v2871 = vadd.f32 0.0, %v2870
  %v2872 = vpop.f32.mrb[0].mxu0
  %v2873 = vadd.f32 0.0, %v2872
  %2874 = vdwg.mxu0
  %v2886 = vunpack.c.l.b16 %v2734
  %v2887 = vunpack.c.h.b16 %v2734
  %v2888 = vunpack.c.l.b16 %v2735
  %v2889 = vunpack.c.h.b16 %v2735
  %v2890 = vunpack.c.l.b16 %v2736
  %v2891 = vunpack.c.h.b16 %v2736
  %v2892 = vunpack.c.l.b16 %v2737
  %v2893 = vunpack.c.h.b16 %v2737
  %v2894 = vunpack.c.l.b16 %v2738
  %v2895 = vunpack.c.h.b16 %v2738
  %v2896 = vunpack.c.l.b16 %v2739
  %v2897 = vunpack.c.h.b16 %v2739
  %v2898 = vunpack.c.l.b16 %v2740
  %v2899 = vunpack.c.h.b16 %v2740
  %v2900 = vunpack.c.l.b16 %v2741
  %v2901 = vunpack.c.h.b16 %v2741
  %v2902 = vunpack.c.l.b16 %v2742
  %v2903 = vunpack.c.h.b16 %v2742
  %v2904 = vunpack.c.l.b16 %v2743
  %v2905 = vunpack.c.h.b16 %v2743
  %v2906 = vunpack.c.l.b16 %v2744
  %v2907 = vunpack.c.h.b16 %v2744
  %v2908 = vpack.c.b16 %v2888, %v2886
  %v2909 = vpack.c.b16 %v2889, %v2887
  %v2910 = vpack.c.b16 %v2892, %v2890
  %v2911 = vpack.c.b16 %v2893, %v2891
  %v2912 = vpack.c.b16 %v2896, %v2894
  %v2913 = vpack.c.b16 %v2897, %v2895
  %v2914 = vpack.c.b16 %v2900, %v2898
  %v2915 = vpack.c.b16 %v2901, %v2899
  %v2916 = vpack.c.b16 %v2904, %v2902
  %v2917 = vpack.c.b16 %v2905, %v2903
  %v2918 = vpack.c.b16 %v2906, %v2906
  %v2919 = vpack.c.b16 %v2907, %v2907
  %v2930 = vsel %vm108, %v2760, 0
  %v2933 = vsel %vm112, %v2918, 0
  %v2936 = vsel %vm112, %v2919, 0
  %2938 = vmatprep.subr.bf16.mxu0 %v2909
  %2939 = vmatpush1.bf16.msra.mxu0 %v2908
  %2940 = vmatprep.subr.bf16.mxu0 %v2911
  %2941 = vmatpush1.bf16.msra.mxu0 %v2910
  %2942 = vmatprep.subr.bf16.mxu0 %v2913
  %2943 = vmatpush1.bf16.msra.mxu0 %v2912
  %2944 = vmatprep.subr.bf16.mxu0 %v2915
  %2945 = vmatpush1.bf16.msra.mxu0 %v2914
  %2946 = vmatprep.subr.bf16.mxu0 %v2917
  %2947 = vmatpush1.bf16.msra.mxu0 %v2916
  %2948 = vmatprep.subr.bf16.mxu0 %v2936
  %2949 = vmatpush1.bf16.msra.mxu0 %v2933
  %2950 = vmatprep.subr.bf16.mxu0 0
  %2951 = vmatpush1.bf16.msra.mxu0 0
  %2952 = vmatprep.subr.bf16.mxu0 0
  %2953 = vmatpush1.bf16.msra.mxu0 0
  %2954 = vmatprep.subr.bf16.mxu0 0
  %2955 = vmatpush1.bf16.msra.mxu0 0
  %2956 = vmatprep.subr.bf16.mxu0 0
  %2957 = vmatpush1.bf16.msra.mxu0 0
  %2958 = vmatprep.subr.bf16.mxu0 0
  %2959 = vmatpush1.bf16.msra.mxu0 0
  %2960 = vmatprep.subr.bf16.mxu0 0
  %2961 = vmatpush1.bf16.msra.mxu0 0
  %2962 = vmatprep.subr.bf16.mxu0 0
  %2963 = vmatpush1.bf16.msra.mxu0 0
  %2964 = vmatprep.subr.bf16.mxu0 0
  %2965 = vmatpush1.bf16.msra.mxu0 0
  %2966 = vmatprep.subr.bf16.mxu0 0
  %2967 = vmatpush1.bf16.msra.mxu0 0
  %2968 = vmatprep.subr.bf16.mxu0 0
  %2969 = vmatpush1.bf16.msra.mxu0 0
  %2970 = vmatprep.mubr.bf16.mxu0 0
  %2971 = vmatmul.mubr.bf16.gmra.mrb[0].mxu0 %v2930
  %v2972 = vpop.f32.mrb[0].mxu0
  %v2973 = vadd.f32 %v2867, %v2972
  %v2974 = vpop.f32.mrb[0].mxu0
  %v2975 = vadd.f32 %v2869, %v2974
  %v2976 = vpop.f32.mrb[0].mxu0
  %v2977 = vadd.f32 %v2871, %v2976
  %v2978 = vpop.f32.mrb[0].mxu0
  %v2979 = vadd.f32 %v2873, %v2978
  %2980 = vdwg.mxu0
  %v2981 = vld [vmem:[%s268] sm:$0xff]
  %v2982 = vld [vmem:[%s268 + $0x8] sm:$0xff]
  %v2983 = vld [vmem:[%s268 + $0x10] sm:$0xff]
  %v2984 = vld [vmem:[%s268 + $0x18] sm:$0xff]
  %v2985 = vld [vmem:[%s268 + $0x20] sm:$0xff]
  %v2986 = vld [vmem:[%s268 + $0x28] sm:$0xff]
  %v2987 = vld [vmem:[%s268 + $0x30] sm:$0xff]
  %v2988 = vld [vmem:[%s268 + $0x38] sm:$0xff]
  %v2989 = vld [vmem:[%s268 + $0x40] sm:$0xff]
  %v2990 = vld [vmem:[%s268 + $0x48] sm:$0xff]
  %v2991 = vld [vmem:[%s268 + $0x50] sm:$0x33]
  %v2992 = vrot.slane %v2760, 1
  %v3004 = vunpack.c.l.b16 %v2981
  %v3005 = vunpack.c.h.b16 %v2981
  %v3006 = vunpack.c.l.b16 %v2982
  %v3007 = vunpack.c.h.b16 %v2982
  %v3008 = vunpack.c.l.b16 %v2983
  %v3009 = vunpack.c.h.b16 %v2983
  %v3010 = vunpack.c.l.b16 %v2984
  %v3011 = vunpack.c.h.b16 %v2984
  %v3012 = vunpack.c.l.b16 %v2985
  %v3013 = vunpack.c.h.b16 %v2985
  %v3014 = vunpack.c.l.b16 %v2986
  %v3015 = vunpack.c.h.b16 %v2986
  %v3016 = vunpack.c.l.b16 %v2987
  %v3017 = vunpack.c.h.b16 %v2987
  %v3018 = vunpack.c.l.b16 %v2988
  %v3019 = vunpack.c.h.b16 %v2988
  %v3020 = vunpack.c.l.b16 %v2989
  %v3021 = vunpack.c.h.b16 %v2989
  %v3022 = vunpack.c.l.b16 %v2990
  %v3023 = vunpack.c.h.b16 %v2990
  %v3024 = vunpack.c.l.b16 %v2991
  %v3025 = vunpack.c.h.b16 %v2991
  %v3026 = vpack.c.b16 %v3006, %v3004
  %v3027 = vpack.c.b16 %v3007, %v3005
  %v3028 = vpack.c.b16 %v3010, %v3008
  %v3029 = vpack.c.b16 %v3011, %v3009
  %v3030 = vpack.c.b16 %v3014, %v3012
  %v3031 = vpack.c.b16 %v3015, %v3013
  %v3032 = vpack.c.b16 %v3018, %v3016
  %v3033 = vpack.c.b16 %v3019, %v3017
  %v3034 = vpack.c.b16 %v3022, %v3020
  %v3035 = vpack.c.b16 %v3023, %v3021
  %v3036 = vpack.c.b16 %v3024, %v3024
  %v3037 = vpack.c.b16 %v3025, %v3025
  %v3049 = vsel %vm108, %v2992, 0
  %v3052 = vsel %vm112, %v3036, 0
  %v3055 = vsel %vm112, %v3037, 0
  %3057 = vmatprep.subr.bf16.mxu0 %v3027
  %3058 = vmatpush1.bf16.msra.mxu0 %v3026
  %3059 = vmatprep.subr.bf16.mxu0 %v3029
  %3060 = vmatpush1.bf16.msra.mxu0 %v3028
  %3061 = vmatprep.subr.bf16.mxu0 %v3031
  %3062 = vmatpush1.bf16.msra.mxu0 %v3030
  %3063 = vmatprep.subr.bf16.mxu0 %v3033
  %3064 = vmatpush1.bf16.msra.mxu0 %v3032
  %3065 = vmatprep.subr.bf16.mxu0 %v3035
  %3066 = vmatpush1.bf16.msra.mxu0 %v3034
  %3067 = vmatprep.subr.bf16.mxu0 %v3055
  %3068 = vmatpush1.bf16.msra.mxu0 %v3052
  %3069 = vmatprep.subr.bf16.mxu0 0
  %3070 = vmatpush1.bf16.msra.mxu0 0
  %3071 = vmatprep.subr.bf16.mxu0 0
  %3072 = vmatpush1.bf16.msra.mxu0 0
  %3073 = vmatprep.subr.bf16.mxu0 0
  %3074 = vmatpush1.bf16.msra.mxu0 0
  %3075 = vmatprep.subr.bf16.mxu0 0
  %3076 = vmatpush1.bf16.msra.mxu0 0
  %3077 = vmatprep.subr.bf16.mxu0 0
  %3078 = vmatpush1.bf16.msra.mxu0 0
  %3079 = vmatprep.subr.bf16.mxu0 0
  %3080 = vmatpush1.bf16.msra.mxu0 0
  %3081 = vmatprep.subr.bf16.mxu0 0
  %3082 = vmatpush1.bf16.msra.mxu0 0
  %3083 = vmatprep.subr.bf16.mxu0 0
  %3084 = vmatpush1.bf16.msra.mxu0 0
  %3085 = vmatprep.subr.bf16.mxu0 0
  %3086 = vmatpush1.bf16.msra.mxu0 0
  %3087 = vmatprep.subr.bf16.mxu0 0
  %3088 = vmatpush1.bf16.msra.mxu0 0
  %3089 = vmatprep.mubr.bf16.mxu0 0
  %3090 = vmatmul.mubr.bf16.gmra.mrb[0].mxu0 %v3049
  %v3091 = vpop.f32.mrb[0].mxu0
  %v3092 = vadd.f32 0.0, %v3091
  %v3093 = vpop.f32.mrb[0].mxu0
  %v3094 = vadd.f32 0.0, %v3093
  %v3095 = vpop.f32.mrb[0].mxu0
  %v3096 = vadd.f32 0.0, %v3095
  %v3097 = vpop.f32.mrb[0].mxu0
  %v3098 = vadd.f32 0.0, %v3097
  %3099 = vdwg.mxu0
  %v3100 = vadd.f32 %v2973, %v3092
  %v3101 = vadd.f32 %v2975, %v3094
  %v3102 = vadd.f32 %v2977, %v3096
  %v3103 = vadd.f32 %v2979, %v3098
  %v3104 = vld [vmem:[%s392] sm:$0xff]
  %v3105 = vld [vmem:[%s392 + $0x8] sm:$0xff]
  %v3106 = vld [vmem:[%s392 + $0x10] sm:$0xff]
  %v3107 = vld [vmem:[%s392 + $0x18] sm:$0xff]
  %v3108 = vld [vmem:[%s392 + $0x20] sm:$0xff]
  %v3109 = vld [vmem:[%s392 + $0x28] sm:$0xff]
  %v3110 = vld [vmem:[%s392 + $0x30] sm:$0xff]
  %v3111 = vld [vmem:[%s392 + $0x38] sm:$0xff]
  %v3112 = vld [vmem:[%s392 + $0x40] sm:$0xff]
  %v3113 = vld [vmem:[%s392 + $0x48] sm:$0xff]
  %v3114 = vld [vmem:[%s392 + $0x50] sm:$0x33]
  %v3115 = vrot.slane %v2762, 1
  %v3116 = vrot.slane %v2764, 2
  %v3117 = vor.u32 %v3115, %v3116
  %v3129 = vunpack.c.l.b16 %v3104
  %v3130 = vunpack.c.h.b16 %v3104
  %v3131 = vunpack.c.l.b16 %v3105
  %v3132 = vunpack.c.h.b16 %v3105
  %v3133 = vunpack.c.l.b16 %v3106
  %v3134 = vunpack.c.h.b16 %v3106
  %v3135 = vunpack.c.l.b16 %v3107
  %v3136 = vunpack.c.h.b16 %v3107
  %v3137 = vunpack.c.l.b16 %v3108
  %v3138 = vunpack.c.h.b16 %v3108
  %v3139 = vunpack.c.l.b16 %v3109
  %v3140 = vunpack.c.h.b16 %v3109
  %v3141 = vunpack.c.l.b16 %v3110
  %v3142 = vunpack.c.h.b16 %v3110
  %v3143 = vunpack.c.l.b16 %v3111
  %v3144 = vunpack.c.h.b16 %v3111
  %v3145 = vunpack.c.l.b16 %v3112
  %v3146 = vunpack.c.h.b16 %v3112
  %v3147 = vunpack.c.l.b16 %v3113
  %v3148 = vunpack.c.h.b16 %v3113
  %v3149 = vunpack.c.l.b16 %v3114
  %v3150 = vunpack.c.h.b16 %v3114
  %v3151 = vpack.c.b16 %v3131, %v3129
  %v3152 = vpack.c.b16 %v3132, %v3130
  %v3153 = vpack.c.b16 %v3135, %v3133
  %v3154 = vpack.c.b16 %v3136, %v3134
  %v3155 = vpack.c.b16 %v3139, %v3137
  %v3156 = vpack.c.b16 %v3140, %v3138
  %v3157 = vpack.c.b16 %v3143, %v3141
  %v3158 = vpack.c.b16 %v3144, %v3142
  %v3159 = vpack.c.b16 %v3147, %v3145
  %v3160 = vpack.c.b16 %v3148, %v3146
  %v3161 = vpack.c.b16 %v3149, %v3149
  %v3162 = vpack.c.b16 %v3150, %v3150
  %v3174 = vsel %vm108, %v3117, 0
  %v3177 = vsel %vm112, %v3161, 0
  %v3180 = vsel %vm112, %v3162, 0
  %3182 = vmatprep.subr.bf16.mxu0 %v3152
  %3183 = vmatpush1.bf16.msra.mxu0 %v3151
  %3184 = vmatprep.subr.bf16.mxu0 %v3154
  %3185 = vmatpush1.bf16.msra.mxu0 %v3153
  %3186 = vmatprep.subr.bf16.mxu0 %v3156
  %3187 = vmatpush1.bf16.msra.mxu0 %v3155
  %3188 = vmatprep.subr.bf16.mxu0 %v3158
  %3189 = vmatpush1.bf16.msra.mxu0 %v3157
  %3190 = vmatprep.subr.bf16.mxu0 %v3160
  %3191 = vmatpush1.bf16.msra.mxu0 %v3159
  %3192 = vmatprep.subr.bf16.mxu0 %v3180
  %3193 = vmatpush1.bf16.msra.mxu0 %v3177
  %3194 = vmatprep.subr.bf16.mxu0 0
  %3195 = vmatpush1.bf16.msra.mxu0 0
  %3196 = vmatprep.subr.bf16.mxu0 0
  %3197 = vmatpush1.bf16.msra.mxu0 0
  %3198 = vmatprep.subr.bf16.mxu0 0
  %3199 = vmatpush1.bf16.msra.mxu0 0
  %3200 = vmatprep.subr.bf16.mxu0 0
  %3201 = vmatpush1.bf16.msra.mxu0 0
  %3202 = vmatprep.subr.bf16.mxu0 0
  %3203 = vmatpush1.bf16.msra.mxu0 0
  %3204 = vmatprep.subr.bf16.mxu0 0
  %3205 = vmatpush1.bf16.msra.mxu0 0
  %3206 = vmatprep.subr.bf16.mxu0 0
  %3207 = vmatpush1.bf16.msra.mxu0 0
  %3208 = vmatprep.subr.bf16.mxu0 0
  %3209 = vmatpush1.bf16.msra.mxu0 0
  %3210 = vmatprep.subr.bf16.mxu0 0
  %3211 = vmatpush1.bf16.msra.mxu0 0
  %3212 = vmatprep.subr.bf16.mxu0 0
  %3213 = vmatpush1.bf16.msra.mxu0 0
  %3214 = vmatprep.mubr.bf16.mxu0 0
  %3215 = vmatmul.mubr.bf16.gmra.mrb[0].mxu0 %v3174
  %v3216 = vpop.f32.mrb[0].mxu0
  %v3217 = vadd.f32 0.0, %v3216
  %v3218 = vpop.f32.mrb[0].mxu0
  %v3219 = vadd.f32 0.0, %v3218
  %v3220 = vpop.f32.mrb[0].mxu0
  %v3221 = vadd.f32 0.0, %v3220
  %v3222 = vpop.f32.mrb[0].mxu0
  %v3223 = vadd.f32 0.0, %v3222
  %3224 = vdwg.mxu0
  %v3225 = vadd.f32 %v3100, %v3217
  %v3226 = vadd.f32 %v3101, %v3219
  %v3227 = vadd.f32 %v3102, %v3221
  %v3228 = vadd.f32 %v3103, %v3223
  %v3229 = vld [vmem:[%s518] sm:$0xff]
  %v3230 = vld [vmem:[%s518 + $0x8] sm:$0xff]
  %v3231 = vld [vmem:[%s518 + $0x10] sm:$0xff]
  %v3232 = vld [vmem:[%s518 + $0x18] sm:$0xff]
  %v3233 = vld [vmem:[%s518 + $0x20] sm:$0xff]
  %v3234 = vld [vmem:[%s518 + $0x28] sm:$0xff]
  %v3235 = vld [vmem:[%s518 + $0x30] sm:$0xff]
  %v3236 = vld [vmem:[%s518 + $0x38] sm:$0xff]
  %v3237 = vld [vmem:[%s518 + $0x40] sm:$0xff]
  %v3238 = vld [vmem:[%s518 + $0x48] sm:$0xff]
  %v3239 = vld [vmem:[%s518 + $0x50] sm:$0x33]
  %v3240 = vrot.slane %v2760, 2
  %v3252 = vunpack.c.l.b16 %v3229
  %v3253 = vunpack.c.h.b16 %v3229
  %v3254 = vunpack.c.l.b16 %v3230
  %v3255 = vunpack.c.h.b16 %v3230
  %v3256 = vunpack.c.l.b16 %v3231
  %v3257 = vunpack.c.h.b16 %v3231
  %v3258 = vunpack.c.l.b16 %v3232
  %v3259 = vunpack.c.h.b16 %v3232
  %v3260 = vunpack.c.l.b16 %v3233
  %v3261 = vunpack.c.h.b16 %v3233
  %v3262 = vunpack.c.l.b16 %v3234
  %v3263 = vunpack.c.h.b16 %v3234
  %v3264 = vunpack.c.l.b16 %v3235
  %v3265 = vunpack.c.h.b16 %v3235
  %v3266 = vunpack.c.l.b16 %v3236
  %v3267 = vunpack.c.h.b16 %v3236
  %v3268 = vunpack.c.l.b16 %v3237
  %v3269 = vunpack.c.h.b16 %v3237
  %v3270 = vunpack.c.l.b16 %v3238
  %v3271 = vunpack.c.h.b16 %v3238
  %v3272 = vunpack.c.l.b16 %v3239
  %v3273 = vunpack.c.h.b16 %v3239
  %v3274 = vpack.c.b16 %v3254, %v3252
  %v3275 = vpack.c.b16 %v3255, %v3253
  %v3276 = vpack.c.b16 %v3258, %v3256
  %v3277 = vpack.c.b16 %v3259, %v3257
  %v3278 = vpack.c.b16 %v3262, %v3260
  %v3279 = vpack.c.b16 %v3263, %v3261
  %v3280 = vpack.c.b16 %v3266, %v3264
  %v3281 = vpack.c.b16 %v3267, %v3265
  %v3282 = vpack.c.b16 %v3270, %v3268
  %v3283 = vpack.c.b16 %v3271, %v3269
  %v3284 = vpack.c.b16 %v3272, %v3272
  %v3285 = vpack.c.b16 %v3273, %v3273
  %v3297 = vsel %vm108, %v3240, 0
  %v3300 = vsel %vm112, %v3284, 0
  %v3303 = vsel %vm112, %v3285, 0
  %3305 = vmatprep.subr.bf16.mxu0 %v3275
  %3306 = vmatpush1.bf16.msra.mxu0 %v3274
  %3307 = vmatprep.subr.bf16.mxu0 %v3277
  %3308 = vmatpush1.bf16.msra.mxu0 %v3276
  %3309 = vmatprep.subr.bf16.mxu0 %v3279
  %3310 = vmatpush1.bf16.msra.mxu0 %v3278
  %3311 = vmatprep.subr.bf16.mxu0 %v3281
  %3312 = vmatpush1.bf16.msra.mxu0 %v3280
  %3313 = vmatprep.subr.bf16.mxu0 %v3283
  %3314 = vmatpush1.bf16.msra.mxu0 %v3282
  %3315 = vmatprep.subr.bf16.mxu0 %v3303
  %3316 = vmatpush1.bf16.msra.mxu0 %v3300
  %3317 = vmatprep.subr.bf16.mxu0 0
  %3318 = vmatpush1.bf16.msra.mxu0 0
  %3319 = vmatprep.subr.bf16.mxu0 0
  %3320 = vmatpush1.bf16.msra.mxu0 0
  %3321 = vmatprep.subr.bf16.mxu0 0
  %3322 = vmatpush1.bf16.msra.mxu0 0
  %3323 = vmatprep.subr.bf16.mxu0 0
  %3324 = vmatpush1.bf16.msra.mxu0 0
  %3325 = vmatprep.subr.bf16.mxu0 0
  %3326 = vmatpush1.bf16.msra.mxu0 0
  %3327 = vmatprep.subr.bf16.mxu0 0
  %3328 = vmatpush1.bf16.msra.mxu0 0
  %3329 = vmatprep.subr.bf16.mxu0 0
  %3330 = vmatpush1.bf16.msra.mxu0 0
  %3331 = vmatprep.subr.bf16.mxu0 0
  %3332 = vmatpush1.bf16.msra.mxu0 0
  %3333 = vmatprep.subr.bf16.mxu0 0
  %3334 = vmatpush1.bf16.msra.mxu0 0
  %3335 = vmatprep.subr.bf16.mxu0 0
  %3336 = vmatpush1.bf16.msra.mxu0 0
  %3337 = vmatprep.mubr.bf16.mxu0 0
  %3338 = vmatmul.mubr.bf16.gmra.mrb[0].mxu0 %v3297
  %v3339 = vpop.f32.mrb[0].mxu0
  %v3340 = vadd.f32 0.0, %v3339
  %v3341 = vpop.f32.mrb[0].mxu0
  %v3342 = vadd.f32 0.0, %v3341
  %v3343 = vpop.f32.mrb[0].mxu0
  %v3344 = vadd.f32 0.0, %v3343
  %v3345 = vpop.f32.mrb[0].mxu0
  %v3346 = vadd.f32 0.0, %v3345
  %3347 = vdwg.mxu0
  %v3348 = vadd.f32 %v3225, %v3340
  %v3349 = vadd.f32 %v3226, %v3342
  %v3350 = vadd.f32 %v3227, %v3344
  %v3351 = vadd.f32 %v3228, %v3346
  %v3352 = vadd.f32 %v3348, %v646
  %v3353 = vadd.f32 %v3349, %v650
  %v3354 = vadd.f32 %v3350, %v646
  %v3355 = vadd.f32 %v3351, %v650
  %v3356 = vmax.f32 %v3352, 0.0
  %v3357 = vmax.f32 %v3353, 0.0
  %v3358 = vmax.f32 %v3354, 0.0
  %v3359 = vmax.f32 %v3355, 0.0
  %v3364 = vrot.slane %v3356, 1
  %v3365 = vrot.slane %v3358, 1
  %v3366 = vsel %vm665, %v3364, %v3365
  %v3367 = vrot.slane %v3357, 1
  %v3368 = vrot.slane %v3359, 1
  %v3369 = vsel %vm665, %v3367, %v3368
  %v3374 = vmax.f32 %v3356, %v3366
  %v3375 = vmax.f32 %v3357, %v3369
  %v3376 = vmax.f32 %v3358, %v3365
  %v3377 = vmax.f32 %v3359, %v3368
  %3382 = vrot.lane.b32.xlu0 %v3374, 112
  %v3383 = vpop.permute.xlu0 %3382
  %3384 = vrot.lane.b32.xlu0 %v3375, 112
  %v3385 = vpop.permute.xlu0 %3384
  %3386 = vrot.lane.b32.xlu0 %v3376, 112
  %v3387 = vpop.permute.xlu0 %3386
  %3388 = vrot.lane.b32.xlu0 %v3377, 112
  %v3389 = vpop.permute.xlu0 %3388
  %v3390 = vsel %vm692, %v3383, %v3385
  %v3391 = vsel %vm692, %v3387, %v3389
  %v3396 = vmax.f32 %v3374, %v3390
  %v3397 = vmax.f32 %v3375, %v3385
  %v3398 = vmax.f32 %v3376, %v3391
  %v3399 = vmax.f32 %v3377, %v3389
  %s3400 = scalar_lea.vmem %s3, 128
  %3401 = vst [vmem:[%s3400] sm:$0xff] %v3396
  %3402 = vst.msk [vmem:[%s3400 + $0x8] sm:$0xff] %vm704, %v3397
  %3403 = vst [vmem:[%s3400 + $0x10] sm:$0x1] %v3398
  %3404 = vst.msk [vmem:[%s3400 + $0x18] sm:$0x1] %vm707, %v3399
  %s3405 = scalar_lea.vmem %s0, 40
  %v3406 = vld [vmem:[%s3405] sm:$0xf]
  %v3407 = vld [vmem:[%s3405 + $0x4] sm:$0x7]
  %v3408 = vld [vmem:[%s1] sm:$0xff]
  %v3409 = vld [vmem:[%s1 + $0x8] sm:$0xff]
  %v3410 = vld [vmem:[%s1 + $0x10] sm:$0xff]
  %v3411 = vld [vmem:[%s1 + $0x18] sm:$0xff]
  %v3412 = vld [vmem:[%s1 + $0x20] sm:$0xff]
  %v3413 = vld [vmem:[%s1 + $0x28] sm:$0xff]
  %v3414 = vld [vmem:[%s1 + $0x30] sm:$0xff]
  %v3415 = vld [vmem:[%s1 + $0x38] sm:$0xff]
  %v3416 = vld [vmem:[%s1 + $0x40] sm:$0xff]
  %v3417 = vld [vmem:[%s1 + $0x48] sm:$0xff]
  %v3418 = vld [vmem:[%s1 + $0x50] sm:$0x33]
  %v3419 = vld [vmem:[%s29] sm:$0xff]
  %v3420 = vld [vmem:[%s29 + $0x8] sm:$0xff]
  %v3421 = vld [vmem:[%s29 + $0x10] sm:$0xff]
  %v3422 = vld [vmem:[%s29 + $0x18] sm:$0xff]
  %v3423 = vld [vmem:[%s29 + $0x20] sm:$0xff]
  %v3424 = vld [vmem:[%s29 + $0x28] sm:$0xff]
  %v3425 = vld [vmem:[%s29 + $0x30] sm:$0xff]
  %v3426 = vld [vmem:[%s29 + $0x38] sm:$0xff]
  %v3427 = vld [vmem:[%s29 + $0x40] sm:$0xff]
  %v3428 = vld [vmem:[%s29 + $0x48] sm:$0xff]
  %v3429 = vld [vmem:[%s29 + $0x50] sm:$0x33]
  %v3432 = vunpack.c.l.b16 %v3406
  %v3433 = vunpack.c.l.b16 %v3407
  %v3434 = vpack.c.b16 %v3433, %v3432
  %v3436 = vshrl.u32 %v3434, 16
  %v3438 = vshll.u32 %v3434, 16
  %v3440 = vrot.slane %v3438, 1
  %v3441 = vor.u32 %v3436, %v3440
  %v3453 = vunpack.c.l.b16 %v3419
  %v3454 = vunpack.c.h.b16 %v3419
  %v3455 = vunpack.c.l.b16 %v3420
  %v3456 = vunpack.c.h.b16 %v3420
  %v3457 = vunpack.c.l.b16 %v3421
  %v3458 = vunpack.c.h.b16 %v3421
  %v3459 = vunpack.c.l.b16 %v3422
  %v3460 = vunpack.c.h.b16 %v3422
  %v3461 = vunpack.c.l.b16 %v3423
  %v3462 = vunpack.c.h.b16 %v3423
  %v3463 = vunpack.c.l.b16 %v3424
  %v3464 = vunpack.c.h.b16 %v3424
  %v3465 = vunpack.c.l.b16 %v3425
  %v3466 = vunpack.c.h.b16 %v3425
  %v3467 = vunpack.c.l.b16 %v3426
  %v3468 = vunpack.c.h.b16 %v3426
  %v3469 = vunpack.c.l.b16 %v3427
  %v3470 = vunpack.c.h.b16 %v3427
  %v3471 = vunpack.c.l.b16 %v3428
  %v3472 = vunpack.c.h.b16 %v3428
  %v3473 = vunpack.c.l.b16 %v3429
  %v3474 = vunpack.c.h.b16 %v3429
  %v3475 = vpack.c.b16 %v3455, %v3453
  %v3476 = vpack.c.b16 %v3456, %v3454
  %v3477 = vpack.c.b16 %v3459, %v3457
  %v3478 = vpack.c.b16 %v3460, %v3458
  %v3479 = vpack.c.b16 %v3463, %v3461
  %v3480 = vpack.c.b16 %v3464, %v3462
  %v3481 = vpack.c.b16 %v3467, %v3465
  %v3482 = vpack.c.b16 %v3468, %v3466
  %v3483 = vpack.c.b16 %v3471, %v3469
  %v3484 = vpack.c.b16 %v3472, %v3470
  %v3485 = vpack.c.b16 %v3473, %v3473
  %v3486 = vpack.c.b16 %v3474, %v3474
  %v3498 = vsel %vm108, %v3441, 0
  %v3501 = vsel %vm112, %v3485, 0
  %v3504 = vsel %vm112, %v3486, 0
  %3506 = vmatprep.subr.bf16.mxu0 %v3476
  %3507 = vmatpush1.bf16.msra.mxu0 %v3475
  %3508 = vmatprep.subr.bf16.mxu0 %v3478
  %3509 = vmatpush1.bf16.msra.mxu0 %v3477
  %3510 = vmatprep.subr.bf16.mxu0 %v3480
  %3511 = vmatpush1.bf16.msra.mxu0 %v3479
  %3512 = vmatprep.subr.bf16.mxu0 %v3482
  %3513 = vmatpush1.bf16.msra.mxu0 %v3481
  %3514 = vmatprep.subr.bf16.mxu0 %v3484
  %3515 = vmatpush1.bf16.msra.mxu0 %v3483
  %3516 = vmatprep.subr.bf16.mxu0 %v3504
  %3517 = vmatpush1.bf16.msra.mxu0 %v3501
  %3518 = vmatprep.subr.bf16.mxu0 0
  %3519 = vmatpush1.bf16.msra.mxu0 0
  %3520 = vmatprep.subr.bf16.mxu0 0
  %3521 = vmatpush1.bf16.msra.mxu0 0
  %3522 = vmatprep.subr.bf16.mxu0 0
  %3523 = vmatpush1.bf16.msra.mxu0 0
  %3524 = vmatprep.subr.bf16.mxu0 0
  %3525 = vmatpush1.bf16.msra.mxu0 0
  %3526 = vmatprep.subr.bf16.mxu0 0
  %3527 = vmatpush1.bf16.msra.mxu0 0
  %3528 = vmatprep.subr.bf16.mxu0 0
  %3529 = vmatpush1.bf16.msra.mxu0 0
  %3530 = vmatprep.subr.bf16.mxu0 0
  %3531 = vmatpush1.bf16.msra.mxu0 0
  %3532 = vmatprep.subr.bf16.mxu0 0
  %3533 = vmatpush1.bf16.msra.mxu0 0
  %3534 = vmatprep.subr.bf16.mxu0 0
  %3535 = vmatpush1.bf16.msra.mxu0 0
  %3536 = vmatprep.subr.bf16.mxu0 0
  %3537 = vmatpush1.bf16.msra.mxu0 0
  %3538 = vmatprep.mubr.bf16.mxu0 0
  %3539 = vmatmul.mubr.bf16.gmra.mrb[0].mxu0 %v3498
  %v3540 = vpop.f32.mrb[0].mxu0
  %v3541 = vadd.f32 0.0, %v3540
  %v3542 = vpop.f32.mrb[0].mxu0
  %v3543 = vadd.f32 0.0, %v3542
  %v3544 = vpop.f32.mrb[0].mxu0
  %v3545 = vadd.f32 0.0, %v3544
  %v3546 = vpop.f32.mrb[0].mxu0
  %v3547 = vadd.f32 0.0, %v3546
  %3548 = vdwg.mxu0
  %v3560 = vunpack.c.l.b16 %v3408
  %v3561 = vunpack.c.h.b16 %v3408
  %v3562 = vunpack.c.l.b16 %v3409
  %v3563 = vunpack.c.h.b16 %v3409
  %v3564 = vunpack.c.l.b16 %v3410
  %v3565 = vunpack.c.h.b16 %v3410
  %v3566 = vunpack.c.l.b16 %v3411
  %v3567 = vunpack.c.h.b16 %v3411
  %v3568 = vunpack.c.l.b16 %v3412
  %v3569 = vunpack.c.h.b16 %v3412
  %v3570 = vunpack.c.l.b16 %v3413
  %v3571 = vunpack.c.h.b16 %v3413
  %v3572 = vunpack.c.l.b16 %v3414
  %v3573 = vunpack.c.h.b16 %v3414
  %v3574 = vunpack.c.l.b16 %v3415
  %v3575 = vunpack.c.h.b16 %v3415
  %v3576 = vunpack.c.l.b16 %v3416
  %v3577 = vunpack.c.h.b16 %v3416
  %v3578 = vunpack.c.l.b16 %v3417
  %v3579 = vunpack.c.h.b16 %v3417
  %v3580 = vunpack.c.l.b16 %v3418
  %v3581 = vunpack.c.h.b16 %v3418
  %v3582 = vpack.c.b16 %v3562, %v3560
  %v3583 = vpack.c.b16 %v3563, %v3561
  %v3584 = vpack.c.b16 %v3566, %v3564
  %v3585 = vpack.c.b16 %v3567, %v3565
  %v3586 = vpack.c.b16 %v3570, %v3568
  %v3587 = vpack.c.b16 %v3571, %v3569
  %v3588 = vpack.c.b16 %v3574, %v3572
  %v3589 = vpack.c.b16 %v3575, %v3573
  %v3590 = vpack.c.b16 %v3578, %v3576
  %v3591 = vpack.c.b16 %v3579, %v3577
  %v3592 = vpack.c.b16 %v3580, %v3580
  %v3593 = vpack.c.b16 %v3581, %v3581
  %v3604 = vsel %vm108, %v3434, 0
  %v3607 = vsel %vm112, %v3592, 0
  %v3610 = vsel %vm112, %v3593, 0
  %3612 = vmatprep.subr.bf16.mxu0 %v3583
  %3613 = vmatpush1.bf16.msra.mxu0 %v3582
  %3614 = vmatprep.subr.bf16.mxu0 %v3585
  %3615 = vmatpush1.bf16.msra.mxu0 %v3584
  %3616 = vmatprep.subr.bf16.mxu0 %v3587
  %3617 = vmatpush1.bf16.msra.mxu0 %v3586
  %3618 = vmatprep.subr.bf16.mxu0 %v3589
  %3619 = vmatpush1.bf16.msra.mxu0 %v3588
  %3620 = vmatprep.subr.bf16.mxu0 %v3591
  %3621 = vmatpush1.bf16.msra.mxu0 %v3590
  %3622 = vmatprep.subr.bf16.mxu0 %v3610
  %3623 = vmatpush1.bf16.msra.mxu0 %v3607
  %3624 = vmatprep.subr.bf16.mxu0 0
  %3625 = vmatpush1.bf16.msra.mxu0 0
  %3626 = vmatprep.subr.bf16.mxu0 0
  %3627 = vmatpush1.bf16.msra.mxu0 0
  %3628 = vmatprep.subr.bf16.mxu0 0
  %3629 = vmatpush1.bf16.msra.mxu0 0
  %3630 = vmatprep.subr.bf16.mxu0 0
  %3631 = vmatpush1.bf16.msra.mxu0 0
  %3632 = vmatprep.subr.bf16.mxu0 0
  %3633 = vmatpush1.bf16.msra.mxu0 0
  %3634 = vmatprep.subr.bf16.mxu0 0
  %3635 = vmatpush1.bf16.msra.mxu0 0
  %3636 = vmatprep.subr.bf16.mxu0 0
  %3637 = vmatpush1.bf16.msra.mxu0 0
  %3638 = vmatprep.subr.bf16.mxu0 0
  %3639 = vmatpush1.bf16.msra.mxu0 0
  %3640 = vmatprep.subr.bf16.mxu0 0
  %3641 = vmatpush1.bf16.msra.mxu0 0
  %3642 = vmatprep.subr.bf16.mxu0 0
  %3643 = vmatpush1.bf16.msra.mxu0 0
  %3644 = vmatprep.mubr.bf16.mxu0 0
  %3645 = vmatmul.mubr.bf16.gmra.mrb[0].mxu0 %v3604
  %v3646 = vpop.f32.mrb[0].mxu0
  %v3647 = vadd.f32 %v3541, %v3646
  %v3648 = vpop.f32.mrb[0].mxu0
  %v3649 = vadd.f32 %v3543, %v3648
  %v3650 = vpop.f32.mrb[0].mxu0
  %v3651 = vadd.f32 %v3545, %v3650
  %v3652 = vpop.f32.mrb[0].mxu0
  %v3653 = vadd.f32 %v3547, %v3652
  %3654 = vdwg.mxu0
  %v3655 = vld [vmem:[%s268] sm:$0xff]
  %v3656 = vld [vmem:[%s268 + $0x8] sm:$0xff]
  %v3657 = vld [vmem:[%s268 + $0x10] sm:$0xff]
  %v3658 = vld [vmem:[%s268 + $0x18] sm:$0xff]
  %v3659 = vld [vmem:[%s268 + $0x20] sm:$0xff]
  %v3660 = vld [vmem:[%s268 + $0x28] sm:$0xff]
  %v3661 = vld [vmem:[%s268 + $0x30] sm:$0xff]
  %v3662 = vld [vmem:[%s268 + $0x38] sm:$0xff]
  %v3663 = vld [vmem:[%s268 + $0x40] sm:$0xff]
  %v3664 = vld [vmem:[%s268 + $0x48] sm:$0xff]
  %v3665 = vld [vmem:[%s268 + $0x50] sm:$0x33]
  %v3666 = vrot.slane %v3434, 1
  %v3678 = vunpack.c.l.b16 %v3655
  %v3679 = vunpack.c.h.b16 %v3655
  %v3680 = vunpack.c.l.b16 %v3656
  %v3681 = vunpack.c.h.b16 %v3656
  %v3682 = vunpack.c.l.b16 %v3657
  %v3683 = vunpack.c.h.b16 %v3657
  %v3684 = vunpack.c.l.b16 %v3658
  %v3685 = vunpack.c.h.b16 %v3658
  %v3686 = vunpack.c.l.b16 %v3659
  %v3687 = vunpack.c.h.b16 %v3659
  %v3688 = vunpack.c.l.b16 %v3660
  %v3689 = vunpack.c.h.b16 %v3660
  %v3690 = vunpack.c.l.b16 %v3661
  %v3691 = vunpack.c.h.b16 %v3661
  %v3692 = vunpack.c.l.b16 %v3662
  %v3693 = vunpack.c.h.b16 %v3662
  %v3694 = vunpack.c.l.b16 %v3663
  %v3695 = vunpack.c.h.b16 %v3663
  %v3696 = vunpack.c.l.b16 %v3664
  %v3697 = vunpack.c.h.b16 %v3664
  %v3698 = vunpack.c.l.b16 %v3665
  %v3699 = vunpack.c.h.b16 %v3665
  %v3700 = vpack.c.b16 %v3680, %v3678
  %v3701 = vpack.c.b16 %v3681, %v3679
  %v3702 = vpack.c.b16 %v3684, %v3682
  %v3703 = vpack.c.b16 %v3685, %v3683
  %v3704 = vpack.c.b16 %v3688, %v3686
  %v3705 = vpack.c.b16 %v3689, %v3687
  %v3706 = vpack.c.b16 %v3692, %v3690
  %v3707 = vpack.c.b16 %v3693, %v3691
  %v3708 = vpack.c.b16 %v3696, %v3694
  %v3709 = vpack.c.b16 %v3697, %v3695
  %v3710 = vpack.c.b16 %v3698, %v3698
  %v3711 = vpack.c.b16 %v3699, %v3699
  %v3723 = vsel %vm108, %v3666, 0
  %v3726 = vsel %vm112, %v3710, 0
  %v3729 = vsel %vm112, %v3711, 0
  %3731 = vmatprep.subr.bf16.mxu0 %v3701
  %3732 = vmatpush1.bf16.msra.mxu0 %v3700
  %3733 = vmatprep.subr.bf16.mxu0 %v3703
  %3734 = vmatpush1.bf16.msra.mxu0 %v3702
  %3735 = vmatprep.subr.bf16.mxu0 %v3705
  %3736 = vmatpush1.bf16.msra.mxu0 %v3704
  %3737 = vmatprep.subr.bf16.mxu0 %v3707
  %3738 = vmatpush1.bf16.msra.mxu0 %v3706
  %3739 = vmatprep.subr.bf16.mxu0 %v3709
  %3740 = vmatpush1.bf16.msra.mxu0 %v3708
  %3741 = vmatprep.subr.bf16.mxu0 %v3729
  %3742 = vmatpush1.bf16.msra.mxu0 %v3726
  %3743 = vmatprep.subr.bf16.mxu0 0
  %3744 = vmatpush1.bf16.msra.mxu0 0
  %3745 = vmatprep.subr.bf16.mxu0 0
  %3746 = vmatpush1.bf16.msra.mxu0 0
  %3747 = vmatprep.subr.bf16.mxu0 0
  %3748 = vmatpush1.bf16.msra.mxu0 0
  %3749 = vmatprep.subr.bf16.mxu0 0
  %3750 = vmatpush1.bf16.msra.mxu0 0
  %3751 = vmatprep.subr.bf16.mxu0 0
  %3752 = vmatpush1.bf16.msra.mxu0 0
  %3753 = vmatprep.subr.bf16.mxu0 0
  %3754 = vmatpush1.bf16.msra.mxu0 0
  %3755 = vmatprep.subr.bf16.mxu0 0
  %3756 = vmatpush1.bf16.msra.mxu0 0
  %3757 = vmatprep.subr.bf16.mxu0 0
  %3758 = vmatpush1.bf16.msra.mxu0 0
  %3759 = vmatprep.subr.bf16.mxu0 0
  %3760 = vmatpush1.bf16.msra.mxu0 0
  %3761 = vmatprep.subr.bf16.mxu0 0
  %3762 = vmatpush1.bf16.msra.mxu0 0
  %3763 = vmatprep.mubr.bf16.mxu0 0
  %3764 = vmatmul.mubr.bf16.gmra.mrb[0].mxu0 %v3723
  %v3765 = vpop.f32.mrb[0].mxu0
  %v3766 = vadd.f32 0.0, %v3765
  %v3767 = vpop.f32.mrb[0].mxu0
  %v3768 = vadd.f32 0.0, %v3767
  %v3769 = vpop.f32.mrb[0].mxu0
  %v3770 = vadd.f32 0.0, %v3769
  %v3771 = vpop.f32.mrb[0].mxu0
  %v3772 = vadd.f32 0.0, %v3771
  %3773 = vdwg.mxu0
  %v3774 = vadd.f32 %v3647, %v3766
  %v3775 = vadd.f32 %v3649, %v3768
  %v3776 = vadd.f32 %v3651, %v3770
  %v3777 = vadd.f32 %v3653, %v3772
  %v3778 = vld [vmem:[%s392] sm:$0xff]
  %v3779 = vld [vmem:[%s392 + $0x8] sm:$0xff]
  %v3780 = vld [vmem:[%s392 + $0x10] sm:$0xff]
  %v3781 = vld [vmem:[%s392 + $0x18] sm:$0xff]
  %v3782 = vld [vmem:[%s392 + $0x20] sm:$0xff]
  %v3783 = vld [vmem:[%s392 + $0x28] sm:$0xff]
  %v3784 = vld [vmem:[%s392 + $0x30] sm:$0xff]
  %v3785 = vld [vmem:[%s392 + $0x38] sm:$0xff]
  %v3786 = vld [vmem:[%s392 + $0x40] sm:$0xff]
  %v3787 = vld [vmem:[%s392 + $0x48] sm:$0xff]
  %v3788 = vld [vmem:[%s392 + $0x50] sm:$0x33]
  %v3789 = vrot.slane %v3436, 1
  %v3790 = vrot.slane %v3438, 2
  %v3791 = vor.u32 %v3789, %v3790
  %v3803 = vunpack.c.l.b16 %v3778
  %v3804 = vunpack.c.h.b16 %v3778
  %v3805 = vunpack.c.l.b16 %v3779
  %v3806 = vunpack.c.h.b16 %v3779
  %v3807 = vunpack.c.l.b16 %v3780
  %v3808 = vunpack.c.h.b16 %v3780
  %v3809 = vunpack.c.l.b16 %v3781
  %v3810 = vunpack.c.h.b16 %v3781
  %v3811 = vunpack.c.l.b16 %v3782
  %v3812 = vunpack.c.h.b16 %v3782
  %v3813 = vunpack.c.l.b16 %v3783
  %v3814 = vunpack.c.h.b16 %v3783
  %v3815 = vunpack.c.l.b16 %v3784
  %v3816 = vunpack.c.h.b16 %v3784
  %v3817 = vunpack.c.l.b16 %v3785
  %v3818 = vunpack.c.h.b16 %v3785
  %v3819 = vunpack.c.l.b16 %v3786
  %v3820 = vunpack.c.h.b16 %v3786
  %v3821 = vunpack.c.l.b16 %v3787
  %v3822 = vunpack.c.h.b16 %v3787
  %v3823 = vunpack.c.l.b16 %v3788
  %v3824 = vunpack.c.h.b16 %v3788
  %v3825 = vpack.c.b16 %v3805, %v3803
  %v3826 = vpack.c.b16 %v3806, %v3804
  %v3827 = vpack.c.b16 %v3809, %v3807
  %v3828 = vpack.c.b16 %v3810, %v3808
  %v3829 = vpack.c.b16 %v3813, %v3811
  %v3830 = vpack.c.b16 %v3814, %v3812
  %v3831 = vpack.c.b16 %v3817, %v3815
  %v3832 = vpack.c.b16 %v3818, %v3816
  %v3833 = vpack.c.b16 %v3821, %v3819
  %v3834 = vpack.c.b16 %v3822, %v3820
  %v3835 = vpack.c.b16 %v3823, %v3823
  %v3836 = vpack.c.b16 %v3824, %v3824
  %v3848 = vsel %vm108, %v3791, 0
  %v3851 = vsel %vm112, %v3835, 0
  %v3854 = vsel %vm112, %v3836, 0
  %3856 = vmatprep.subr.bf16.mxu0 %v3826
  %3857 = vmatpush1.bf16.msra.mxu0 %v3825
  %3858 = vmatprep.subr.bf16.mxu0 %v3828
  %3859 = vmatpush1.bf16.msra.mxu0 %v3827
  %3860 = vmatprep.subr.bf16.mxu0 %v3830
  %3861 = vmatpush1.bf16.msra.mxu0 %v3829
  %3862 = vmatprep.subr.bf16.mxu0 %v3832
  %3863 = vmatpush1.bf16.msra.mxu0 %v3831
  %3864 = vmatprep.subr.bf16.mxu0 %v3834
  %3865 = vmatpush1.bf16.msra.mxu0 %v3833
  %3866 = vmatprep.subr.bf16.mxu0 %v3854
  %3867 = vmatpush1.bf16.msra.mxu0 %v3851
  %3868 = vmatprep.subr.bf16.mxu0 0
  %3869 = vmatpush1.bf16.msra.mxu0 0
  %3870 = vmatprep.subr.bf16.mxu0 0
  %3871 = vmatpush1.bf16.msra.mxu0 0
  %3872 = vmatprep.subr.bf16.mxu0 0
  %3873 = vmatpush1.bf16.msra.mxu0 0
  %3874 = vmatprep.subr.bf16.mxu0 0
  %3875 = vmatpush1.bf16.msra.mxu0 0
  %3876 = vmatprep.subr.bf16.mxu0 0
  %3877 = vmatpush1.bf16.msra.mxu0 0
  %3878 = vmatprep.subr.bf16.mxu0 0
  %3879 = vmatpush1.bf16.msra.mxu0 0
  %3880 = vmatprep.subr.bf16.mxu0 0
  %3881 = vmatpush1.bf16.msra.mxu0 0
  %3882 = vmatprep.subr.bf16.mxu0 0
  %3883 = vmatpush1.bf16.msra.mxu0 0
  %3884 = vmatprep.subr.bf16.mxu0 0
  %3885 = vmatpush1.bf16.msra.mxu0 0
  %3886 = vmatprep.subr.bf16.mxu0 0
  %3887 = vmatpush1.bf16.msra.mxu0 0
  %3888 = vmatprep.mubr.bf16.mxu0 0
  %3889 = vmatmul.mubr.bf16.gmra.mrb[0].mxu0 %v3848
  %v3890 = vpop.f32.mrb[0].mxu0
  %v3891 = vadd.f32 0.0, %v3890
  %v3892 = vpop.f32.mrb[0].mxu0
  %v3893 = vadd.f32 0.0, %v3892
  %v3894 = vpop.f32.mrb[0].mxu0
  %v3895 = vadd.f32 0.0, %v3894
  %v3896 = vpop.f32.mrb[0].mxu0
  %v3897 = vadd.f32 0.0, %v3896
  %3898 = vdwg.mxu0
  %v3899 = vadd.f32 %v3774, %v3891
  %v3900 = vadd.f32 %v3775, %v3893
  %v3901 = vadd.f32 %v3776, %v3895
  %v3902 = vadd.f32 %v3777, %v3897
  %v3903 = vld [vmem:[%s518] sm:$0xff]
  %v3904 = vld [vmem:[%s518 + $0x8] sm:$0xff]
  %v3905 = vld [vmem:[%s518 + $0x10] sm:$0xff]
  %v3906 = vld [vmem:[%s518 + $0x18] sm:$0xff]
  %v3907 = vld [vmem:[%s518 + $0x20] sm:$0xff]
  %v3908 = vld [vmem:[%s518 + $0x28] sm:$0xff]
  %v3909 = vld [vmem:[%s518 + $0x30] sm:$0xff]
  %v3910 = vld [vmem:[%s518 + $0x38] sm:$0xff]
  %v3911 = vld [vmem:[%s518 + $0x40] sm:$0xff]
  %v3912 = vld [vmem:[%s518 + $0x48] sm:$0xff]
  %v3913 = vld [vmem:[%s518 + $0x50] sm:$0x33]
  %v3914 = vrot.slane %v3434, 2
  %v3926 = vunpack.c.l.b16 %v3903
  %v3927 = vunpack.c.h.b16 %v3903
  %v3928 = vunpack.c.l.b16 %v3904
  %v3929 = vunpack.c.h.b16 %v3904
  %v3930 = vunpack.c.l.b16 %v3905
  %v3931 = vunpack.c.h.b16 %v3905
  %v3932 = vunpack.c.l.b16 %v3906
  %v3933 = vunpack.c.h.b16 %v3906
  %v3934 = vunpack.c.l.b16 %v3907
  %v3935 = vunpack.c.h.b16 %v3907
  %v3936 = vunpack.c.l.b16 %v3908
  %v3937 = vunpack.c.h.b16 %v3908
  %v3938 = vunpack.c.l.b16 %v3909
  %v3939 = vunpack.c.h.b16 %v3909
  %v3940 = vunpack.c.l.b16 %v3910
  %v3941 = vunpack.c.h.b16 %v3910
  %v3942 = vunpack.c.l.b16 %v3911
  %v3943 = vunpack.c.h.b16 %v3911
  %v3944 = vunpack.c.l.b16 %v3912
  %v3945 = vunpack.c.h.b16 %v3912
  %v3946 = vunpack.c.l.b16 %v3913
  %v3947 = vunpack.c.h.b16 %v3913
  %v3948 = vpack.c.b16 %v3928, %v3926
  %v3949 = vpack.c.b16 %v3929, %v3927
  %v3950 = vpack.c.b16 %v3932, %v3930
  %v3951 = vpack.c.b16 %v3933, %v3931
  %v3952 = vpack.c.b16 %v3936, %v3934
  %v3953 = vpack.c.b16 %v3937, %v3935
  %v3954 = vpack.c.b16 %v3940, %v3938
  %v3955 = vpack.c.b16 %v3941, %v3939
  %v3956 = vpack.c.b16 %v3944, %v3942
  %v3957 = vpack.c.b16 %v3945, %v3943
  %v3958 = vpack.c.b16 %v3946, %v3946
  %v3959 = vpack.c.b16 %v3947, %v3947
  %v3971 = vsel %vm108, %v3914, 0
  %v3974 = vsel %vm112, %v3958, 0
  %v3977 = vsel %vm112, %v3959, 0
  %3979 = vmatprep.subr.bf16.mxu0 %v3949
  %3980 = vmatpush1.bf16.msra.mxu0 %v3948
  %3981 = vmatprep.subr.bf16.mxu0 %v3951
  %3982 = vmatpush1.bf16.msra.mxu0 %v3950
  %3983 = vmatprep.subr.bf16.mxu0 %v3953
  %3984 = vmatpush1.bf16.msra.mxu0 %v3952
  %3985 = vmatprep.subr.bf16.mxu0 %v3955
  %3986 = vmatpush1.bf16.msra.mxu0 %v3954
  %3987 = vmatprep.subr.bf16.mxu0 %v3957
  %3988 = vmatpush1.bf16.msra.mxu0 %v3956
  %3989 = vmatprep.subr.bf16.mxu0 %v3977
  %3990 = vmatpush1.bf16.msra.mxu0 %v3974
  %3991 = vmatprep.subr.bf16.mxu0 0
  %3992 = vmatpush1.bf16.msra.mxu0 0
  %3993 = vmatprep.subr.bf16.mxu0 0
  %3994 = vmatpush1.bf16.msra.mxu0 0
  %3995 = vmatprep.subr.bf16.mxu0 0
  %3996 = vmatpush1.bf16.msra.mxu0 0
  %3997 = vmatprep.subr.bf16.mxu0 0
  %3998 = vmatpush1.bf16.msra.mxu0 0
  %3999 = vmatprep.subr.bf16.mxu0 0
  %4000 = vmatpush1.bf16.msra.mxu0 0
  %4001 = vmatprep.subr.bf16.mxu0 0
  %4002 = vmatpush1.bf16.msra.mxu0 0
  %4003 = vmatprep.subr.bf16.mxu0 0
  %4004 = vmatpush1.bf16.msra.mxu0 0
  %4005 = vmatprep.subr.bf16.mxu0 0
  %4006 = vmatpush1.bf16.msra.mxu0 0
  %4007 = vmatprep.subr.bf16.mxu0 0
  %4008 = vmatpush1.bf16.msra.mxu0 0
  %4009 = vmatprep.subr.bf16.mxu0 0
  %4010 = vmatpush1.bf16.msra.mxu0 0
  %4011 = vmatprep.mubr.bf16.mxu0 0
  %4012 = vmatmul.mubr.bf16.gmra.mrb[0].mxu0 %v3971
  %v4013 = vpop.f32.mrb[0].mxu0
  %v4014 = vadd.f32 0.0, %v4013
  %v4015 = vpop.f32.mrb[0].mxu0
  %v4016 = vadd.f32 0.0, %v4015
  %v4017 = vpop.f32.mrb[0].mxu0
  %v4018 = vadd.f32 0.0, %v4017
  %v4019 = vpop.f32.mrb[0].mxu0
  %v4020 = vadd.f32 0.0, %v4019
  %4021 = vdwg.mxu0
  %v4022 = vadd.f32 %v3899, %v4014
  %v4023 = vadd.f32 %v3900, %v4016
  %v4024 = vadd.f32 %v3901, %v4018
  %v4025 = vadd.f32 %v3902, %v4020
  %v4026 = vadd.f32 %v4022, %v646
  %v4027 = vadd.f32 %v4023, %v650
  %v4028 = vadd.f32 %v4024, %v646
  %v4029 = vadd.f32 %v4025, %v650
  %v4030 = vmax.f32 %v4026, 0.0
  %v4031 = vmax.f32 %v4027, 0.0
  %v4032 = vmax.f32 %v4028, 0.0
  %v4033 = vmax.f32 %v4029, 0.0
  %v4038 = vrot.slane %v4030, 1
  %v4039 = vrot.slane %v4032, 1
  %v4040 = vsel %vm665, %v4038, %v4039
  %v4041 = vrot.slane %v4031, 1
  %v4042 = vrot.slane %v4033, 1
  %v4043 = vsel %vm665, %v4041, %v4042
  %v4048 = vmax.f32 %v4030, %v4040
  %v4049 = vmax.f32 %v4031, %v4043
  %v4050 = vmax.f32 %v4032, %v4039
  %v4051 = vmax.f32 %v4033, %v4042
  %4056 = vrot.lane.b32.xlu0 %v4048, 112
  %v4057 = vpop.permute.xlu0 %4056
  %4058 = vrot.lane.b32.xlu0 %v4049, 112
  %v4059 = vpop.permute.xlu0 %4058
  %4060 = vrot.lane.b32.xlu0 %v4050, 112
  %v4061 = vpop.permute.xlu0 %4060
  %4062 = vrot.lane.b32.xlu0 %v4051, 112
  %v4063 = vpop.permute.xlu0 %4062
  %v4064 = vsel %vm692, %v4057, %v4059
  %v4065 = vsel %vm692, %v4061, %v4063
  %v4070 = vmax.f32 %v4048, %v4064
  %v4071 = vmax.f32 %v4049, %v4059
  %v4072 = vmax.f32 %v4050, %v4065
  %v4073 = vmax.f32 %v4051, %v4063
  %s4074 = scalar_lea.vmem %s3, 160
  %4075 = vst [vmem:[%s4074] sm:$0xff] %v4070
  %4076 = vst.msk [vmem:[%s4074 + $0x8] sm:$0xff] %vm704, %v4071
  %4077 = vst [vmem:[%s4074 + $0x10] sm:$0x1] %v4072
  %4078 = vst.msk [vmem:[%s4074 + $0x18] sm:$0x1] %vm707, %v4073
  %s4079 = scalar_lea.vmem %s0, 48
  %v4080 = vld [vmem:[%s4079] sm:$0xf]
  %v4081 = vld [vmem:[%s4079 + $0x4] sm:$0x7]
  %v4082 = vld [vmem:[%s1] sm:$0xff]
  %v4083 = vld [vmem:[%s1 + $0x8] sm:$0xff]
  %v4084 = vld [vmem:[%s1 + $0x10] sm:$0xff]
  %v4085 = vld [vmem:[%s1 + $0x18] sm:$0xff]
  %v4086 = vld [vmem:[%s1 + $0x20] sm:$0xff]
  %v4087 = vld [vmem:[%s1 + $0x28] sm:$0xff]
  %v4088 = vld [vmem:[%s1 + $0x30] sm:$0xff]
  %v4089 = vld [vmem:[%s1 + $0x38] sm:$0xff]
  %v4090 = vld [vmem:[%s1 + $0x40] sm:$0xff]
  %v4091 = vld [vmem:[%s1 + $0x48] sm:$0xff]
  %v4092 = vld [vmem:[%s1 + $0x50] sm:$0x33]
  %v4093 = vld [vmem:[%s29] sm:$0xff]
  %v4094 = vld [vmem:[%s29 + $0x8] sm:$0xff]
  %v4095 = vld [vmem:[%s29 + $0x10] sm:$0xff]
  %v4096 = vld [vmem:[%s29 + $0x18] sm:$0xff]
  %v4097 = vld [vmem:[%s29 + $0x20] sm:$0xff]
  %v4098 = vld [vmem:[%s29 + $0x28] sm:$0xff]
  %v4099 = vld [vmem:[%s29 + $0x30] sm:$0xff]
  %v4100 = vld [vmem:[%s29 + $0x38] sm:$0xff]
  %v4101 = vld [vmem:[%s29 + $0x40] sm:$0xff]
  %v4102 = vld [vmem:[%s29 + $0x48] sm:$0xff]
  %v4103 = vld [vmem:[%s29 + $0x50] sm:$0x33]
  %v4106 = vunpack.c.l.b16 %v4080
  %v4107 = vunpack.c.l.b16 %v4081
  %v4108 = vpack.c.b16 %v4107, %v4106
  %v4110 = vshrl.u32 %v4108, 16
  %v4112 = vshll.u32 %v4108, 16
  %v4114 = vrot.slane %v4112, 1
  %v4115 = vor.u32 %v4110, %v4114
  %v4127 = vunpack.c.l.b16 %v4093
  %v4128 = vunpack.c.h.b16 %v4093
  %v4129 = vunpack.c.l.b16 %v4094
  %v4130 = vunpack.c.h.b16 %v4094
  %v4131 = vunpack.c.l.b16 %v4095
  %v4132 = vunpack.c.h.b16 %v4095
  %v4133 = vunpack.c.l.b16 %v4096
  %v4134 = vunpack.c.h.b16 %v4096
  %v4135 = vunpack.c.l.b16 %v4097
  %v4136 = vunpack.c.h.b16 %v4097
  %v4137 = vunpack.c.l.b16 %v4098
  %v4138 = vunpack.c.h.b16 %v4098
  %v4139 = vunpack.c.l.b16 %v4099
  %v4140 = vunpack.c.h.b16 %v4099
  %v4141 = vunpack.c.l.b16 %v4100
  %v4142 = vunpack.c.h.b16 %v4100
  %v4143 = vunpack.c.l.b16 %v4101
  %v4144 = vunpack.c.h.b16 %v4101
  %v4145 = vunpack.c.l.b16 %v4102
  %v4146 = vunpack.c.h.b16 %v4102
  %v4147 = vunpack.c.l.b16 %v4103
  %v4148 = vunpack.c.h.b16 %v4103
  %v4149 = vpack.c.b16 %v4129, %v4127
  %v4150 = vpack.c.b16 %v4130, %v4128
  %v4151 = vpack.c.b16 %v4133, %v4131
  %v4152 = vpack.c.b16 %v4134, %v4132
  %v4153 = vpack.c.b16 %v4137, %v4135
  %v4154 = vpack.c.b16 %v4138, %v4136
  %v4155 = vpack.c.b16 %v4141, %v4139
  %v4156 = vpack.c.b16 %v4142, %v4140
  %v4157 = vpack.c.b16 %v4145, %v4143
  %v4158 = vpack.c.b16 %v4146, %v4144
  %v4159 = vpack.c.b16 %v4147, %v4147
  %v4160 = vpack.c.b16 %v4148, %v4148
  %v4172 = vsel %vm108, %v4115, 0
  %v4175 = vsel %vm112, %v4159, 0
  %v4178 = vsel %vm112, %v4160, 0
  %4180 = vmatprep.subr.bf16.mxu0 %v4150
  %4181 = vmatpush1.bf16.msra.mxu0 %v4149
  %4182 = vmatprep.subr.bf16.mxu0 %v4152
  %4183 = vmatpush1.bf16.msra.mxu0 %v4151
  %4184 = vmatprep.subr.bf16.mxu0 %v4154
  %4185 = vmatpush1.bf16.msra.mxu0 %v4153
  %4186 = vmatprep.subr.bf16.mxu0 %v4156
  %4187 = vmatpush1.bf16.msra.mxu0 %v4155
  %4188 = vmatprep.subr.bf16.mxu0 %v4158
  %4189 = vmatpush1.bf16.msra.mxu0 %v4157
  %4190 = vmatprep.subr.bf16.mxu0 %v4178
  %4191 = vmatpush1.bf16.msra.mxu0 %v4175
  %4192 = vmatprep.subr.bf16.mxu0 0
  %4193 = vmatpush1.bf16.msra.mxu0 0
  %4194 = vmatprep.subr.bf16.mxu0 0
  %4195 = vmatpush1.bf16.msra.mxu0 0
  %4196 = vmatprep.subr.bf16.mxu0 0
  %4197 = vmatpush1.bf16.msra.mxu0 0
  %4198 = vmatprep.subr.bf16.mxu0 0
  %4199 = vmatpush1.bf16.msra.mxu0 0
  %4200 = vmatprep.subr.bf16.mxu0 0
  %4201 = vmatpush1.bf16.msra.mxu0 0
  %4202 = vmatprep.subr.bf16.mxu0 0
  %4203 = vmatpush1.bf16.msra.mxu0 0
  %4204 = vmatprep.subr.bf16.mxu0 0
  %4205 = vmatpush1.bf16.msra.mxu0 0
  %4206 = vmatprep.subr.bf16.mxu0 0
  %4207 = vmatpush1.bf16.msra.mxu0 0
  %4208 = vmatprep.subr.bf16.mxu0 0
  %4209 = vmatpush1.bf16.msra.mxu0 0
  %4210 = vmatprep.subr.bf16.mxu0 0
  %4211 = vmatpush1.bf16.msra.mxu0 0
  %4212 = vmatprep.mubr.bf16.mxu0 0
  %4213 = vmatmul.mubr.bf16.gmra.mrb[0].mxu0 %v4172
  %v4214 = vpop.f32.mrb[0].mxu0
  %v4215 = vadd.f32 0.0, %v4214
  %v4216 = vpop.f32.mrb[0].mxu0
  %v4217 = vadd.f32 0.0, %v4216
  %v4218 = vpop.f32.mrb[0].mxu0
  %v4219 = vadd.f32 0.0, %v4218
  %v4220 = vpop.f32.mrb[0].mxu0
  %v4221 = vadd.f32 0.0, %v4220
  %4222 = vdwg.mxu0
  %v4234 = vunpack.c.l.b16 %v4082
  %v4235 = vunpack.c.h.b16 %v4082
  %v4236 = vunpack.c.l.b16 %v4083
  %v4237 = vunpack.c.h.b16 %v4083
  %v4238 = vunpack.c.l.b16 %v4084
  %v4239 = vunpack.c.h.b16 %v4084
  %v4240 = vunpack.c.l.b16 %v4085
  %v4241 = vunpack.c.h.b16 %v4085
  %v4242 = vunpack.c.l.b16 %v4086
  %v4243 = vunpack.c.h.b16 %v4086
  %v4244 = vunpack.c.l.b16 %v4087
  %v4245 = vunpack.c.h.b16 %v4087
  %v4246 = vunpack.c.l.b16 %v4088
  %v4247 = vunpack.c.h.b16 %v4088
  %v4248 = vunpack.c.l.b16 %v4089
  %v4249 = vunpack.c.h.b16 %v4089
  %v4250 = vunpack.c.l.b16 %v4090
  %v4251 = vunpack.c.h.b16 %v4090
  %v4252 = vunpack.c.l.b16 %v4091
  %v4253 = vunpack.c.h.b16 %v4091
  %v4254 = vunpack.c.l.b16 %v4092
  %v4255 = vunpack.c.h.b16 %v4092
  %v4256 = vpack.c.b16 %v4236, %v4234
  %v4257 = vpack.c.b16 %v4237, %v4235
  %v4258 = vpack.c.b16 %v4240, %v4238
  %v4259 = vpack.c.b16 %v4241, %v4239
  %v4260 = vpack.c.b16 %v4244, %v4242
  %v4261 = vpack.c.b16 %v4245, %v4243
  %v4262 = vpack.c.b16 %v4248, %v4246
  %v4263 = vpack.c.b16 %v4249, %v4247
  %v4264 = vpack.c.b16 %v4252, %v4250
  %v4265 = vpack.c.b16 %v4253, %v4251
  %v4266 = vpack.c.b16 %v4254, %v4254
  %v4267 = vpack.c.b16 %v4255, %v4255
  %v4278 = vsel %vm108, %v4108, 0
  %v4281 = vsel %vm112, %v4266, 0
  %v4284 = vsel %vm112, %v4267, 0
  %4286 = vmatprep.subr.bf16.mxu0 %v4257
  %4287 = vmatpush1.bf16.msra.mxu0 %v4256
  %4288 = vmatprep.subr.bf16.mxu0 %v4259
  %4289 = vmatpush1.bf16.msra.mxu0 %v4258
  %4290 = vmatprep.subr.bf16.mxu0 %v4261
  %4291 = vmatpush1.bf16.msra.mxu0 %v4260
  %4292 = vmatprep.subr.bf16.mxu0 %v4263
  %4293 = vmatpush1.bf16.msra.mxu0 %v4262
  %4294 = vmatprep.subr.bf16.mxu0 %v4265
  %4295 = vmatpush1.bf16.msra.mxu0 %v4264
  %4296 = vmatprep.subr.bf16.mxu0 %v4284
  %4297 = vmatpush1.bf16.msra.mxu0 %v4281
  %4298 = vmatprep.subr.bf16.mxu0 0
  %4299 = vmatpush1.bf16.msra.mxu0 0
  %4300 = vmatprep.subr.bf16.mxu0 0
  %4301 = vmatpush1.bf16.msra.mxu0 0
  %4302 = vmatprep.subr.bf16.mxu0 0
  %4303 = vmatpush1.bf16.msra.mxu0 0
  %4304 = vmatprep.subr.bf16.mxu0 0
  %4305 = vmatpush1.bf16.msra.mxu0 0
  %4306 = vmatprep.subr.bf16.mxu0 0
  %4307 = vmatpush1.bf16.msra.mxu0 0
  %4308 = vmatprep.subr.bf16.mxu0 0
  %4309 = vmatpush1.bf16.msra.mxu0 0
  %4310 = vmatprep.subr.bf16.mxu0 0
  %4311 = vmatpush1.bf16.msra.mxu0 0
  %4312 = vmatprep.subr.bf16.mxu0 0
  %4313 = vmatpush1.bf16.msra.mxu0 0
  %4314 = vmatprep.subr.bf16.mxu0 0
  %4315 = vmatpush1.bf16.msra.mxu0 0
  %4316 = vmatprep.subr.bf16.mxu0 0
  %4317 = vmatpush1.bf16.msra.mxu0 0
  %4318 = vmatprep.mubr.bf16.mxu0 0
  %4319 = vmatmul.mubr.bf16.gmra.mrb[0].mxu0 %v4278
  %v4320 = vpop.f32.mrb[0].mxu0
  %v4321 = vadd.f32 %v4215, %v4320
  %v4322 = vpop.f32.mrb[0].mxu0
  %v4323 = vadd.f32 %v4217, %v4322
  %v4324 = vpop.f32.mrb[0].mxu0
  %v4325 = vadd.f32 %v4219, %v4324
  %v4326 = vpop.f32.mrb[0].mxu0
  %v4327 = vadd.f32 %v4221, %v4326
  %4328 = vdwg.mxu0
  %v4329 = vld [vmem:[%s268] sm:$0xff]
  %v4330 = vld [vmem:[%s268 + $0x8] sm:$0xff]
  %v4331 = vld [vmem:[%s268 + $0x10] sm:$0xff]
  %v4332 = vld [vmem:[%s268 + $0x18] sm:$0xff]
  %v4333 = vld [vmem:[%s268 + $0x20] sm:$0xff]
  %v4334 = vld [vmem:[%s268 + $0x28] sm:$0xff]
  %v4335 = vld [vmem:[%s268 + $0x30] sm:$0xff]
  %v4336 = vld [vmem:[%s268 + $0x38] sm:$0xff]
  %v4337 = vld [vmem:[%s268 + $0x40] sm:$0xff]
  %v4338 = vld [vmem:[%s268 + $0x48] sm:$0xff]
  %v4339 = vld [vmem:[%s268 + $0x50] sm:$0x33]
  %v4340 = vrot.slane %v4108, 1
  %v4352 = vunpack.c.l.b16 %v4329
  %v4353 = vunpack.c.h.b16 %v4329
  %v4354 = vunpack.c.l.b16 %v4330
  %v4355 = vunpack.c.h.b16 %v4330
  %v4356 = vunpack.c.l.b16 %v4331
  %v4357 = vunpack.c.h.b16 %v4331
  %v4358 = vunpack.c.l.b16 %v4332
  %v4359 = vunpack.c.h.b16 %v4332
  %v4360 = vunpack.c.l.b16 %v4333
  %v4361 = vunpack.c.h.b16 %v4333
  %v4362 = vunpack.c.l.b16 %v4334
  %v4363 = vunpack.c.h.b16 %v4334
  %v4364 = vunpack.c.l.b16 %v4335
  %v4365 = vunpack.c.h.b16 %v4335
  %v4366 = vunpack.c.l.b16 %v4336
  %v4367 = vunpack.c.h.b16 %v4336
  %v4368 = vunpack.c.l.b16 %v4337
  %v4369 = vunpack.c.h.b16 %v4337
  %v4370 = vunpack.c.l.b16 %v4338
  %v4371 = vunpack.c.h.b16 %v4338
  %v4372 = vunpack.c.l.b16 %v4339
  %v4373 = vunpack.c.h.b16 %v4339
  %v4374 = vpack.c.b16 %v4354, %v4352
  %v4375 = vpack.c.b16 %v4355, %v4353
  %v4376 = vpack.c.b16 %v4358, %v4356
  %v4377 = vpack.c.b16 %v4359, %v4357
  %v4378 = vpack.c.b16 %v4362, %v4360
  %v4379 = vpack.c.b16 %v4363, %v4361
  %v4380 = vpack.c.b16 %v4366, %v4364
  %v4381 = vpack.c.b16 %v4367, %v4365
  %v4382 = vpack.c.b16 %v4370, %v4368
  %v4383 = vpack.c.b16 %v4371, %v4369
  %v4384 = vpack.c.b16 %v4372, %v4372
  %v4385 = vpack.c.b16 %v4373, %v4373
  %v4397 = vsel %vm108, %v4340, 0
  %v4400 = vsel %vm112, %v4384, 0
  %v4403 = vsel %vm112, %v4385, 0
  %4405 = vmatprep.subr.bf16.mxu0 %v4375
  %4406 = vmatpush1.bf16.msra.mxu0 %v4374
  %4407 = vmatprep.subr.bf16.mxu0 %v4377
  %4408 = vmatpush1.bf16.msra.mxu0 %v4376
  %4409 = vmatprep.subr.bf16.mxu0 %v4379
  %4410 = vmatpush1.bf16.msra.mxu0 %v4378
  %4411 = vmatprep.subr.bf16.mxu0 %v4381
  %4412 = vmatpush1.bf16.msra.mxu0 %v4380
  %4413 = vmatprep.subr.bf16.mxu0 %v4383
  %4414 = vmatpush1.bf16.msra.mxu0 %v4382
  %4415 = vmatprep.subr.bf16.mxu0 %v4403
  %4416 = vmatpush1.bf16.msra.mxu0 %v4400
  %4417 = vmatprep.subr.bf16.mxu0 0
  %4418 = vmatpush1.bf16.msra.mxu0 0
  %4419 = vmatprep.subr.bf16.mxu0 0
  %4420 = vmatpush1.bf16.msra.mxu0 0
  %4421 = vmatprep.subr.bf16.mxu0 0
  %4422 = vmatpush1.bf16.msra.mxu0 0
  %4423 = vmatprep.subr.bf16.mxu0 0
  %4424 = vmatpush1.bf16.msra.mxu0 0
  %4425 = vmatprep.subr.bf16.mxu0 0
  %4426 = vmatpush1.bf16.msra.mxu0 0
  %4427 = vmatprep.subr.bf16.mxu0 0
  %4428 = vmatpush1.bf16.msra.mxu0 0
  %4429 = vmatprep.subr.bf16.mxu0 0
  %4430 = vmatpush1.bf16.msra.mxu0 0
  %4431 = vmatprep.subr.bf16.mxu0 0
  %4432 = vmatpush1.bf16.msra.mxu0 0
  %4433 = vmatprep.subr.bf16.mxu0 0
  %4434 = vmatpush1.bf16.msra.mxu0 0
  %4435 = vmatprep.subr.bf16.mxu0 0
  %4436 = vmatpush1.bf16.msra.mxu0 0
  %4437 = vmatprep.mubr.bf16.mxu0 0
  %4438 = vmatmul.mubr.bf16.gmra.mrb[0].mxu0 %v4397
  %v4439 = vpop.f32.mrb[0].mxu0
  %v4440 = vadd.f32 0.0, %v4439
  %v4441 = vpop.f32.mrb[0].mxu0
  %v4442 = vadd.f32 0.0, %v4441
  %v4443 = vpop.f32.mrb[0].mxu0
  %v4444 = vadd.f32 0.0, %v4443
  %v4445 = vpop.f32.mrb[0].mxu0
  %v4446 = vadd.f32 0.0, %v4445
  %4447 = vdwg.mxu0
  %v4448 = vadd.f32 %v4321, %v4440
  %v4449 = vadd.f32 %v4323, %v4442
  %v4450 = vadd.f32 %v4325, %v4444
  %v4451 = vadd.f32 %v4327, %v4446
  %v4452 = vld [vmem:[%s392] sm:$0xff]
  %v4453 = vld [vmem:[%s392 + $0x8] sm:$0xff]
  %v4454 = vld [vmem:[%s392 + $0x10] sm:$0xff]
  %v4455 = vld [vmem:[%s392 + $0x18] sm:$0xff]
  %v4456 = vld [vmem:[%s392 + $0x20] sm:$0xff]
  %v4457 = vld [vmem:[%s392 + $0x28] sm:$0xff]
  %v4458 = vld [vmem:[%s392 + $0x30] sm:$0xff]
  %v4459 = vld [vmem:[%s392 + $0x38] sm:$0xff]
  %v4460 = vld [vmem:[%s392 + $0x40] sm:$0xff]
  %v4461 = vld [vmem:[%s392 + $0x48] sm:$0xff]
  %v4462 = vld [vmem:[%s392 + $0x50] sm:$0x33]
  %v4463 = vrot.slane %v4110, 1
  %v4464 = vrot.slane %v4112, 2
  %v4465 = vor.u32 %v4463, %v4464
  %v4477 = vunpack.c.l.b16 %v4452
  %v4478 = vunpack.c.h.b16 %v4452
  %v4479 = vunpack.c.l.b16 %v4453
  %v4480 = vunpack.c.h.b16 %v4453
  %v4481 = vunpack.c.l.b16 %v4454
  %v4482 = vunpack.c.h.b16 %v4454
  %v4483 = vunpack.c.l.b16 %v4455
  %v4484 = vunpack.c.h.b16 %v4455
  %v4485 = vunpack.c.l.b16 %v4456
  %v4486 = vunpack.c.h.b16 %v4456
  %v4487 = vunpack.c.l.b16 %v4457
  %v4488 = vunpack.c.h.b16 %v4457
  %v4489 = vunpack.c.l.b16 %v4458
  %v4490 = vunpack.c.h.b16 %v4458
  %v4491 = vunpack.c.l.b16 %v4459
  %v4492 = vunpack.c.h.b16 %v4459
  %v4493 = vunpack.c.l.b16 %v4460
  %v4494 = vunpack.c.h.b16 %v4460
  %v4495 = vunpack.c.l.b16 %v4461
  %v4496 = vunpack.c.h.b16 %v4461
  %v4497 = vunpack.c.l.b16 %v4462
  %v4498 = vunpack.c.h.b16 %v4462
  %v4499 = vpack.c.b16 %v4479, %v4477
  %v4500 = vpack.c.b16 %v4480, %v4478
  %v4501 = vpack.c.b16 %v4483, %v4481
  %v4502 = vpack.c.b16 %v4484, %v4482
  %v4503 = vpack.c.b16 %v4487, %v4485
  %v4504 = vpack.c.b16 %v4488, %v4486
  %v4505 = vpack.c.b16 %v4491, %v4489
  %v4506 = vpack.c.b16 %v4492, %v4490
  %v4507 = vpack.c.b16 %v4495, %v4493
  %v4508 = vpack.c.b16 %v4496, %v4494
  %v4509 = vpack.c.b16 %v4497, %v4497
  %v4510 = vpack.c.b16 %v4498, %v4498
  %v4522 = vsel %vm108, %v4465, 0
  %v4525 = vsel %vm112, %v4509, 0
  %v4528 = vsel %vm112, %v4510, 0
  %4530 = vmatprep.subr.bf16.mxu0 %v4500
  %4531 = vmatpush1.bf16.msra.mxu0 %v4499
  %4532 = vmatprep.subr.bf16.mxu0 %v4502
  %4533 = vmatpush1.bf16.msra.mxu0 %v4501
  %4534 = vmatprep.subr.bf16.mxu0 %v4504
  %4535 = vmatpush1.bf16.msra.mxu0 %v4503
  %4536 = vmatprep.subr.bf16.mxu0 %v4506
  %4537 = vmatpush1.bf16.msra.mxu0 %v4505
  %4538 = vmatprep.subr.bf16.mxu0 %v4508
  %4539 = vmatpush1.bf16.msra.mxu0 %v4507
  %4540 = vmatprep.subr.bf16.mxu0 %v4528
  %4541 = vmatpush1.bf16.msra.mxu0 %v4525
  %4542 = vmatprep.subr.bf16.mxu0 0
  %4543 = vmatpush1.bf16.msra.mxu0 0
  %4544 = vmatprep.subr.bf16.mxu0 0
  %4545 = vmatpush1.bf16.msra.mxu0 0
  %4546 = vmatprep.subr.bf16.mxu0 0
  %4547 = vmatpush1.bf16.msra.mxu0 0
  %4548 = vmatprep.subr.bf16.mxu0 0
  %4549 = vmatpush1.bf16.msra.mxu0 0
  %4550 = vmatprep.subr.bf16.mxu0 0
  %4551 = vmatpush1.bf16.msra.mxu0 0
  %4552 = vmatprep.subr.bf16.mxu0 0
  %4553 = vmatpush1.bf16.msra.mxu0 0
  %4554 = vmatprep.subr.bf16.mxu0 0
  %4555 = vmatpush1.bf16.msra.mxu0 0
  %4556 = vmatprep.subr.bf16.mxu0 0
  %4557 = vmatpush1.bf16.msra.mxu0 0
  %4558 = vmatprep.subr.bf16.mxu0 0
  %4559 = vmatpush1.bf16.msra.mxu0 0
  %4560 = vmatprep.subr.bf16.mxu0 0
  %4561 = vmatpush1.bf16.msra.mxu0 0
  %4562 = vmatprep.mubr.bf16.mxu0 0
  %4563 = vmatmul.mubr.bf16.gmra.mrb[0].mxu0 %v4522
  %v4564 = vpop.f32.mrb[0].mxu0
  %v4565 = vadd.f32 0.0, %v4564
  %v4566 = vpop.f32.mrb[0].mxu0
  %v4567 = vadd.f32 0.0, %v4566
  %v4568 = vpop.f32.mrb[0].mxu0
  %v4569 = vadd.f32 0.0, %v4568
  %v4570 = vpop.f32.mrb[0].mxu0
  %v4571 = vadd.f32 0.0, %v4570
  %4572 = vdwg.mxu0
  %v4573 = vadd.f32 %v4448, %v4565
  %v4574 = vadd.f32 %v4449, %v4567
  %v4575 = vadd.f32 %v4450, %v4569
  %v4576 = vadd.f32 %v4451, %v4571
  %v4577 = vld [vmem:[%s518] sm:$0xff]
  %v4578 = vld [vmem:[%s518 + $0x8] sm:$0xff]
  %v4579 = vld [vmem:[%s518 + $0x10] sm:$0xff]
  %v4580 = vld [vmem:[%s518 + $0x18] sm:$0xff]
  %v4581 = vld [vmem:[%s518 + $0x20] sm:$0xff]
  %v4582 = vld [vmem:[%s518 + $0x28] sm:$0xff]
  %v4583 = vld [vmem:[%s518 + $0x30] sm:$0xff]
  %v4584 = vld [vmem:[%s518 + $0x38] sm:$0xff]
  %v4585 = vld [vmem:[%s518 + $0x40] sm:$0xff]
  %v4586 = vld [vmem:[%s518 + $0x48] sm:$0xff]
  %v4587 = vld [vmem:[%s518 + $0x50] sm:$0x33]
  %v4588 = vrot.slane %v4108, 2
  %v4600 = vunpack.c.l.b16 %v4577
  %v4601 = vunpack.c.h.b16 %v4577
  %v4602 = vunpack.c.l.b16 %v4578
  %v4603 = vunpack.c.h.b16 %v4578
  %v4604 = vunpack.c.l.b16 %v4579
  %v4605 = vunpack.c.h.b16 %v4579
  %v4606 = vunpack.c.l.b16 %v4580
  %v4607 = vunpack.c.h.b16 %v4580
  %v4608 = vunpack.c.l.b16 %v4581
  %v4609 = vunpack.c.h.b16 %v4581
  %v4610 = vunpack.c.l.b16 %v4582
  %v4611 = vunpack.c.h.b16 %v4582
  %v4612 = vunpack.c.l.b16 %v4583
  %v4613 = vunpack.c.h.b16 %v4583
  %v4614 = vunpack.c.l.b16 %v4584
  %v4615 = vunpack.c.h.b16 %v4584
  %v4616 = vunpack.c.l.b16 %v4585
  %v4617 = vunpack.c.h.b16 %v4585
  %v4618 = vunpack.c.l.b16 %v4586
  %v4619 = vunpack.c.h.b16 %v4586
  %v4620 = vunpack.c.l.b16 %v4587
  %v4621 = vunpack.c.h.b16 %v4587
  %v4622 = vpack.c.b16 %v4602, %v4600
  %v4623 = vpack.c.b16 %v4603, %v4601
  %v4624 = vpack.c.b16 %v4606, %v4604
  %v4625 = vpack.c.b16 %v4607, %v4605
  %v4626 = vpack.c.b16 %v4610, %v4608
  %v4627 = vpack.c.b16 %v4611, %v4609
  %v4628 = vpack.c.b16 %v4614, %v4612
  %v4629 = vpack.c.b16 %v4615, %v4613
  %v4630 = vpack.c.b16 %v4618, %v4616
  %v4631 = vpack.c.b16 %v4619, %v4617
  %v4632 = vpack.c.b16 %v4620, %v4620
  %v4633 = vpack.c.b16 %v4621, %v4621
  %v4645 = vsel %vm108, %v4588, 0
  %v4648 = vsel %vm112, %v4632, 0
  %v4651 = vsel %vm112, %v4633, 0
  %4653 = vmatprep.subr.bf16.mxu0 %v4623
  %4654 = vmatpush1.bf16.msra.mxu0 %v4622
  %4655 = vmatprep.subr.bf16.mxu0 %v4625
  %4656 = vmatpush1.bf16.msra.mxu0 %v4624
  %4657 = vmatprep.subr.bf16.mxu0 %v4627
  %4658 = vmatpush1.bf16.msra.mxu0 %v4626
  %4659 = vmatprep.subr.bf16.mxu0 %v4629
  %4660 = vmatpush1.bf16.msra.mxu0 %v4628
  %4661 = vmatprep.subr.bf16.mxu0 %v4631
  %4662 = vmatpush1.bf16.msra.mxu0 %v4630
  %4663 = vmatprep.subr.bf16.mxu0 %v4651
  %4664 = vmatpush1.bf16.msra.mxu0 %v4648
  %4665 = vmatprep.subr.bf16.mxu0 0
  %4666 = vmatpush1.bf16.msra.mxu0 0
  %4667 = vmatprep.subr.bf16.mxu0 0
  %4668 = vmatpush1.bf16.msra.mxu0 0
  %4669 = vmatprep.subr.bf16.mxu0 0
  %4670 = vmatpush1.bf16.msra.mxu0 0
  %4671 = vmatprep.subr.bf16.mxu0 0
  %4672 = vmatpush1.bf16.msra.mxu0 0
  %4673 = vmatprep.subr.bf16.mxu0 0
  %4674 = vmatpush1.bf16.msra.mxu0 0
  %4675 = vmatprep.subr.bf16.mxu0 0
  %4676 = vmatpush1.bf16.msra.mxu0 0
  %4677 = vmatprep.subr.bf16.mxu0 0
  %4678 = vmatpush1.bf16.msra.mxu0 0
  %4679 = vmatprep.subr.bf16.mxu0 0
  %4680 = vmatpush1.bf16.msra.mxu0 0
  %4681 = vmatprep.subr.bf16.mxu0 0
  %4682 = vmatpush1.bf16.msra.mxu0 0
  %4683 = vmatprep.subr.bf16.mxu0 0
  %4684 = vmatpush1.bf16.msra.mxu0 0
  %4685 = vmatprep.mubr.bf16.mxu0 0
  %4686 = vmatmul.mubr.bf16.gmra.mrb[0].mxu0 %v4645
  %v4687 = vpop.f32.mrb[0].mxu0
  %v4688 = vadd.f32 0.0, %v4687
  %v4689 = vpop.f32.mrb[0].mxu0
  %v4690 = vadd.f32 0.0, %v4689
  %v4691 = vpop.f32.mrb[0].mxu0
  %v4692 = vadd.f32 0.0, %v4691
  %v4693 = vpop.f32.mrb[0].mxu0
  %v4694 = vadd.f32 0.0, %v4693
  %4695 = vdwg.mxu0
  %v4696 = vadd.f32 %v4573, %v4688
  %v4697 = vadd.f32 %v4574, %v4690
  %v4698 = vadd.f32 %v4575, %v4692
  %v4699 = vadd.f32 %v4576, %v4694
  %v4700 = vadd.f32 %v4696, %v646
  %v4701 = vadd.f32 %v4697, %v650
  %v4702 = vadd.f32 %v4698, %v646
  %v4703 = vadd.f32 %v4699, %v650
  %v4704 = vmax.f32 %v4700, 0.0
  %v4705 = vmax.f32 %v4701, 0.0
  %v4706 = vmax.f32 %v4702, 0.0
  %v4707 = vmax.f32 %v4703, 0.0
  %v4712 = vrot.slane %v4704, 1
  %v4713 = vrot.slane %v4706, 1
  %v4714 = vsel %vm665, %v4712, %v4713
  %v4715 = vrot.slane %v4705, 1
  %v4716 = vrot.slane %v4707, 1
  %v4717 = vsel %vm665, %v4715, %v4716
  %v4722 = vmax.f32 %v4704, %v4714
  %v4723 = vmax.f32 %v4705, %v4717
  %v4724 = vmax.f32 %v4706, %v4713
  %v4725 = vmax.f32 %v4707, %v4716
  %4730 = vrot.lane.b32.xlu0 %v4722, 112
  %v4731 = vpop.permute.xlu0 %4730
  %4732 = vrot.lane.b32.xlu0 %v4723, 112
  %v4733 = vpop.permute.xlu0 %4732
  %4734 = vrot.lane.b32.xlu0 %v4724, 112
  %v4735 = vpop.permute.xlu0 %4734
  %4736 = vrot.lane.b32.xlu0 %v4725, 112
  %v4737 = vpop.permute.xlu0 %4736
  %v4738 = vsel %vm692, %v4731, %v4733
  %v4739 = vsel %vm692, %v4735, %v4737
  %v4744 = vmax.f32 %v4722, %v4738
  %v4745 = vmax.f32 %v4723, %v4733
  %v4746 = vmax.f32 %v4724, %v4739
  %v4747 = vmax.f32 %v4725, %v4737
  %s4748 = scalar_lea.vmem %s3, 192
  %4749 = vst [vmem:[%s4748] sm:$0xff] %v4744
  %4750 = vst.msk [vmem:[%s4748 + $0x8] sm:$0xff] %vm704, %v4745
  %4751 = vst [vmem:[%s4748 + $0x10] sm:$0x1] %v4746
  %4752 = vst.msk [vmem:[%s4748 + $0x18] sm:$0x1] %vm707, %v4747
  %s4753 = scalar_lea.vmem %s0, 56
  %v4754 = vld [vmem:[%s4753] sm:$0xf]
  %v4755 = vld [vmem:[%s4753 + $0x4] sm:$0x7]
  %v4756 = vld [vmem:[%s1] sm:$0xff]
  %v4757 = vld [vmem:[%s1 + $0x8] sm:$0xff]
  %v4758 = vld [vmem:[%s1 + $0x10] sm:$0xff]
  %v4759 = vld [vmem:[%s1 + $0x18] sm:$0xff]
  %v4760 = vld [vmem:[%s1 + $0x20] sm:$0xff]
  %v4761 = vld [vmem:[%s1 + $0x28] sm:$0xff]
  %v4762 = vld [vmem:[%s1 + $0x30] sm:$0xff]
  %v4763 = vld [vmem:[%s1 + $0x38] sm:$0xff]
  %v4764 = vld [vmem:[%s1 + $0x40] sm:$0xff]
  %v4765 = vld [vmem:[%s1 + $0x48] sm:$0xff]
  %v4766 = vld [vmem:[%s1 + $0x50] sm:$0x33]
  %v4767 = vld [vmem:[%s29] sm:$0xff]
  %v4768 = vld [vmem:[%s29 + $0x8] sm:$0xff]
  %v4769 = vld [vmem:[%s29 + $0x10] sm:$0xff]
  %v4770 = vld [vmem:[%s29 + $0x18] sm:$0xff]
  %v4771 = vld [vmem:[%s29 + $0x20] sm:$0xff]
  %v4772 = vld [vmem:[%s29 + $0x28] sm:$0xff]
  %v4773 = vld [vmem:[%s29 + $0x30] sm:$0xff]
  %v4774 = vld [vmem:[%s29 + $0x38] sm:$0xff]
  %v4775 = vld [vmem:[%s29 + $0x40] sm:$0xff]
  %v4776 = vld [vmem:[%s29 + $0x48] sm:$0xff]
  %v4777 = vld [vmem:[%s29 + $0x50] sm:$0x33]
  %v4780 = vunpack.c.l.b16 %v4754
  %v4781 = vunpack.c.l.b16 %v4755
  %v4782 = vpack.c.b16 %v4781, %v4780
  %v4784 = vshrl.u32 %v4782, 16
  %v4786 = vshll.u32 %v4782, 16
  %v4788 = vrot.slane %v4786, 1
  %v4789 = vor.u32 %v4784, %v4788
  %v4801 = vunpack.c.l.b16 %v4767
  %v4802 = vunpack.c.h.b16 %v4767
  %v4803 = vunpack.c.l.b16 %v4768
  %v4804 = vunpack.c.h.b16 %v4768
  %v4805 = vunpack.c.l.b16 %v4769
  %v4806 = vunpack.c.h.b16 %v4769
  %v4807 = vunpack.c.l.b16 %v4770
  %v4808 = vunpack.c.h.b16 %v4770
  %v4809 = vunpack.c.l.b16 %v4771
  %v4810 = vunpack.c.h.b16 %v4771
  %v4811 = vunpack.c.l.b16 %v4772
  %v4812 = vunpack.c.h.b16 %v4772
  %v4813 = vunpack.c.l.b16 %v4773
  %v4814 = vunpack.c.h.b16 %v4773
  %v4815 = vunpack.c.l.b16 %v4774
  %v4816 = vunpack.c.h.b16 %v4774
  %v4817 = vunpack.c.l.b16 %v4775
  %v4818 = vunpack.c.h.b16 %v4775
  %v4819 = vunpack.c.l.b16 %v4776
  %v4820 = vunpack.c.h.b16 %v4776
  %v4821 = vunpack.c.l.b16 %v4777
  %v4822 = vunpack.c.h.b16 %v4777
  %v4823 = vpack.c.b16 %v4803, %v4801
  %v4824 = vpack.c.b16 %v4804, %v4802
  %v4825 = vpack.c.b16 %v4807, %v4805
  %v4826 = vpack.c.b16 %v4808, %v4806
  %v4827 = vpack.c.b16 %v4811, %v4809
  %v4828 = vpack.c.b16 %v4812, %v4810
  %v4829 = vpack.c.b16 %v4815, %v4813
  %v4830 = vpack.c.b16 %v4816, %v4814
  %v4831 = vpack.c.b16 %v4819, %v4817
  %v4832 = vpack.c.b16 %v4820, %v4818
  %v4833 = vpack.c.b16 %v4821, %v4821
  %v4834 = vpack.c.b16 %v4822, %v4822
  %v4846 = vsel %vm108, %v4789, 0
  %v4849 = vsel %vm112, %v4833, 0
  %v4852 = vsel %vm112, %v4834, 0
  %4854 = vmatprep.subr.bf16.mxu0 %v4824
  %4855 = vmatpush1.bf16.msra.mxu0 %v4823
  %4856 = vmatprep.subr.bf16.mxu0 %v4826
  %4857 = vmatpush1.bf16.msra.mxu0 %v4825
  %4858 = vmatprep.subr.bf16.mxu0 %v4828
  %4859 = vmatpush1.bf16.msra.mxu0 %v4827
  %4860 = vmatprep.subr.bf16.mxu0 %v4830
  %4861 = vmatpush1.bf16.msra.mxu0 %v4829
  %4862 = vmatprep.subr.bf16.mxu0 %v4832
  %4863 = vmatpush1.bf16.msra.mxu0 %v4831
  %4864 = vmatprep.subr.bf16.mxu0 %v4852
  %4865 = vmatpush1.bf16.msra.mxu0 %v4849
  %4866 = vmatprep.subr.bf16.mxu0 0
  %4867 = vmatpush1.bf16.msra.mxu0 0
  %4868 = vmatprep.subr.bf16.mxu0 0
  %4869 = vmatpush1.bf16.msra.mxu0 0
  %4870 = vmatprep.subr.bf16.mxu0 0
  %4871 = vmatpush1.bf16.msra.mxu0 0
  %4872 = vmatprep.subr.bf16.mxu0 0
  %4873 = vmatpush1.bf16.msra.mxu0 0
  %4874 = vmatprep.subr.bf16.mxu0 0
  %4875 = vmatpush1.bf16.msra.mxu0 0
  %4876 = vmatprep.subr.bf16.mxu0 0
  %4877 = vmatpush1.bf16.msra.mxu0 0
  %4878 = vmatprep.subr.bf16.mxu0 0
  %4879 = vmatpush1.bf16.msra.mxu0 0
  %4880 = vmatprep.subr.bf16.mxu0 0
  %4881 = vmatpush1.bf16.msra.mxu0 0
  %4882 = vmatprep.subr.bf16.mxu0 0
  %4883 = vmatpush1.bf16.msra.mxu0 0
  %4884 = vmatprep.subr.bf16.mxu0 0
  %4885 = vmatpush1.bf16.msra.mxu0 0
  %4886 = vmatprep.mubr.bf16.mxu0 0
  %4887 = vmatmul.mubr.bf16.gmra.mrb[0].mxu0 %v4846
  %v4888 = vpop.f32.mrb[0].mxu0
  %v4889 = vadd.f32 0.0, %v4888
  %v4890 = vpop.f32.mrb[0].mxu0
  %v4891 = vadd.f32 0.0, %v4890
  %v4892 = vpop.f32.mrb[0].mxu0
  %v4893 = vadd.f32 0.0, %v4892
  %v4894 = vpop.f32.mrb[0].mxu0
  %v4895 = vadd.f32 0.0, %v4894
  %4896 = vdwg.mxu0
  %v4908 = vunpack.c.l.b16 %v4756
  %v4909 = vunpack.c.h.b16 %v4756
  %v4910 = vunpack.c.l.b16 %v4757
  %v4911 = vunpack.c.h.b16 %v4757
  %v4912 = vunpack.c.l.b16 %v4758
  %v4913 = vunpack.c.h.b16 %v4758
  %v4914 = vunpack.c.l.b16 %v4759
  %v4915 = vunpack.c.h.b16 %v4759
  %v4916 = vunpack.c.l.b16 %v4760
  %v4917 = vunpack.c.h.b16 %v4760
  %v4918 = vunpack.c.l.b16 %v4761
  %v4919 = vunpack.c.h.b16 %v4761
  %v4920 = vunpack.c.l.b16 %v4762
  %v4921 = vunpack.c.h.b16 %v4762
  %v4922 = vunpack.c.l.b16 %v4763
  %v4923 = vunpack.c.h.b16 %v4763
  %v4924 = vunpack.c.l.b16 %v4764
  %v4925 = vunpack.c.h.b16 %v4764
  %v4926 = vunpack.c.l.b16 %v4765
  %v4927 = vunpack.c.h.b16 %v4765
  %v4928 = vunpack.c.l.b16 %v4766
  %v4929 = vunpack.c.h.b16 %v4766
  %v4930 = vpack.c.b16 %v4910, %v4908
  %v4931 = vpack.c.b16 %v4911, %v4909
  %v4932 = vpack.c.b16 %v4914, %v4912
  %v4933 = vpack.c.b16 %v4915, %v4913
  %v4934 = vpack.c.b16 %v4918, %v4916
  %v4935 = vpack.c.b16 %v4919, %v4917
  %v4936 = vpack.c.b16 %v4922, %v4920
  %v4937 = vpack.c.b16 %v4923, %v4921
  %v4938 = vpack.c.b16 %v4926, %v4924
  %v4939 = vpack.c.b16 %v4927, %v4925
  %v4940 = vpack.c.b16 %v4928, %v4928
  %v4941 = vpack.c.b16 %v4929, %v4929
  %v4952 = vsel %vm108, %v4782, 0
  %v4955 = vsel %vm112, %v4940, 0
  %v4958 = vsel %vm112, %v4941, 0
  %4960 = vmatprep.subr.bf16.mxu0 %v4931
  %4961 = vmatpush1.bf16.msra.mxu0 %v4930
  %4962 = vmatprep.subr.bf16.mxu0 %v4933
  %4963 = vmatpush1.bf16.msra.mxu0 %v4932
  %4964 = vmatprep.subr.bf16.mxu0 %v4935
  %4965 = vmatpush1.bf16.msra.mxu0 %v4934
  %4966 = vmatprep.subr.bf16.mxu0 %v4937
  %4967 = vmatpush1.bf16.msra.mxu0 %v4936
  %4968 = vmatprep.subr.bf16.mxu0 %v4939
  %4969 = vmatpush1.bf16.msra.mxu0 %v4938
  %4970 = vmatprep.subr.bf16.mxu0 %v4958
  %4971 = vmatpush1.bf16.msra.mxu0 %v4955
  %4972 = vmatprep.subr.bf16.mxu0 0
  %4973 = vmatpush1.bf16.msra.mxu0 0
  %4974 = vmatprep.subr.bf16.mxu0 0
  %4975 = vmatpush1.bf16.msra.mxu0 0
  %4976 = vmatprep.subr.bf16.mxu0 0
  %4977 = vmatpush1.bf16.msra.mxu0 0
  %4978 = vmatprep.subr.bf16.mxu0 0
  %4979 = vmatpush1.bf16.msra.mxu0 0
  %4980 = vmatprep.subr.bf16.mxu0 0
  %4981 = vmatpush1.bf16.msra.mxu0 0
  %4982 = vmatprep.subr.bf16.mxu0 0
  %4983 = vmatpush1.bf16.msra.mxu0 0
  %4984 = vmatprep.subr.bf16.mxu0 0
  %4985 = vmatpush1.bf16.msra.mxu0 0
  %4986 = vmatprep.subr.bf16.mxu0 0
  %4987 = vmatpush1.bf16.msra.mxu0 0
  %4988 = vmatprep.subr.bf16.mxu0 0
  %4989 = vmatpush1.bf16.msra.mxu0 0
  %4990 = vmatprep.subr.bf16.mxu0 0
  %4991 = vmatpush1.bf16.msra.mxu0 0
  %4992 = vmatprep.mubr.bf16.mxu0 0
  %4993 = vmatmul.mubr.bf16.gmra.mrb[0].mxu0 %v4952
  %v4994 = vpop.f32.mrb[0].mxu0
  %v4995 = vadd.f32 %v4889, %v4994
  %v4996 = vpop.f32.mrb[0].mxu0
  %v4997 = vadd.f32 %v4891, %v4996
  %v4998 = vpop.f32.mrb[0].mxu0
  %v4999 = vadd.f32 %v4893, %v4998
  %v5000 = vpop.f32.mrb[0].mxu0
  %v5001 = vadd.f32 %v4895, %v5000
  %5002 = vdwg.mxu0
  %v5003 = vld [vmem:[%s268] sm:$0xff]
  %v5004 = vld [vmem:[%s268 + $0x8] sm:$0xff]
  %v5005 = vld [vmem:[%s268 + $0x10] sm:$0xff]
  %v5006 = vld [vmem:[%s268 + $0x18] sm:$0xff]
  %v5007 = vld [vmem:[%s268 + $0x20] sm:$0xff]
  %v5008 = vld [vmem:[%s268 + $0x28] sm:$0xff]
  %v5009 = vld [vmem:[%s268 + $0x30] sm:$0xff]
  %v5010 = vld [vmem:[%s268 + $0x38] sm:$0xff]
  %v5011 = vld [vmem:[%s268 + $0x40] sm:$0xff]
  %v5012 = vld [vmem:[%s268 + $0x48] sm:$0xff]
  %v5013 = vld [vmem:[%s268 + $0x50] sm:$0x33]
  %v5014 = vrot.slane %v4782, 1
  %v5026 = vunpack.c.l.b16 %v5003
  %v5027 = vunpack.c.h.b16 %v5003
  %v5028 = vunpack.c.l.b16 %v5004
  %v5029 = vunpack.c.h.b16 %v5004
  %v5030 = vunpack.c.l.b16 %v5005
  %v5031 = vunpack.c.h.b16 %v5005
  %v5032 = vunpack.c.l.b16 %v5006
  %v5033 = vunpack.c.h.b16 %v5006
  %v5034 = vunpack.c.l.b16 %v5007
  %v5035 = vunpack.c.h.b16 %v5007
  %v5036 = vunpack.c.l.b16 %v5008
  %v5037 = vunpack.c.h.b16 %v5008
  %v5038 = vunpack.c.l.b16 %v5009
  %v5039 = vunpack.c.h.b16 %v5009
  %v5040 = vunpack.c.l.b16 %v5010
  %v5041 = vunpack.c.h.b16 %v5010
  %v5042 = vunpack.c.l.b16 %v5011
  %v5043 = vunpack.c.h.b16 %v5011
  %v5044 = vunpack.c.l.b16 %v5012
  %v5045 = vunpack.c.h.b16 %v5012
  %v5046 = vunpack.c.l.b16 %v5013
  %v5047 = vunpack.c.h.b16 %v5013
  %v5048 = vpack.c.b16 %v5028, %v5026
  %v5049 = vpack.c.b16 %v5029, %v5027
  %v5050 = vpack.c.b16 %v5032, %v5030
  %v5051 = vpack.c.b16 %v5033, %v5031
  %v5052 = vpack.c.b16 %v5036, %v5034
  %v5053 = vpack.c.b16 %v5037, %v5035
  %v5054 = vpack.c.b16 %v5040, %v5038
  %v5055 = vpack.c.b16 %v5041, %v5039
  %v5056 = vpack.c.b16 %v5044, %v5042
  %v5057 = vpack.c.b16 %v5045, %v5043
  %v5058 = vpack.c.b16 %v5046, %v5046
  %v5059 = vpack.c.b16 %v5047, %v5047
  %v5071 = vsel %vm108, %v5014, 0
  %v5074 = vsel %vm112, %v5058, 0
  %v5077 = vsel %vm112, %v5059, 0
  %5079 = vmatprep.subr.bf16.mxu0 %v5049
  %5080 = vmatpush1.bf16.msra.mxu0 %v5048
  %5081 = vmatprep.subr.bf16.mxu0 %v5051
  %5082 = vmatpush1.bf16.msra.mxu0 %v5050
  %5083 = vmatprep.subr.bf16.mxu0 %v5053
  %5084 = vmatpush1.bf16.msra.mxu0 %v5052
  %5085 = vmatprep.subr.bf16.mxu0 %v5055
  %5086 = vmatpush1.bf16.msra.mxu0 %v5054
  %5087 = vmatprep.subr.bf16.mxu0 %v5057
  %5088 = vmatpush1.bf16.msra.mxu0 %v5056
  %5089 = vmatprep.subr.bf16.mxu0 %v5077
  %5090 = vmatpush1.bf16.msra.mxu0 %v5074
  %5091 = vmatprep.subr.bf16.mxu0 0
  %5092 = vmatpush1.bf16.msra.mxu0 0
  %5093 = vmatprep.subr.bf16.mxu0 0
  %5094 = vmatpush1.bf16.msra.mxu0 0
  %5095 = vmatprep.subr.bf16.mxu0 0
  %5096 = vmatpush1.bf16.msra.mxu0 0
  %5097 = vmatprep.subr.bf16.mxu0 0
  %5098 = vmatpush1.bf16.msra.mxu0 0
  %5099 = vmatprep.subr.bf16.mxu0 0
  %5100 = vmatpush1.bf16.msra.mxu0 0
  %5101 = vmatprep.subr.bf16.mxu0 0
  %5102 = vmatpush1.bf16.msra.mxu0 0
  %5103 = vmatprep.subr.bf16.mxu0 0
  %5104 = vmatpush1.bf16.msra.mxu0 0
  %5105 = vmatprep.subr.bf16.mxu0 0
  %5106 = vmatpush1.bf16.msra.mxu0 0
  %5107 = vmatprep.subr.bf16.mxu0 0
  %5108 = vmatpush1.bf16.msra.mxu0 0
  %5109 = vmatprep.subr.bf16.mxu0 0
  %5110 = vmatpush1.bf16.msra.mxu0 0
  %5111 = vmatprep.mubr.bf16.mxu0 0
  %5112 = vmatmul.mubr.bf16.gmra.mrb[0].mxu0 %v5071
  %v5113 = vpop.f32.mrb[0].mxu0
  %v5114 = vadd.f32 0.0, %v5113
  %v5115 = vpop.f32.mrb[0].mxu0
  %v5116 = vadd.f32 0.0, %v5115
  %v5117 = vpop.f32.mrb[0].mxu0
  %v5118 = vadd.f32 0.0, %v5117
  %v5119 = vpop.f32.mrb[0].mxu0
  %v5120 = vadd.f32 0.0, %v5119
  %5121 = vdwg.mxu0
  %v5122 = vadd.f32 %v4995, %v5114
  %v5123 = vadd.f32 %v4997, %v5116
  %v5124 = vadd.f32 %v4999, %v5118
  %v5125 = vadd.f32 %v5001, %v5120
  %v5126 = vld [vmem:[%s392] sm:$0xff]
  %v5127 = vld [vmem:[%s392 + $0x8] sm:$0xff]
  %v5128 = vld [vmem:[%s392 + $0x10] sm:$0xff]
  %v5129 = vld [vmem:[%s392 + $0x18] sm:$0xff]
  %v5130 = vld [vmem:[%s392 + $0x20] sm:$0xff]
  %v5131 = vld [vmem:[%s392 + $0x28] sm:$0xff]
  %v5132 = vld [vmem:[%s392 + $0x30] sm:$0xff]
  %v5133 = vld [vmem:[%s392 + $0x38] sm:$0xff]
  %v5134 = vld [vmem:[%s392 + $0x40] sm:$0xff]
  %v5135 = vld [vmem:[%s392 + $0x48] sm:$0xff]
  %v5136 = vld [vmem:[%s392 + $0x50] sm:$0x33]
  %v5137 = vrot.slane %v4784, 1
  %v5138 = vrot.slane %v4786, 2
  %v5139 = vor.u32 %v5137, %v5138
  %v5151 = vunpack.c.l.b16 %v5126
  %v5152 = vunpack.c.h.b16 %v5126
  %v5153 = vunpack.c.l.b16 %v5127
  %v5154 = vunpack.c.h.b16 %v5127
  %v5155 = vunpack.c.l.b16 %v5128
  %v5156 = vunpack.c.h.b16 %v5128
  %v5157 = vunpack.c.l.b16 %v5129
  %v5158 = vunpack.c.h.b16 %v5129
  %v5159 = vunpack.c.l.b16 %v5130
  %v5160 = vunpack.c.h.b16 %v5130
  %v5161 = vunpack.c.l.b16 %v5131
  %v5162 = vunpack.c.h.b16 %v5131
  %v5163 = vunpack.c.l.b16 %v5132
  %v5164 = vunpack.c.h.b16 %v5132
  %v5165 = vunpack.c.l.b16 %v5133
  %v5166 = vunpack.c.h.b16 %v5133
  %v5167 = vunpack.c.l.b16 %v5134
  %v5168 = vunpack.c.h.b16 %v5134
  %v5169 = vunpack.c.l.b16 %v5135
  %v5170 = vunpack.c.h.b16 %v5135
  %v5171 = vunpack.c.l.b16 %v5136
  %v5172 = vunpack.c.h.b16 %v5136
  %v5173 = vpack.c.b16 %v5153, %v5151
  %v5174 = vpack.c.b16 %v5154, %v5152
  %v5175 = vpack.c.b16 %v5157, %v5155
  %v5176 = vpack.c.b16 %v5158, %v5156
  %v5177 = vpack.c.b16 %v5161, %v5159
  %v5178 = vpack.c.b16 %v5162, %v5160
  %v5179 = vpack.c.b16 %v5165, %v5163
  %v5180 = vpack.c.b16 %v5166, %v5164
  %v5181 = vpack.c.b16 %v5169, %v5167
  %v5182 = vpack.c.b16 %v5170, %v5168
  %v5183 = vpack.c.b16 %v5171, %v5171
  %v5184 = vpack.c.b16 %v5172, %v5172
  %v5196 = vsel %vm108, %v5139, 0
  %v5199 = vsel %vm112, %v5183, 0
  %v5202 = vsel %vm112, %v5184, 0
  %5204 = vmatprep.subr.bf16.mxu0 %v5174
  %5205 = vmatpush1.bf16.msra.mxu0 %v5173
  %5206 = vmatprep.subr.bf16.mxu0 %v5176
  %5207 = vmatpush1.bf16.msra.mxu0 %v5175
  %5208 = vmatprep.subr.bf16.mxu0 %v5178
  %5209 = vmatpush1.bf16.msra.mxu0 %v5177
  %5210 = vmatprep.subr.bf16.mxu0 %v5180
  %5211 = vmatpush1.bf16.msra.mxu0 %v5179
  %5212 = vmatprep.subr.bf16.mxu0 %v5182
  %5213 = vmatpush1.bf16.msra.mxu0 %v5181
  %5214 = vmatprep.subr.bf16.mxu0 %v5202
  %5215 = vmatpush1.bf16.msra.mxu0 %v5199
  %5216 = vmatprep.subr.bf16.mxu0 0
  %5217 = vmatpush1.bf16.msra.mxu0 0
  %5218 = vmatprep.subr.bf16.mxu0 0
  %5219 = vmatpush1.bf16.msra.mxu0 0
  %5220 = vmatprep.subr.bf16.mxu0 0
  %5221 = vmatpush1.bf16.msra.mxu0 0
  %5222 = vmatprep.subr.bf16.mxu0 0
  %5223 = vmatpush1.bf16.msra.mxu0 0
  %5224 = vmatprep.subr.bf16.mxu0 0
  %5225 = vmatpush1.bf16.msra.mxu0 0
  %5226 = vmatprep.subr.bf16.mxu0 0
  %5227 = vmatpush1.bf16.msra.mxu0 0
  %5228 = vmatprep.subr.bf16.mxu0 0
  %5229 = vmatpush1.bf16.msra.mxu0 0
  %5230 = vmatprep.subr.bf16.mxu0 0
  %5231 = vmatpush1.bf16.msra.mxu0 0
  %5232 = vmatprep.subr.bf16.mxu0 0
  %5233 = vmatpush1.bf16.msra.mxu0 0
  %5234 = vmatprep.subr.bf16.mxu0 0
  %5235 = vmatpush1.bf16.msra.mxu0 0
  %5236 = vmatprep.mubr.bf16.mxu0 0
  %5237 = vmatmul.mubr.bf16.gmra.mrb[0].mxu0 %v5196
  %v5238 = vpop.f32.mrb[0].mxu0
  %v5239 = vadd.f32 0.0, %v5238
  %v5240 = vpop.f32.mrb[0].mxu0
  %v5241 = vadd.f32 0.0, %v5240
  %v5242 = vpop.f32.mrb[0].mxu0
  %v5243 = vadd.f32 0.0, %v5242
  %v5244 = vpop.f32.mrb[0].mxu0
  %v5245 = vadd.f32 0.0, %v5244
  %5246 = vdwg.mxu0
  %v5247 = vadd.f32 %v5122, %v5239
  %v5248 = vadd.f32 %v5123, %v5241
  %v5249 = vadd.f32 %v5124, %v5243
  %v5250 = vadd.f32 %v5125, %v5245
  %v5251 = vld [vmem:[%s518] sm:$0xff]
  %v5252 = vld [vmem:[%s518 + $0x8] sm:$0xff]
  %v5253 = vld [vmem:[%s518 + $0x10] sm:$0xff]
  %v5254 = vld [vmem:[%s518 + $0x18] sm:$0xff]
  %v5255 = vld [vmem:[%s518 + $0x20] sm:$0xff]
  %v5256 = vld [vmem:[%s518 + $0x28] sm:$0xff]
  %v5257 = vld [vmem:[%s518 + $0x30] sm:$0xff]
  %v5258 = vld [vmem:[%s518 + $0x38] sm:$0xff]
  %v5259 = vld [vmem:[%s518 + $0x40] sm:$0xff]
  %v5260 = vld [vmem:[%s518 + $0x48] sm:$0xff]
  %v5261 = vld [vmem:[%s518 + $0x50] sm:$0x33]
  %v5262 = vrot.slane %v4782, 2
  %v5274 = vunpack.c.l.b16 %v5251
  %v5275 = vunpack.c.h.b16 %v5251
  %v5276 = vunpack.c.l.b16 %v5252
  %v5277 = vunpack.c.h.b16 %v5252
  %v5278 = vunpack.c.l.b16 %v5253
  %v5279 = vunpack.c.h.b16 %v5253
  %v5280 = vunpack.c.l.b16 %v5254
  %v5281 = vunpack.c.h.b16 %v5254
  %v5282 = vunpack.c.l.b16 %v5255
  %v5283 = vunpack.c.h.b16 %v5255
  %v5284 = vunpack.c.l.b16 %v5256
  %v5285 = vunpack.c.h.b16 %v5256
  %v5286 = vunpack.c.l.b16 %v5257
  %v5287 = vunpack.c.h.b16 %v5257
  %v5288 = vunpack.c.l.b16 %v5258
  %v5289 = vunpack.c.h.b16 %v5258
  %v5290 = vunpack.c.l.b16 %v5259
  %v5291 = vunpack.c.h.b16 %v5259
  %v5292 = vunpack.c.l.b16 %v5260
  %v5293 = vunpack.c.h.b16 %v5260
  %v5294 = vunpack.c.l.b16 %v5261
  %v5295 = vunpack.c.h.b16 %v5261
  %v5296 = vpack.c.b16 %v5276, %v5274
  %v5297 = vpack.c.b16 %v5277, %v5275
  %v5298 = vpack.c.b16 %v5280, %v5278
  %v5299 = vpack.c.b16 %v5281, %v5279
  %v5300 = vpack.c.b16 %v5284, %v5282
  %v5301 = vpack.c.b16 %v5285, %v5283
  %v5302 = vpack.c.b16 %v5288, %v5286
  %v5303 = vpack.c.b16 %v5289, %v5287
  %v5304 = vpack.c.b16 %v5292, %v5290
  %v5305 = vpack.c.b16 %v5293, %v5291
  %v5306 = vpack.c.b16 %v5294, %v5294
  %v5307 = vpack.c.b16 %v5295, %v5295
  %v5319 = vsel %vm108, %v5262, 0
  %v5322 = vsel %vm112, %v5306, 0
  %v5325 = vsel %vm112, %v5307, 0
  %5327 = vmatprep.subr.bf16.mxu0 %v5297
  %5328 = vmatpush1.bf16.msra.mxu0 %v5296
  %5329 = vmatprep.subr.bf16.mxu0 %v5299
  %5330 = vmatpush1.bf16.msra.mxu0 %v5298
  %5331 = vmatprep.subr.bf16.mxu0 %v5301
  %5332 = vmatpush1.bf16.msra.mxu0 %v5300
  %5333 = vmatprep.subr.bf16.mxu0 %v5303
  %5334 = vmatpush1.bf16.msra.mxu0 %v5302
  %5335 = vmatprep.subr.bf16.mxu0 %v5305
  %5336 = vmatpush1.bf16.msra.mxu0 %v5304
  %5337 = vmatprep.subr.bf16.mxu0 %v5325
  %5338 = vmatpush1.bf16.msra.mxu0 %v5322
  %5339 = vmatprep.subr.bf16.mxu0 0
  %5340 = vmatpush1.bf16.msra.mxu0 0
  %5341 = vmatprep.subr.bf16.mxu0 0
  %5342 = vmatpush1.bf16.msra.mxu0 0
  %5343 = vmatprep.subr.bf16.mxu0 0
  %5344 = vmatpush1.bf16.msra.mxu0 0
  %5345 = vmatprep.subr.bf16.mxu0 0
  %5346 = vmatpush1.bf16.msra.mxu0 0
  %5347 = vmatprep.subr.bf16.mxu0 0
  %5348 = vmatpush1.bf16.msra.mxu0 0
  %5349 = vmatprep.subr.bf16.mxu0 0
  %5350 = vmatpush1.bf16.msra.mxu0 0
  %5351 = vmatprep.subr.bf16.mxu0 0
  %5352 = vmatpush1.bf16.msra.mxu0 0
  %5353 = vmatprep.subr.bf16.mxu0 0
  %5354 = vmatpush1.bf16.msra.mxu0 0
  %5355 = vmatprep.subr.bf16.mxu0 0
  %5356 = vmatpush1.bf16.msra.mxu0 0
  %5357 = vmatprep.subr.bf16.mxu0 0
  %5358 = vmatpush1.bf16.msra.mxu0 0
  %5359 = vmatprep.mubr.bf16.mxu0 0
  %5360 = vmatmul.mubr.bf16.gmra.mrb[0].mxu0 %v5319
  %v5361 = vpop.f32.mrb[0].mxu0
  %v5362 = vadd.f32 0.0, %v5361
  %v5363 = vpop.f32.mrb[0].mxu0
  %v5364 = vadd.f32 0.0, %v5363
  %v5365 = vpop.f32.mrb[0].mxu0
  %v5366 = vadd.f32 0.0, %v5365
  %v5367 = vpop.f32.mrb[0].mxu0
  %v5368 = vadd.f32 0.0, %v5367
  %5369 = vdwg.mxu0
  %v5370 = vadd.f32 %v5247, %v5362
  %v5371 = vadd.f32 %v5248, %v5364
  %v5372 = vadd.f32 %v5249, %v5366
  %v5373 = vadd.f32 %v5250, %v5368
  %v5374 = vadd.f32 %v5370, %v646
  %v5375 = vadd.f32 %v5371, %v650
  %v5376 = vadd.f32 %v5372, %v646
  %v5377 = vadd.f32 %v5373, %v650
  %v5378 = vmax.f32 %v5374, 0.0
  %v5379 = vmax.f32 %v5375, 0.0
  %v5380 = vmax.f32 %v5376, 0.0
  %v5381 = vmax.f32 %v5377, 0.0
  %v5386 = vrot.slane %v5378, 1
  %v5387 = vrot.slane %v5380, 1
  %v5388 = vsel %vm665, %v5386, %v5387
  %v5389 = vrot.slane %v5379, 1
  %v5390 = vrot.slane %v5381, 1
  %v5391 = vsel %vm665, %v5389, %v5390
  %v5396 = vmax.f32 %v5378, %v5388
  %v5397 = vmax.f32 %v5379, %v5391
  %v5398 = vmax.f32 %v5380, %v5387
  %v5399 = vmax.f32 %v5381, %v5390
  %5404 = vrot.lane.b32.xlu0 %v5396, 112
  %v5405 = vpop.permute.xlu0 %5404
  %5406 = vrot.lane.b32.xlu0 %v5397, 112
  %v5407 = vpop.permute.xlu0 %5406
  %5408 = vrot.lane.b32.xlu0 %v5398, 112
  %v5409 = vpop.permute.xlu0 %5408
  %5410 = vrot.lane.b32.xlu0 %v5399, 112
  %v5411 = vpop.permute.xlu0 %5410
  %v5412 = vsel %vm692, %v5405, %v5407
  %v5413 = vsel %vm692, %v5409, %v5411
  %v5418 = vmax.f32 %v5396, %v5412
  %v5419 = vmax.f32 %v5397, %v5407
  %v5420 = vmax.f32 %v5398, %v5413
  %v5421 = vmax.f32 %v5399, %v5411
  %s5422 = scalar_lea.vmem %s3, 224
  %5423 = vst [vmem:[%s5422] sm:$0xff] %v5418
  %5424 = vst.msk [vmem:[%s5422 + $0x8] sm:$0xff] %vm704, %v5419
  %5425 = vst [vmem:[%s5422 + $0x10] sm:$0x1] %v5420
  %5426 = vst.msk [vmem:[%s5422 + $0x18] sm:$0x1] %vm707, %v5421
  // Predicated region
  $region14: #{lenet_forward.4} parent=0 // pred_check
    _
  $region15: #{lenet_forward.4} parent=0 // pred_check_branch
    %5428 = sbr.rel (0) target = $region17
  $region16: #{lenet_forward.4} parent=0 // pred_region
    _
  $region17: #{lenet_forward.4} parent=0 // pred_fallthru
    _
  // Predicated region
  $region18: #{lenet_forward.4} parent=0 // pred_check
    _
  $region19: #{lenet_forward.4} parent=0 // pred_check_branch
    %5430 = sbr.rel (0) target = $region21
  $region20: #{lenet_forward.4} parent=0 // pred_region
    _
  $region21: #{lenet_forward.4} parent=0 // pred_fallthru
    _

</llo_original>
